<compile_context>
chip_gen: v6e
topology: v6e:2x2x1
jax: 0.10.0
libtpu: 0.0.40
codegen_flags: <defaults>
</compile_context>

<pallas_src>
import jax
import jax.numpy as jnp
from jax.experimental import pallas as pl
from jax.experimental.pallas import tpu as pltpu

NUM_ACTIONS = 6    # typical bomberman action set: UP, DOWN, LEFT, RIGHT, WAIT, BOMB
_P = 49            # conv2 output positions (7 x 7)
_CP = 7            # positions per conv chunk (bounds live intermediates in VMEM)
_C2 = 64           # conv2 output channels
_MAX_BLOCK = 128   # samples per grid step (aligns GEMM M to the MXU on all gens)


def dqn_kernel(xs_ref, w1_ref, b1_ref, w2_ref, b2_ref,
               w4_ref, b4_ref, w5_ref, b5_ref, out_ref, h_ref):
    """One batch tile.
    xs_ref : (49*B, 9) bf16, rows ordered p*B + b (p = conv2 output position)
    h_ref  : (B, 3136) bf16 VMEM scratch = fc4 activation layout
    out_ref: (B, 128) f32 (lane-dense, cols >= NUM_ACTIONS are padding)
    """
    f32, bf16 = jnp.float32, jnp.bfloat16
    B = h_ref.shape[0]

    w1 = w1_ref[...]          # (9, 128)  bf16: conv1 weights, 4 conv2-taps concatenated
    b1 = b1_ref[...]          # (1, 128)  f32
    w2 = w2_ref[...]          # (128, 64) bf16: conv2 weights, taps stacked on K
    b2 = b2_ref[...]          # (1, 64)   f32

    # conv1(k2,s1)+relu and conv2(k2,s2)+relu as two GEMMs per chunk of output
    # positions; scatter each (B, 64) position-slab into h_ref[b, p*64 + c].
    for q in range(_P // _CP):
        r0 = q * _CP * B
        xc = xs_ref[r0:r0 + _CP * B, :]                            # (7B, 9)
        h1 = jnp.dot(xc, w1, preferred_element_type=f32) + b1      # (7B, 128)
        h1 = jnp.maximum(h1, 0.0).astype(bf16)
        h2 = jnp.dot(h1, w2, preferred_element_type=f32) + b2      # (7B, 64)
        h2 = jnp.maximum(h2, 0.0).astype(bf16)
        for j in range(_CP):
            p = q * _CP + j
            h_ref[:, p * _C2:(p + 1) * _C2] = h2[j * B:(j + 1) * B, :]

    # fc4 + relu: one (B, 3136) @ (3136, 512) GEMM (w4 pre-permuted on host so the
    # p-major / c-minor scratch layout matches PyTorch's (C, H, W) flatten order).
    y4 = jnp.dot(h_ref[...], w4_ref[...], preferred_element_type=f32) + b4_ref[...]
    y4 = jnp.maximum(y4, 0.0).astype(bf16)

    # fc5 (output padded to 128 lane-dense columns).
    y5 = jnp.dot(y4, w5_ref[...], preferred_element_type=f32) + b5_ref[...]
    out_ref[...] = y5.astype(out_ref.dtype)


def prepare_params(params):
    """One-time weight re-layout. Keep the result around; do NOT redo per step."""
    W1, b1, W2, b2, W4, b4, W5, b5 = params
    f32, bf16 = jnp.float32, jnp.bfloat16

    # conv1 weights expanded per conv2-tap parity, taps concatenated on out-channels:
    # w1c[(kh+di)*3+(kw+dj), (kh*2+kw)*32 + co] = W1[co, 0, di, dj]
    w1e = jnp.zeros((4, 9, 32), f32)
    for kh in range(2):
        for kw in range(2):
            for di in range(2):
                for dj in range(2):
                    c = (kh + di) * 3 + (kw + dj)
                    w1e = w1e.at[kh * 2 + kw, c, :].set(W1[:, 0, di, dj])
    w1c = w1e.transpose(1, 0, 2).reshape(9, 128).astype(bf16)
    b1c = jnp.tile(b1, 4).reshape(1, 128).astype(f32)

    # conv2 weights stacked along the contraction dim:
    # w2s[(kh*2+kw)*32 + ci, co] = W2[co, ci, kh, kw]
    w2s = jnp.transpose(W2, (2, 3, 1, 0)).reshape(128, 64).astype(bf16)
    b2r = b2.reshape(1, 64).astype(f32)

    # fc4 weights permuted & flattened so w4f[p*64 + c, o] == W4[o, c*49 + p]
    w4f = jnp.transpose(W4.reshape(512, 64, 49), (2, 1, 0)).reshape(3136, 512).astype(bf16)
    b4r = b4.reshape(1, 512).astype(f32)

    # fc5 padded to 128 output columns (lane-dense stores); sliced off in wrapper.
    w5p = jnp.zeros((512, 128), f32).at[:, :NUM_ACTIONS].set(W5.T).astype(bf16)
    b5p = jnp.zeros((1, 128), f32).at[0, :NUM_ACTIONS].set(b5)

    return (w1c, b1c, w2s, b2r, w4f, b4r, w5p, b5p)


@jax.jit
def dqn_forward_pallas(x, prepped):
    w1c, b1c, w2s, b2r, w4f, b4r, w5p, b5p = prepped
    N = x.shape[0]
    assert x.shape == (N, 1, 15, 15)

    # im2col of the composed 3x3/stride-2 receptive field of conv1∘conv2:
    # xs[n, io*7+jo, a*3+b] = x[n, 0, 2*io + a, 2*jo + b]
    patches = [x[:, 0, a:a + 13:2, b:b + 13:2].reshape(N, _P)
               for a in range(3) for b in range(3)]
    xs = jnp.stack(patches, axis=-1)                               # (N, 49, 9) f32

    B = min(_MAX_BLOCK, max(8, -(-N // 8) * 8))                    # samples per tile
    T = -(-N // B)
    Np = T * B
    xs = jnp.pad(xs, ((0, Np - N), (0, 0), (0, 0)))
    # p-major rows inside each batch tile: global row = t*(49*B) + p*B + b
    xs = xs.reshape(T, B, _P, 9).transpose(0, 2, 1, 3).reshape(T * _P * B, 9)
    xs = xs.astype(jnp.bfloat16)

    out = pl.pallas_call(
        dqn_kernel,
        out_shape=jax.ShapeDtypeStruct((Np, 128), jnp.float32),
        grid_spec=pltpu.PrefetchScalarGridSpec(
            num_scalar_prefetch=0,
            grid=(T,),
            in_specs=[
                pl.BlockSpec((_P * B, 9), lambda t: (t, 0)),
                # constant-index weight blocks (re-fetch is skipped across steps)
                pl.BlockSpec((9, 128), lambda t: (0, 0)),
                pl.BlockSpec((1, 128), lambda t: (0, 0)),
                pl.BlockSpec((128, 64), lambda t: (0, 0)),
                pl.BlockSpec((1, 64), lambda t: (0, 0)),
                pl.BlockSpec((3136, 512), lambda t: (0, 0)),
                pl.BlockSpec((1, 512), lambda t: (0, 0)),
                pl.BlockSpec((512, 128), lambda t: (0, 0)),
                pl.BlockSpec((1, 128), lambda t: (0, 0)),
            ],
            out_specs=pl.BlockSpec((B, 128), lambda t: (t, 0)),
            scratch_shapes=[pltpu.VMEM((B, 3136), jnp.bfloat16)],
        ),
        compiler_params=pltpu.CompilerParams(
            dimension_semantics=("parallel",),   # batch tiles independent (v7x: 2 TCs)
            vmem_limit_bytes=48 << 20),
    )(xs, w1c, b1c, w2s, b2r, w4f, b4r, w5p, b5p)
    return out[:N, :NUM_ACTIONS]


def dqn_forward_ref(x, params):
    """Pure-JAX f32 reference reproducing the PyTorch forward exactly."""
    W1, b1, W2, b2, W4, b4, W5, b5 = params
    dn = ('NCHW', 'OIHW', 'NCHW')
    h = jax.lax.conv_general_dilated(x, W1, (1, 1), 'VALID', dimension_numbers=dn)
    h = jnp.maximum(h + b1[None, :, None, None], 0.0)
    h = jax.lax.conv_general_dilated(h, W2, (2, 2), 'VALID', dimension_numbers=dn)
    h = jnp.maximum(h + b2[None, :, None, None], 0.0)
    h = h.reshape(h.shape[0], -1)                      # PyTorch .view flatten (C,H,W)
    h = jnp.maximum(h @ W4.T + b4, 0.0)
    return h @ W5.T + b5


def init_params(key):
    # mirrors set_weights(random=True): weights ~ U(-0.01, 0.01), biases = 0.01
    k1, k2, k4, k5 = jax.random.split(key, 4)
    u = lambda k, shape: jax.random.uniform(k, shape, jnp.float32, -0.01, 0.01)
    W1 = u(k1, (32, 1, 2, 2));      b1 = jnp.full((32,), 0.01, jnp.float32)
    W2 = u(k2, (64, 32, 2, 2));     b2 = jnp.full((64,), 0.01, jnp.float32)
    W4 = u(k4, (512, 64 * 7 * 7));  b4 = jnp.full((512,), 0.01, jnp.float32)
    W5 = u(k5, (NUM_ACTIONS, 512)); b5 = jnp.full((NUM_ACTIONS,), 0.01, jnp.float32)
    return (W1, b1, W2, b2, W4, b4, W5, b5)


if __name__ == "__main__":
    key = jax.random.PRNGKey(0)
    kp, kx = jax.random.split(key)
    params = init_params(kp)
    prepped = prepare_params(params)                  # one-time weight re-layout

    x = jax.random.normal(kx, (2, 1, 15, 15), jnp.float32)   # NCHW, like PyTorch

    q_pallas = jax.block_until_ready(dqn_forward_pallas(x, prepped))
    q_ref = dqn_forward_ref(x, params)

    assert q_pallas.shape == (2, NUM_ACTIONS)
    assert jnp.allclose(q_pallas, q_ref, rtol=2e-2, atol=1e-3), (q_pallas, q_ref)
    print("KERNEL_OK")
</pallas_src>

<mosaic_0001>
module attributes {stable_mosaic.version = 11 : i64} {
  func.func @dqn_kernel(%arg0: i32, %arg1: memref<392x9xbf16, #tpu.memory_space<vmem>>, %arg2: memref<9x128xbf16, #tpu.memory_space<vmem>>, %arg3: memref<1x128xf32, #tpu.memory_space<vmem>>, %arg4: memref<128x64xbf16, #tpu.memory_space<vmem>>, %arg5: memref<1x64xf32, #tpu.memory_space<vmem>>, %arg6: memref<3136x512xbf16, #tpu.memory_space<vmem>>, %arg7: memref<1x512xf32, #tpu.memory_space<vmem>>, %arg8: memref<512x128xbf16, #tpu.memory_space<vmem>>, %arg9: memref<1x128xf32, #tpu.memory_space<vmem>>, %arg10: memref<8x128xf32, #tpu.memory_space<vmem>>, %arg11: memref<8x3136xbf16, #tpu.memory_space<vmem>>) attributes {dimension_semantics = [#tpu.dimension_semantics<parallel>], iteration_bounds = array<i64: 1>, scalar_prefetch = 0 : i64, scratch_operands = 1 : i64, tpu.core_type = #tpu.core_type<tc>, window_params = [{transform_indices = @transform_0, window_bounds = array<i64: 392, 9>}, {pipeline_mode = #tpu.pipeline_mode<synchronous>, transform_indices = @transform_1, window_bounds = array<i64: 9, 128>}, {pipeline_mode = #tpu.pipeline_mode<synchronous>, transform_indices = @transform_2, window_bounds = array<i64: 1, 128>}, {pipeline_mode = #tpu.pipeline_mode<synchronous>, transform_indices = @transform_3, window_bounds = array<i64: 128, 64>}, {pipeline_mode = #tpu.pipeline_mode<synchronous>, transform_indices = @transform_4, window_bounds = array<i64: 1, 64>}, {pipeline_mode = #tpu.pipeline_mode<synchronous>, transform_indices = @transform_5, window_bounds = array<i64: 3136, 512>}, {pipeline_mode = #tpu.pipeline_mode<synchronous>, transform_indices = @transform_6, window_bounds = array<i64: 1, 512>}, {pipeline_mode = #tpu.pipeline_mode<synchronous>, transform_indices = @transform_7, window_bounds = array<i64: 512, 128>}, {pipeline_mode = #tpu.pipeline_mode<synchronous>, transform_indices = @transform_8, window_bounds = array<i64: 1, 128>}, {transform_indices = @transform_9, window_bounds = array<i64: 8, 128>}]} {
    %c0 = arith.constant 0 : index
    %c0_0 = arith.constant 0 : index
    %0 = vector.load %arg2[%c0, %c0_0] : memref<9x128xbf16, #tpu.memory_space<vmem>>, vector<9x128xbf16>
    %c0_1 = arith.constant 0 : index
    %c0_2 = arith.constant 0 : index
    %1 = vector.load %arg3[%c0_1, %c0_2] : memref<1x128xf32, #tpu.memory_space<vmem>>, vector<1x128xf32>
    %c0_3 = arith.constant 0 : index
    %c0_4 = arith.constant 0 : index
    %2 = vector.load %arg4[%c0_3, %c0_4] : memref<128x64xbf16, #tpu.memory_space<vmem>>, vector<128x64xbf16>
    %c0_5 = arith.constant 0 : index
    %c0_6 = arith.constant 0 : index
    %3 = vector.load %arg5[%c0_5, %c0_6] : memref<1x64xf32, #tpu.memory_space<vmem>>, vector<1x64xf32>
    %c0_7 = arith.constant 0 : index
    %c0_8 = arith.constant 0 : index
    %4 = vector.load %arg1[%c0_7, %c0_8] : memref<392x9xbf16, #tpu.memory_space<vmem>>, vector<56x9xbf16>
    %cst = arith.constant dense<0.000000e+00> : vector<56x128xf32>
    %5 = tpu.matmul %4, %0, %cst {dimension_numbers = #tpu.dot_dimension_numbers<[1], [0], [0], [1], [0, 0, 1, 1], [], []>} : vector<56x9xbf16>, vector<9x128xbf16>, vector<56x128xf32> -> vector<56x128xf32>
    %6 = vector.broadcast %1 : vector<1x128xf32> to vector<56x128xf32>
    %7 = arith.addf %5, %6 : vector<56x128xf32>
    %cst_9 = arith.constant 0.000000e+00 : f32
    %8 = vector.broadcast %cst_9 : f32 to vector<56x128xf32>
    %9 = arith.maximumf %7, %8 : vector<56x128xf32>
    %10 = arith.truncf %9 : vector<56x128xf32> to vector<56x128xbf16>
    %cst_10 = arith.constant dense<0.000000e+00> : vector<56x64xf32>
    %11 = tpu.matmul %10, %2, %cst_10 {dimension_numbers = #tpu.dot_dimension_numbers<[1], [0], [0], [1], [0, 0, 1, 1], [], []>} : vector<56x128xbf16>, vector<128x64xbf16>, vector<56x64xf32> -> vector<56x64xf32>
    %12 = vector.broadcast %3 : vector<1x64xf32> to vector<56x64xf32>
    %13 = arith.addf %11, %12 : vector<56x64xf32>
    %cst_11 = arith.constant 0.000000e+00 : f32
    %14 = vector.broadcast %cst_11 : f32 to vector<56x64xf32>
    %15 = arith.maximumf %13, %14 : vector<56x64xf32>
    %16 = arith.truncf %15 : vector<56x64xf32> to vector<56x64xbf16>
    %17 = vector.extract_strided_slice %16 {offsets = [0, 0], sizes = [8, 64], strides = [1, 1]} : vector<56x64xbf16> to vector<8x64xbf16>
    %c0_12 = arith.constant 0 : index
    %c0_13 = arith.constant 0 : index
    %18 = vector.load %arg11[%c0_12, %c0_13] : memref<8x3136xbf16, #tpu.memory_space<vmem>>, vector<8x64xbf16>
    tpu.vector_store %arg11[%c0_12, %c0_13], %17 {strides = array<i32>} : memref<8x3136xbf16, #tpu.memory_space<vmem>>, vector<8x64xbf16>,
    %19 = vector.extract_strided_slice %16 {offsets = [8, 0], sizes = [8, 64], strides = [1, 1]} : vector<56x64xbf16> to vector<8x64xbf16>
    %c0_14 = arith.constant 0 : index
    %c64 = arith.constant 64 : index
    %20 = vector.load %arg11[%c0_14, %c64] : memref<8x3136xbf16, #tpu.memory_space<vmem>>, vector<8x64xbf16>
    tpu.vector_store %arg11[%c0_14, %c64], %19 {strides = array<i32>} : memref<8x3136xbf16, #tpu.memory_space<vmem>>, vector<8x64xbf16>,
    %21 = vector.extract_strided_slice %16 {offsets = [16, 0], sizes = [8, 64], strides = [1, 1]} : vector<56x64xbf16> to vector<8x64xbf16>
    %c0_15 = arith.constant 0 : index
    %c128 = arith.constant 128 : index
    %22 = vector.load %arg11[%c0_15, %c128] : memref<8x3136xbf16, #tpu.memory_space<vmem>>, vector<8x64xbf16>
    tpu.vector_store %arg11[%c0_15, %c128], %21 {strides = array<i32>} : memref<8x3136xbf16, #tpu.memory_space<vmem>>, vector<8x64xbf16>,
    %23 = vector.extract_strided_slice %16 {offsets = [24, 0], sizes = [8, 64], strides = [1, 1]} : vector<56x64xbf16> to vector<8x64xbf16>
    %c0_16 = arith.constant 0 : index
    %c192 = arith.constant 192 : index
    %24 = vector.load %arg11[%c0_16, %c192] : memref<8x3136xbf16, #tpu.memory_space<vmem>>, vector<8x64xbf16>
    tpu.vector_store %arg11[%c0_16, %c192], %23 {strides = array<i32>} : memref<8x3136xbf16, #tpu.memory_space<vmem>>, vector<8x64xbf16>,
    %25 = vector.extract_strided_slice %16 {offsets = [32, 0], sizes = [8, 64], strides = [1, 1]} : vector<56x64xbf16> to vector<8x64xbf16>
    %c0_17 = arith.constant 0 : index
    %c256 = arith.constant 256 : index
    %26 = vector.load %arg11[%c0_17, %c256] : memref<8x3136xbf16, #tpu.memory_space<vmem>>, vector<8x64xbf16>
    tpu.vector_store %arg11[%c0_17, %c256], %25 {strides = array<i32>} : memref<8x3136xbf16, #tpu.memory_space<vmem>>, vector<8x64xbf16>,
    %27 = vector.extract_strided_slice %16 {offsets = [40, 0], sizes = [8, 64], strides = [1, 1]} : vector<56x64xbf16> to vector<8x64xbf16>
    %c0_18 = arith.constant 0 : index
    %c320 = arith.constant 320 : index
    %28 = vector.load %arg11[%c0_18, %c320] : memref<8x3136xbf16, #tpu.memory_space<vmem>>, vector<8x64xbf16>
    tpu.vector_store %arg11[%c0_18, %c320], %27 {strides = array<i32>} : memref<8x3136xbf16, #tpu.memory_space<vmem>>, vector<8x64xbf16>,
    %29 = vector.extract_strided_slice %16 {offsets = [48, 0], sizes = [8, 64], strides = [1, 1]} : vector<56x64xbf16> to vector<8x64xbf16>
    %c0_19 = arith.constant 0 : index
    %c384 = arith.constant 384 : index
    %30 = vector.load %arg11[%c0_19, %c384] : memref<8x3136xbf16, #tpu.memory_space<vmem>>, vector<8x64xbf16>
    tpu.vector_store %arg11[%c0_19, %c384], %29 {strides = array<i32>} : memref<8x3136xbf16, #tpu.memory_space<vmem>>, vector<8x64xbf16>,
    %c56 = arith.constant 56 : index
    %c0_20 = arith.constant 0 : index
    %31 = vector.load %arg1[%c56, %c0_20] : memref<392x9xbf16, #tpu.memory_space<vmem>>, vector<56x9xbf16>
    %cst_21 = arith.constant dense<0.000000e+00> : vector<56x128xf32>
    %32 = tpu.matmul %31, %0, %cst_21 {dimension_numbers = #tpu.dot_dimension_numbers<[1], [0], [0], [1], [0, 0, 1, 1], [], []>} : vector<56x9xbf16>, vector<9x128xbf16>, vector<56x128xf32> -> vector<56x128xf32>
    %33 = vector.broadcast %1 : vector<1x128xf32> to vector<56x128xf32>
    %34 = arith.addf %32, %33 : vector<56x128xf32>
    %cst_22 = arith.constant 0.000000e+00 : f32
    %35 = vector.broadcast %cst_22 : f32 to vector<56x128xf32>
    %36 = arith.maximumf %34, %35 : vector<56x128xf32>
    %37 = arith.truncf %36 : vector<56x128xf32> to vector<56x128xbf16>
    %cst_23 = arith.constant dense<0.000000e+00> : vector<56x64xf32>
    %38 = tpu.matmul %37, %2, %cst_23 {dimension_numbers = #tpu.dot_dimension_numbers<[1], [0], [0], [1], [0, 0, 1, 1], [], []>} : vector<56x128xbf16>, vector<128x64xbf16>, vector<56x64xf32> -> vector<56x64xf32>
    %39 = vector.broadcast %3 : vector<1x64xf32> to vector<56x64xf32>
    %40 = arith.addf %38, %39 : vector<56x64xf32>
    %cst_24 = arith.constant 0.000000e+00 : f32
    %41 = vector.broadcast %cst_24 : f32 to vector<56x64xf32>
    %42 = arith.maximumf %40, %41 : vector<56x64xf32>
    %43 = arith.truncf %42 : vector<56x64xf32> to vector<56x64xbf16>
    %44 = vector.extract_strided_slice %43 {offsets = [0, 0], sizes = [8, 64], strides = [1, 1]} : vector<56x64xbf16> to vector<8x64xbf16>
    %c0_25 = arith.constant 0 : index
    %c448 = arith.constant 448 : index
    %45 = vector.load %arg11[%c0_25, %c448] : memref<8x3136xbf16, #tpu.memory_space<vmem>>, vector<8x64xbf16>
    tpu.vector_store %arg11[%c0_25, %c448], %44 {strides = array<i32>} : memref<8x3136xbf16, #tpu.memory_space<vmem>>, vector<8x64xbf16>,
    %46 = vector.extract_strided_slice %43 {offsets = [8, 0], sizes = [8, 64], strides = [1, 1]} : vector<56x64xbf16> to vector<8x64xbf16>
    %c0_26 = arith.constant 0 : index
    %c512 = arith.constant 512 : index
    %47 = vector.load %arg11[%c0_26, %c512] : memref<8x3136xbf16, #tpu.memory_space<vmem>>, vector<8x64xbf16>
    tpu.vector_store %arg11[%c0_26, %c512], %46 {strides = array<i32>} : memref<8x3136xbf16, #tpu.memory_space<vmem>>, vector<8x64xbf16>,
    %48 = vector.extract_strided_slice %43 {offsets = [16, 0], sizes = [8, 64], strides = [1, 1]} : vector<56x64xbf16> to vector<8x64xbf16>
    %c0_27 = arith.constant 0 : index
    %c576 = arith.constant 576 : index
    %49 = vector.load %arg11[%c0_27, %c576] : memref<8x3136xbf16, #tpu.memory_space<vmem>>, vector<8x64xbf16>
    tpu.vector_store %arg11[%c0_27, %c576], %48 {strides = array<i32>} : memref<8x3136xbf16, #tpu.memory_space<vmem>>, vector<8x64xbf16>,
    %50 = vector.extract_strided_slice %43 {offsets = [24, 0], sizes = [8, 64], strides = [1, 1]} : vector<56x64xbf16> to vector<8x64xbf16>
    %c0_28 = arith.constant 0 : index
    %c640 = arith.constant 640 : index
    %51 = vector.load %arg11[%c0_28, %c640] : memref<8x3136xbf16, #tpu.memory_space<vmem>>, vector<8x64xbf16>
    tpu.vector_store %arg11[%c0_28, %c640], %50 {strides = array<i32>} : memref<8x3136xbf16, #tpu.memory_space<vmem>>, vector<8x64xbf16>,
    %52 = vector.extract_strided_slice %43 {offsets = [32, 0], sizes = [8, 64], strides = [1, 1]} : vector<56x64xbf16> to vector<8x64xbf16>
    %c0_29 = arith.constant 0 : index
    %c704 = arith.constant 704 : index
    %53 = vector.load %arg11[%c0_29, %c704] : memref<8x3136xbf16, #tpu.memory_space<vmem>>, vector<8x64xbf16>
    tpu.vector_store %arg11[%c0_29, %c704], %52 {strides = array<i32>} : memref<8x3136xbf16, #tpu.memory_space<vmem>>, vector<8x64xbf16>,
    %54 = vector.extract_strided_slice %43 {offsets = [40, 0], sizes = [8, 64], strides = [1, 1]} : vector<56x64xbf16> to vector<8x64xbf16>
    %c0_30 = arith.constant 0 : index
    %c768 = arith.constant 768 : index
    %55 = vector.load %arg11[%c0_30, %c768] : memref<8x3136xbf16, #tpu.memory_space<vmem>>, vector<8x64xbf16>
    tpu.vector_store %arg11[%c0_30, %c768], %54 {strides = array<i32>} : memref<8x3136xbf16, #tpu.memory_space<vmem>>, vector<8x64xbf16>,
    %56 = vector.extract_strided_slice %43 {offsets = [48, 0], sizes = [8, 64], strides = [1, 1]} : vector<56x64xbf16> to vector<8x64xbf16>
    %c0_31 = arith.constant 0 : index
    %c832 = arith.constant 832 : index
    %57 = vector.load %arg11[%c0_31, %c832] : memref<8x3136xbf16, #tpu.memory_space<vmem>>, vector<8x64xbf16>
    tpu.vector_store %arg11[%c0_31, %c832], %56 {strides = array<i32>} : memref<8x3136xbf16, #tpu.memory_space<vmem>>, vector<8x64xbf16>,
    %c112 = arith.constant 112 : index
    %c0_32 = arith.constant 0 : index
    %58 = vector.load %arg1[%c112, %c0_32] : memref<392x9xbf16, #tpu.memory_space<vmem>>, vector<56x9xbf16>
    %cst_33 = arith.constant dense<0.000000e+00> : vector<56x128xf32>
    %59 = tpu.matmul %58, %0, %cst_33 {dimension_numbers = #tpu.dot_dimension_numbers<[1], [0], [0], [1], [0, 0, 1, 1], [], []>} : vector<56x9xbf16>, vector<9x128xbf16>, vector<56x128xf32> -> vector<56x128xf32>
    %60 = vector.broadcast %1 : vector<1x128xf32> to vector<56x128xf32>
    %61 = arith.addf %59, %60 : vector<56x128xf32>
    %cst_34 = arith.constant 0.000000e+00 : f32
    %62 = vector.broadcast %cst_34 : f32 to vector<56x128xf32>
    %63 = arith.maximumf %61, %62 : vector<56x128xf32>
    %64 = arith.truncf %63 : vector<56x128xf32> to vector<56x128xbf16>
    %cst_35 = arith.constant dense<0.000000e+00> : vector<56x64xf32>
    %65 = tpu.matmul %64, %2, %cst_35 {dimension_numbers = #tpu.dot_dimension_numbers<[1], [0], [0], [1], [0, 0, 1, 1], [], []>} : vector<56x128xbf16>, vector<128x64xbf16>, vector<56x64xf32> -> vector<56x64xf32>
    %66 = vector.broadcast %3 : vector<1x64xf32> to vector<56x64xf32>
    %67 = arith.addf %65, %66 : vector<56x64xf32>
    %cst_36 = arith.constant 0.000000e+00 : f32
    %68 = vector.broadcast %cst_36 : f32 to vector<56x64xf32>
    %69 = arith.maximumf %67, %68 : vector<56x64xf32>
    %70 = arith.truncf %69 : vector<56x64xf32> to vector<56x64xbf16>
    %71 = vector.extract_strided_slice %70 {offsets = [0, 0], sizes = [8, 64], strides = [1, 1]} : vector<56x64xbf16> to vector<8x64xbf16>
    %c0_37 = arith.constant 0 : index
    %c896 = arith.constant 896 : index
    %72 = vector.load %arg11[%c0_37, %c896] : memref<8x3136xbf16, #tpu.memory_space<vmem>>, vector<8x64xbf16>
    tpu.vector_store %arg11[%c0_37, %c896], %71 {strides = array<i32>} : memref<8x3136xbf16, #tpu.memory_space<vmem>>, vector<8x64xbf16>,
    %73 = vector.extract_strided_slice %70 {offsets = [8, 0], sizes = [8, 64], strides = [1, 1]} : vector<56x64xbf16> to vector<8x64xbf16>
    %c0_38 = arith.constant 0 : index
    %c960 = arith.constant 960 : index
    %74 = vector.load %arg11[%c0_38, %c960] : memref<8x3136xbf16, #tpu.memory_space<vmem>>, vector<8x64xbf16>
    tpu.vector_store %arg11[%c0_38, %c960], %73 {strides = array<i32>} : memref<8x3136xbf16, #tpu.memory_space<vmem>>, vector<8x64xbf16>,
    %75 = vector.extract_strided_slice %70 {offsets = [16, 0], sizes = [8, 64], strides = [1, 1]} : vector<56x64xbf16> to vector<8x64xbf16>
    %c0_39 = arith.constant 0 : index
    %c1024 = arith.constant 1024 : index
    %76 = vector.load %arg11[%c0_39, %c1024] : memref<8x3136xbf16, #tpu.memory_space<vmem>>, vector<8x64xbf16>
    tpu.vector_store %arg11[%c0_39, %c1024], %75 {strides = array<i32>} : memref<8x3136xbf16, #tpu.memory_space<vmem>>, vector<8x64xbf16>,
    %77 = vector.extract_strided_slice %70 {offsets = [24, 0], sizes = [8, 64], strides = [1, 1]} : vector<56x64xbf16> to vector<8x64xbf16>
    %c0_40 = arith.constant 0 : index
    %c1088 = arith.constant 1088 : index
    %78 = vector.load %arg11[%c0_40, %c1088] : memref<8x3136xbf16, #tpu.memory_space<vmem>>, vector<8x64xbf16>
    tpu.vector_store %arg11[%c0_40, %c1088], %77 {strides = array<i32>} : memref<8x3136xbf16, #tpu.memory_space<vmem>>, vector<8x64xbf16>,
    %79 = vector.extract_strided_slice %70 {offsets = [32, 0], sizes = [8, 64], strides = [1, 1]} : vector<56x64xbf16> to vector<8x64xbf16>
    %c0_41 = arith.constant 0 : index
    %c1152 = arith.constant 1152 : index
    %80 = vector.load %arg11[%c0_41, %c1152] : memref<8x3136xbf16, #tpu.memory_space<vmem>>, vector<8x64xbf16>
    tpu.vector_store %arg11[%c0_41, %c1152], %79 {strides = array<i32>} : memref<8x3136xbf16, #tpu.memory_space<vmem>>, vector<8x64xbf16>,
    %81 = vector.extract_strided_slice %70 {offsets = [40, 0], sizes = [8, 64], strides = [1, 1]} : vector<56x64xbf16> to vector<8x64xbf16>
    %c0_42 = arith.constant 0 : index
    %c1216 = arith.constant 1216 : index
    %82 = vector.load %arg11[%c0_42, %c1216] : memref<8x3136xbf16, #tpu.memory_space<vmem>>, vector<8x64xbf16>
    tpu.vector_store %arg11[%c0_42, %c1216], %81 {strides = array<i32>} : memref<8x3136xbf16, #tpu.memory_space<vmem>>, vector<8x64xbf16>,
    %83 = vector.extract_strided_slice %70 {offsets = [48, 0], sizes = [8, 64], strides = [1, 1]} : vector<56x64xbf16> to vector<8x64xbf16>
    %c0_43 = arith.constant 0 : index
    %c1280 = arith.constant 1280 : index
    %84 = vector.load %arg11[%c0_43, %c1280] : memref<8x3136xbf16, #tpu.memory_space<vmem>>, vector<8x64xbf16>
    tpu.vector_store %arg11[%c0_43, %c1280], %83 {strides = array<i32>} : memref<8x3136xbf16, #tpu.memory_space<vmem>>, vector<8x64xbf16>,
    %c168 = arith.constant 168 : index
    %c0_44 = arith.constant 0 : index
    %85 = vector.load %arg1[%c168, %c0_44] : memref<392x9xbf16, #tpu.memory_space<vmem>>, vector<56x9xbf16>
    %cst_45 = arith.constant dense<0.000000e+00> : vector<56x128xf32>
    %86 = tpu.matmul %85, %0, %cst_45 {dimension_numbers = #tpu.dot_dimension_numbers<[1], [0], [0], [1], [0, 0, 1, 1], [], []>} : vector<56x9xbf16>, vector<9x128xbf16>, vector<56x128xf32> -> vector<56x128xf32>
    %87 = vector.broadcast %1 : vector<1x128xf32> to vector<56x128xf32>
    %88 = arith.addf %86, %87 : vector<56x128xf32>
    %cst_46 = arith.constant 0.000000e+00 : f32
    %89 = vector.broadcast %cst_46 : f32 to vector<56x128xf32>
    %90 = arith.maximumf %88, %89 : vector<56x128xf32>
    %91 = arith.truncf %90 : vector<56x128xf32> to vector<56x128xbf16>
    %cst_47 = arith.constant dense<0.000000e+00> : vector<56x64xf32>
    %92 = tpu.matmul %91, %2, %cst_47 {dimension_numbers = #tpu.dot_dimension_numbers<[1], [0], [0], [1], [0, 0, 1, 1], [], []>} : vector<56x128xbf16>, vector<128x64xbf16>, vector<56x64xf32> -> vector<56x64xf32>
    %93 = vector.broadcast %3 : vector<1x64xf32> to vector<56x64xf32>
    %94 = arith.addf %92, %93 : vector<56x64xf32>
    %cst_48 = arith.constant 0.000000e+00 : f32
    %95 = vector.broadcast %cst_48 : f32 to vector<56x64xf32>
    %96 = arith.maximumf %94, %95 : vector<56x64xf32>
    %97 = arith.truncf %96 : vector<56x64xf32> to vector<56x64xbf16>
    %98 = vector.extract_strided_slice %97 {offsets = [0, 0], sizes = [8, 64], strides = [1, 1]} : vector<56x64xbf16> to vector<8x64xbf16>
    %c0_49 = arith.constant 0 : index
    %c1344 = arith.constant 1344 : index
    %99 = vector.load %arg11[%c0_49, %c1344] : memref<8x3136xbf16, #tpu.memory_space<vmem>>, vector<8x64xbf16>
    tpu.vector_store %arg11[%c0_49, %c1344], %98 {strides = array<i32>} : memref<8x3136xbf16, #tpu.memory_space<vmem>>, vector<8x64xbf16>,
    %100 = vector.extract_strided_slice %97 {offsets = [8, 0], sizes = [8, 64], strides = [1, 1]} : vector<56x64xbf16> to vector<8x64xbf16>
    %c0_50 = arith.constant 0 : index
    %c1408 = arith.constant 1408 : index
    %101 = vector.load %arg11[%c0_50, %c1408] : memref<8x3136xbf16, #tpu.memory_space<vmem>>, vector<8x64xbf16>
    tpu.vector_store %arg11[%c0_50, %c1408], %100 {strides = array<i32>} : memref<8x3136xbf16, #tpu.memory_space<vmem>>, vector<8x64xbf16>,
    %102 = vector.extract_strided_slice %97 {offsets = [16, 0], sizes = [8, 64], strides = [1, 1]} : vector<56x64xbf16> to vector<8x64xbf16>
    %c0_51 = arith.constant 0 : index
    %c1472 = arith.constant 1472 : index
    %103 = vector.load %arg11[%c0_51, %c1472] : memref<8x3136xbf16, #tpu.memory_space<vmem>>, vector<8x64xbf16>
    tpu.vector_store %arg11[%c0_51, %c1472], %102 {strides = array<i32>} : memref<8x3136xbf16, #tpu.memory_space<vmem>>, vector<8x64xbf16>,
    %104 = vector.extract_strided_slice %97 {offsets = [24, 0], sizes = [8, 64], strides = [1, 1]} : vector<56x64xbf16> to vector<8x64xbf16>
    %c0_52 = arith.constant 0 : index
    %c1536 = arith.constant 1536 : index
    %105 = vector.load %arg11[%c0_52, %c1536] : memref<8x3136xbf16, #tpu.memory_space<vmem>>, vector<8x64xbf16>
    tpu.vector_store %arg11[%c0_52, %c1536], %104 {strides = array<i32>} : memref<8x3136xbf16, #tpu.memory_space<vmem>>, vector<8x64xbf16>,
    %106 = vector.extract_strided_slice %97 {offsets = [32, 0], sizes = [8, 64], strides = [1, 1]} : vector<56x64xbf16> to vector<8x64xbf16>
    %c0_53 = arith.constant 0 : index
    %c1600 = arith.constant 1600 : index
    %107 = vector.load %arg11[%c0_53, %c1600] : memref<8x3136xbf16, #tpu.memory_space<vmem>>, vector<8x64xbf16>
    tpu.vector_store %arg11[%c0_53, %c1600], %106 {strides = array<i32>} : memref<8x3136xbf16, #tpu.memory_space<vmem>>, vector<8x64xbf16>,
    %108 = vector.extract_strided_slice %97 {offsets = [40, 0], sizes = [8, 64], strides = [1, 1]} : vector<56x64xbf16> to vector<8x64xbf16>
    %c0_54 = arith.constant 0 : index
    %c1664 = arith.constant 1664 : index
    %109 = vector.load %arg11[%c0_54, %c1664] : memref<8x3136xbf16, #tpu.memory_space<vmem>>, vector<8x64xbf16>
    tpu.vector_store %arg11[%c0_54, %c1664], %108 {strides = array<i32>} : memref<8x3136xbf16, #tpu.memory_space<vmem>>, vector<8x64xbf16>,
    %110 = vector.extract_strided_slice %97 {offsets = [48, 0], sizes = [8, 64], strides = [1, 1]} : vector<56x64xbf16> to vector<8x64xbf16>
    %c0_55 = arith.constant 0 : index
    %c1728 = arith.constant 1728 : index
    %111 = vector.load %arg11[%c0_55, %c1728] : memref<8x3136xbf16, #tpu.memory_space<vmem>>, vector<8x64xbf16>
    tpu.vector_store %arg11[%c0_55, %c1728], %110 {strides = array<i32>} : memref<8x3136xbf16, #tpu.memory_space<vmem>>, vector<8x64xbf16>,
    %c224 = arith.constant 224 : index
    %c0_56 = arith.constant 0 : index
    %112 = vector.load %arg1[%c224, %c0_56] : memref<392x9xbf16, #tpu.memory_space<vmem>>, vector<56x9xbf16>
    %cst_57 = arith.constant dense<0.000000e+00> : vector<56x128xf32>
    %113 = tpu.matmul %112, %0, %cst_57 {dimension_numbers = #tpu.dot_dimension_numbers<[1], [0], [0], [1], [0, 0, 1, 1], [], []>} : vector<56x9xbf16>, vector<9x128xbf16>, vector<56x128xf32> -> vector<56x128xf32>
    %114 = vector.broadcast %1 : vector<1x128xf32> to vector<56x128xf32>
    %115 = arith.addf %113, %114 : vector<56x128xf32>
    %cst_58 = arith.constant 0.000000e+00 : f32
    %116 = vector.broadcast %cst_58 : f32 to vector<56x128xf32>
    %117 = arith.maximumf %115, %116 : vector<56x128xf32>
    %118 = arith.truncf %117 : vector<56x128xf32> to vector<56x128xbf16>
    %cst_59 = arith.constant dense<0.000000e+00> : vector<56x64xf32>
    %119 = tpu.matmul %118, %2, %cst_59 {dimension_numbers = #tpu.dot_dimension_numbers<[1], [0], [0], [1], [0, 0, 1, 1], [], []>} : vector<56x128xbf16>, vector<128x64xbf16>, vector<56x64xf32> -> vector<56x64xf32>
    %120 = vector.broadcast %3 : vector<1x64xf32> to vector<56x64xf32>
    %121 = arith.addf %119, %120 : vector<56x64xf32>
    %cst_60 = arith.constant 0.000000e+00 : f32
    %122 = vector.broadcast %cst_60 : f32 to vector<56x64xf32>
    %123 = arith.maximumf %121, %122 : vector<56x64xf32>
    %124 = arith.truncf %123 : vector<56x64xf32> to vector<56x64xbf16>
    %125 = vector.extract_strided_slice %124 {offsets = [0, 0], sizes = [8, 64], strides = [1, 1]} : vector<56x64xbf16> to vector<8x64xbf16>
    %c0_61 = arith.constant 0 : index
    %c1792 = arith.constant 1792 : index
    %126 = vector.load %arg11[%c0_61, %c1792] : memref<8x3136xbf16, #tpu.memory_space<vmem>>, vector<8x64xbf16>
    tpu.vector_store %arg11[%c0_61, %c1792], %125 {strides = array<i32>} : memref<8x3136xbf16, #tpu.memory_space<vmem>>, vector<8x64xbf16>,
    %127 = vector.extract_strided_slice %124 {offsets = [8, 0], sizes = [8, 64], strides = [1, 1]} : vector<56x64xbf16> to vector<8x64xbf16>
    %c0_62 = arith.constant 0 : index
    %c1856 = arith.constant 1856 : index
    %128 = vector.load %arg11[%c0_62, %c1856] : memref<8x3136xbf16, #tpu.memory_space<vmem>>, vector<8x64xbf16>
    tpu.vector_store %arg11[%c0_62, %c1856], %127 {strides = array<i32>} : memref<8x3136xbf16, #tpu.memory_space<vmem>>, vector<8x64xbf16>,
    %129 = vector.extract_strided_slice %124 {offsets = [16, 0], sizes = [8, 64], strides = [1, 1]} : vector<56x64xbf16> to vector<8x64xbf16>
    %c0_63 = arith.constant 0 : index
    %c1920 = arith.constant 1920 : index
    %130 = vector.load %arg11[%c0_63, %c1920] : memref<8x3136xbf16, #tpu.memory_space<vmem>>, vector<8x64xbf16>
    tpu.vector_store %arg11[%c0_63, %c1920], %129 {strides = array<i32>} : memref<8x3136xbf16, #tpu.memory_space<vmem>>, vector<8x64xbf16>,
    %131 = vector.extract_strided_slice %124 {offsets = [24, 0], sizes = [8, 64], strides = [1, 1]} : vector<56x64xbf16> to vector<8x64xbf16>
    %c0_64 = arith.constant 0 : index
    %c1984 = arith.constant 1984 : index
    %132 = vector.load %arg11[%c0_64, %c1984] : memref<8x3136xbf16, #tpu.memory_space<vmem>>, vector<8x64xbf16>
    tpu.vector_store %arg11[%c0_64, %c1984], %131 {strides = array<i32>} : memref<8x3136xbf16, #tpu.memory_space<vmem>>, vector<8x64xbf16>,
    %133 = vector.extract_strided_slice %124 {offsets = [32, 0], sizes = [8, 64], strides = [1, 1]} : vector<56x64xbf16> to vector<8x64xbf16>
    %c0_65 = arith.constant 0 : index
    %c2048 = arith.constant 2048 : index
    %134 = vector.load %arg11[%c0_65, %c2048] : memref<8x3136xbf16, #tpu.memory_space<vmem>>, vector<8x64xbf16>
    tpu.vector_store %arg11[%c0_65, %c2048], %133 {strides = array<i32>} : memref<8x3136xbf16, #tpu.memory_space<vmem>>, vector<8x64xbf16>,
    %135 = vector.extract_strided_slice %124 {offsets = [40, 0], sizes = [8, 64], strides = [1, 1]} : vector<56x64xbf16> to vector<8x64xbf16>
    %c0_66 = arith.constant 0 : index
    %c2112 = arith.constant 2112 : index
    %136 = vector.load %arg11[%c0_66, %c2112] : memref<8x3136xbf16, #tpu.memory_space<vmem>>, vector<8x64xbf16>
    tpu.vector_store %arg11[%c0_66, %c2112], %135 {strides = array<i32>} : memref<8x3136xbf16, #tpu.memory_space<vmem>>, vector<8x64xbf16>,
    %137 = vector.extract_strided_slice %124 {offsets = [48, 0], sizes = [8, 64], strides = [1, 1]} : vector<56x64xbf16> to vector<8x64xbf16>
    %c0_67 = arith.constant 0 : index
    %c2176 = arith.constant 2176 : index
    %138 = vector.load %arg11[%c0_67, %c2176] : memref<8x3136xbf16, #tpu.memory_space<vmem>>, vector<8x64xbf16>
    tpu.vector_store %arg11[%c0_67, %c2176], %137 {strides = array<i32>} : memref<8x3136xbf16, #tpu.memory_space<vmem>>, vector<8x64xbf16>,
    %c280 = arith.constant 280 : index
    %c0_68 = arith.constant 0 : index
    %139 = vector.load %arg1[%c280, %c0_68] : memref<392x9xbf16, #tpu.memory_space<vmem>>, vector<56x9xbf16>
    %cst_69 = arith.constant dense<0.000000e+00> : vector<56x128xf32>
    %140 = tpu.matmul %139, %0, %cst_69 {dimension_numbers = #tpu.dot_dimension_numbers<[1], [0], [0], [1], [0, 0, 1, 1], [], []>} : vector<56x9xbf16>, vector<9x128xbf16>, vector<56x128xf32> -> vector<56x128xf32>
    %141 = vector.broadcast %1 : vector<1x128xf32> to vector<56x128xf32>
    %142 = arith.addf %140, %141 : vector<56x128xf32>
    %cst_70 = arith.constant 0.000000e+00 : f32
    %143 = vector.broadcast %cst_70 : f32 to vector<56x128xf32>
    %144 = arith.maximumf %142, %143 : vector<56x128xf32>
    %145 = arith.truncf %144 : vector<56x128xf32> to vector<56x128xbf16>
    %cst_71 = arith.constant dense<0.000000e+00> : vector<56x64xf32>
    %146 = tpu.matmul %145, %2, %cst_71 {dimension_numbers = #tpu.dot_dimension_numbers<[1], [0], [0], [1], [0, 0, 1, 1], [], []>} : vector<56x128xbf16>, vector<128x64xbf16>, vector<56x64xf32> -> vector<56x64xf32>
    %147 = vector.broadcast %3 : vector<1x64xf32> to vector<56x64xf32>
    %148 = arith.addf %146, %147 : vector<56x64xf32>
    %cst_72 = arith.constant 0.000000e+00 : f32
    %149 = vector.broadcast %cst_72 : f32 to vector<56x64xf32>
    %150 = arith.maximumf %148, %149 : vector<56x64xf32>
    %151 = arith.truncf %150 : vector<56x64xf32> to vector<56x64xbf16>
    %152 = vector.extract_strided_slice %151 {offsets = [0, 0], sizes = [8, 64], strides = [1, 1]} : vector<56x64xbf16> to vector<8x64xbf16>
    %c0_73 = arith.constant 0 : index
    %c2240 = arith.constant 2240 : index
    %153 = vector.load %arg11[%c0_73, %c2240] : memref<8x3136xbf16, #tpu.memory_space<vmem>>, vector<8x64xbf16>
    tpu.vector_store %arg11[%c0_73, %c2240], %152 {strides = array<i32>} : memref<8x3136xbf16, #tpu.memory_space<vmem>>, vector<8x64xbf16>,
    %154 = vector.extract_strided_slice %151 {offsets = [8, 0], sizes = [8, 64], strides = [1, 1]} : vector<56x64xbf16> to vector<8x64xbf16>
    %c0_74 = arith.constant 0 : index
    %c2304 = arith.constant 2304 : index
    %155 = vector.load %arg11[%c0_74, %c2304] : memref<8x3136xbf16, #tpu.memory_space<vmem>>, vector<8x64xbf16>
    tpu.vector_store %arg11[%c0_74, %c2304], %154 {strides = array<i32>} : memref<8x3136xbf16, #tpu.memory_space<vmem>>, vector<8x64xbf16>,
    %156 = vector.extract_strided_slice %151 {offsets = [16, 0], sizes = [8, 64], strides = [1, 1]} : vector<56x64xbf16> to vector<8x64xbf16>
    %c0_75 = arith.constant 0 : index
    %c2368 = arith.constant 2368 : index
    %157 = vector.load %arg11[%c0_75, %c2368] : memref<8x3136xbf16, #tpu.memory_space<vmem>>, vector<8x64xbf16>
    tpu.vector_store %arg11[%c0_75, %c2368], %156 {strides = array<i32>} : memref<8x3136xbf16, #tpu.memory_space<vmem>>, vector<8x64xbf16>,
    %158 = vector.extract_strided_slice %151 {offsets = [24, 0], sizes = [8, 64], strides = [1, 1]} : vector<56x64xbf16> to vector<8x64xbf16>
    %c0_76 = arith.constant 0 : index
    %c2432 = arith.constant 2432 : index
    %159 = vector.load %arg11[%c0_76, %c2432] : memref<8x3136xbf16, #tpu.memory_space<vmem>>, vector<8x64xbf16>
    tpu.vector_store %arg11[%c0_76, %c2432], %158 {strides = array<i32>} : memref<8x3136xbf16, #tpu.memory_space<vmem>>, vector<8x64xbf16>,
    %160 = vector.extract_strided_slice %151 {offsets = [32, 0], sizes = [8, 64], strides = [1, 1]} : vector<56x64xbf16> to vector<8x64xbf16>
    %c0_77 = arith.constant 0 : index
    %c2496 = arith.constant 2496 : index
    %161 = vector.load %arg11[%c0_77, %c2496] : memref<8x3136xbf16, #tpu.memory_space<vmem>>, vector<8x64xbf16>
    tpu.vector_store %arg11[%c0_77, %c2496], %160 {strides = array<i32>} : memref<8x3136xbf16, #tpu.memory_space<vmem>>, vector<8x64xbf16>,
    %162 = vector.extract_strided_slice %151 {offsets = [40, 0], sizes = [8, 64], strides = [1, 1]} : vector<56x64xbf16> to vector<8x64xbf16>
    %c0_78 = arith.constant 0 : index
    %c2560 = arith.constant 2560 : index
    %163 = vector.load %arg11[%c0_78, %c2560] : memref<8x3136xbf16, #tpu.memory_space<vmem>>, vector<8x64xbf16>
    tpu.vector_store %arg11[%c0_78, %c2560], %162 {strides = array<i32>} : memref<8x3136xbf16, #tpu.memory_space<vmem>>, vector<8x64xbf16>,
    %164 = vector.extract_strided_slice %151 {offsets = [48, 0], sizes = [8, 64], strides = [1, 1]} : vector<56x64xbf16> to vector<8x64xbf16>
    %c0_79 = arith.constant 0 : index
    %c2624 = arith.constant 2624 : index
    %165 = vector.load %arg11[%c0_79, %c2624] : memref<8x3136xbf16, #tpu.memory_space<vmem>>, vector<8x64xbf16>
    tpu.vector_store %arg11[%c0_79, %c2624], %164 {strides = array<i32>} : memref<8x3136xbf16, #tpu.memory_space<vmem>>, vector<8x64xbf16>,
    %c336 = arith.constant 336 : index
    %c0_80 = arith.constant 0 : index
    %166 = vector.load %arg1[%c336, %c0_80] : memref<392x9xbf16, #tpu.memory_space<vmem>>, vector<56x9xbf16>
    %cst_81 = arith.constant dense<0.000000e+00> : vector<56x128xf32>
    %167 = tpu.matmul %166, %0, %cst_81 {dimension_numbers = #tpu.dot_dimension_numbers<[1], [0], [0], [1], [0, 0, 1, 1], [], []>} : vector<56x9xbf16>, vector<9x128xbf16>, vector<56x128xf32> -> vector<56x128xf32>
    %168 = vector.broadcast %1 : vector<1x128xf32> to vector<56x128xf32>
    %169 = arith.addf %167, %168 : vector<56x128xf32>
    %cst_82 = arith.constant 0.000000e+00 : f32
    %170 = vector.broadcast %cst_82 : f32 to vector<56x128xf32>
    %171 = arith.maximumf %169, %170 : vector<56x128xf32>
    %172 = arith.truncf %171 : vector<56x128xf32> to vector<56x128xbf16>
    %cst_83 = arith.constant dense<0.000000e+00> : vector<56x64xf32>
    %173 = tpu.matmul %172, %2, %cst_83 {dimension_numbers = #tpu.dot_dimension_numbers<[1], [0], [0], [1], [0, 0, 1, 1], [], []>} : vector<56x128xbf16>, vector<128x64xbf16>, vector<56x64xf32> -> vector<56x64xf32>
    %174 = vector.broadcast %3 : vector<1x64xf32> to vector<56x64xf32>
    %175 = arith.addf %173, %174 : vector<56x64xf32>
    %cst_84 = arith.constant 0.000000e+00 : f32
    %176 = vector.broadcast %cst_84 : f32 to vector<56x64xf32>
    %177 = arith.maximumf %175, %176 : vector<56x64xf32>
    %178 = arith.truncf %177 : vector<56x64xf32> to vector<56x64xbf16>
    %179 = vector.extract_strided_slice %178 {offsets = [0, 0], sizes = [8, 64], strides = [1, 1]} : vector<56x64xbf16> to vector<8x64xbf16>
    %c0_85 = arith.constant 0 : index
    %c2688 = arith.constant 2688 : index
    %180 = vector.load %arg11[%c0_85, %c2688] : memref<8x3136xbf16, #tpu.memory_space<vmem>>, vector<8x64xbf16>
    tpu.vector_store %arg11[%c0_85, %c2688], %179 {strides = array<i32>} : memref<8x3136xbf16, #tpu.memory_space<vmem>>, vector<8x64xbf16>,
    %181 = vector.extract_strided_slice %178 {offsets = [8, 0], sizes = [8, 64], strides = [1, 1]} : vector<56x64xbf16> to vector<8x64xbf16>
    %c0_86 = arith.constant 0 : index
    %c2752 = arith.constant 2752 : index
    %182 = vector.load %arg11[%c0_86, %c2752] : memref<8x3136xbf16, #tpu.memory_space<vmem>>, vector<8x64xbf16>
    tpu.vector_store %arg11[%c0_86, %c2752], %181 {strides = array<i32>} : memref<8x3136xbf16, #tpu.memory_space<vmem>>, vector<8x64xbf16>,
    %183 = vector.extract_strided_slice %178 {offsets = [16, 0], sizes = [8, 64], strides = [1, 1]} : vector<56x64xbf16> to vector<8x64xbf16>
    %c0_87 = arith.constant 0 : index
    %c2816 = arith.constant 2816 : index
    %184 = vector.load %arg11[%c0_87, %c2816] : memref<8x3136xbf16, #tpu.memory_space<vmem>>, vector<8x64xbf16>
    tpu.vector_store %arg11[%c0_87, %c2816], %183 {strides = array<i32>} : memref<8x3136xbf16, #tpu.memory_space<vmem>>, vector<8x64xbf16>,
    %185 = vector.extract_strided_slice %178 {offsets = [24, 0], sizes = [8, 64], strides = [1, 1]} : vector<56x64xbf16> to vector<8x64xbf16>
    %c0_88 = arith.constant 0 : index
    %c2880 = arith.constant 2880 : index
    %186 = vector.load %arg11[%c0_88, %c2880] : memref<8x3136xbf16, #tpu.memory_space<vmem>>, vector<8x64xbf16>
    tpu.vector_store %arg11[%c0_88, %c2880], %185 {strides = array<i32>} : memref<8x3136xbf16, #tpu.memory_space<vmem>>, vector<8x64xbf16>,
    %187 = vector.extract_strided_slice %178 {offsets = [32, 0], sizes = [8, 64], strides = [1, 1]} : vector<56x64xbf16> to vector<8x64xbf16>
    %c0_89 = arith.constant 0 : index
    %c2944 = arith.constant 2944 : index
    %188 = vector.load %arg11[%c0_89, %c2944] : memref<8x3136xbf16, #tpu.memory_space<vmem>>, vector<8x64xbf16>
    tpu.vector_store %arg11[%c0_89, %c2944], %187 {strides = array<i32>} : memref<8x3136xbf16, #tpu.memory_space<vmem>>, vector<8x64xbf16>,
    %189 = vector.extract_strided_slice %178 {offsets = [40, 0], sizes = [8, 64], strides = [1, 1]} : vector<56x64xbf16> to vector<8x64xbf16>
    %c0_90 = arith.constant 0 : index
    %c3008 = arith.constant 3008 : index
    %190 = vector.load %arg11[%c0_90, %c3008] : memref<8x3136xbf16, #tpu.memory_space<vmem>>, vector<8x64xbf16>
    tpu.vector_store %arg11[%c0_90, %c3008], %189 {strides = array<i32>} : memref<8x3136xbf16, #tpu.memory_space<vmem>>, vector<8x64xbf16>,
    %191 = vector.extract_strided_slice %178 {offsets = [48, 0], sizes = [8, 64], strides = [1, 1]} : vector<56x64xbf16> to vector<8x64xbf16>
    %c0_91 = arith.constant 0 : index
    %c3072 = arith.constant 3072 : index
    %192 = vector.load %arg11[%c0_91, %c3072] : memref<8x3136xbf16, #tpu.memory_space<vmem>>, vector<8x64xbf16>
    tpu.vector_store %arg11[%c0_91, %c3072], %191 {strides = array<i32>} : memref<8x3136xbf16, #tpu.memory_space<vmem>>, vector<8x64xbf16>,
    %c0_92 = arith.constant 0 : index
    %c0_93 = arith.constant 0 : index
    %193 = vector.load %arg11[%c0_92, %c0_93] : memref<8x3136xbf16, #tpu.memory_space<vmem>>, vector<8x3136xbf16>
    %c0_94 = arith.constant 0 : index
    %c0_95 = arith.constant 0 : index
    %194 = vector.load %arg6[%c0_94, %c0_95] : memref<3136x512xbf16, #tpu.memory_space<vmem>>, vector<3136x512xbf16>
    %cst_96 = arith.constant dense<0.000000e+00> : vector<8x512xf32>
    %195 = tpu.matmul %193, %194, %cst_96 {dimension_numbers = #tpu.dot_dimension_numbers<[1], [0], [0], [1], [0, 0, 1, 1], [], []>} : vector<8x3136xbf16>, vector<3136x512xbf16>, vector<8x512xf32> -> vector<8x512xf32>
    %c0_97 = arith.constant 0 : index
    %c0_98 = arith.constant 0 : index
    %196 = vector.load %arg7[%c0_97, %c0_98] : memref<1x512xf32, #tpu.memory_space<vmem>>, vector<1x512xf32>
    %197 = vector.broadcast %196 : vector<1x512xf32> to vector<8x512xf32>
    %198 = arith.addf %195, %197 : vector<8x512xf32>
    %cst_99 = arith.constant 0.000000e+00 : f32
    %199 = vector.broadcast %cst_99 : f32 to vector<8x512xf32>
    %200 = arith.maximumf %198, %199 : vector<8x512xf32>
    %201 = arith.truncf %200 : vector<8x512xf32> to vector<8x512xbf16>
    %c0_100 = arith.constant 0 : index
    %c0_101 = arith.constant 0 : index
    %202 = vector.load %arg8[%c0_100, %c0_101] : memref<512x128xbf16, #tpu.memory_space<vmem>>, vector<512x128xbf16>
    %cst_102 = arith.constant dense<0.000000e+00> : vector<8x128xf32>
    %203 = tpu.matmul %201, %202, %cst_102 {dimension_numbers = #tpu.dot_dimension_numbers<[1], [0], [0], [1], [0, 0, 1, 1], [], []>} : vector<8x512xbf16>, vector<512x128xbf16>, vector<8x128xf32> -> vector<8x128xf32>
    %c0_103 = arith.constant 0 : index
    %c0_104 = arith.constant 0 : index
    %204 = vector.load %arg9[%c0_103, %c0_104] : memref<1x128xf32, #tpu.memory_space<vmem>>, vector<1x128xf32>
    %205 = vector.broadcast %204 : vector<1x128xf32> to vector<8x128xf32>
    %206 = arith.addf %203, %205 : vector<8x128xf32>
    %c0_105 = arith.constant 0 : index
    %c0_106 = arith.constant 0 : index
    %207 = vector.load %arg10[%c0_105, %c0_106] : memref<8x128xf32, #tpu.memory_space<vmem>>, vector<8x128xf32>
    tpu.vector_store %arg10[%c0_105, %c0_106], %206 {strides = array<i32>} : memref<8x128xf32, #tpu.memory_space<vmem>>, vector<8x128xf32>,
    return
  }
  func.func @transform_0(%arg0: i32) -> (i32, i32) {
    %c0_i32 = arith.constant 0 : i32
    %c0_i32_0 = arith.constant 0 : i32
    return %arg0, %c0_i32 : i32, i32
  }
  func.func @transform_1(%arg0: i32) -> (i32, i32) {
    %c0_i32 = arith.constant 0 : i32
    %c0_i32_0 = arith.constant 0 : i32
    %c0_i32_1 = arith.constant 0 : i32
    return %c0_i32, %c0_i32_0 : i32, i32
  }
  func.func @transform_2(%arg0: i32) -> (i32, i32) {
    %c0_i32 = arith.constant 0 : i32
    %c0_i32_0 = arith.constant 0 : i32
    %c0_i32_1 = arith.constant 0 : i32
    return %c0_i32, %c0_i32_0 : i32, i32
  }
  func.func @transform_3(%arg0: i32) -> (i32, i32) {
    %c0_i32 = arith.constant 0 : i32
    %c0_i32_0 = arith.constant 0 : i32
    %c0_i32_1 = arith.constant 0 : i32
    return %c0_i32, %c0_i32_0 : i32, i32
  }
  func.func @transform_4(%arg0: i32) -> (i32, i32) {
    %c0_i32 = arith.constant 0 : i32
    %c0_i32_0 = arith.constant 0 : i32
    %c0_i32_1 = arith.constant 0 : i32
    return %c0_i32, %c0_i32_0 : i32, i32
  }
  func.func @transform_5(%arg0: i32) -> (i32, i32) {
    %c0_i32 = arith.constant 0 : i32
    %c0_i32_0 = arith.constant 0 : i32
    %c0_i32_1 = arith.constant 0 : i32
    return %c0_i32, %c0_i32_0 : i32, i32
  }
  func.func @transform_6(%arg0: i32) -> (i32, i32) {
    %c0_i32 = arith.constant 0 : i32
    %c0_i32_0 = arith.constant 0 : i32
    %c0_i32_1 = arith.constant 0 : i32
    return %c0_i32, %c0_i32_0 : i32, i32
  }
  func.func @transform_7(%arg0: i32) -> (i32, i32) {
    %c0_i32 = arith.constant 0 : i32
    %c0_i32_0 = arith.constant 0 : i32
    %c0_i32_1 = arith.constant 0 : i32
    return %c0_i32, %c0_i32_0 : i32, i32
  }
  func.func @transform_8(%arg0: i32) -> (i32, i32) {
    %c0_i32 = arith.constant 0 : i32
    %c0_i32_0 = arith.constant 0 : i32
    %c0_i32_1 = arith.constant 0 : i32
    return %c0_i32, %c0_i32_0 : i32, i32
  }
  func.func @transform_9(%arg0: i32) -> (i32, i32) {
    %c0_i32 = arith.constant 0 : i32
    %c0_i32_0 = arith.constant 0 : i32
    return %arg0, %c0_i32 : i32, i32
  }
}

</mosaic_0001>

<llo_original>
// kernel: squeeze.8
$region0: #{squeeze.8}
  %s0 = inlined_call_operand.vmem [shape: bf16[2,7,7], index: 0, kind: input, shape index: {}]
  %s1 = inlined_call_operand.vmem [shape: bf16[2,49,1], index: 1, kind: output, shape index: {}]
  $region1: #{squeeze.8} parent=0
    #allocation0 [shape = 'u8[4096]{0}', space=vmem, size = 0x1000, scoped, tag = 'scoped mem for output reshape']
    #allocation1 [shape = 'u8[8192]{0}', space=vmem, size = 0x2000, scoped, tag = 'scoped mem for input reshape']
    %s3 = smul.u32 4, 2
    %s4 = sshll.u32 1, %s3
    %s5 = ssub.s32 %s4, 1
    %s6 = scalar_lea.vmem %s0, 4
    %s7 = sshrl.u32 %s5, 1
    %s8 = sor.u32 %s5, %s7
    %s9 = sand.u32 %s8, 85
    %s10 = sshrl.u32 %s9, 1
    %s11 = sor.u32 %s9, %s10
    %s12 = sand.u32 51, %s11
    %s13 = sshrl.u32 %s12, 2
    %s14 = sor.u32 %s12, %s13
    %s15 = sand.u32 15, %s14
    %v16 = vld [vmem:[%s6] sm:%s15]
    %v17 = vunpack.c.l.bf16 %v16
    %v18 = vunpack.c.h.bf16 %v16
    %s19 = scalar_lea.vmem [#allocation1], 8
    %20 = vst [vmem:[%s19] sm:%s5] %v17
    %s21 = sshrl.u32 %s5, 1
    %s22 = sor.u32 %s5, %s21
    %s23 = sand.u32 %s22, 85
    %s24 = sshrl.u32 %s23, 1
    %s25 = sor.u32 %s23, %s24
    %s26 = sand.u32 51, %s25
    %s27 = sshrl.u32 %s26, 2
    %s28 = sor.u32 %s26, %s27
    %s29 = sand.u32 15, %s28
    %v30 = vld [vmem:[%s0] sm:%s29]
    %v31 = vunpack.c.l.bf16 %v30
    %v32 = vunpack.c.h.bf16 %v30
    %33 = vst [vmem:[#allocation1] sm:%s5] %v31
    %s34 = smov 3
    %v35 = vld [vmem:[#allocation1] ss:$8 sm:%s34]
    %vm36 = vcmask 56320
    %37 = vst.msk [vmem:[#allocation0] sm:$0x3] %vm36, %v35
    %s38 = scalar_lea.vmem [#allocation1], 6
    %s39 = smov 3
    %v40 = vld [vmem:[%s38] ss:$8 sm:%s39]
    %41 = vrot.lane.b32.xlu0 %v40, 42
    %v42 = vpop.permute.xlu0 %41
    %vm43 = vcmask 400720
    %44 = vst.msk [vmem:[#allocation0] sm:$0x3] %vm43, %v42
    %s45 = scalar_lea.vmem [#allocation1], 5
    %s46 = smov 3
    %v47 = vld [vmem:[%s45] ss:$8 sm:%s46]
    %48 = vrot.lane.b32.xlu0 %v47, 35
    %v49 = vpop.permute.xlu0 %48
    %vm50 = vcmask 343320
    %51 = vst.msk [vmem:[#allocation0] sm:$0x3] %vm50, %v49
    %s52 = scalar_lea.vmem [#allocation1], 4
    %s53 = smov 3
    %v54 = vld [vmem:[%s52] ss:$8 sm:%s53]
    %55 = vrot.lane.b32.xlu0 %v54, 28
    %v56 = vpop.permute.xlu0 %55
    %vm57 = vcmask 285920
    %58 = vst.msk [vmem:[#allocation0] sm:$0x3] %vm57, %v56
    %s59 = scalar_lea.vmem [#allocation1], 3
    %s60 = smov 3
    %v61 = vld [vmem:[%s59] ss:$8 sm:%s60]
    %62 = vrot.lane.b32.xlu0 %v61, 21
    %v63 = vpop.permute.xlu0 %62
    %vm64 = vcmask 228520
    %65 = vst.msk [vmem:[#allocation0] sm:$0x3] %vm64, %v63
    %s66 = scalar_lea.vmem [#allocation1], 2
    %s67 = smov 3
    %v68 = vld [vmem:[%s66] ss:$8 sm:%s67]
    %69 = vrot.lane.b32.xlu0 %v68, 14
    %v70 = vpop.permute.xlu0 %69
    %vm71 = vcmask 171120
    %72 = vst.msk [vmem:[#allocation0] sm:$0x3] %vm71, %v70
    %s73 = scalar_lea.vmem [#allocation1], 1
    %s74 = smov 3
    %v75 = vld [vmem:[%s73] ss:$8 sm:%s74]
    %76 = vrot.lane.b32.xlu0 %v75, 7
    %v77 = vpop.permute.xlu0 %76
    %vm78 = vcmask 113720
    %79 = vst.msk [vmem:[#allocation0] sm:$0x3] %vm78, %v77
    %s81 = smul.u32 1, 2
    %s82 = sshll.u32 1, %s81
    %s83 = ssub.s32 %s82, 1
    %s84 = sshrl.u32 %s81, 1
    %v85 = vld [vmem:[#allocation0] sm:%s83]
    %v86 = vpack.c.bf16 0.0, %v85
    %s87 = sshll.u32 1, %s84
    %s88 = ssub.s32 %s87, 1
    %89 = vst [vmem:[%s1] sm:%s88] %v86

// kernel: dqn_forward_pallas.1
$region0: #{dqn_forward_pallas.1}
  #allocation0 [shape = 'u32[]', space=smem, size = 0x4, offset = 0x4, fixed_abs, tag = 'smem constant byte address 0x4 - core index']
  #allocation1 [shape = 'u32[144,128]{1,0:T(1,128)}', space=vmem, size = 0x12000, scoped, tag = 'internal scratch']
  #allocation2 [shape = 'bf16[8,3136]{1,0:T(8,128)(2,1)}', space=vmem, size = 0xc800, scoped, tag = 'scratch operand']
  %s0 = inlined_call_operand.vmem [shape: bf16[392,9], index: 0, kind: input, shape index: {}]
  %s1 = inlined_call_operand.hbm [shape: bf16[9,128], index: 1, kind: input, shape index: {}]
  %s2 = inlined_call_operand.hbm [shape: f32[1,128], index: 2, kind: input, shape index: {}]
  %s3 = inlined_call_operand.vmem [shape: bf16[128,64], index: 3, kind: input, shape index: {}]
  %s4 = inlined_call_operand.hbm [shape: f32[1,64], index: 4, kind: input, shape index: {}]
  %s5 = inlined_call_operand.hbm [shape: bf16[3136,512], index: 5, kind: input, shape index: {}]
  %s6 = inlined_call_operand.hbm [shape: f32[1,512], index: 6, kind: input, shape index: {}]
  %s7 = inlined_call_operand.hbm [shape: bf16[512,128], index: 7, kind: input, shape index: {}]
  %s8 = inlined_call_operand.hbm [shape: f32[1,128], index: 8, kind: input, shape index: {}]
  %s9 = inlined_call_operand.vmem [shape: f32[8,128], index: 9, kind: output, shape index: {}]
  %s10 = sld [smem:[#allocation0]]
  $region74: #{dqn_forward_pallas.1} parent=0
    _
  %s12 = ssub.s32 1, %s10
  %s13 = scalar_select 0, %s12, %s10
  $region1: #{dqn_forward_pallas.1} parent=0
    #allocation3 [shape = 'u8[4096]{0}', space=vmem, size = 0x1000, scoped, tag = 'input window, operand 1, single buffered']
    #allocation4 [shape = 's32[1]{0}', space=sflag, size = 0x4, scoped, tag = 'scoped memory for dqn_forward_pallas.1']
    #allocation5 [shape = 'u8[512]{0}', space=vmem, size = 0x400, scoped, tag = 'input window, operand 2, single buffered']
    #allocation6 [shape = 's32[1]{0}', space=sflag, size = 0x4, scoped, tag = 'scoped memory for dqn_forward_pallas.1']
    #allocation7 [shape = 'u8[512]{0}', space=vmem, size = 0x400, scoped, tag = 'input window, operand 4, single buffered']
    #allocation8 [shape = 'u8[3211264]{0}', space=vmem, size = 0x310000, scoped, tag = 'input window, operand 5, single buffered']
    #allocation9 [shape = 's32[1]{0}', space=sflag, size = 0x4, scoped, tag = 'scoped memory for dqn_forward_pallas.1']
    #allocation10 [shape = 'u8[2048]{0}', space=vmem, size = 0x800, scoped, tag = 'input window, operand 6, single buffered']
    #allocation11 [shape = 'u8[131072]{0}', space=vmem, size = 0x20000, scoped, tag = 'input window, operand 7, single buffered']
    #allocation12 [shape = 's32[1]{0}', space=sflag, size = 0x4, scoped, tag = 'scoped memory for dqn_forward_pallas.1']
    #allocation13 [shape = 'u8[512]{0}', space=vmem, size = 0x400, scoped, tag = 'input window, operand 8, single buffered']
    %14 = vsyncpa [#allocation4], 0
    %15 = vsyncpa [#allocation6], 0
    %16 = vsyncpa [#allocation9], 0
    %17 = vsyncpa [#allocation12], 0
    // Predicated region
    $region2: #{dqn_forward_pallas.1} parent=1 // pred_check
      _
    $region3: #{dqn_forward_pallas.1} parent=1 // pred_check_branch
      %19 = sbr.rel (0) target = $region5
    $region4: #{dqn_forward_pallas.1} parent=1 // pred_region
      _
    $region5: #{dqn_forward_pallas.1} parent=1 // pred_fallthru
      _
    // Predicated region
    $region6: #{dqn_forward_pallas.1} parent=1 // pred_check
      _
    $region7: #{dqn_forward_pallas.1} parent=1 // pred_check_branch
      %21 = sbr.rel (0) target = $region9
    $region8: #{dqn_forward_pallas.1} parent=1 // pred_region
      %s23 = ssub.s32 128, 128
      %24 = vsyncadd [#allocation4], %s23
      %s25 = sshll.u32 [#allocation3], 4
      %s26 = int_to_ptr.vmem [resolvable:$true] %s25
      %31 = dma.hbm_to_vmem [thread:$0]  %s1, 128, %s26, [#allocation4], 64, 64, 4
    $region9: #{dqn_forward_pallas.1} parent=1 // pred_fallthru
      _
    // Predicated region
    $region10: #{dqn_forward_pallas.1} parent=1 // pred_check
      _
    $region11: #{dqn_forward_pallas.1} parent=1 // pred_check_branch
      %33 = sbr.rel (0) target = $region13
    $region12: #{dqn_forward_pallas.1} parent=1 // pred_region
      %s35 = ssub.s32 16, 16
      %36 = vsyncadd [#allocation6], %s35
      %s38 = sshll.u32 [#allocation5], 4
      %s39 = int_to_ptr.vmem [resolvable:$true] %s38
      %41 = dma.hbm_to_vmem [thread:$0]  %s2, 16, %s39, [#allocation6]
    $region13: #{dqn_forward_pallas.1} parent=1 // pred_fallthru
      _
    // Predicated region
    $region14: #{dqn_forward_pallas.1} parent=1 // pred_check
      _
    $region15: #{dqn_forward_pallas.1} parent=1 // pred_check_branch
      %43 = sbr.rel (0) target = $region17
    $region16: #{dqn_forward_pallas.1} parent=1 // pred_region
      _
    $region17: #{dqn_forward_pallas.1} parent=1 // pred_fallthru
      _
    // Predicated region
    $region18: #{dqn_forward_pallas.1} parent=1 // pred_check
      _
    $region19: #{dqn_forward_pallas.1} parent=1 // pred_check_branch
      %45 = sbr.rel (0) target = $region21
    $region20: #{dqn_forward_pallas.1} parent=1 // pred_region
      %s47 = ssub.s32 16, 16
      %48 = vsyncadd [#allocation6], %s47
      %s50 = sshll.u32 [#allocation7], 4
      %s51 = int_to_ptr.vmem [resolvable:$true] %s50
      %53 = dma.hbm_to_vmem [thread:$0]  %s4, 16, %s51, [#allocation6]
    $region21: #{dqn_forward_pallas.1} parent=1 // pred_fallthru
      _
    // Predicated region
    $region22: #{dqn_forward_pallas.1} parent=1 // pred_check
      _
    $region23: #{dqn_forward_pallas.1} parent=1 // pred_check_branch
      %55 = sbr.rel (0) target = $region25
    $region24: #{dqn_forward_pallas.1} parent=1 // pred_region
      %s57 = ssub.s32 100352, 100352
      %58 = vsyncadd [#allocation9], %s57
      %s59 = sshll.u32 [#allocation8], 4
      %s60 = int_to_ptr.vmem [resolvable:$true] %s59
      %65 = dma.hbm_to_vmem [thread:$0]  %s5, 100352, %s60, [#allocation9], 256, 256, 16
    $region25: #{dqn_forward_pallas.1} parent=1 // pred_fallthru
      _
    // Predicated region
    $region26: #{dqn_forward_pallas.1} parent=1 // pred_check
      _
    $region27: #{dqn_forward_pallas.1} parent=1 // pred_check_branch
      %67 = sbr.rel (0) target = $region29
    $region28: #{dqn_forward_pallas.1} parent=1 // pred_region
      %s69 = ssub.s32 64, 64
      %70 = vsyncadd [#allocation9], %s69
      %s72 = sshll.u32 [#allocation10], 4
      %s73 = int_to_ptr.vmem [resolvable:$true] %s72
      %75 = dma.hbm_to_vmem [thread:$0]  %s6, 64, %s73, [#allocation9]
    $region29: #{dqn_forward_pallas.1} parent=1 // pred_fallthru
      _
    // Predicated region
    $region30: #{dqn_forward_pallas.1} parent=1 // pred_check
      _
    $region31: #{dqn_forward_pallas.1} parent=1 // pred_check_branch
      %77 = sbr.rel (0) target = $region33
    $region32: #{dqn_forward_pallas.1} parent=1 // pred_region
      %s79 = ssub.s32 4096, 4096
      %80 = vsyncadd [#allocation12], %s79
      %s81 = sshll.u32 [#allocation11], 4
      %s82 = int_to_ptr.vmem [resolvable:$true] %s81
      %87 = dma.hbm_to_vmem [thread:$0]  %s7, 4096, %s82, [#allocation12], 64, 64, 4
    $region33: #{dqn_forward_pallas.1} parent=1 // pred_fallthru
      _
    // Predicated region
    $region34: #{dqn_forward_pallas.1} parent=1 // pred_check
      _
    $region35: #{dqn_forward_pallas.1} parent=1 // pred_check_branch
      %89 = sbr.rel (0) target = $region37
    $region36: #{dqn_forward_pallas.1} parent=1 // pred_region
      %s91 = ssub.s32 16, 16
      %92 = vsyncadd [#allocation12], %s91
      %s94 = sshll.u32 [#allocation13], 4
      %s95 = int_to_ptr.vmem [resolvable:$true] %s94
      %97 = dma.hbm_to_vmem [thread:$0]  %s8, 16, %s95, [#allocation12]
    $region37: #{dqn_forward_pallas.1} parent=1 // pred_fallthru
      _
    // Predicated region
    $region38: #{dqn_forward_pallas.1} parent=1 // pred_check
      _
    $region39: #{dqn_forward_pallas.1} parent=1 // pred_check_branch
      %99 = sbr.rel (0) target = $region41
    $region40: #{dqn_forward_pallas.1} parent=1 // pred_region
      %100 = dma.done [#allocation4], 128
    $region41: #{dqn_forward_pallas.1} parent=1 // pred_fallthru
      _
    // Predicated region
    $region42: #{dqn_forward_pallas.1} parent=1 // pred_check
      _
    $region43: #{dqn_forward_pallas.1} parent=1 // pred_check_branch
      %102 = sbr.rel (0) target = $region45
    $region44: #{dqn_forward_pallas.1} parent=1 // pred_region
      %103 = dma.done [#allocation6], 16
    $region45: #{dqn_forward_pallas.1} parent=1 // pred_fallthru
      _
    // Predicated region
    $region46: #{dqn_forward_pallas.1} parent=1 // pred_check
      _
    $region47: #{dqn_forward_pallas.1} parent=1 // pred_check_branch
      %105 = sbr.rel (0) target = $region49
    $region48: #{dqn_forward_pallas.1} parent=1 // pred_region
      %106 = dma.done [#allocation6], 16
    $region49: #{dqn_forward_pallas.1} parent=1 // pred_fallthru
      _
    // Predicated region
    $region50: #{dqn_forward_pallas.1} parent=1 // pred_check
      _
    $region51: #{dqn_forward_pallas.1} parent=1 // pred_check_branch
      %108 = sbr.rel (0) target = $region53
    $region52: #{dqn_forward_pallas.1} parent=1 // pred_region
      %109 = dma.done [#allocation9], 100352
    $region53: #{dqn_forward_pallas.1} parent=1 // pred_fallthru
      _
    // Predicated region
    $region54: #{dqn_forward_pallas.1} parent=1 // pred_check
      _
    $region55: #{dqn_forward_pallas.1} parent=1 // pred_check_branch
      %111 = sbr.rel (0) target = $region57
    $region56: #{dqn_forward_pallas.1} parent=1 // pred_region
      %112 = dma.done [#allocation9], 64
    $region57: #{dqn_forward_pallas.1} parent=1 // pred_fallthru
      _
    // Predicated region
    $region58: #{dqn_forward_pallas.1} parent=1 // pred_check
      _
    $region59: #{dqn_forward_pallas.1} parent=1 // pred_check_branch
      %114 = sbr.rel (0) target = $region61
    $region60: #{dqn_forward_pallas.1} parent=1 // pred_region
      %115 = dma.done [#allocation12], 4096
    $region61: #{dqn_forward_pallas.1} parent=1 // pred_fallthru
      _
    // Predicated region
    $region62: #{dqn_forward_pallas.1} parent=1 // pred_check
      _
    $region63: #{dqn_forward_pallas.1} parent=1 // pred_check_branch
      %117 = sbr.rel (0) target = $region65
    $region64: #{dqn_forward_pallas.1} parent=1 // pred_region
      %118 = dma.done [#allocation12], 16
    $region65: #{dqn_forward_pallas.1} parent=1 // pred_fallthru
      _
    %v120 = vld [vmem:[#allocation3] sm:$0xf]
    %v121 = vld [vmem:[#allocation3 + $0x4] sm:$0x1]
    %v122 = vld [vmem:[#allocation5] sm:$0x1]
    %v123 = vld [vmem:[%s3] sm:$0xf]
    %v124 = vld [vmem:[%s3 + $0x4] sm:$0xf]
    %v125 = vld [vmem:[%s3 + $0x8] sm:$0xf]
    %v126 = vld [vmem:[%s3 + $0xc] sm:$0xf]
    %v127 = vld [vmem:[%s3 + $0x10] sm:$0xf]
    %v128 = vld [vmem:[%s3 + $0x14] sm:$0xf]
    %v129 = vld [vmem:[%s3 + $0x18] sm:$0xf]
    %v130 = vld [vmem:[%s3 + $0x1c] sm:$0xf]
    %v131 = vld [vmem:[%s3 + $0x20] sm:$0xf]
    %v132 = vld [vmem:[%s3 + $0x24] sm:$0xf]
    %v133 = vld [vmem:[%s3 + $0x28] sm:$0xf]
    %v134 = vld [vmem:[%s3 + $0x2c] sm:$0xf]
    %v135 = vld [vmem:[%s3 + $0x30] sm:$0xf]
    %v136 = vld [vmem:[%s3 + $0x34] sm:$0xf]
    %v137 = vld [vmem:[%s3 + $0x38] sm:$0xf]
    %v138 = vld [vmem:[%s3 + $0x3c] sm:$0xf]
    %v139 = vld [vmem:[#allocation7] sm:$0x1]
    %v140 = vld [vmem:[%s0] sm:$0xf]
    %v141 = vld [vmem:[%s0 + $0x4] sm:$0xf]
    %v142 = vld [vmem:[%s0 + $0x8] sm:$0xf]
    %v143 = vld [vmem:[%s0 + $0xc] sm:$0xf]
    %v144 = vld [vmem:[%s0 + $0x10] sm:$0xf]
    %v145 = vld [vmem:[%s0 + $0x14] sm:$0xf]
    %v146 = vld [vmem:[%s0 + $0x18] sm:$0xf]
    %v148 = vlaneseq
    %v149 = vshrl.u32 %v148, 7
    %v150 = vsub.s32 0, %v149
    %v151 = vrot.slane %v122, %v150
    %v160 = vunpack.c.l.b16 %v140
    %v161 = vunpack.c.l.b16 %v141
    %v162 = vunpack.c.l.b16 %v142
    %v163 = vunpack.c.l.b16 %v143
    %v164 = vunpack.c.l.b16 %v144
    %v165 = vunpack.c.l.b16 %v145
    %v166 = vunpack.c.l.b16 %v146
    %v167 = vpack.c.b16 %v161, %v160
    %v168 = vpack.c.b16 %v163, %v162
    %v169 = vpack.c.b16 %v165, %v164
    %v170 = vpack.c.b16 %v166, %v166
    %v173 = vunpack.c.l.b16 %v120
    %v174 = vunpack.c.l.b16 %v121
    %v175 = vpack.c.b16 %v174, %v173
    %vm176 = vcmask 72704
    %v178 = vsel %vm176, %v167, 0
    %v181 = vsel %vm176, %v168, 0
    %v184 = vsel %vm176, %v169, 0
    %v187 = vsel %vm176, %v170, 0
    %vm189 = vcmask 1043456
    %vm190 = vcmask 1044480
    %v191 = vsel %vm189, 4294967295, 65535
    %v192 = vsel %vm190, %v191, 0
    %v194 = vand.u32 %v175, %v192
    %196 = vmatprep.subr.bf16.mxu0 0
    %197 = vmatpush1.bf16.msra.mxu0 0
    %198 = vmatprep.subr.bf16.mxu0 0
    %199 = vmatpush1.bf16.msra.mxu0 0
    %200 = vmatprep.subr.bf16.mxu0 0
    %201 = vmatpush1.bf16.msra.mxu0 0
    %202 = vmatprep.subr.bf16.mxu0 0
    %203 = vmatpush1.bf16.msra.mxu0 0
    %204 = vmatprep.subr.bf16.mxu0 0
    %205 = vmatpush1.bf16.msra.mxu0 0
    %206 = vmatprep.subr.bf16.mxu0 0
    %207 = vmatpush1.bf16.msra.mxu0 0
    %208 = vmatprep.subr.bf16.mxu0 0
    %209 = vmatpush1.bf16.msra.mxu0 0
    %210 = vmatprep.subr.bf16.mxu0 0
    %211 = vmatpush1.bf16.msra.mxu0 %v194
    %212 = vmatprep.subr.bf16.mxu0 0
    %213 = vmatpush2.bf16.msra.mxu0 0
    %214 = vmatprep.subr.bf16.mxu0 0
    %215 = vmatpush2.bf16.msra.mxu0 0
    %216 = vmatprep.subr.bf16.mxu0 0
    %217 = vmatpush2.bf16.msra.mxu0 0
    %218 = vmatprep.subr.bf16.mxu0 0
    %219 = vmatpush2.bf16.msra.mxu0 0
    %220 = vmatprep.subr.bf16.mxu0 0
    %221 = vmatpush2.bf16.msra.mxu0 0
    %222 = vmatprep.subr.bf16.mxu0 0
    %223 = vmatpush2.bf16.msra.mxu0 0
    %224 = vmatprep.subr.bf16.mxu0 0
    %225 = vmatpush2.bf16.msra.mxu0 0
    %226 = vmatprep.subr.bf16.mxu0 0
    %227 = vmatpush2.bf16.msra.mxu0 0
    %228 = vmatprep.mubr.bf16.mxu0 0
    %229 = vmatmul.mubr.bf16.gmra.mxu0 %v178
    %v230 = vpop.f32.mrf.mxu0
    %v231 = vadd.f32 %v151, %v230
    %v232 = vpop.f32.mrf.mxu0
    %v233 = vpop.f32.mrf.mxu0
    %v234 = vadd.f32 %v151, %v233
    %v235 = vpop.f32.mrf.mxu0
    %236 = vmatprep.mubr.bf16.mxu0 0
    %237 = vmatmul.mubr.bf16.gmra.mxu0 %v181
    %v238 = vpop.f32.mrf.mxu0
    %v239 = vadd.f32 %v151, %v238
    %v240 = vpop.f32.mrf.mxu0
    %v241 = vpop.f32.mrf.mxu0
    %v242 = vadd.f32 %v151, %v241
    %v243 = vpop.f32.mrf.mxu0
    %244 = vmatprep.mubr.bf16.mxu0 0
    %245 = vmatmul.mubr.bf16.gmra.mxu0 %v184
    %v246 = vpop.f32.mrf.mxu0
    %v247 = vadd.f32 %v151, %v246
    %v248 = vpop.f32.mrf.mxu0
    %v249 = vpop.f32.mrf.mxu0
    %v250 = vadd.f32 %v151, %v249
    %v251 = vpop.f32.mrf.mxu0
    %252 = vmatprep.mubr.bf16.mxu0 0
    %253 = vmatmul.mubr.bf16.gmra.mxu0 %v187
    %v254 = vpop.f32.mrf.mxu0
    %v255 = vadd.f32 %v151, %v254
    %v256 = vpop.f32.mrf.mxu0
    %v257 = vpop.f32.mrf.mxu0
    %v258 = vpop.f32.mrf.mxu0
    %259 = vdwg.mxu0
    %v260 = vmax.f32 %v231, 0.0
    %v261 = vmax.f32 %v234, 0.0
    %v262 = vmax.f32 %v239, 0.0
    %v263 = vmax.f32 %v242, 0.0
    %v264 = vmax.f32 %v247, 0.0
    %v265 = vmax.f32 %v250, 0.0
    %v266 = vmax.f32 %v255, 0.0
    %v267 = vpack.c.bf16 %v261, %v260
    %v268 = vpack.c.bf16 %v263, %v262
    %v269 = vpack.c.bf16 %v265, %v264
    %v270 = vpack.c.bf16 %v266, %v266
    %v272 = vlaneseq
    %v273 = vshrl.u32 %v272, 7
    %v274 = vsub.s32 0, %v273
    %v275 = vrot.slane %v139, %v274
    %v293 = vunpack.c.l.b16 %v123
    %v294 = vunpack.c.l.b16 %v124
    %v295 = vunpack.c.l.b16 %v125
    %v296 = vunpack.c.l.b16 %v126
    %v297 = vunpack.c.l.b16 %v127
    %v298 = vunpack.c.l.b16 %v128
    %v299 = vunpack.c.l.b16 %v129
    %v300 = vunpack.c.l.b16 %v130
    %v301 = vunpack.c.l.b16 %v131
    %v302 = vunpack.c.l.b16 %v132
    %v303 = vunpack.c.l.b16 %v133
    %v304 = vunpack.c.l.b16 %v134
    %v305 = vunpack.c.l.b16 %v135
    %v306 = vunpack.c.l.b16 %v136
    %v307 = vunpack.c.l.b16 %v137
    %v308 = vunpack.c.l.b16 %v138
    %v309 = vpack.c.b16 %v294, %v293
    %v310 = vpack.c.b16 %v296, %v295
    %v311 = vpack.c.b16 %v298, %v297
    %v312 = vpack.c.b16 %v300, %v299
    %v313 = vpack.c.b16 %v302, %v301
    %v314 = vpack.c.b16 %v304, %v303
    %v315 = vpack.c.b16 %v306, %v305
    %v316 = vpack.c.b16 %v308, %v307
    %325 = vmatprep.subr.bf16.mxu0 0
    %326 = vmatpush1.bf16.msra.mxu0 %v316
    %327 = vmatprep.subr.bf16.mxu0 0
    %328 = vmatpush1.bf16.msra.mxu0 %v315
    %329 = vmatprep.subr.bf16.mxu0 0
    %330 = vmatpush1.bf16.msra.mxu0 %v314
    %331 = vmatprep.subr.bf16.mxu0 0
    %332 = vmatpush1.bf16.msra.mxu0 %v313
    %333 = vmatprep.subr.bf16.mxu0 0
    %334 = vmatpush1.bf16.msra.mxu0 %v312
    %335 = vmatprep.subr.bf16.mxu0 0
    %336 = vmatpush1.bf16.msra.mxu0 %v311
    %337 = vmatprep.subr.bf16.mxu0 0
    %338 = vmatpush1.bf16.msra.mxu0 %v310
    %339 = vmatprep.subr.bf16.mxu0 0
    %340 = vmatpush1.bf16.msra.mxu0 %v309
    %341 = vmatprep.subr.bf16.mxu0 0
    %342 = vmatpush2.bf16.msra.mxu0 0
    %343 = vmatprep.subr.bf16.mxu0 0
    %344 = vmatpush2.bf16.msra.mxu0 0
    %345 = vmatprep.subr.bf16.mxu0 0
    %346 = vmatpush2.bf16.msra.mxu0 0
    %347 = vmatprep.subr.bf16.mxu0 0
    %348 = vmatpush2.bf16.msra.mxu0 0
    %349 = vmatprep.subr.bf16.mxu0 0
    %350 = vmatpush2.bf16.msra.mxu0 0
    %351 = vmatprep.subr.bf16.mxu0 0
    %352 = vmatpush2.bf16.msra.mxu0 0
    %353 = vmatprep.subr.bf16.mxu0 0
    %354 = vmatpush2.bf16.msra.mxu0 0
    %355 = vmatprep.subr.bf16.mxu0 0
    %356 = vmatpush2.bf16.msra.mxu0 0
    %357 = vmatprep.mubr.bf16.mxu0 0
    %358 = vmatmul.mubr.bf16.gmra.mxu0 %v267
    %v359 = vpop.f32.mrf.mxu0
    %v360 = vadd.f32 %v275, %v359
    %v361 = vpop.f32.mrf.mxu0
    %v362 = vpop.f32.mrf.mxu0
    %v363 = vadd.f32 %v275, %v362
    %v364 = vpop.f32.mrf.mxu0
    %365 = vmatprep.mubr.bf16.mxu0 0
    %366 = vmatmul.mubr.bf16.gmra.mxu0 %v268
    %v367 = vpop.f32.mrf.mxu0
    %v368 = vadd.f32 %v275, %v367
    %v369 = vpop.f32.mrf.mxu0
    %v370 = vpop.f32.mrf.mxu0
    %v371 = vadd.f32 %v275, %v370
    %v372 = vpop.f32.mrf.mxu0
    %373 = vmatprep.mubr.bf16.mxu0 0
    %374 = vmatmul.mubr.bf16.gmra.mxu0 %v269
    %v375 = vpop.f32.mrf.mxu0
    %v376 = vadd.f32 %v275, %v375
    %v377 = vpop.f32.mrf.mxu0
    %v378 = vpop.f32.mrf.mxu0
    %v379 = vadd.f32 %v275, %v378
    %v380 = vpop.f32.mrf.mxu0
    %381 = vmatprep.mubr.bf16.mxu0 0
    %382 = vmatmul.mubr.bf16.gmra.mxu0 %v270
    %v383 = vpop.f32.mrf.mxu0
    %v384 = vadd.f32 %v275, %v383
    %v385 = vpop.f32.mrf.mxu0
    %v386 = vpop.f32.mrf.mxu0
    %v387 = vpop.f32.mrf.mxu0
    %388 = vdwg.mxu0
    %v389 = vmax.f32 %v360, 0.0
    %v390 = vmax.f32 %v363, 0.0
    %v391 = vmax.f32 %v368, 0.0
    %v392 = vmax.f32 %v371, 0.0
    %v393 = vmax.f32 %v376, 0.0
    %v394 = vmax.f32 %v379, 0.0
    %v395 = vmax.f32 %v384, 0.0
    %v396 = vpack.c.bf16 %v390, %v389
    %v397 = vpack.c.bf16 %v392, %v391
    %v398 = vpack.c.bf16 %v394, %v393
    %v399 = vpack.c.bf16 %v395, %v395
    %vm400 = vcmask 519168
    %401 = vst.msk [vmem:[#allocation2] sm:$0xf] %vm400, %v396
    %v403 = vunpack.c.h.b16 %v396
    %v404 = vpack.c.b16 %v403, %v403
    %405 = vrot.lane.b32.xlu0 %v404, 64
    %v406 = vpop.permute.xlu0 %405
    %vm408 = vcmask 1043968
    %409 = vst.msk [vmem:[#allocation2] sm:$0xf] %vm408, %v406
    %410 = vst.msk [vmem:[#allocation2 + $0x4] sm:$0xf] %vm400, %v397
    %v412 = vunpack.c.h.b16 %v397
    %v413 = vpack.c.b16 %v412, %v412
    %414 = vrot.lane.b32.xlu0 %v413, 64
    %v415 = vpop.permute.xlu0 %414
    %417 = vst.msk [vmem:[#allocation2 + $0x4] sm:$0xf] %vm408, %v415
    %418 = vst.msk [vmem:[#allocation2 + $0x8] sm:$0xf] %vm400, %v398
    %v420 = vunpack.c.h.b16 %v398
    %v421 = vpack.c.b16 %v420, %v420
    %422 = vrot.lane.b32.xlu0 %v421, 64
    %v423 = vpop.permute.xlu0 %422
    %425 = vst.msk [vmem:[#allocation2 + $0x8] sm:$0xf] %vm408, %v423
    %426 = vst.msk [vmem:[#allocation2 + $0xc] sm:$0xf] %vm400, %v399
    %v427 = vld [vmem:[%s0 + $0x1c] sm:$0xf]
    %v428 = vld [vmem:[%s0 + $0x20] sm:$0xf]
    %v429 = vld [vmem:[%s0 + $0x24] sm:$0xf]
    %v430 = vld [vmem:[%s0 + $0x28] sm:$0xf]
    %v431 = vld [vmem:[%s0 + $0x2c] sm:$0xf]
    %v432 = vld [vmem:[%s0 + $0x30] sm:$0xf]
    %v433 = vld [vmem:[%s0 + $0x34] sm:$0xf]
    %v441 = vunpack.c.l.b16 %v427
    %v442 = vunpack.c.l.b16 %v428
    %v443 = vunpack.c.l.b16 %v429
    %v444 = vunpack.c.l.b16 %v430
    %v445 = vunpack.c.l.b16 %v431
    %v446 = vunpack.c.l.b16 %v432
    %v447 = vunpack.c.l.b16 %v433
    %v448 = vpack.c.b16 %v442, %v441
    %v449 = vpack.c.b16 %v444, %v443
    %v450 = vpack.c.b16 %v446, %v445
    %v451 = vpack.c.b16 %v447, %v447
    %v453 = vsel %vm176, %v448, 0
    %v456 = vsel %vm176, %v449, 0
    %v459 = vsel %vm176, %v450, 0
    %v462 = vsel %vm176, %v451, 0
    %464 = vmatprep.subr.bf16.mxu0 0
    %465 = vmatpush1.bf16.msra.mxu0 0
    %466 = vmatprep.subr.bf16.mxu0 0
    %467 = vmatpush1.bf16.msra.mxu0 0
    %468 = vmatprep.subr.bf16.mxu0 0
    %469 = vmatpush1.bf16.msra.mxu0 0
    %470 = vmatprep.subr.bf16.mxu0 0
    %471 = vmatpush1.bf16.msra.mxu0 0
    %472 = vmatprep.subr.bf16.mxu0 0
    %473 = vmatpush1.bf16.msra.mxu0 0
    %474 = vmatprep.subr.bf16.mxu0 0
    %475 = vmatpush1.bf16.msra.mxu0 0
    %476 = vmatprep.subr.bf16.mxu0 0
    %477 = vmatpush1.bf16.msra.mxu0 0
    %478 = vmatprep.subr.bf16.mxu0 0
    %479 = vmatpush1.bf16.msra.mxu0 %v194
    %480 = vmatprep.subr.bf16.mxu0 0
    %481 = vmatpush2.bf16.msra.mxu0 0
    %482 = vmatprep.subr.bf16.mxu0 0
    %483 = vmatpush2.bf16.msra.mxu0 0
    %484 = vmatprep.subr.bf16.mxu0 0
    %485 = vmatpush2.bf16.msra.mxu0 0
    %486 = vmatprep.subr.bf16.mxu0 0
    %487 = vmatpush2.bf16.msra.mxu0 0
    %488 = vmatprep.subr.bf16.mxu0 0
    %489 = vmatpush2.bf16.msra.mxu0 0
    %490 = vmatprep.subr.bf16.mxu0 0
    %491 = vmatpush2.bf16.msra.mxu0 0
    %492 = vmatprep.subr.bf16.mxu0 0
    %493 = vmatpush2.bf16.msra.mxu0 0
    %494 = vmatprep.subr.bf16.mxu0 0
    %495 = vmatpush2.bf16.msra.mxu0 0
    %496 = vmatprep.mubr.bf16.mxu0 0
    %497 = vmatmul.mubr.bf16.gmra.mxu0 %v453
    %v498 = vpop.f32.mrf.mxu0
    %v499 = vadd.f32 %v151, %v498
    %v500 = vpop.f32.mrf.mxu0
    %v501 = vpop.f32.mrf.mxu0
    %v502 = vadd.f32 %v151, %v501
    %v503 = vpop.f32.mrf.mxu0
    %504 = vmatprep.mubr.bf16.mxu0 0
    %505 = vmatmul.mubr.bf16.gmra.mxu0 %v456
    %v506 = vpop.f32.mrf.mxu0
    %v507 = vadd.f32 %v151, %v506
    %v508 = vpop.f32.mrf.mxu0
    %v509 = vpop.f32.mrf.mxu0
    %v510 = vadd.f32 %v151, %v509
    %v511 = vpop.f32.mrf.mxu0
    %512 = vmatprep.mubr.bf16.mxu0 0
    %513 = vmatmul.mubr.bf16.gmra.mxu0 %v459
    %v514 = vpop.f32.mrf.mxu0
    %v515 = vadd.f32 %v151, %v514
    %v516 = vpop.f32.mrf.mxu0
    %v517 = vpop.f32.mrf.mxu0
    %v518 = vadd.f32 %v151, %v517
    %v519 = vpop.f32.mrf.mxu0
    %520 = vmatprep.mubr.bf16.mxu0 0
    %521 = vmatmul.mubr.bf16.gmra.mxu0 %v462
    %v522 = vpop.f32.mrf.mxu0
    %v523 = vadd.f32 %v151, %v522
    %v524 = vpop.f32.mrf.mxu0
    %v525 = vpop.f32.mrf.mxu0
    %v526 = vpop.f32.mrf.mxu0
    %527 = vdwg.mxu0
    %v528 = vmax.f32 %v499, 0.0
    %v529 = vmax.f32 %v502, 0.0
    %v530 = vmax.f32 %v507, 0.0
    %v531 = vmax.f32 %v510, 0.0
    %v532 = vmax.f32 %v515, 0.0
    %v533 = vmax.f32 %v518, 0.0
    %v534 = vmax.f32 %v523, 0.0
    %v535 = vpack.c.bf16 %v529, %v528
    %v536 = vpack.c.bf16 %v531, %v530
    %v537 = vpack.c.bf16 %v533, %v532
    %v538 = vpack.c.bf16 %v534, %v534
    %539 = vmatprep.subr.bf16.mxu0 0
    %540 = vmatpush1.bf16.msra.mxu0 %v316
    %541 = vmatprep.subr.bf16.mxu0 0
    %542 = vmatpush1.bf16.msra.mxu0 %v315
    %543 = vmatprep.subr.bf16.mxu0 0
    %544 = vmatpush1.bf16.msra.mxu0 %v314
    %545 = vmatprep.subr.bf16.mxu0 0
    %546 = vmatpush1.bf16.msra.mxu0 %v313
    %547 = vmatprep.subr.bf16.mxu0 0
    %548 = vmatpush1.bf16.msra.mxu0 %v312
    %549 = vmatprep.subr.bf16.mxu0 0
    %550 = vmatpush1.bf16.msra.mxu0 %v311
    %551 = vmatprep.subr.bf16.mxu0 0
    %552 = vmatpush1.bf16.msra.mxu0 %v310
    %553 = vmatprep.subr.bf16.mxu0 0
    %554 = vmatpush1.bf16.msra.mxu0 %v309
    %555 = vmatprep.subr.bf16.mxu0 0
    %556 = vmatpush2.bf16.msra.mxu0 0
    %557 = vmatprep.subr.bf16.mxu0 0
    %558 = vmatpush2.bf16.msra.mxu0 0
    %559 = vmatprep.subr.bf16.mxu0 0
    %560 = vmatpush2.bf16.msra.mxu0 0
    %561 = vmatprep.subr.bf16.mxu0 0
    %562 = vmatpush2.bf16.msra.mxu0 0
    %563 = vmatprep.subr.bf16.mxu0 0
    %564 = vmatpush2.bf16.msra.mxu0 0
    %565 = vmatprep.subr.bf16.mxu0 0
    %566 = vmatpush2.bf16.msra.mxu0 0
    %567 = vmatprep.subr.bf16.mxu0 0
    %568 = vmatpush2.bf16.msra.mxu0 0
    %569 = vmatprep.subr.bf16.mxu0 0
    %570 = vmatpush2.bf16.msra.mxu0 0
    %571 = vmatprep.mubr.bf16.mxu0 0
    %572 = vmatmul.mubr.bf16.gmra.mxu0 %v535
    %v573 = vpop.f32.mrf.mxu0
    %v574 = vadd.f32 %v275, %v573
    %v575 = vpop.f32.mrf.mxu0
    %v576 = vpop.f32.mrf.mxu0
    %v577 = vadd.f32 %v275, %v576
    %v578 = vpop.f32.mrf.mxu0
    %579 = vmatprep.mubr.bf16.mxu0 0
    %580 = vmatmul.mubr.bf16.gmra.mxu0 %v536
    %v581 = vpop.f32.mrf.mxu0
    %v582 = vadd.f32 %v275, %v581
    %v583 = vpop.f32.mrf.mxu0
    %v584 = vpop.f32.mrf.mxu0
    %v585 = vadd.f32 %v275, %v584
    %v586 = vpop.f32.mrf.mxu0
    %587 = vmatprep.mubr.bf16.mxu0 0
    %588 = vmatmul.mubr.bf16.gmra.mxu0 %v537
    %v589 = vpop.f32.mrf.mxu0
    %v590 = vadd.f32 %v275, %v589
    %v591 = vpop.f32.mrf.mxu0
    %v592 = vpop.f32.mrf.mxu0
    %v593 = vadd.f32 %v275, %v592
    %v594 = vpop.f32.mrf.mxu0
    %595 = vmatprep.mubr.bf16.mxu0 0
    %596 = vmatmul.mubr.bf16.gmra.mxu0 %v538
    %v597 = vpop.f32.mrf.mxu0
    %v598 = vadd.f32 %v275, %v597
    %v599 = vpop.f32.mrf.mxu0
    %v600 = vpop.f32.mrf.mxu0
    %v601 = vpop.f32.mrf.mxu0
    %602 = vdwg.mxu0
    %v603 = vmax.f32 %v574, 0.0
    %v604 = vmax.f32 %v577, 0.0
    %v605 = vmax.f32 %v582, 0.0
    %v606 = vmax.f32 %v585, 0.0
    %v607 = vmax.f32 %v590, 0.0
    %v608 = vmax.f32 %v593, 0.0
    %v609 = vmax.f32 %v598, 0.0
    %v610 = vpack.c.bf16 %v604, %v603
    %v611 = vpack.c.bf16 %v606, %v605
    %v612 = vpack.c.bf16 %v608, %v607
    %v613 = vpack.c.bf16 %v609, %v609
    %v615 = vunpack.c.l.b16 %v610
    %v616 = vpack.c.b16 %v615, %v615
    %617 = vrot.lane.b32.xlu0 %v616, 64
    %v618 = vpop.permute.xlu0 %617
    %620 = vst.msk [vmem:[#allocation2 + $0xc] sm:$0xf] %vm408, %v618
    %v621 = vunpack.c.h.b16 %v610
    %v622 = vpack.c.b16 %v621, %v621
    %624 = vst.msk [vmem:[#allocation2 + $0x10] sm:$0xf] %vm400, %v622
    %v626 = vunpack.c.l.b16 %v611
    %v627 = vpack.c.b16 %v626, %v626
    %628 = vrot.lane.b32.xlu0 %v627, 64
    %v629 = vpop.permute.xlu0 %628
    %631 = vst.msk [vmem:[#allocation2 + $0x10] sm:$0xf] %vm408, %v629
    %v632 = vunpack.c.h.b16 %v611
    %v633 = vpack.c.b16 %v632, %v632
    %635 = vst.msk [vmem:[#allocation2 + $0x14] sm:$0xf] %vm400, %v633
    %v637 = vunpack.c.l.b16 %v612
    %v638 = vpack.c.b16 %v637, %v637
    %639 = vrot.lane.b32.xlu0 %v638, 64
    %v640 = vpop.permute.xlu0 %639
    %642 = vst.msk [vmem:[#allocation2 + $0x14] sm:$0xf] %vm408, %v640
    %v643 = vunpack.c.h.b16 %v612
    %v644 = vpack.c.b16 %v643, %v643
    %646 = vst.msk [vmem:[#allocation2 + $0x18] sm:$0xf] %vm400, %v644
    %v648 = vunpack.c.l.b16 %v613
    %v649 = vpack.c.b16 %v648, %v648
    %650 = vrot.lane.b32.xlu0 %v649, 64
    %v651 = vpop.permute.xlu0 %650
    %653 = vst.msk [vmem:[#allocation2 + $0x18] sm:$0xf] %vm408, %v651
    %v654 = vld [vmem:[%s0 + $0x38] sm:$0xf]
    %v655 = vld [vmem:[%s0 + $0x3c] sm:$0xf]
    %v656 = vld [vmem:[%s0 + $0x40] sm:$0xf]
    %v657 = vld [vmem:[%s0 + $0x44] sm:$0xf]
    %v658 = vld [vmem:[%s0 + $0x48] sm:$0xf]
    %v659 = vld [vmem:[%s0 + $0x4c] sm:$0xf]
    %v660 = vld [vmem:[%s0 + $0x50] sm:$0xf]
    %v668 = vunpack.c.l.b16 %v654
    %v669 = vunpack.c.l.b16 %v655
    %v670 = vunpack.c.l.b16 %v656
    %v671 = vunpack.c.l.b16 %v657
    %v672 = vunpack.c.l.b16 %v658
    %v673 = vunpack.c.l.b16 %v659
    %v674 = vunpack.c.l.b16 %v660
    %v675 = vpack.c.b16 %v669, %v668
    %v676 = vpack.c.b16 %v671, %v670
    %v677 = vpack.c.b16 %v673, %v672
    %v678 = vpack.c.b16 %v674, %v674
    %v680 = vsel %vm176, %v675, 0
    %v683 = vsel %vm176, %v676, 0
    %v686 = vsel %vm176, %v677, 0
    %v689 = vsel %vm176, %v678, 0
    %691 = vmatprep.subr.bf16.mxu0 0
    %692 = vmatpush1.bf16.msra.mxu0 0
    %693 = vmatprep.subr.bf16.mxu0 0
    %694 = vmatpush1.bf16.msra.mxu0 0
    %695 = vmatprep.subr.bf16.mxu0 0
    %696 = vmatpush1.bf16.msra.mxu0 0
    %697 = vmatprep.subr.bf16.mxu0 0
    %698 = vmatpush1.bf16.msra.mxu0 0
    %699 = vmatprep.subr.bf16.mxu0 0
    %700 = vmatpush1.bf16.msra.mxu0 0
    %701 = vmatprep.subr.bf16.mxu0 0
    %702 = vmatpush1.bf16.msra.mxu0 0
    %703 = vmatprep.subr.bf16.mxu0 0
    %704 = vmatpush1.bf16.msra.mxu0 0
    %705 = vmatprep.subr.bf16.mxu0 0
    %706 = vmatpush1.bf16.msra.mxu0 %v194
    %707 = vmatprep.subr.bf16.mxu0 0
    %708 = vmatpush2.bf16.msra.mxu0 0
    %709 = vmatprep.subr.bf16.mxu0 0
    %710 = vmatpush2.bf16.msra.mxu0 0
    %711 = vmatprep.subr.bf16.mxu0 0
    %712 = vmatpush2.bf16.msra.mxu0 0
    %713 = vmatprep.subr.bf16.mxu0 0
    %714 = vmatpush2.bf16.msra.mxu0 0
    %715 = vmatprep.subr.bf16.mxu0 0
    %716 = vmatpush2.bf16.msra.mxu0 0
    %717 = vmatprep.subr.bf16.mxu0 0
    %718 = vmatpush2.bf16.msra.mxu0 0
    %719 = vmatprep.subr.bf16.mxu0 0
    %720 = vmatpush2.bf16.msra.mxu0 0
    %721 = vmatprep.subr.bf16.mxu0 0
    %722 = vmatpush2.bf16.msra.mxu0 0
    %723 = vmatprep.mubr.bf16.mxu0 0
    %724 = vmatmul.mubr.bf16.gmra.mxu0 %v680
    %v725 = vpop.f32.mrf.mxu0
    %v726 = vadd.f32 %v151, %v725
    %v727 = vpop.f32.mrf.mxu0
    %v728 = vpop.f32.mrf.mxu0
    %v729 = vadd.f32 %v151, %v728
    %v730 = vpop.f32.mrf.mxu0
    %731 = vmatprep.mubr.bf16.mxu0 0
    %732 = vmatmul.mubr.bf16.gmra.mxu0 %v683
    %v733 = vpop.f32.mrf.mxu0
    %v734 = vadd.f32 %v151, %v733
    %v735 = vpop.f32.mrf.mxu0
    %v736 = vpop.f32.mrf.mxu0
    %v737 = vadd.f32 %v151, %v736
    %v738 = vpop.f32.mrf.mxu0
    %739 = vmatprep.mubr.bf16.mxu0 0
    %740 = vmatmul.mubr.bf16.gmra.mxu0 %v686
    %v741 = vpop.f32.mrf.mxu0
    %v742 = vadd.f32 %v151, %v741
    %v743 = vpop.f32.mrf.mxu0
    %v744 = vpop.f32.mrf.mxu0
    %v745 = vadd.f32 %v151, %v744
    %v746 = vpop.f32.mrf.mxu0
    %747 = vmatprep.mubr.bf16.mxu0 0
    %748 = vmatmul.mubr.bf16.gmra.mxu0 %v689
    %v749 = vpop.f32.mrf.mxu0
    %v750 = vadd.f32 %v151, %v749
    %v751 = vpop.f32.mrf.mxu0
    %v752 = vpop.f32.mrf.mxu0
    %v753 = vpop.f32.mrf.mxu0
    %754 = vdwg.mxu0
    %v755 = vmax.f32 %v726, 0.0
    %v756 = vmax.f32 %v729, 0.0
    %v757 = vmax.f32 %v734, 0.0
    %v758 = vmax.f32 %v737, 0.0
    %v759 = vmax.f32 %v742, 0.0
    %v760 = vmax.f32 %v745, 0.0
    %v761 = vmax.f32 %v750, 0.0
    %v762 = vpack.c.bf16 %v756, %v755
    %v763 = vpack.c.bf16 %v758, %v757
    %v764 = vpack.c.bf16 %v760, %v759
    %v765 = vpack.c.bf16 %v761, %v761
    %766 = vmatprep.subr.bf16.mxu0 0
    %767 = vmatpush1.bf16.msra.mxu0 %v316
    %768 = vmatprep.subr.bf16.mxu0 0
    %769 = vmatpush1.bf16.msra.mxu0 %v315
    %770 = vmatprep.subr.bf16.mxu0 0
    %771 = vmatpush1.bf16.msra.mxu0 %v314
    %772 = vmatprep.subr.bf16.mxu0 0
    %773 = vmatpush1.bf16.msra.mxu0 %v313
    %774 = vmatprep.subr.bf16.mxu0 0
    %775 = vmatpush1.bf16.msra.mxu0 %v312
    %776 = vmatprep.subr.bf16.mxu0 0
    %777 = vmatpush1.bf16.msra.mxu0 %v311
    %778 = vmatprep.subr.bf16.mxu0 0
    %779 = vmatpush1.bf16.msra.mxu0 %v310
    %780 = vmatprep.subr.bf16.mxu0 0
    %781 = vmatpush1.bf16.msra.mxu0 %v309
    %782 = vmatprep.subr.bf16.mxu0 0
    %783 = vmatpush2.bf16.msra.mxu0 0
    %784 = vmatprep.subr.bf16.mxu0 0
    %785 = vmatpush2.bf16.msra.mxu0 0
    %786 = vmatprep.subr.bf16.mxu0 0
    %787 = vmatpush2.bf16.msra.mxu0 0
    %788 = vmatprep.subr.bf16.mxu0 0
    %789 = vmatpush2.bf16.msra.mxu0 0
    %790 = vmatprep.subr.bf16.mxu0 0
    %791 = vmatpush2.bf16.msra.mxu0 0
    %792 = vmatprep.subr.bf16.mxu0 0
    %793 = vmatpush2.bf16.msra.mxu0 0
    %794 = vmatprep.subr.bf16.mxu0 0
    %795 = vmatpush2.bf16.msra.mxu0 0
    %796 = vmatprep.subr.bf16.mxu0 0
    %797 = vmatpush2.bf16.msra.mxu0 0
    %798 = vmatprep.mubr.bf16.mxu0 0
    %799 = vmatmul.mubr.bf16.gmra.mxu0 %v762
    %v800 = vpop.f32.mrf.mxu0
    %v801 = vadd.f32 %v275, %v800
    %v802 = vpop.f32.mrf.mxu0
    %v803 = vpop.f32.mrf.mxu0
    %v804 = vadd.f32 %v275, %v803
    %v805 = vpop.f32.mrf.mxu0
    %806 = vmatprep.mubr.bf16.mxu0 0
    %807 = vmatmul.mubr.bf16.gmra.mxu0 %v763
    %v808 = vpop.f32.mrf.mxu0
    %v809 = vadd.f32 %v275, %v808
    %v810 = vpop.f32.mrf.mxu0
    %v811 = vpop.f32.mrf.mxu0
    %v812 = vadd.f32 %v275, %v811
    %v813 = vpop.f32.mrf.mxu0
    %814 = vmatprep.mubr.bf16.mxu0 0
    %815 = vmatmul.mubr.bf16.gmra.mxu0 %v764
    %v816 = vpop.f32.mrf.mxu0
    %v817 = vadd.f32 %v275, %v816
    %v818 = vpop.f32.mrf.mxu0
    %v819 = vpop.f32.mrf.mxu0
    %v820 = vadd.f32 %v275, %v819
    %v821 = vpop.f32.mrf.mxu0
    %822 = vmatprep.mubr.bf16.mxu0 0
    %823 = vmatmul.mubr.bf16.gmra.mxu0 %v765
    %v824 = vpop.f32.mrf.mxu0
    %v825 = vadd.f32 %v275, %v824
    %v826 = vpop.f32.mrf.mxu0
    %v827 = vpop.f32.mrf.mxu0
    %v828 = vpop.f32.mrf.mxu0
    %829 = vdwg.mxu0
    %v830 = vmax.f32 %v801, 0.0
    %v831 = vmax.f32 %v804, 0.0
    %v832 = vmax.f32 %v809, 0.0
    %v833 = vmax.f32 %v812, 0.0
    %v834 = vmax.f32 %v817, 0.0
    %v835 = vmax.f32 %v820, 0.0
    %v836 = vmax.f32 %v825, 0.0
    %v837 = vpack.c.bf16 %v831, %v830
    %v838 = vpack.c.bf16 %v833, %v832
    %v839 = vpack.c.bf16 %v835, %v834
    %v840 = vpack.c.bf16 %v836, %v836
    %841 = vst.msk [vmem:[#allocation2 + $0x1c] sm:$0xf] %vm400, %v837
    %v843 = vunpack.c.h.b16 %v837
    %v844 = vpack.c.b16 %v843, %v843
    %845 = vrot.lane.b32.xlu0 %v844, 64
    %v846 = vpop.permute.xlu0 %845
    %848 = vst.msk [vmem:[#allocation2 + $0x1c] sm:$0xf] %vm408, %v846
    %849 = vst.msk [vmem:[#allocation2 + $0x20] sm:$0xf] %vm400, %v838
    %v851 = vunpack.c.h.b16 %v838
    %v852 = vpack.c.b16 %v851, %v851
    %853 = vrot.lane.b32.xlu0 %v852, 64
    %v854 = vpop.permute.xlu0 %853
    %856 = vst.msk [vmem:[#allocation2 + $0x20] sm:$0xf] %vm408, %v854
    %857 = vst.msk [vmem:[#allocation2 + $0x24] sm:$0xf] %vm400, %v839
    %v859 = vunpack.c.h.b16 %v839
    %v860 = vpack.c.b16 %v859, %v859
    %861 = vrot.lane.b32.xlu0 %v860, 64
    %v862 = vpop.permute.xlu0 %861
    %864 = vst.msk [vmem:[#allocation2 + $0x24] sm:$0xf] %vm408, %v862
    %865 = vst.msk [vmem:[#allocation2 + $0x28] sm:$0xf] %vm400, %v840
    %v866 = vld [vmem:[%s0 + $0x54] sm:$0xf]
    %v867 = vld [vmem:[%s0 + $0x58] sm:$0xf]
    %v868 = vld [vmem:[%s0 + $0x5c] sm:$0xf]
    %v869 = vld [vmem:[%s0 + $0x60] sm:$0xf]
    %v870 = vld [vmem:[%s0 + $0x64] sm:$0xf]
    %v871 = vld [vmem:[%s0 + $0x68] sm:$0xf]
    %v872 = vld [vmem:[%s0 + $0x6c] sm:$0xf]
    %v880 = vunpack.c.l.b16 %v866
    %v881 = vunpack.c.l.b16 %v867
    %v882 = vunpack.c.l.b16 %v868
    %v883 = vunpack.c.l.b16 %v869
    %v884 = vunpack.c.l.b16 %v870
    %v885 = vunpack.c.l.b16 %v871
    %v886 = vunpack.c.l.b16 %v872
    %v887 = vpack.c.b16 %v881, %v880
    %v888 = vpack.c.b16 %v883, %v882
    %v889 = vpack.c.b16 %v885, %v884
    %v890 = vpack.c.b16 %v886, %v886
    %v892 = vsel %vm176, %v887, 0
    %v895 = vsel %vm176, %v888, 0
    %v898 = vsel %vm176, %v889, 0
    %v901 = vsel %vm176, %v890, 0
    %903 = vmatprep.subr.bf16.mxu0 0
    %904 = vmatpush1.bf16.msra.mxu0 0
    %905 = vmatprep.subr.bf16.mxu0 0
    %906 = vmatpush1.bf16.msra.mxu0 0
    %907 = vmatprep.subr.bf16.mxu0 0
    %908 = vmatpush1.bf16.msra.mxu0 0
    %909 = vmatprep.subr.bf16.mxu0 0
    %910 = vmatpush1.bf16.msra.mxu0 0
    %911 = vmatprep.subr.bf16.mxu0 0
    %912 = vmatpush1.bf16.msra.mxu0 0
    %913 = vmatprep.subr.bf16.mxu0 0
    %914 = vmatpush1.bf16.msra.mxu0 0
    %915 = vmatprep.subr.bf16.mxu0 0
    %916 = vmatpush1.bf16.msra.mxu0 0
    %917 = vmatprep.subr.bf16.mxu0 0
    %918 = vmatpush1.bf16.msra.mxu0 %v194
    %919 = vmatprep.subr.bf16.mxu0 0
    %920 = vmatpush2.bf16.msra.mxu0 0
    %921 = vmatprep.subr.bf16.mxu0 0
    %922 = vmatpush2.bf16.msra.mxu0 0
    %923 = vmatprep.subr.bf16.mxu0 0
    %924 = vmatpush2.bf16.msra.mxu0 0
    %925 = vmatprep.subr.bf16.mxu0 0
    %926 = vmatpush2.bf16.msra.mxu0 0
    %927 = vmatprep.subr.bf16.mxu0 0
    %928 = vmatpush2.bf16.msra.mxu0 0
    %929 = vmatprep.subr.bf16.mxu0 0
    %930 = vmatpush2.bf16.msra.mxu0 0
    %931 = vmatprep.subr.bf16.mxu0 0
    %932 = vmatpush2.bf16.msra.mxu0 0
    %933 = vmatprep.subr.bf16.mxu0 0
    %934 = vmatpush2.bf16.msra.mxu0 0
    %935 = vmatprep.mubr.bf16.mxu0 0
    %936 = vmatmul.mubr.bf16.gmra.mxu0 %v892
    %v937 = vpop.f32.mrf.mxu0
    %v938 = vadd.f32 %v151, %v937
    %v939 = vpop.f32.mrf.mxu0
    %v940 = vpop.f32.mrf.mxu0
    %v941 = vadd.f32 %v151, %v940
    %v942 = vpop.f32.mrf.mxu0
    %943 = vmatprep.mubr.bf16.mxu0 0
    %944 = vmatmul.mubr.bf16.gmra.mxu0 %v895
    %v945 = vpop.f32.mrf.mxu0
    %v946 = vadd.f32 %v151, %v945
    %v947 = vpop.f32.mrf.mxu0
    %v948 = vpop.f32.mrf.mxu0
    %v949 = vadd.f32 %v151, %v948
    %v950 = vpop.f32.mrf.mxu0
    %951 = vmatprep.mubr.bf16.mxu0 0
    %952 = vmatmul.mubr.bf16.gmra.mxu0 %v898
    %v953 = vpop.f32.mrf.mxu0
    %v954 = vadd.f32 %v151, %v953
    %v955 = vpop.f32.mrf.mxu0
    %v956 = vpop.f32.mrf.mxu0
    %v957 = vadd.f32 %v151, %v956
    %v958 = vpop.f32.mrf.mxu0
    %959 = vmatprep.mubr.bf16.mxu0 0
    %960 = vmatmul.mubr.bf16.gmra.mxu0 %v901
    %v961 = vpop.f32.mrf.mxu0
    %v962 = vadd.f32 %v151, %v961
    %v963 = vpop.f32.mrf.mxu0
    %v964 = vpop.f32.mrf.mxu0
    %v965 = vpop.f32.mrf.mxu0
    %966 = vdwg.mxu0
    %v967 = vmax.f32 %v938, 0.0
    %v968 = vmax.f32 %v941, 0.0
    %v969 = vmax.f32 %v946, 0.0
    %v970 = vmax.f32 %v949, 0.0
    %v971 = vmax.f32 %v954, 0.0
    %v972 = vmax.f32 %v957, 0.0
    %v973 = vmax.f32 %v962, 0.0
    %v974 = vpack.c.bf16 %v968, %v967
    %v975 = vpack.c.bf16 %v970, %v969
    %v976 = vpack.c.bf16 %v972, %v971
    %v977 = vpack.c.bf16 %v973, %v973
    %978 = vmatprep.subr.bf16.mxu0 0
    %979 = vmatpush1.bf16.msra.mxu0 %v316
    %980 = vmatprep.subr.bf16.mxu0 0
    %981 = vmatpush1.bf16.msra.mxu0 %v315
    %982 = vmatprep.subr.bf16.mxu0 0
    %983 = vmatpush1.bf16.msra.mxu0 %v314
    %984 = vmatprep.subr.bf16.mxu0 0
    %985 = vmatpush1.bf16.msra.mxu0 %v313
    %986 = vmatprep.subr.bf16.mxu0 0
    %987 = vmatpush1.bf16.msra.mxu0 %v312
    %988 = vmatprep.subr.bf16.mxu0 0
    %989 = vmatpush1.bf16.msra.mxu0 %v311
    %990 = vmatprep.subr.bf16.mxu0 0
    %991 = vmatpush1.bf16.msra.mxu0 %v310
    %992 = vmatprep.subr.bf16.mxu0 0
    %993 = vmatpush1.bf16.msra.mxu0 %v309
    %994 = vmatprep.subr.bf16.mxu0 0
    %995 = vmatpush2.bf16.msra.mxu0 0
    %996 = vmatprep.subr.bf16.mxu0 0
    %997 = vmatpush2.bf16.msra.mxu0 0
    %998 = vmatprep.subr.bf16.mxu0 0
    %999 = vmatpush2.bf16.msra.mxu0 0
    %1000 = vmatprep.subr.bf16.mxu0 0
    %1001 = vmatpush2.bf16.msra.mxu0 0
    %1002 = vmatprep.subr.bf16.mxu0 0
    %1003 = vmatpush2.bf16.msra.mxu0 0
    %1004 = vmatprep.subr.bf16.mxu0 0
    %1005 = vmatpush2.bf16.msra.mxu0 0
    %1006 = vmatprep.subr.bf16.mxu0 0
    %1007 = vmatpush2.bf16.msra.mxu0 0
    %1008 = vmatprep.subr.bf16.mxu0 0
    %1009 = vmatpush2.bf16.msra.mxu0 0
    %1010 = vmatprep.mubr.bf16.mxu0 0
    %1011 = vmatmul.mubr.bf16.gmra.mxu0 %v974
    %v1012 = vpop.f32.mrf.mxu0
    %v1013 = vadd.f32 %v275, %v1012
    %v1014 = vpop.f32.mrf.mxu0
    %v1015 = vpop.f32.mrf.mxu0
    %v1016 = vadd.f32 %v275, %v1015
    %v1017 = vpop.f32.mrf.mxu0
    %1018 = vmatprep.mubr.bf16.mxu0 0
    %1019 = vmatmul.mubr.bf16.gmra.mxu0 %v975
    %v1020 = vpop.f32.mrf.mxu0
    %v1021 = vadd.f32 %v275, %v1020
    %v1022 = vpop.f32.mrf.mxu0
    %v1023 = vpop.f32.mrf.mxu0
    %v1024 = vadd.f32 %v275, %v1023
    %v1025 = vpop.f32.mrf.mxu0
    %1026 = vmatprep.mubr.bf16.mxu0 0
    %1027 = vmatmul.mubr.bf16.gmra.mxu0 %v976
    %v1028 = vpop.f32.mrf.mxu0
    %v1029 = vadd.f32 %v275, %v1028
    %v1030 = vpop.f32.mrf.mxu0
    %v1031 = vpop.f32.mrf.mxu0
    %v1032 = vadd.f32 %v275, %v1031
    %v1033 = vpop.f32.mrf.mxu0
    %1034 = vmatprep.mubr.bf16.mxu0 0
    %1035 = vmatmul.mubr.bf16.gmra.mxu0 %v977
    %v1036 = vpop.f32.mrf.mxu0
    %v1037 = vadd.f32 %v275, %v1036
    %v1038 = vpop.f32.mrf.mxu0
    %v1039 = vpop.f32.mrf.mxu0
    %v1040 = vpop.f32.mrf.mxu0
    %1041 = vdwg.mxu0
    %v1042 = vmax.f32 %v1013, 0.0
    %v1043 = vmax.f32 %v1016, 0.0
    %v1044 = vmax.f32 %v1021, 0.0
    %v1045 = vmax.f32 %v1024, 0.0
    %v1046 = vmax.f32 %v1029, 0.0
    %v1047 = vmax.f32 %v1032, 0.0
    %v1048 = vmax.f32 %v1037, 0.0
    %v1049 = vpack.c.bf16 %v1043, %v1042
    %v1050 = vpack.c.bf16 %v1045, %v1044
    %v1051 = vpack.c.bf16 %v1047, %v1046
    %v1052 = vpack.c.bf16 %v1048, %v1048
    %v1054 = vunpack.c.l.b16 %v1049
    %v1055 = vpack.c.b16 %v1054, %v1054
    %1056 = vrot.lane.b32.xlu0 %v1055, 64
    %v1057 = vpop.permute.xlu0 %1056
    %1059 = vst.msk [vmem:[#allocation2 + $0x28] sm:$0xf] %vm408, %v1057
    %v1060 = vunpack.c.h.b16 %v1049
    %v1061 = vpack.c.b16 %v1060, %v1060
    %1063 = vst.msk [vmem:[#allocation2 + $0x2c] sm:$0xf] %vm400, %v1061
    %v1065 = vunpack.c.l.b16 %v1050
    %v1066 = vpack.c.b16 %v1065, %v1065
    %1067 = vrot.lane.b32.xlu0 %v1066, 64
    %v1068 = vpop.permute.xlu0 %1067
    %1070 = vst.msk [vmem:[#allocation2 + $0x2c] sm:$0xf] %vm408, %v1068
    %v1071 = vunpack.c.h.b16 %v1050
    %v1072 = vpack.c.b16 %v1071, %v1071
    %1074 = vst.msk [vmem:[#allocation2 + $0x30] sm:$0xf] %vm400, %v1072
    %v1076 = vunpack.c.l.b16 %v1051
    %v1077 = vpack.c.b16 %v1076, %v1076
    %1078 = vrot.lane.b32.xlu0 %v1077, 64
    %v1079 = vpop.permute.xlu0 %1078
    %1081 = vst.msk [vmem:[#allocation2 + $0x30] sm:$0xf] %vm408, %v1079
    %v1082 = vunpack.c.h.b16 %v1051
    %v1083 = vpack.c.b16 %v1082, %v1082
    %1085 = vst.msk [vmem:[#allocation2 + $0x34] sm:$0xf] %vm400, %v1083
    %v1087 = vunpack.c.l.b16 %v1052
    %v1088 = vpack.c.b16 %v1087, %v1087
    %1089 = vrot.lane.b32.xlu0 %v1088, 64
    %v1090 = vpop.permute.xlu0 %1089
    %1092 = vst.msk [vmem:[#allocation2 + $0x34] sm:$0xf] %vm408, %v1090
    %v1093 = vld [vmem:[%s0 + $0x70] sm:$0xf]
    %v1094 = vld [vmem:[%s0 + $0x74] sm:$0xf]
    %v1095 = vld [vmem:[%s0 + $0x78] sm:$0xf]
    %v1096 = vld [vmem:[%s0 + $0x7c] sm:$0xf]
    %v1097 = vld [vmem:[%s0 + $0x80] sm:$0xf]
    %v1098 = vld [vmem:[%s0 + $0x84] sm:$0xf]
    %v1099 = vld [vmem:[%s0 + $0x88] sm:$0xf]
    %v1107 = vunpack.c.l.b16 %v1093
    %v1108 = vunpack.c.l.b16 %v1094
    %v1109 = vunpack.c.l.b16 %v1095
    %v1110 = vunpack.c.l.b16 %v1096
    %v1111 = vunpack.c.l.b16 %v1097
    %v1112 = vunpack.c.l.b16 %v1098
    %v1113 = vunpack.c.l.b16 %v1099
    %v1114 = vpack.c.b16 %v1108, %v1107
    %v1115 = vpack.c.b16 %v1110, %v1109
    %v1116 = vpack.c.b16 %v1112, %v1111
    %v1117 = vpack.c.b16 %v1113, %v1113
    %v1119 = vsel %vm176, %v1114, 0
    %v1122 = vsel %vm176, %v1115, 0
    %v1125 = vsel %vm176, %v1116, 0
    %v1128 = vsel %vm176, %v1117, 0
    %1130 = vmatprep.subr.bf16.mxu0 0
    %1131 = vmatpush1.bf16.msra.mxu0 0
    %1132 = vmatprep.subr.bf16.mxu0 0
    %1133 = vmatpush1.bf16.msra.mxu0 0
    %1134 = vmatprep.subr.bf16.mxu0 0
    %1135 = vmatpush1.bf16.msra.mxu0 0
    %1136 = vmatprep.subr.bf16.mxu0 0
    %1137 = vmatpush1.bf16.msra.mxu0 0
    %1138 = vmatprep.subr.bf16.mxu0 0
    %1139 = vmatpush1.bf16.msra.mxu0 0
    %1140 = vmatprep.subr.bf16.mxu0 0
    %1141 = vmatpush1.bf16.msra.mxu0 0
    %1142 = vmatprep.subr.bf16.mxu0 0
    %1143 = vmatpush1.bf16.msra.mxu0 0
    %1144 = vmatprep.subr.bf16.mxu0 0
    %1145 = vmatpush1.bf16.msra.mxu0 %v194
    %1146 = vmatprep.subr.bf16.mxu0 0
    %1147 = vmatpush2.bf16.msra.mxu0 0
    %1148 = vmatprep.subr.bf16.mxu0 0
    %1149 = vmatpush2.bf16.msra.mxu0 0
    %1150 = vmatprep.subr.bf16.mxu0 0
    %1151 = vmatpush2.bf16.msra.mxu0 0
    %1152 = vmatprep.subr.bf16.mxu0 0
    %1153 = vmatpush2.bf16.msra.mxu0 0
    %1154 = vmatprep.subr.bf16.mxu0 0
    %1155 = vmatpush2.bf16.msra.mxu0 0
    %1156 = vmatprep.subr.bf16.mxu0 0
    %1157 = vmatpush2.bf16.msra.mxu0 0
    %1158 = vmatprep.subr.bf16.mxu0 0
    %1159 = vmatpush2.bf16.msra.mxu0 0
    %1160 = vmatprep.subr.bf16.mxu0 0
    %1161 = vmatpush2.bf16.msra.mxu0 0
    %1162 = vmatprep.mubr.bf16.mxu0 0
    %1163 = vmatmul.mubr.bf16.gmra.mxu0 %v1119
    %v1164 = vpop.f32.mrf.mxu0
    %v1165 = vadd.f32 %v151, %v1164
    %v1166 = vpop.f32.mrf.mxu0
    %v1167 = vpop.f32.mrf.mxu0
    %v1168 = vadd.f32 %v151, %v1167
    %v1169 = vpop.f32.mrf.mxu0
    %1170 = vmatprep.mubr.bf16.mxu0 0
    %1171 = vmatmul.mubr.bf16.gmra.mxu0 %v1122
    %v1172 = vpop.f32.mrf.mxu0
    %v1173 = vadd.f32 %v151, %v1172
    %v1174 = vpop.f32.mrf.mxu0
    %v1175 = vpop.f32.mrf.mxu0
    %v1176 = vadd.f32 %v151, %v1175
    %v1177 = vpop.f32.mrf.mxu0
    %1178 = vmatprep.mubr.bf16.mxu0 0
    %1179 = vmatmul.mubr.bf16.gmra.mxu0 %v1125
    %v1180 = vpop.f32.mrf.mxu0
    %v1181 = vadd.f32 %v151, %v1180
    %v1182 = vpop.f32.mrf.mxu0
    %v1183 = vpop.f32.mrf.mxu0
    %v1184 = vadd.f32 %v151, %v1183
    %v1185 = vpop.f32.mrf.mxu0
    %1186 = vmatprep.mubr.bf16.mxu0 0
    %1187 = vmatmul.mubr.bf16.gmra.mxu0 %v1128
    %v1188 = vpop.f32.mrf.mxu0
    %v1189 = vadd.f32 %v151, %v1188
    %v1190 = vpop.f32.mrf.mxu0
    %v1191 = vpop.f32.mrf.mxu0
    %v1192 = vpop.f32.mrf.mxu0
    %1193 = vdwg.mxu0
    %v1194 = vmax.f32 %v1165, 0.0
    %v1195 = vmax.f32 %v1168, 0.0
    %v1196 = vmax.f32 %v1173, 0.0
    %v1197 = vmax.f32 %v1176, 0.0
    %v1198 = vmax.f32 %v1181, 0.0
    %v1199 = vmax.f32 %v1184, 0.0
    %v1200 = vmax.f32 %v1189, 0.0
    %v1201 = vpack.c.bf16 %v1195, %v1194
    %v1202 = vpack.c.bf16 %v1197, %v1196
    %v1203 = vpack.c.bf16 %v1199, %v1198
    %v1204 = vpack.c.bf16 %v1200, %v1200
    %1205 = vmatprep.subr.bf16.mxu0 0
    %1206 = vmatpush1.bf16.msra.mxu0 %v316
    %1207 = vmatprep.subr.bf16.mxu0 0
    %1208 = vmatpush1.bf16.msra.mxu0 %v315
    %1209 = vmatprep.subr.bf16.mxu0 0
    %1210 = vmatpush1.bf16.msra.mxu0 %v314
    %1211 = vmatprep.subr.bf16.mxu0 0
    %1212 = vmatpush1.bf16.msra.mxu0 %v313
    %1213 = vmatprep.subr.bf16.mxu0 0
    %1214 = vmatpush1.bf16.msra.mxu0 %v312
    %1215 = vmatprep.subr.bf16.mxu0 0
    %1216 = vmatpush1.bf16.msra.mxu0 %v311
    %1217 = vmatprep.subr.bf16.mxu0 0
    %1218 = vmatpush1.bf16.msra.mxu0 %v310
    %1219 = vmatprep.subr.bf16.mxu0 0
    %1220 = vmatpush1.bf16.msra.mxu0 %v309
    %1221 = vmatprep.subr.bf16.mxu0 0
    %1222 = vmatpush2.bf16.msra.mxu0 0
    %1223 = vmatprep.subr.bf16.mxu0 0
    %1224 = vmatpush2.bf16.msra.mxu0 0
    %1225 = vmatprep.subr.bf16.mxu0 0
    %1226 = vmatpush2.bf16.msra.mxu0 0
    %1227 = vmatprep.subr.bf16.mxu0 0
    %1228 = vmatpush2.bf16.msra.mxu0 0
    %1229 = vmatprep.subr.bf16.mxu0 0
    %1230 = vmatpush2.bf16.msra.mxu0 0
    %1231 = vmatprep.subr.bf16.mxu0 0
    %1232 = vmatpush2.bf16.msra.mxu0 0
    %1233 = vmatprep.subr.bf16.mxu0 0
    %1234 = vmatpush2.bf16.msra.mxu0 0
    %1235 = vmatprep.subr.bf16.mxu0 0
    %1236 = vmatpush2.bf16.msra.mxu0 0
    %1237 = vmatprep.mubr.bf16.mxu0 0
    %1238 = vmatmul.mubr.bf16.gmra.mxu0 %v1201
    %v1239 = vpop.f32.mrf.mxu0
    %v1240 = vadd.f32 %v275, %v1239
    %v1241 = vpop.f32.mrf.mxu0
    %v1242 = vpop.f32.mrf.mxu0
    %v1243 = vadd.f32 %v275, %v1242
    %v1244 = vpop.f32.mrf.mxu0
    %1245 = vmatprep.mubr.bf16.mxu0 0
    %1246 = vmatmul.mubr.bf16.gmra.mxu0 %v1202
    %v1247 = vpop.f32.mrf.mxu0
    %v1248 = vadd.f32 %v275, %v1247
    %v1249 = vpop.f32.mrf.mxu0
    %v1250 = vpop.f32.mrf.mxu0
    %v1251 = vadd.f32 %v275, %v1250
    %v1252 = vpop.f32.mrf.mxu0
    %1253 = vmatprep.mubr.bf16.mxu0 0
    %1254 = vmatmul.mubr.bf16.gmra.mxu0 %v1203
    %v1255 = vpop.f32.mrf.mxu0
    %v1256 = vadd.f32 %v275, %v1255
    %v1257 = vpop.f32.mrf.mxu0
    %v1258 = vpop.f32.mrf.mxu0
    %v1259 = vadd.f32 %v275, %v1258
    %v1260 = vpop.f32.mrf.mxu0
    %1261 = vmatprep.mubr.bf16.mxu0 0
    %1262 = vmatmul.mubr.bf16.gmra.mxu0 %v1204
    %v1263 = vpop.f32.mrf.mxu0
    %v1264 = vadd.f32 %v275, %v1263
    %v1265 = vpop.f32.mrf.mxu0
    %v1266 = vpop.f32.mrf.mxu0
    %v1267 = vpop.f32.mrf.mxu0
    %1268 = vdwg.mxu0
    %v1269 = vmax.f32 %v1240, 0.0
    %v1270 = vmax.f32 %v1243, 0.0
    %v1271 = vmax.f32 %v1248, 0.0
    %v1272 = vmax.f32 %v1251, 0.0
    %v1273 = vmax.f32 %v1256, 0.0
    %v1274 = vmax.f32 %v1259, 0.0
    %v1275 = vmax.f32 %v1264, 0.0
    %v1276 = vpack.c.bf16 %v1270, %v1269
    %v1277 = vpack.c.bf16 %v1272, %v1271
    %v1278 = vpack.c.bf16 %v1274, %v1273
    %v1279 = vpack.c.bf16 %v1275, %v1275
    %1280 = vst.msk [vmem:[#allocation2 + $0x38] sm:$0xf] %vm400, %v1276
    %v1282 = vunpack.c.h.b16 %v1276
    %v1283 = vpack.c.b16 %v1282, %v1282
    %1284 = vrot.lane.b32.xlu0 %v1283, 64
    %v1285 = vpop.permute.xlu0 %1284
    %1287 = vst.msk [vmem:[#allocation2 + $0x38] sm:$0xf] %vm408, %v1285
    %1288 = vst.msk [vmem:[#allocation2 + $0x3c] sm:$0xf] %vm400, %v1277
    %v1290 = vunpack.c.h.b16 %v1277
    %v1291 = vpack.c.b16 %v1290, %v1290
    %1292 = vrot.lane.b32.xlu0 %v1291, 64
    %v1293 = vpop.permute.xlu0 %1292
    %1295 = vst.msk [vmem:[#allocation2 + $0x3c] sm:$0xf] %vm408, %v1293
    %1296 = vst.msk [vmem:[#allocation2 + $0x40] sm:$0xf] %vm400, %v1278
    %v1298 = vunpack.c.h.b16 %v1278
    %v1299 = vpack.c.b16 %v1298, %v1298
    %1300 = vrot.lane.b32.xlu0 %v1299, 64
    %v1301 = vpop.permute.xlu0 %1300
    %1303 = vst.msk [vmem:[#allocation2 + $0x40] sm:$0xf] %vm408, %v1301
    %1304 = vst.msk [vmem:[#allocation2 + $0x44] sm:$0xf] %vm400, %v1279
    %v1305 = vld [vmem:[%s0 + $0x8c] sm:$0xf]
    %v1306 = vld [vmem:[%s0 + $0x90] sm:$0xf]
    %v1307 = vld [vmem:[%s0 + $0x94] sm:$0xf]
    %v1308 = vld [vmem:[%s0 + $0x98] sm:$0xf]
    %v1309 = vld [vmem:[%s0 + $0x9c] sm:$0xf]
    %v1310 = vld [vmem:[%s0 + $0xa0] sm:$0xf]
    %v1311 = vld [vmem:[%s0 + $0xa4] sm:$0xf]
    %v1319 = vunpack.c.l.b16 %v1305
    %v1320 = vunpack.c.l.b16 %v1306
    %v1321 = vunpack.c.l.b16 %v1307
    %v1322 = vunpack.c.l.b16 %v1308
    %v1323 = vunpack.c.l.b16 %v1309
    %v1324 = vunpack.c.l.b16 %v1310
    %v1325 = vunpack.c.l.b16 %v1311
    %v1326 = vpack.c.b16 %v1320, %v1319
    %v1327 = vpack.c.b16 %v1322, %v1321
    %v1328 = vpack.c.b16 %v1324, %v1323
    %v1329 = vpack.c.b16 %v1325, %v1325
    %v1331 = vsel %vm176, %v1326, 0
    %v1334 = vsel %vm176, %v1327, 0
    %v1337 = vsel %vm176, %v1328, 0
    %v1340 = vsel %vm176, %v1329, 0
    %1342 = vmatprep.subr.bf16.mxu0 0
    %1343 = vmatpush1.bf16.msra.mxu0 0
    %1344 = vmatprep.subr.bf16.mxu0 0
    %1345 = vmatpush1.bf16.msra.mxu0 0
    %1346 = vmatprep.subr.bf16.mxu0 0
    %1347 = vmatpush1.bf16.msra.mxu0 0
    %1348 = vmatprep.subr.bf16.mxu0 0
    %1349 = vmatpush1.bf16.msra.mxu0 0
    %1350 = vmatprep.subr.bf16.mxu0 0
    %1351 = vmatpush1.bf16.msra.mxu0 0
    %1352 = vmatprep.subr.bf16.mxu0 0
    %1353 = vmatpush1.bf16.msra.mxu0 0
    %1354 = vmatprep.subr.bf16.mxu0 0
    %1355 = vmatpush1.bf16.msra.mxu0 0
    %1356 = vmatprep.subr.bf16.mxu0 0
    %1357 = vmatpush1.bf16.msra.mxu0 %v194
    %1358 = vmatprep.subr.bf16.mxu0 0
    %1359 = vmatpush2.bf16.msra.mxu0 0
    %1360 = vmatprep.subr.bf16.mxu0 0
    %1361 = vmatpush2.bf16.msra.mxu0 0
    %1362 = vmatprep.subr.bf16.mxu0 0
    %1363 = vmatpush2.bf16.msra.mxu0 0
    %1364 = vmatprep.subr.bf16.mxu0 0
    %1365 = vmatpush2.bf16.msra.mxu0 0
    %1366 = vmatprep.subr.bf16.mxu0 0
    %1367 = vmatpush2.bf16.msra.mxu0 0
    %1368 = vmatprep.subr.bf16.mxu0 0
    %1369 = vmatpush2.bf16.msra.mxu0 0
    %1370 = vmatprep.subr.bf16.mxu0 0
    %1371 = vmatpush2.bf16.msra.mxu0 0
    %1372 = vmatprep.subr.bf16.mxu0 0
    %1373 = vmatpush2.bf16.msra.mxu0 0
    %1374 = vmatprep.mubr.bf16.mxu0 0
    %1375 = vmatmul.mubr.bf16.gmra.mxu0 %v1331
    %v1376 = vpop.f32.mrf.mxu0
    %v1377 = vadd.f32 %v151, %v1376
    %v1378 = vpop.f32.mrf.mxu0
    %v1379 = vpop.f32.mrf.mxu0
    %v1380 = vadd.f32 %v151, %v1379
    %v1381 = vpop.f32.mrf.mxu0
    %1382 = vmatprep.mubr.bf16.mxu0 0
    %1383 = vmatmul.mubr.bf16.gmra.mxu0 %v1334
    %v1384 = vpop.f32.mrf.mxu0
    %v1385 = vadd.f32 %v151, %v1384
    %v1386 = vpop.f32.mrf.mxu0
    %v1387 = vpop.f32.mrf.mxu0
    %v1388 = vadd.f32 %v151, %v1387
    %v1389 = vpop.f32.mrf.mxu0
    %1390 = vmatprep.mubr.bf16.mxu0 0
    %1391 = vmatmul.mubr.bf16.gmra.mxu0 %v1337
    %v1392 = vpop.f32.mrf.mxu0
    %v1393 = vadd.f32 %v151, %v1392
    %v1394 = vpop.f32.mrf.mxu0
    %v1395 = vpop.f32.mrf.mxu0
    %v1396 = vadd.f32 %v151, %v1395
    %v1397 = vpop.f32.mrf.mxu0
    %1398 = vmatprep.mubr.bf16.mxu0 0
    %1399 = vmatmul.mubr.bf16.gmra.mxu0 %v1340
    %v1400 = vpop.f32.mrf.mxu0
    %v1401 = vadd.f32 %v151, %v1400
    %v1402 = vpop.f32.mrf.mxu0
    %v1403 = vpop.f32.mrf.mxu0
    %v1404 = vpop.f32.mrf.mxu0
    %1405 = vdwg.mxu0
    %v1406 = vmax.f32 %v1377, 0.0
    %v1407 = vmax.f32 %v1380, 0.0
    %v1408 = vmax.f32 %v1385, 0.0
    %v1409 = vmax.f32 %v1388, 0.0
    %v1410 = vmax.f32 %v1393, 0.0
    %v1411 = vmax.f32 %v1396, 0.0
    %v1412 = vmax.f32 %v1401, 0.0
    %v1413 = vpack.c.bf16 %v1407, %v1406
    %v1414 = vpack.c.bf16 %v1409, %v1408
    %v1415 = vpack.c.bf16 %v1411, %v1410
    %v1416 = vpack.c.bf16 %v1412, %v1412
    %1417 = vmatprep.subr.bf16.mxu0 0
    %1418 = vmatpush1.bf16.msra.mxu0 %v316
    %1419 = vmatprep.subr.bf16.mxu0 0
    %1420 = vmatpush1.bf16.msra.mxu0 %v315
    %1421 = vmatprep.subr.bf16.mxu0 0
    %1422 = vmatpush1.bf16.msra.mxu0 %v314
    %1423 = vmatprep.subr.bf16.mxu0 0
    %1424 = vmatpush1.bf16.msra.mxu0 %v313
    %1425 = vmatprep.subr.bf16.mxu0 0
    %1426 = vmatpush1.bf16.msra.mxu0 %v312
    %1427 = vmatprep.subr.bf16.mxu0 0
    %1428 = vmatpush1.bf16.msra.mxu0 %v311
    %1429 = vmatprep.subr.bf16.mxu0 0
    %1430 = vmatpush1.bf16.msra.mxu0 %v310
    %1431 = vmatprep.subr.bf16.mxu0 0
    %1432 = vmatpush1.bf16.msra.mxu0 %v309
    %1433 = vmatprep.subr.bf16.mxu0 0
    %1434 = vmatpush2.bf16.msra.mxu0 0
    %1435 = vmatprep.subr.bf16.mxu0 0
    %1436 = vmatpush2.bf16.msra.mxu0 0
    %1437 = vmatprep.subr.bf16.mxu0 0
    %1438 = vmatpush2.bf16.msra.mxu0 0
    %1439 = vmatprep.subr.bf16.mxu0 0
    %1440 = vmatpush2.bf16.msra.mxu0 0
    %1441 = vmatprep.subr.bf16.mxu0 0
    %1442 = vmatpush2.bf16.msra.mxu0 0
    %1443 = vmatprep.subr.bf16.mxu0 0
    %1444 = vmatpush2.bf16.msra.mxu0 0
    %1445 = vmatprep.subr.bf16.mxu0 0
    %1446 = vmatpush2.bf16.msra.mxu0 0
    %1447 = vmatprep.subr.bf16.mxu0 0
    %1448 = vmatpush2.bf16.msra.mxu0 0
    %1449 = vmatprep.mubr.bf16.mxu0 0
    %1450 = vmatmul.mubr.bf16.gmra.mxu0 %v1413
    %v1451 = vpop.f32.mrf.mxu0
    %v1452 = vadd.f32 %v275, %v1451
    %v1453 = vpop.f32.mrf.mxu0
    %v1454 = vpop.f32.mrf.mxu0
    %v1455 = vadd.f32 %v275, %v1454
    %v1456 = vpop.f32.mrf.mxu0
    %1457 = vmatprep.mubr.bf16.mxu0 0
    %1458 = vmatmul.mubr.bf16.gmra.mxu0 %v1414
    %v1459 = vpop.f32.mrf.mxu0
    %v1460 = vadd.f32 %v275, %v1459
    %v1461 = vpop.f32.mrf.mxu0
    %v1462 = vpop.f32.mrf.mxu0
    %v1463 = vadd.f32 %v275, %v1462
    %v1464 = vpop.f32.mrf.mxu0
    %1465 = vmatprep.mubr.bf16.mxu0 0
    %1466 = vmatmul.mubr.bf16.gmra.mxu0 %v1415
    %v1467 = vpop.f32.mrf.mxu0
    %v1468 = vadd.f32 %v275, %v1467
    %v1469 = vpop.f32.mrf.mxu0
    %v1470 = vpop.f32.mrf.mxu0
    %v1471 = vadd.f32 %v275, %v1470
    %v1472 = vpop.f32.mrf.mxu0
    %1473 = vmatprep.mubr.bf16.mxu0 0
    %1474 = vmatmul.mubr.bf16.gmra.mxu0 %v1416
    %v1475 = vpop.f32.mrf.mxu0
    %v1476 = vadd.f32 %v275, %v1475
    %v1477 = vpop.f32.mrf.mxu0
    %v1478 = vpop.f32.mrf.mxu0
    %v1479 = vpop.f32.mrf.mxu0
    %1480 = vdwg.mxu0
    %v1481 = vmax.f32 %v1452, 0.0
    %v1482 = vmax.f32 %v1455, 0.0
    %v1483 = vmax.f32 %v1460, 0.0
    %v1484 = vmax.f32 %v1463, 0.0
    %v1485 = vmax.f32 %v1468, 0.0
    %v1486 = vmax.f32 %v1471, 0.0
    %v1487 = vmax.f32 %v1476, 0.0
    %v1488 = vpack.c.bf16 %v1482, %v1481
    %v1489 = vpack.c.bf16 %v1484, %v1483
    %v1490 = vpack.c.bf16 %v1486, %v1485
    %v1491 = vpack.c.bf16 %v1487, %v1487
    %v1493 = vunpack.c.l.b16 %v1488
    %v1494 = vpack.c.b16 %v1493, %v1493
    %1495 = vrot.lane.b32.xlu0 %v1494, 64
    %v1496 = vpop.permute.xlu0 %1495
    %1498 = vst.msk [vmem:[#allocation2 + $0x44] sm:$0xf] %vm408, %v1496
    %v1499 = vunpack.c.h.b16 %v1488
    %v1500 = vpack.c.b16 %v1499, %v1499
    %1502 = vst.msk [vmem:[#allocation2 + $0x48] sm:$0xf] %vm400, %v1500
    %v1504 = vunpack.c.l.b16 %v1489
    %v1505 = vpack.c.b16 %v1504, %v1504
    %1506 = vrot.lane.b32.xlu0 %v1505, 64
    %v1507 = vpop.permute.xlu0 %1506
    %1509 = vst.msk [vmem:[#allocation2 + $0x48] sm:$0xf] %vm408, %v1507
    %v1510 = vunpack.c.h.b16 %v1489
    %v1511 = vpack.c.b16 %v1510, %v1510
    %1513 = vst.msk [vmem:[#allocation2 + $0x4c] sm:$0xf] %vm400, %v1511
    %v1515 = vunpack.c.l.b16 %v1490
    %v1516 = vpack.c.b16 %v1515, %v1515
    %1517 = vrot.lane.b32.xlu0 %v1516, 64
    %v1518 = vpop.permute.xlu0 %1517
    %1520 = vst.msk [vmem:[#allocation2 + $0x4c] sm:$0xf] %vm408, %v1518
    %v1521 = vunpack.c.h.b16 %v1490
    %v1522 = vpack.c.b16 %v1521, %v1521
    %1524 = vst.msk [vmem:[#allocation2 + $0x50] sm:$0xf] %vm400, %v1522
    %v1526 = vunpack.c.l.b16 %v1491
    %v1527 = vpack.c.b16 %v1526, %v1526
    %1528 = vrot.lane.b32.xlu0 %v1527, 64
    %v1529 = vpop.permute.xlu0 %1528
    %1531 = vst.msk [vmem:[#allocation2 + $0x50] sm:$0xf] %vm408, %v1529
    %v1532 = vld [vmem:[%s0 + $0xa8] sm:$0xf]
    %v1533 = vld [vmem:[%s0 + $0xac] sm:$0xf]
    %v1534 = vld [vmem:[%s0 + $0xb0] sm:$0xf]
    %v1535 = vld [vmem:[%s0 + $0xb4] sm:$0xf]
    %v1536 = vld [vmem:[%s0 + $0xb8] sm:$0xf]
    %v1537 = vld [vmem:[%s0 + $0xbc] sm:$0xf]
    %v1538 = vld [vmem:[%s0 + $0xc0] sm:$0xf]
    %v1546 = vunpack.c.l.b16 %v1532
    %v1547 = vunpack.c.l.b16 %v1533
    %v1548 = vunpack.c.l.b16 %v1534
    %v1549 = vunpack.c.l.b16 %v1535
    %v1550 = vunpack.c.l.b16 %v1536
    %v1551 = vunpack.c.l.b16 %v1537
    %v1552 = vunpack.c.l.b16 %v1538
    %v1553 = vpack.c.b16 %v1547, %v1546
    %v1554 = vpack.c.b16 %v1549, %v1548
    %v1555 = vpack.c.b16 %v1551, %v1550
    %v1556 = vpack.c.b16 %v1552, %v1552
    %v1558 = vsel %vm176, %v1553, 0
    %v1561 = vsel %vm176, %v1554, 0
    %v1564 = vsel %vm176, %v1555, 0
    %v1567 = vsel %vm176, %v1556, 0
    %1569 = vmatprep.subr.bf16.mxu0 0
    %1570 = vmatpush1.bf16.msra.mxu0 0
    %1571 = vmatprep.subr.bf16.mxu0 0
    %1572 = vmatpush1.bf16.msra.mxu0 0
    %1573 = vmatprep.subr.bf16.mxu0 0
    %1574 = vmatpush1.bf16.msra.mxu0 0
    %1575 = vmatprep.subr.bf16.mxu0 0
    %1576 = vmatpush1.bf16.msra.mxu0 0
    %1577 = vmatprep.subr.bf16.mxu0 0
    %1578 = vmatpush1.bf16.msra.mxu0 0
    %1579 = vmatprep.subr.bf16.mxu0 0
    %1580 = vmatpush1.bf16.msra.mxu0 0
    %1581 = vmatprep.subr.bf16.mxu0 0
    %1582 = vmatpush1.bf16.msra.mxu0 0
    %1583 = vmatprep.subr.bf16.mxu0 0
    %1584 = vmatpush1.bf16.msra.mxu0 %v194
    %1585 = vmatprep.subr.bf16.mxu0 0
    %1586 = vmatpush2.bf16.msra.mxu0 0
    %1587 = vmatprep.subr.bf16.mxu0 0
    %1588 = vmatpush2.bf16.msra.mxu0 0
    %1589 = vmatprep.subr.bf16.mxu0 0
    %1590 = vmatpush2.bf16.msra.mxu0 0
    %1591 = vmatprep.subr.bf16.mxu0 0
    %1592 = vmatpush2.bf16.msra.mxu0 0
    %1593 = vmatprep.subr.bf16.mxu0 0
    %1594 = vmatpush2.bf16.msra.mxu0 0
    %1595 = vmatprep.subr.bf16.mxu0 0
    %1596 = vmatpush2.bf16.msra.mxu0 0
    %1597 = vmatprep.subr.bf16.mxu0 0
    %1598 = vmatpush2.bf16.msra.mxu0 0
    %1599 = vmatprep.subr.bf16.mxu0 0
    %1600 = vmatpush2.bf16.msra.mxu0 0
    %1601 = vmatprep.mubr.bf16.mxu0 0
    %1602 = vmatmul.mubr.bf16.gmra.mxu0 %v1558
    %v1603 = vpop.f32.mrf.mxu0
    %v1604 = vadd.f32 %v151, %v1603
    %v1605 = vpop.f32.mrf.mxu0
    %v1606 = vpop.f32.mrf.mxu0
    %v1607 = vadd.f32 %v151, %v1606
    %v1608 = vpop.f32.mrf.mxu0
    %1609 = vmatprep.mubr.bf16.mxu0 0
    %1610 = vmatmul.mubr.bf16.gmra.mxu0 %v1561
    %v1611 = vpop.f32.mrf.mxu0
    %v1612 = vadd.f32 %v151, %v1611
    %v1613 = vpop.f32.mrf.mxu0
    %v1614 = vpop.f32.mrf.mxu0
    %v1615 = vadd.f32 %v151, %v1614
    %v1616 = vpop.f32.mrf.mxu0
    %1617 = vmatprep.mubr.bf16.mxu0 0
    %1618 = vmatmul.mubr.bf16.gmra.mxu0 %v1564
    %v1619 = vpop.f32.mrf.mxu0
    %v1620 = vadd.f32 %v151, %v1619
    %v1621 = vpop.f32.mrf.mxu0
    %v1622 = vpop.f32.mrf.mxu0
    %v1623 = vadd.f32 %v151, %v1622
    %v1624 = vpop.f32.mrf.mxu0
    %1625 = vmatprep.mubr.bf16.mxu0 0
    %1626 = vmatmul.mubr.bf16.gmra.mxu0 %v1567
    %v1627 = vpop.f32.mrf.mxu0
    %v1628 = vadd.f32 %v151, %v1627
    %v1629 = vpop.f32.mrf.mxu0
    %v1630 = vpop.f32.mrf.mxu0
    %v1631 = vpop.f32.mrf.mxu0
    %1632 = vdwg.mxu0
    %v1633 = vmax.f32 %v1604, 0.0
    %v1634 = vmax.f32 %v1607, 0.0
    %v1635 = vmax.f32 %v1612, 0.0
    %v1636 = vmax.f32 %v1615, 0.0
    %v1637 = vmax.f32 %v1620, 0.0
    %v1638 = vmax.f32 %v1623, 0.0
    %v1639 = vmax.f32 %v1628, 0.0
    %v1640 = vpack.c.bf16 %v1634, %v1633
    %v1641 = vpack.c.bf16 %v1636, %v1635
    %v1642 = vpack.c.bf16 %v1638, %v1637
    %v1643 = vpack.c.bf16 %v1639, %v1639
    %1644 = vmatprep.subr.bf16.mxu0 0
    %1645 = vmatpush1.bf16.msra.mxu0 %v316
    %1646 = vmatprep.subr.bf16.mxu0 0
    %1647 = vmatpush1.bf16.msra.mxu0 %v315
    %1648 = vmatprep.subr.bf16.mxu0 0
    %1649 = vmatpush1.bf16.msra.mxu0 %v314
    %1650 = vmatprep.subr.bf16.mxu0 0
    %1651 = vmatpush1.bf16.msra.mxu0 %v313
    %1652 = vmatprep.subr.bf16.mxu0 0
    %1653 = vmatpush1.bf16.msra.mxu0 %v312
    %1654 = vmatprep.subr.bf16.mxu0 0
    %1655 = vmatpush1.bf16.msra.mxu0 %v311
    %1656 = vmatprep.subr.bf16.mxu0 0
    %1657 = vmatpush1.bf16.msra.mxu0 %v310
    %1658 = vmatprep.subr.bf16.mxu0 0
    %1659 = vmatpush1.bf16.msra.mxu0 %v309
    %1660 = vmatprep.subr.bf16.mxu0 0
    %1661 = vmatpush2.bf16.msra.mxu0 0
    %1662 = vmatprep.subr.bf16.mxu0 0
    %1663 = vmatpush2.bf16.msra.mxu0 0
    %1664 = vmatprep.subr.bf16.mxu0 0
    %1665 = vmatpush2.bf16.msra.mxu0 0
    %1666 = vmatprep.subr.bf16.mxu0 0
    %1667 = vmatpush2.bf16.msra.mxu0 0
    %1668 = vmatprep.subr.bf16.mxu0 0
    %1669 = vmatpush2.bf16.msra.mxu0 0
    %1670 = vmatprep.subr.bf16.mxu0 0
    %1671 = vmatpush2.bf16.msra.mxu0 0
    %1672 = vmatprep.subr.bf16.mxu0 0
    %1673 = vmatpush2.bf16.msra.mxu0 0
    %1674 = vmatprep.subr.bf16.mxu0 0
    %1675 = vmatpush2.bf16.msra.mxu0 0
    %1676 = vmatprep.mubr.bf16.mxu0 0
    %1677 = vmatmul.mubr.bf16.gmra.mxu0 %v1640
    %v1678 = vpop.f32.mrf.mxu0
    %v1679 = vadd.f32 %v275, %v1678
    %v1680 = vpop.f32.mrf.mxu0
    %v1681 = vpop.f32.mrf.mxu0
    %v1682 = vadd.f32 %v275, %v1681
    %v1683 = vpop.f32.mrf.mxu0
    %1684 = vmatprep.mubr.bf16.mxu0 0
    %1685 = vmatmul.mubr.bf16.gmra.mxu0 %v1641
    %v1686 = vpop.f32.mrf.mxu0
    %v1687 = vadd.f32 %v275, %v1686
    %v1688 = vpop.f32.mrf.mxu0
    %v1689 = vpop.f32.mrf.mxu0
    %v1690 = vadd.f32 %v275, %v1689
    %v1691 = vpop.f32.mrf.mxu0
    %1692 = vmatprep.mubr.bf16.mxu0 0
    %1693 = vmatmul.mubr.bf16.gmra.mxu0 %v1642
    %v1694 = vpop.f32.mrf.mxu0
    %v1695 = vadd.f32 %v275, %v1694
    %v1696 = vpop.f32.mrf.mxu0
    %v1697 = vpop.f32.mrf.mxu0
    %v1698 = vadd.f32 %v275, %v1697
    %v1699 = vpop.f32.mrf.mxu0
    %1700 = vmatprep.mubr.bf16.mxu0 0
    %1701 = vmatmul.mubr.bf16.gmra.mxu0 %v1643
    %v1702 = vpop.f32.mrf.mxu0
    %v1703 = vadd.f32 %v275, %v1702
    %v1704 = vpop.f32.mrf.mxu0
    %v1705 = vpop.f32.mrf.mxu0
    %v1706 = vpop.f32.mrf.mxu0
    %1707 = vdwg.mxu0
    %v1708 = vmax.f32 %v1679, 0.0
    %v1709 = vmax.f32 %v1682, 0.0
    %v1710 = vmax.f32 %v1687, 0.0
    %v1711 = vmax.f32 %v1690, 0.0
    %v1712 = vmax.f32 %v1695, 0.0
    %v1713 = vmax.f32 %v1698, 0.0
    %v1714 = vmax.f32 %v1703, 0.0
    %v1715 = vpack.c.bf16 %v1709, %v1708
    %v1716 = vpack.c.bf16 %v1711, %v1710
    %v1717 = vpack.c.bf16 %v1713, %v1712
    %v1718 = vpack.c.bf16 %v1714, %v1714
    %1719 = vst.msk [vmem:[#allocation2 + $0x54] sm:$0xf] %vm400, %v1715
    %v1721 = vunpack.c.h.b16 %v1715
    %v1722 = vpack.c.b16 %v1721, %v1721
    %1723 = vrot.lane.b32.xlu0 %v1722, 64
    %v1724 = vpop.permute.xlu0 %1723
    %1726 = vst.msk [vmem:[#allocation2 + $0x54] sm:$0xf] %vm408, %v1724
    %1727 = vst.msk [vmem:[#allocation2 + $0x58] sm:$0xf] %vm400, %v1716
    %v1729 = vunpack.c.h.b16 %v1716
    %v1730 = vpack.c.b16 %v1729, %v1729
    %1731 = vrot.lane.b32.xlu0 %v1730, 64
    %v1732 = vpop.permute.xlu0 %1731
    %1734 = vst.msk [vmem:[#allocation2 + $0x58] sm:$0xf] %vm408, %v1732
    %1735 = vst.msk [vmem:[#allocation2 + $0x5c] sm:$0xf] %vm400, %v1717
    %v1737 = vunpack.c.h.b16 %v1717
    %v1738 = vpack.c.b16 %v1737, %v1737
    %1739 = vrot.lane.b32.xlu0 %v1738, 64
    %v1740 = vpop.permute.xlu0 %1739
    %1742 = vst.msk [vmem:[#allocation2 + $0x5c] sm:$0xf] %vm408, %v1740
    %1743 = vst.msk [vmem:[#allocation2 + $0x60] sm:$0xf] %vm400, %v1718
    %v1744 = vld [vmem:[#allocation2] sm:$0xff]
    %v1745 = vld [vmem:[#allocation2 + $0x8] sm:$0xff]
    %v1746 = vld [vmem:[#allocation2 + $0x10] sm:$0xff]
    %v1747 = vld [vmem:[#allocation2 + $0x18] sm:$0xff]
    %v1748 = vld [vmem:[#allocation2 + $0x20] sm:$0xff]
    %v1749 = vld [vmem:[#allocation2 + $0x28] sm:$0xff]
    %v1750 = vld [vmem:[#allocation2 + $0x30] sm:$0xff]
    %v1751 = vld [vmem:[#allocation2 + $0x38] sm:$0xff]
    %v1752 = vld [vmem:[#allocation2 + $0x40] sm:$0xff]
    %v1753 = vld [vmem:[#allocation2 + $0x48] sm:$0xff]
    %v1754 = vld [vmem:[#allocation2 + $0x50] sm:$0xff]
    %v1755 = vld [vmem:[#allocation2 + $0x58] sm:$0xff]
    %v1756 = vld [vmem:[#allocation2 + $0x60] sm:$0xf]
    %v1757 = vld [vmem:[#allocation8] sm:$0xff]
    %v1758 = vld [vmem:[#allocation8 + $0x8] sm:$0xff]
    %v1759 = vld [vmem:[#allocation8 + $0x10] sm:$0xff]
    %v1760 = vld [vmem:[#allocation8 + $0x18] sm:$0xff]
    %v1761 = vld [vmem:[#allocation8 + $0x20] sm:$0xff]
    %v1762 = vld [vmem:[#allocation8 + $0x28] sm:$0xff]
    %v1763 = vld [vmem:[#allocation8 + $0x30] sm:$0xff]
    %v1764 = vld [vmem:[#allocation8 + $0x38] sm:$0xff]
    %v1765 = vld [vmem:[#allocation8 + $0x40] sm:$0xff]
    %v1766 = vld [vmem:[#allocation8 + $0x48] sm:$0xff]
    %v1767 = vld [vmem:[#allocation8 + $0x50] sm:$0xff]
    %v1768 = vld [vmem:[#allocation8 + $0x58] sm:$0xff]
    %v1769 = vld [vmem:[#allocation8 + $0x60] sm:$0xff]
    %v1770 = vld [vmem:[#allocation8 + $0x68] sm:$0xff]
    %v1771 = vld [vmem:[#allocation8 + $0x70] sm:$0xff]
    %v1772 = vld [vmem:[#allocation8 + $0x78] sm:$0xff]
    %v1773 = vld [vmem:[#allocation8 + $0x80] sm:$0xff]
    %v1774 = vld [vmem:[#allocation8 + $0x88] sm:$0xff]
    %v1775 = vld [vmem:[#allocation8 + $0x90] sm:$0xff]
    %v1776 = vld [vmem:[#allocation8 + $0x98] sm:$0xff]
    %v1777 = vld [vmem:[#allocation8 + $0xa0] sm:$0xff]
    %v1778 = vld [vmem:[#allocation8 + $0xa8] sm:$0xff]
    %v1779 = vld [vmem:[#allocation8 + $0xb0] sm:$0xff]
    %v1780 = vld [vmem:[#allocation8 + $0xb8] sm:$0xff]
    %v1781 = vld [vmem:[#allocation8 + $0xc0] sm:$0xff]
    %v1782 = vld [vmem:[#allocation8 + $0xc8] sm:$0xff]
    %v1783 = vld [vmem:[#allocation8 + $0xd0] sm:$0xff]
    %v1784 = vld [vmem:[#allocation8 + $0xd8] sm:$0xff]
    %v1785 = vld [vmem:[#allocation8 + $0xe0] sm:$0xff]
    %v1786 = vld [vmem:[#allocation8 + $0xe8] sm:$0xff]
    %v1787 = vld [vmem:[#allocation8 + $0xf0] sm:$0xff]
    %v1788 = vld [vmem:[#allocation8 + $0xf8] sm:$0xff]
    %v1789 = vld [vmem:[#allocation8 + $0x100] sm:$0xff]
    %v1790 = vld [vmem:[#allocation8 + $0x108] sm:$0xff]
    %v1791 = vld [vmem:[#allocation8 + $0x110] sm:$0xff]
    %v1792 = vld [vmem:[#allocation8 + $0x118] sm:$0xff]
    %v1793 = vld [vmem:[#allocation8 + $0x120] sm:$0xff]
    %v1794 = vld [vmem:[#allocation8 + $0x128] sm:$0xff]
    %v1795 = vld [vmem:[#allocation8 + $0x130] sm:$0xff]
    %v1796 = vld [vmem:[#allocation8 + $0x138] sm:$0xff]
    %v1797 = vld [vmem:[#allocation8 + $0x140] sm:$0xff]
    %v1798 = vld [vmem:[#allocation8 + $0x148] sm:$0xff]
    %v1799 = vld [vmem:[#allocation8 + $0x150] sm:$0xff]
    %v1800 = vld [vmem:[#allocation8 + $0x158] sm:$0xff]
    %v1801 = vld [vmem:[#allocation8 + $0x160] sm:$0xff]
    %v1802 = vld [vmem:[#allocation8 + $0x168] sm:$0xff]
    %v1803 = vld [vmem:[#allocation8 + $0x170] sm:$0xff]
    %v1804 = vld [vmem:[#allocation8 + $0x178] sm:$0xff]
    %v1805 = vld [vmem:[#allocation8 + $0x180] sm:$0xff]
    %v1806 = vld [vmem:[#allocation8 + $0x188] sm:$0xff]
    %v1807 = vld [vmem:[#allocation8 + $0x190] sm:$0xff]
    %v1808 = vld [vmem:[#allocation8 + $0x198] sm:$0xff]
    %v1809 = vld [vmem:[#allocation8 + $0x1a0] sm:$0xff]
    %v1810 = vld [vmem:[#allocation8 + $0x1a8] sm:$0xff]
    %v1811 = vld [vmem:[#allocation8 + $0x1b0] sm:$0xff]
    %v1812 = vld [vmem:[#allocation8 + $0x1b8] sm:$0xff]
    %v1813 = vld [vmem:[#allocation8 + $0x1c0] sm:$0xff]
    %v1814 = vld [vmem:[#allocation8 + $0x1c8] sm:$0xff]
    %v1815 = vld [vmem:[#allocation8 + $0x1d0] sm:$0xff]
    %v1816 = vld [vmem:[#allocation8 + $0x1d8] sm:$0xff]
    %v1817 = vld [vmem:[#allocation8 + $0x1e0] sm:$0xff]
    %v1818 = vld [vmem:[#allocation8 + $0x1e8] sm:$0xff]
    %v1819 = vld [vmem:[#allocation8 + $0x1f0] sm:$0xff]
    %v1820 = vld [vmem:[#allocation8 + $0x1f8] sm:$0xff]
    %v1821 = vld [vmem:[#allocation8 + $0x200] sm:$0xff]
    %v1822 = vld [vmem:[#allocation8 + $0x208] sm:$0xff]
    %v1823 = vld [vmem:[#allocation8 + $0x210] sm:$0xff]
    %v1824 = vld [vmem:[#allocation8 + $0x218] sm:$0xff]
    %v1825 = vld [vmem:[#allocation8 + $0x220] sm:$0xff]
    %v1826 = vld [vmem:[#allocation8 + $0x228] sm:$0xff]
    %v1827 = vld [vmem:[#allocation8 + $0x230] sm:$0xff]
    %v1828 = vld [vmem:[#allocation8 + $0x238] sm:$0xff]
    %v1829 = vld [vmem:[#allocation8 + $0x240] sm:$0xff]
    %v1830 = vld [vmem:[#allocation8 + $0x248] sm:$0xff]
    %v1831 = vld [vmem:[#allocation8 + $0x250] sm:$0xff]
    %v1832 = vld [vmem:[#allocation8 + $0x258] sm:$0xff]
    %v1833 = vld [vmem:[#allocation8 + $0x260] sm:$0xff]
    %v1834 = vld [vmem:[#allocation8 + $0x268] sm:$0xff]
    %v1835 = vld [vmem:[#allocation8 + $0x270] sm:$0xff]
    %v1836 = vld [vmem:[#allocation8 + $0x278] sm:$0xff]
    %v1837 = vld [vmem:[#allocation8 + $0x280] sm:$0xff]
    %v1838 = vld [vmem:[#allocation8 + $0x288] sm:$0xff]
    %v1839 = vld [vmem:[#allocation8 + $0x290] sm:$0xff]
    %v1840 = vld [vmem:[#allocation8 + $0x298] sm:$0xff]
    %v1841 = vld [vmem:[#allocation8 + $0x2a0] sm:$0xff]
    %v1842 = vld [vmem:[#allocation8 + $0x2a8] sm:$0xff]
    %v1843 = vld [vmem:[#allocation8 + $0x2b0] sm:$0xff]
    %v1844 = vld [vmem:[#allocation8 + $0x2b8] sm:$0xff]
    %v1845 = vld [vmem:[#allocation8 + $0x2c0] sm:$0xff]
    %v1846 = vld [vmem:[#allocation8 + $0x2c8] sm:$0xff]
    %v1847 = vld [vmem:[#allocation8 + $0x2d0] sm:$0xff]
    %v1848 = vld [vmem:[#allocation8 + $0x2d8] sm:$0xff]
    %v1849 = vld [vmem:[#allocation8 + $0x2e0] sm:$0xff]
    %v1850 = vld [vmem:[#allocation8 + $0x2e8] sm:$0xff]
    %v1851 = vld [vmem:[#allocation8 + $0x2f0] sm:$0xff]
    %v1852 = vld [vmem:[#allocation8 + $0x2f8] sm:$0xff]
    %v1853 = vld [vmem:[#allocation8 + $0x300] sm:$0xff]
    %v1854 = vld [vmem:[#allocation8 + $0x308] sm:$0xff]
    %v1855 = vld [vmem:[#allocation8 + $0x310] sm:$0xff]
    %v1856 = vld [vmem:[#allocation8 + $0x318] sm:$0xff]
    %v1857 = vld [vmem:[#allocation8 + $0x320] sm:$0xff]
    %v1858 = vld [vmem:[#allocation8 + $0x328] sm:$0xff]
    %v1859 = vld [vmem:[#allocation8 + $0x330] sm:$0xff]
    %v1860 = vld [vmem:[#allocation8 + $0x338] sm:$0xff]
    %v1861 = vld [vmem:[#allocation8 + $0x340] sm:$0xff]
    %v1862 = vld [vmem:[#allocation8 + $0x348] sm:$0xff]
    %v1863 = vld [vmem:[#allocation8 + $0x350] sm:$0xff]
    %v1864 = vld [vmem:[#allocation8 + $0x358] sm:$0xff]
    %v1865 = vld [vmem:[#allocation8 + $0x360] sm:$0xff]
    %v1866 = vld [vmem:[#allocation8 + $0x368] sm:$0xff]
    %v1867 = vld [vmem:[#allocation8 + $0x370] sm:$0xff]
    %v1868 = vld [vmem:[#allocation8 + $0x378] sm:$0xff]
    %v1869 = vld [vmem:[#allocation8 + $0x380] sm:$0xff]
    %v1870 = vld [vmem:[#allocation8 + $0x388] sm:$0xff]
    %v1871 = vld [vmem:[#allocation8 + $0x390] sm:$0xff]
    %v1872 = vld [vmem:[#allocation8 + $0x398] sm:$0xff]
    %v1873 = vld [vmem:[#allocation8 + $0x3a0] sm:$0xff]
    %v1874 = vld [vmem:[#allocation8 + $0x3a8] sm:$0xff]
    %v1875 = vld [vmem:[#allocation8 + $0x3b0] sm:$0xff]
    %v1876 = vld [vmem:[#allocation8 + $0x3b8] sm:$0xff]
    %v1877 = vld [vmem:[#allocation8 + $0x3c0] sm:$0xff]
    %v1878 = vld [vmem:[#allocation8 + $0x3c8] sm:$0xff]
    %v1879 = vld [vmem:[#allocation8 + $0x3d0] sm:$0xff]
    %v1880 = vld [vmem:[#allocation8 + $0x3d8] sm:$0xff]
    %v1881 = vld [vmem:[#allocation8 + $0x3e0] sm:$0xff]
    %v1882 = vld [vmem:[#allocation8 + $0x3e8] sm:$0xff]
    %v1883 = vld [vmem:[#allocation8 + $0x3f0] sm:$0xff]
    %v1884 = vld [vmem:[#allocation8 + $0x3f8] sm:$0xff]
    %v1885 = vld [vmem:[#allocation8 + $0x400] sm:$0xff]
    %v1886 = vld [vmem:[#allocation8 + $0x408] sm:$0xff]
    %v1887 = vld [vmem:[#allocation8 + $0x410] sm:$0xff]
    %v1888 = vld [vmem:[#allocation8 + $0x418] sm:$0xff]
    %v1889 = vld [vmem:[#allocation8 + $0x420] sm:$0xff]
    %v1890 = vld [vmem:[#allocation8 + $0x428] sm:$0xff]
    %v1891 = vld [vmem:[#allocation8 + $0x430] sm:$0xff]
    %v1892 = vld [vmem:[#allocation8 + $0x438] sm:$0xff]
    %v1893 = vld [vmem:[#allocation8 + $0x440] sm:$0xff]
    %v1894 = vld [vmem:[#allocation8 + $0x448] sm:$0xff]
    %v1895 = vld [vmem:[#allocation8 + $0x450] sm:$0xff]
    %v1896 = vld [vmem:[#allocation8 + $0x458] sm:$0xff]
    %v1897 = vld [vmem:[#allocation8 + $0x460] sm:$0xff]
    %v1898 = vld [vmem:[#allocation8 + $0x468] sm:$0xff]
    %v1899 = vld [vmem:[#allocation8 + $0x470] sm:$0xff]
    %v1900 = vld [vmem:[#allocation8 + $0x478] sm:$0xff]
    %v1901 = vld [vmem:[#allocation8 + $0x480] sm:$0xff]
    %v1902 = vld [vmem:[#allocation8 + $0x488] sm:$0xff]
    %v1903 = vld [vmem:[#allocation8 + $0x490] sm:$0xff]
    %v1904 = vld [vmem:[#allocation8 + $0x498] sm:$0xff]
    %v1905 = vld [vmem:[#allocation8 + $0x4a0] sm:$0xff]
    %v1906 = vld [vmem:[#allocation8 + $0x4a8] sm:$0xff]
    %v1907 = vld [vmem:[#allocation8 + $0x4b0] sm:$0xff]
    %v1908 = vld [vmem:[#allocation8 + $0x4b8] sm:$0xff]
    %v1909 = vld [vmem:[#allocation8 + $0x4c0] sm:$0xff]
    %v1910 = vld [vmem:[#allocation8 + $0x4c8] sm:$0xff]
    %v1911 = vld [vmem:[#allocation8 + $0x4d0] sm:$0xff]
    %v1912 = vld [vmem:[#allocation8 + $0x4d8] sm:$0xff]
    %v1913 = vld [vmem:[#allocation8 + $0x4e0] sm:$0xff]
    %v1914 = vld [vmem:[#allocation8 + $0x4e8] sm:$0xff]
    %v1915 = vld [vmem:[#allocation8 + $0x4f0] sm:$0xff]
    %v1916 = vld [vmem:[#allocation8 + $0x4f8] sm:$0xff]
    %v1917 = vld [vmem:[#allocation8 + $0x500] sm:$0xff]
    %v1918 = vld [vmem:[#allocation8 + $0x508] sm:$0xff]
    %v1919 = vld [vmem:[#allocation8 + $0x510] sm:$0xff]
    %v1920 = vld [vmem:[#allocation8 + $0x518] sm:$0xff]
    %v1921 = vld [vmem:[#allocation8 + $0x520] sm:$0xff]
    %v1922 = vld [vmem:[#allocation8 + $0x528] sm:$0xff]
    %v1923 = vld [vmem:[#allocation8 + $0x530] sm:$0xff]
    %v1924 = vld [vmem:[#allocation8 + $0x538] sm:$0xff]
    %v1925 = vld [vmem:[#allocation8 + $0x540] sm:$0xff]
    %v1926 = vld [vmem:[#allocation8 + $0x548] sm:$0xff]
    %v1927 = vld [vmem:[#allocation8 + $0x550] sm:$0xff]
    %v1928 = vld [vmem:[#allocation8 + $0x558] sm:$0xff]
    %v1929 = vld [vmem:[#allocation8 + $0x560] sm:$0xff]
    %v1930 = vld [vmem:[#allocation8 + $0x568] sm:$0xff]
    %v1931 = vld [vmem:[#allocation8 + $0x570] sm:$0xff]
    %v1932 = vld [vmem:[#allocation8 + $0x578] sm:$0xff]
    %v1933 = vld [vmem:[#allocation8 + $0x580] sm:$0xff]
    %v1934 = vld [vmem:[#allocation8 + $0x588] sm:$0xff]
    %v1935 = vld [vmem:[#allocation8 + $0x590] sm:$0xff]
    %v1936 = vld [vmem:[#allocation8 + $0x598] sm:$0xff]
    %v1937 = vld [vmem:[#allocation8 + $0x5a0] sm:$0xff]
    %v1938 = vld [vmem:[#allocation8 + $0x5a8] sm:$0xff]
    %v1939 = vld [vmem:[#allocation8 + $0x5b0] sm:$0xff]
    %v1940 = vld [vmem:[#allocation8 + $0x5b8] sm:$0xff]
    %v1941 = vld [vmem:[#allocation8 + $0x5c0] sm:$0xff]
    %v1942 = vld [vmem:[#allocation8 + $0x5c8] sm:$0xff]
    %v1943 = vld [vmem:[#allocation8 + $0x5d0] sm:$0xff]
    %v1944 = vld [vmem:[#allocation8 + $0x5d8] sm:$0xff]
    %v1945 = vld [vmem:[#allocation8 + $0x5e0] sm:$0xff]
    %v1946 = vld [vmem:[#allocation8 + $0x5e8] sm:$0xff]
    %v1947 = vld [vmem:[#allocation8 + $0x5f0] sm:$0xff]
    %v1948 = vld [vmem:[#allocation8 + $0x5f8] sm:$0xff]
    %v1949 = vld [vmem:[#allocation8 + $0x600] sm:$0xff]
    %v1950 = vld [vmem:[#allocation8 + $0x608] sm:$0xff]
    %v1951 = vld [vmem:[#allocation8 + $0x610] sm:$0xff]
    %v1952 = vld [vmem:[#allocation8 + $0x618] sm:$0xff]
    %v1953 = vld [vmem:[#allocation8 + $0x620] sm:$0xff]
    %v1954 = vld [vmem:[#allocation8 + $0x628] sm:$0xff]
    %v1955 = vld [vmem:[#allocation8 + $0x630] sm:$0xff]
    %v1956 = vld [vmem:[#allocation8 + $0x638] sm:$0xff]
    %v1957 = vld [vmem:[#allocation8 + $0x640] sm:$0xff]
    %v1958 = vld [vmem:[#allocation8 + $0x648] sm:$0xff]
    %v1959 = vld [vmem:[#allocation8 + $0x650] sm:$0xff]
    %v1960 = vld [vmem:[#allocation8 + $0x658] sm:$0xff]
    %v1961 = vld [vmem:[#allocation8 + $0x660] sm:$0xff]
    %v1962 = vld [vmem:[#allocation8 + $0x668] sm:$0xff]
    %v1963 = vld [vmem:[#allocation8 + $0x670] sm:$0xff]
    %v1964 = vld [vmem:[#allocation8 + $0x678] sm:$0xff]
    %v1965 = vld [vmem:[#allocation8 + $0x680] sm:$0xff]
    %v1966 = vld [vmem:[#allocation8 + $0x688] sm:$0xff]
    %v1967 = vld [vmem:[#allocation8 + $0x690] sm:$0xff]
    %v1968 = vld [vmem:[#allocation8 + $0x698] sm:$0xff]
    %v1969 = vld [vmem:[#allocation8 + $0x6a0] sm:$0xff]
    %v1970 = vld [vmem:[#allocation8 + $0x6a8] sm:$0xff]
    %v1971 = vld [vmem:[#allocation8 + $0x6b0] sm:$0xff]
    %v1972 = vld [vmem:[#allocation8 + $0x6b8] sm:$0xff]
    %v1973 = vld [vmem:[#allocation8 + $0x6c0] sm:$0xff]
    %v1974 = vld [vmem:[#allocation8 + $0x6c8] sm:$0xff]
    %v1975 = vld [vmem:[#allocation8 + $0x6d0] sm:$0xff]
    %v1976 = vld [vmem:[#allocation8 + $0x6d8] sm:$0xff]
    %v1977 = vld [vmem:[#allocation8 + $0x6e0] sm:$0xff]
    %v1978 = vld [vmem:[#allocation8 + $0x6e8] sm:$0xff]
    %v1979 = vld [vmem:[#allocation8 + $0x6f0] sm:$0xff]
    %v1980 = vld [vmem:[#allocation8 + $0x6f8] sm:$0xff]
    %v1981 = vld [vmem:[#allocation8 + $0x700] sm:$0xff]
    %v1982 = vld [vmem:[#allocation8 + $0x708] sm:$0xff]
    %v1983 = vld [vmem:[#allocation8 + $0x710] sm:$0xff]
    %v1984 = vld [vmem:[#allocation8 + $0x718] sm:$0xff]
    %v1985 = vld [vmem:[#allocation8 + $0x720] sm:$0xff]
    %v1986 = vld [vmem:[#allocation8 + $0x728] sm:$0xff]
    %v1987 = vld [vmem:[#allocation8 + $0x730] sm:$0xff]
    %v1988 = vld [vmem:[#allocation8 + $0x738] sm:$0xff]
    %v1989 = vld [vmem:[#allocation8 + $0x740] sm:$0xff]
    %v1990 = vld [vmem:[#allocation8 + $0x748] sm:$0xff]
    %v1991 = vld [vmem:[#allocation8 + $0x750] sm:$0xff]
    %v1992 = vld [vmem:[#allocation8 + $0x758] sm:$0xff]
    %v1993 = vld [vmem:[#allocation8 + $0x760] sm:$0xff]
    %v1994 = vld [vmem:[#allocation8 + $0x768] sm:$0xff]
    %v1995 = vld [vmem:[#allocation8 + $0x770] sm:$0xff]
    %v1996 = vld [vmem:[#allocation8 + $0x778] sm:$0xff]
    %v1997 = vld [vmem:[#allocation8 + $0x780] sm:$0xff]
    %v1998 = vld [vmem:[#allocation8 + $0x788] sm:$0xff]
    %v1999 = vld [vmem:[#allocation8 + $0x790] sm:$0xff]
    %v2000 = vld [vmem:[#allocation8 + $0x798] sm:$0xff]
    %v2001 = vld [vmem:[#allocation8 + $0x7a0] sm:$0xff]
    %v2002 = vld [vmem:[#allocation8 + $0x7a8] sm:$0xff]
    %v2003 = vld [vmem:[#allocation8 + $0x7b0] sm:$0xff]
    %v2004 = vld [vmem:[#allocation8 + $0x7b8] sm:$0xff]
    %v2005 = vld [vmem:[#allocation8 + $0x7c0] sm:$0xff]
    %v2006 = vld [vmem:[#allocation8 + $0x7c8] sm:$0xff]
    %v2007 = vld [vmem:[#allocation8 + $0x7d0] sm:$0xff]
    %v2008 = vld [vmem:[#allocation8 + $0x7d8] sm:$0xff]
    %v2009 = vld [vmem:[#allocation8 + $0x7e0] sm:$0xff]
    %v2010 = vld [vmem:[#allocation8 + $0x7e8] sm:$0xff]
    %v2011 = vld [vmem:[#allocation8 + $0x7f0] sm:$0xff]
    %v2012 = vld [vmem:[#allocation8 + $0x7f8] sm:$0xff]
    %v2013 = vld [vmem:[#allocation8 + $0x800] sm:$0xff]
    %v2014 = vld [vmem:[#allocation8 + $0x808] sm:$0xff]
    %v2015 = vld [vmem:[#allocation8 + $0x810] sm:$0xff]
    %v2016 = vld [vmem:[#allocation8 + $0x818] sm:$0xff]
    %v2017 = vld [vmem:[#allocation8 + $0x820] sm:$0xff]
    %v2018 = vld [vmem:[#allocation8 + $0x828] sm:$0xff]
    %v2019 = vld [vmem:[#allocation8 + $0x830] sm:$0xff]
    %v2020 = vld [vmem:[#allocation8 + $0x838] sm:$0xff]
    %v2021 = vld [vmem:[#allocation8 + $0x840] sm:$0xff]
    %v2022 = vld [vmem:[#allocation8 + $0x848] sm:$0xff]
    %v2023 = vld [vmem:[#allocation8 + $0x850] sm:$0xff]
    %v2024 = vld [vmem:[#allocation8 + $0x858] sm:$0xff]
    %v2025 = vld [vmem:[#allocation8 + $0x860] sm:$0xff]
    %v2026 = vld [vmem:[#allocation8 + $0x868] sm:$0xff]
    %v2027 = vld [vmem:[#allocation8 + $0x870] sm:$0xff]
    %v2028 = vld [vmem:[#allocation8 + $0x878] sm:$0xff]
    %v2029 = vld [vmem:[#allocation8 + $0x880] sm:$0xff]
    %v2030 = vld [vmem:[#allocation8 + $0x888] sm:$0xff]
    %v2031 = vld [vmem:[#allocation8 + $0x890] sm:$0xff]
    %v2032 = vld [vmem:[#allocation8 + $0x898] sm:$0xff]
    %v2033 = vld [vmem:[#allocation8 + $0x8a0] sm:$0xff]
    %v2034 = vld [vmem:[#allocation8 + $0x8a8] sm:$0xff]
    %v2035 = vld [vmem:[#allocation8 + $0x8b0] sm:$0xff]
    %v2036 = vld [vmem:[#allocation8 + $0x8b8] sm:$0xff]
    %v2037 = vld [vmem:[#allocation8 + $0x8c0] sm:$0xff]
    %v2038 = vld [vmem:[#allocation8 + $0x8c8] sm:$0xff]
    %v2039 = vld [vmem:[#allocation8 + $0x8d0] sm:$0xff]
    %v2040 = vld [vmem:[#allocation8 + $0x8d8] sm:$0xff]
    %v2041 = vld [vmem:[#allocation8 + $0x8e0] sm:$0xff]
    %v2042 = vld [vmem:[#allocation8 + $0x8e8] sm:$0xff]
    %v2043 = vld [vmem:[#allocation8 + $0x8f0] sm:$0xff]
    %v2044 = vld [vmem:[#allocation8 + $0x8f8] sm:$0xff]
    %v2045 = vld [vmem:[#allocation8 + $0x900] sm:$0xff]
    %v2046 = vld [vmem:[#allocation8 + $0x908] sm:$0xff]
    %v2047 = vld [vmem:[#allocation8 + $0x910] sm:$0xff]
    %v2048 = vld [vmem:[#allocation8 + $0x918] sm:$0xff]
    %v2049 = vld [vmem:[#allocation8 + $0x920] sm:$0xff]
    %v2050 = vld [vmem:[#allocation8 + $0x928] sm:$0xff]
    %v2051 = vld [vmem:[#allocation8 + $0x930] sm:$0xff]
    %v2052 = vld [vmem:[#allocation8 + $0x938] sm:$0xff]
    %v2053 = vld [vmem:[#allocation8 + $0x940] sm:$0xff]
    %v2054 = vld [vmem:[#allocation8 + $0x948] sm:$0xff]
    %v2055 = vld [vmem:[#allocation8 + $0x950] sm:$0xff]
    %v2056 = vld [vmem:[#allocation8 + $0x958] sm:$0xff]
    %v2057 = vld [vmem:[#allocation8 + $0x960] sm:$0xff]
    %v2058 = vld [vmem:[#allocation8 + $0x968] sm:$0xff]
    %v2059 = vld [vmem:[#allocation8 + $0x970] sm:$0xff]
    %v2060 = vld [vmem:[#allocation8 + $0x978] sm:$0xff]
    %v2061 = vld [vmem:[#allocation8 + $0x980] sm:$0xff]
    %v2062 = vld [vmem:[#allocation8 + $0x988] sm:$0xff]
    %v2063 = vld [vmem:[#allocation8 + $0x990] sm:$0xff]
    %v2064 = vld [vmem:[#allocation8 + $0x998] sm:$0xff]
    %v2065 = vld [vmem:[#allocation8 + $0x9a0] sm:$0xff]
    %v2066 = vld [vmem:[#allocation8 + $0x9a8] sm:$0xff]
    %v2067 = vld [vmem:[#allocation8 + $0x9b0] sm:$0xff]
    %v2068 = vld [vmem:[#allocation8 + $0x9b8] sm:$0xff]
    %v2069 = vld [vmem:[#allocation8 + $0x9c0] sm:$0xff]
    %v2070 = vld [vmem:[#allocation8 + $0x9c8] sm:$0xff]
    %v2071 = vld [vmem:[#allocation8 + $0x9d0] sm:$0xff]
    %v2072 = vld [vmem:[#allocation8 + $0x9d8] sm:$0xff]
    %v2073 = vld [vmem:[#allocation8 + $0x9e0] sm:$0xff]
    %v2074 = vld [vmem:[#allocation8 + $0x9e8] sm:$0xff]
    %v2075 = vld [vmem:[#allocation8 + $0x9f0] sm:$0xff]
    %v2076 = vld [vmem:[#allocation8 + $0x9f8] sm:$0xff]
    %v2077 = vld [vmem:[#allocation8 + $0xa00] sm:$0xff]
    %v2078 = vld [vmem:[#allocation8 + $0xa08] sm:$0xff]
    %v2079 = vld [vmem:[#allocation8 + $0xa10] sm:$0xff]
    %v2080 = vld [vmem:[#allocation8 + $0xa18] sm:$0xff]
    %v2081 = vld [vmem:[#allocation8 + $0xa20] sm:$0xff]
    %v2082 = vld [vmem:[#allocation8 + $0xa28] sm:$0xff]
    %v2083 = vld [vmem:[#allocation8 + $0xa30] sm:$0xff]
    %v2084 = vld [vmem:[#allocation8 + $0xa38] sm:$0xff]
    %v2085 = vld [vmem:[#allocation8 + $0xa40] sm:$0xff]
    %v2086 = vld [vmem:[#allocation8 + $0xa48] sm:$0xff]
    %v2087 = vld [vmem:[#allocation8 + $0xa50] sm:$0xff]
    %v2088 = vld [vmem:[#allocation8 + $0xa58] sm:$0xff]
    %v2089 = vld [vmem:[#allocation8 + $0xa60] sm:$0xff]
    %v2090 = vld [vmem:[#allocation8 + $0xa68] sm:$0xff]
    %v2091 = vld [vmem:[#allocation8 + $0xa70] sm:$0xff]
    %v2092 = vld [vmem:[#allocation8 + $0xa78] sm:$0xff]
    %v2093 = vld [vmem:[#allocation8 + $0xa80] sm:$0xff]
    %v2094 = vld [vmem:[#allocation8 + $0xa88] sm:$0xff]
    %v2095 = vld [vmem:[#allocation8 + $0xa90] sm:$0xff]
    %v2096 = vld [vmem:[#allocation8 + $0xa98] sm:$0xff]
    %v2097 = vld [vmem:[#allocation8 + $0xaa0] sm:$0xff]
    %v2098 = vld [vmem:[#allocation8 + $0xaa8] sm:$0xff]
    %v2099 = vld [vmem:[#allocation8 + $0xab0] sm:$0xff]
    %v2100 = vld [vmem:[#allocation8 + $0xab8] sm:$0xff]
    %v2101 = vld [vmem:[#allocation8 + $0xac0] sm:$0xff]
    %v2102 = vld [vmem:[#allocation8 + $0xac8] sm:$0xff]
    %v2103 = vld [vmem:[#allocation8 + $0xad0] sm:$0xff]
    %v2104 = vld [vmem:[#allocation8 + $0xad8] sm:$0xff]
    %v2105 = vld [vmem:[#allocation8 + $0xae0] sm:$0xff]
    %v2106 = vld [vmem:[#allocation8 + $0xae8] sm:$0xff]
    %v2107 = vld [vmem:[#allocation8 + $0xaf0] sm:$0xff]
    %v2108 = vld [vmem:[#allocation8 + $0xaf8] sm:$0xff]
    %v2109 = vld [vmem:[#allocation8 + $0xb00] sm:$0xff]
    %v2110 = vld [vmem:[#allocation8 + $0xb08] sm:$0xff]
    %v2111 = vld [vmem:[#allocation8 + $0xb10] sm:$0xff]
    %v2112 = vld [vmem:[#allocation8 + $0xb18] sm:$0xff]
    %v2113 = vld [vmem:[#allocation8 + $0xb20] sm:$0xff]
    %v2114 = vld [vmem:[#allocation8 + $0xb28] sm:$0xff]
    %v2115 = vld [vmem:[#allocation8 + $0xb30] sm:$0xff]
    %v2116 = vld [vmem:[#allocation8 + $0xb38] sm:$0xff]
    %v2117 = vld [vmem:[#allocation8 + $0xb40] sm:$0xff]
    %v2118 = vld [vmem:[#allocation8 + $0xb48] sm:$0xff]
    %v2119 = vld [vmem:[#allocation8 + $0xb50] sm:$0xff]
    %v2120 = vld [vmem:[#allocation8 + $0xb58] sm:$0xff]
    %v2121 = vld [vmem:[#allocation8 + $0xb60] sm:$0xff]
    %v2122 = vld [vmem:[#allocation8 + $0xb68] sm:$0xff]
    %v2123 = vld [vmem:[#allocation8 + $0xb70] sm:$0xff]
    %v2124 = vld [vmem:[#allocation8 + $0xb78] sm:$0xff]
    %v2125 = vld [vmem:[#allocation8 + $0xb80] sm:$0xff]
    %v2126 = vld [vmem:[#allocation8 + $0xb88] sm:$0xff]
    %v2127 = vld [vmem:[#allocation8 + $0xb90] sm:$0xff]
    %v2128 = vld [vmem:[#allocation8 + $0xb98] sm:$0xff]
    %v2129 = vld [vmem:[#allocation8 + $0xba0] sm:$0xff]
    %v2130 = vld [vmem:[#allocation8 + $0xba8] sm:$0xff]
    %v2131 = vld [vmem:[#allocation8 + $0xbb0] sm:$0xff]
    %v2132 = vld [vmem:[#allocation8 + $0xbb8] sm:$0xff]
    %v2133 = vld [vmem:[#allocation8 + $0xbc0] sm:$0xff]
    %v2134 = vld [vmem:[#allocation8 + $0xbc8] sm:$0xff]
    %v2135 = vld [vmem:[#allocation8 + $0xbd0] sm:$0xff]
    %v2136 = vld [vmem:[#allocation8 + $0xbd8] sm:$0xff]
    %v2137 = vld [vmem:[#allocation8 + $0xbe0] sm:$0xff]
    %v2138 = vld [vmem:[#allocation8 + $0xbe8] sm:$0xff]
    %v2139 = vld [vmem:[#allocation8 + $0xbf0] sm:$0xff]
    %v2140 = vld [vmem:[#allocation8 + $0xbf8] sm:$0xff]
    %v2141 = vld [vmem:[#allocation8 + $0xc00] sm:$0xff]
    %v2142 = vld [vmem:[#allocation8 + $0xc08] sm:$0xff]
    %v2143 = vld [vmem:[#allocation8 + $0xc10] sm:$0xff]
    %v2144 = vld [vmem:[#allocation8 + $0xc18] sm:$0xff]
    %v2145 = vld [vmem:[#allocation8 + $0xc20] sm:$0xff]
    %v2146 = vld [vmem:[#allocation8 + $0xc28] sm:$0xff]
    %v2147 = vld [vmem:[#allocation8 + $0xc30] sm:$0xff]
    %v2148 = vld [vmem:[#allocation8 + $0xc38] sm:$0xff]
    %v2149 = vld [vmem:[#allocation8 + $0xc40] sm:$0xff]
    %v2150 = vld [vmem:[#allocation8 + $0xc48] sm:$0xff]
    %v2151 = vld [vmem:[#allocation8 + $0xc50] sm:$0xff]
    %v2152 = vld [vmem:[#allocation8 + $0xc58] sm:$0xff]
    %v2153 = vld [vmem:[#allocation8 + $0xc60] sm:$0xff]
    %v2154 = vld [vmem:[#allocation8 + $0xc68] sm:$0xff]
    %v2155 = vld [vmem:[#allocation8 + $0xc70] sm:$0xff]
    %v2156 = vld [vmem:[#allocation8 + $0xc78] sm:$0xff]
    %v2157 = vld [vmem:[#allocation8 + $0xc80] sm:$0xff]
    %v2158 = vld [vmem:[#allocation8 + $0xc88] sm:$0xff]
    %v2159 = vld [vmem:[#allocation8 + $0xc90] sm:$0xff]
    %v2160 = vld [vmem:[#allocation8 + $0xc98] sm:$0xff]
    %v2161 = vld [vmem:[#allocation8 + $0xca0] sm:$0xff]
    %v2162 = vld [vmem:[#allocation8 + $0xca8] sm:$0xff]
    %v2163 = vld [vmem:[#allocation8 + $0xcb0] sm:$0xff]
    %v2164 = vld [vmem:[#allocation8 + $0xcb8] sm:$0xff]
    %v2165 = vld [vmem:[#allocation8 + $0xcc0] sm:$0xff]
    %v2166 = vld [vmem:[#allocation8 + $0xcc8] sm:$0xff]
    %v2167 = vld [vmem:[#allocation8 + $0xcd0] sm:$0xff]
    %v2168 = vld [vmem:[#allocation8 + $0xcd8] sm:$0xff]
    %v2169 = vld [vmem:[#allocation8 + $0xce0] sm:$0xff]
    %v2170 = vld [vmem:[#allocation8 + $0xce8] sm:$0xff]
    %v2171 = vld [vmem:[#allocation8 + $0xcf0] sm:$0xff]
    %v2172 = vld [vmem:[#allocation8 + $0xcf8] sm:$0xff]
    %v2173 = vld [vmem:[#allocation8 + $0xd00] sm:$0xff]
    %v2174 = vld [vmem:[#allocation8 + $0xd08] sm:$0xff]
    %v2175 = vld [vmem:[#allocation8 + $0xd10] sm:$0xff]
    %v2176 = vld [vmem:[#allocation8 + $0xd18] sm:$0xff]
    %v2177 = vld [vmem:[#allocation8 + $0xd20] sm:$0xff]
    %v2178 = vld [vmem:[#allocation8 + $0xd28] sm:$0xff]
    %v2179 = vld [vmem:[#allocation8 + $0xd30] sm:$0xff]
    %v2180 = vld [vmem:[#allocation8 + $0xd38] sm:$0xff]
    %v2181 = vld [vmem:[#allocation8 + $0xd40] sm:$0xff]
    %v2182 = vld [vmem:[#allocation8 + $0xd48] sm:$0xff]
    %v2183 = vld [vmem:[#allocation8 + $0xd50] sm:$0xff]
    %v2184 = vld [vmem:[#allocation8 + $0xd58] sm:$0xff]
    %v2185 = vld [vmem:[#allocation8 + $0xd60] sm:$0xff]
    %v2186 = vld [vmem:[#allocation8 + $0xd68] sm:$0xff]
    %v2187 = vld [vmem:[#allocation8 + $0xd70] sm:$0xff]
    %v2188 = vld [vmem:[#allocation8 + $0xd78] sm:$0xff]
    %v2189 = vld [vmem:[#allocation8 + $0xd80] sm:$0xff]
    %v2190 = vld [vmem:[#allocation8 + $0xd88] sm:$0xff]
    %v2191 = vld [vmem:[#allocation8 + $0xd90] sm:$0xff]
    %v2192 = vld [vmem:[#allocation8 + $0xd98] sm:$0xff]
    %v2193 = vld [vmem:[#allocation8 + $0xda0] sm:$0xff]
    %v2194 = vld [vmem:[#allocation8 + $0xda8] sm:$0xff]
    %v2195 = vld [vmem:[#allocation8 + $0xdb0] sm:$0xff]
    %v2196 = vld [vmem:[#allocation8 + $0xdb8] sm:$0xff]
    %v2197 = vld [vmem:[#allocation8 + $0xdc0] sm:$0xff]
    %v2198 = vld [vmem:[#allocation8 + $0xdc8] sm:$0xff]
    %v2199 = vld [vmem:[#allocation8 + $0xdd0] sm:$0xff]
    %v2200 = vld [vmem:[#allocation8 + $0xdd8] sm:$0xff]
    %v2201 = vld [vmem:[#allocation8 + $0xde0] sm:$0xff]
    %v2202 = vld [vmem:[#allocation8 + $0xde8] sm:$0xff]
    %v2203 = vld [vmem:[#allocation8 + $0xdf0] sm:$0xff]
    %v2204 = vld [vmem:[#allocation8 + $0xdf8] sm:$0xff]
    %v2205 = vld [vmem:[#allocation8 + $0xe00] sm:$0xff]
    %v2206 = vld [vmem:[#allocation8 + $0xe08] sm:$0xff]
    %v2207 = vld [vmem:[#allocation8 + $0xe10] sm:$0xff]
    %v2208 = vld [vmem:[#allocation8 + $0xe18] sm:$0xff]
    %v2209 = vld [vmem:[#allocation8 + $0xe20] sm:$0xff]
    %v2210 = vld [vmem:[#allocation8 + $0xe28] sm:$0xff]
    %v2211 = vld [vmem:[#allocation8 + $0xe30] sm:$0xff]
    %v2212 = vld [vmem:[#allocation8 + $0xe38] sm:$0xff]
    %v2213 = vld [vmem:[#allocation8 + $0xe40] sm:$0xff]
    %v2214 = vld [vmem:[#allocation8 + $0xe48] sm:$0xff]
    %v2215 = vld [vmem:[#allocation8 + $0xe50] sm:$0xff]
    %v2216 = vld [vmem:[#allocation8 + $0xe58] sm:$0xff]
    %v2217 = vld [vmem:[#allocation8 + $0xe60] sm:$0xff]
    %v2218 = vld [vmem:[#allocation8 + $0xe68] sm:$0xff]
    %v2219 = vld [vmem:[#allocation8 + $0xe70] sm:$0xff]
    %v2220 = vld [vmem:[#allocation8 + $0xe78] sm:$0xff]
    %v2221 = vld [vmem:[#allocation8 + $0xe80] sm:$0xff]
    %v2222 = vld [vmem:[#allocation8 + $0xe88] sm:$0xff]
    %v2223 = vld [vmem:[#allocation8 + $0xe90] sm:$0xff]
    %v2224 = vld [vmem:[#allocation8 + $0xe98] sm:$0xff]
    %v2225 = vld [vmem:[#allocation8 + $0xea0] sm:$0xff]
    %v2226 = vld [vmem:[#allocation8 + $0xea8] sm:$0xff]
    %v2227 = vld [vmem:[#allocation8 + $0xeb0] sm:$0xff]
    %v2228 = vld [vmem:[#allocation8 + $0xeb8] sm:$0xff]
    %v2229 = vld [vmem:[#allocation8 + $0xec0] sm:$0xff]
    %v2230 = vld [vmem:[#allocation8 + $0xec8] sm:$0xff]
    %v2231 = vld [vmem:[#allocation8 + $0xed0] sm:$0xff]
    %v2232 = vld [vmem:[#allocation8 + $0xed8] sm:$0xff]
    %v2233 = vld [vmem:[#allocation8 + $0xee0] sm:$0xff]
    %v2234 = vld [vmem:[#allocation8 + $0xee8] sm:$0xff]
    %v2235 = vld [vmem:[#allocation8 + $0xef0] sm:$0xff]
    %v2236 = vld [vmem:[#allocation8 + $0xef8] sm:$0xff]
    %v2237 = vld [vmem:[#allocation8 + $0xf00] sm:$0xff]
    %v2238 = vld [vmem:[#allocation8 + $0xf08] sm:$0xff]
    %v2239 = vld [vmem:[#allocation8 + $0xf10] sm:$0xff]
    %v2240 = vld [vmem:[#allocation8 + $0xf18] sm:$0xff]
    %v2241 = vld [vmem:[#allocation8 + $0xf20] sm:$0xff]
    %v2242 = vld [vmem:[#allocation8 + $0xf28] sm:$0xff]
    %v2243 = vld [vmem:[#allocation8 + $0xf30] sm:$0xff]
    %v2244 = vld [vmem:[#allocation8 + $0xf38] sm:$0xff]
    %v2245 = vld [vmem:[#allocation8 + $0xf40] sm:$0xff]
    %v2246 = vld [vmem:[#allocation8 + $0xf48] sm:$0xff]
    %v2247 = vld [vmem:[#allocation8 + $0xf50] sm:$0xff]
    %v2248 = vld [vmem:[#allocation8 + $0xf58] sm:$0xff]
    %v2249 = vld [vmem:[#allocation8 + $0xf60] sm:$0xff]
    %v2250 = vld [vmem:[#allocation8 + $0xf68] sm:$0xff]
    %v2251 = vld [vmem:[#allocation8 + $0xf70] sm:$0xff]
    %v2252 = vld [vmem:[#allocation8 + $0xf78] sm:$0xff]
    %v2253 = vld [vmem:[#allocation8 + $0xf80] sm:$0xff]
    %v2254 = vld [vmem:[#allocation8 + $0xf88] sm:$0xff]
    %v2255 = vld [vmem:[#allocation8 + $0xf90] sm:$0xff]
    %v2256 = vld [vmem:[#allocation8 + $0xf98] sm:$0xff]
    %v2257 = vld [vmem:[#allocation8 + $0xfa0] sm:$0xff]
    %v2258 = vld [vmem:[#allocation8 + $0xfa8] sm:$0xff]
    %v2259 = vld [vmem:[#allocation8 + $0xfb0] sm:$0xff]
    %v2260 = vld [vmem:[#allocation8 + $0xfb8] sm:$0xff]
    %v2261 = vld [vmem:[#allocation8 + $0xfc0] sm:$0xff]
    %v2262 = vld [vmem:[#allocation8 + $0xfc8] sm:$0xff]
    %v2263 = vld [vmem:[#allocation8 + $0xfd0] sm:$0xff]
    %v2264 = vld [vmem:[#allocation8 + $0xfd8] sm:$0xff]
    %v2265 = vld [vmem:[#allocation8 + $0xfe0] sm:$0xff]
    %v2266 = vld [vmem:[#allocation8 + $0xfe8] sm:$0xff]
    %v2267 = vld [vmem:[#allocation8 + $0xff0] sm:$0xff]
    %v2268 = vld [vmem:[#allocation8 + $0xff8] sm:$0xff]
    %v2269 = vld [vmem:[#allocation8 + $0x1000] sm:$0xff]
    %v2270 = vld [vmem:[#allocation8 + $0x1008] sm:$0xff]
    %v2271 = vld [vmem:[#allocation8 + $0x1010] sm:$0xff]
    %v2272 = vld [vmem:[#allocation8 + $0x1018] sm:$0xff]
    %v2273 = vld [vmem:[#allocation8 + $0x1020] sm:$0xff]
    %v2274 = vld [vmem:[#allocation8 + $0x1028] sm:$0xff]
    %v2275 = vld [vmem:[#allocation8 + $0x1030] sm:$0xff]
    %v2276 = vld [vmem:[#allocation8 + $0x1038] sm:$0xff]
    %v2277 = vld [vmem:[#allocation8 + $0x1040] sm:$0xff]
    %v2278 = vld [vmem:[#allocation8 + $0x1048] sm:$0xff]
    %v2279 = vld [vmem:[#allocation8 + $0x1050] sm:$0xff]
    %v2280 = vld [vmem:[#allocation8 + $0x1058] sm:$0xff]
    %v2281 = vld [vmem:[#allocation8 + $0x1060] sm:$0xff]
    %v2282 = vld [vmem:[#allocation8 + $0x1068] sm:$0xff]
    %v2283 = vld [vmem:[#allocation8 + $0x1070] sm:$0xff]
    %v2284 = vld [vmem:[#allocation8 + $0x1078] sm:$0xff]
    %v2285 = vld [vmem:[#allocation8 + $0x1080] sm:$0xff]
    %v2286 = vld [vmem:[#allocation8 + $0x1088] sm:$0xff]
    %v2287 = vld [vmem:[#allocation8 + $0x1090] sm:$0xff]
    %v2288 = vld [vmem:[#allocation8 + $0x1098] sm:$0xff]
    %v2289 = vld [vmem:[#allocation8 + $0x10a0] sm:$0xff]
    %v2290 = vld [vmem:[#allocation8 + $0x10a8] sm:$0xff]
    %v2291 = vld [vmem:[#allocation8 + $0x10b0] sm:$0xff]
    %v2292 = vld [vmem:[#allocation8 + $0x10b8] sm:$0xff]
    %v2293 = vld [vmem:[#allocation8 + $0x10c0] sm:$0xff]
    %v2294 = vld [vmem:[#allocation8 + $0x10c8] sm:$0xff]
    %v2295 = vld [vmem:[#allocation8 + $0x10d0] sm:$0xff]
    %v2296 = vld [vmem:[#allocation8 + $0x10d8] sm:$0xff]
    %v2297 = vld [vmem:[#allocation8 + $0x10e0] sm:$0xff]
    %v2298 = vld [vmem:[#allocation8 + $0x10e8] sm:$0xff]
    %v2299 = vld [vmem:[#allocation8 + $0x10f0] sm:$0xff]
    %v2300 = vld [vmem:[#allocation8 + $0x10f8] sm:$0xff]
    %v2301 = vld [vmem:[#allocation8 + $0x1100] sm:$0xff]
    %v2302 = vld [vmem:[#allocation8 + $0x1108] sm:$0xff]
    %v2303 = vld [vmem:[#allocation8 + $0x1110] sm:$0xff]
    %v2304 = vld [vmem:[#allocation8 + $0x1118] sm:$0xff]
    %v2305 = vld [vmem:[#allocation8 + $0x1120] sm:$0xff]
    %v2306 = vld [vmem:[#allocation8 + $0x1128] sm:$0xff]
    %v2307 = vld [vmem:[#allocation8 + $0x1130] sm:$0xff]
    %v2308 = vld [vmem:[#allocation8 + $0x1138] sm:$0xff]
    %v2309 = vld [vmem:[#allocation8 + $0x1140] sm:$0xff]
    %v2310 = vld [vmem:[#allocation8 + $0x1148] sm:$0xff]
    %v2311 = vld [vmem:[#allocation8 + $0x1150] sm:$0xff]
    %v2312 = vld [vmem:[#allocation8 + $0x1158] sm:$0xff]
    %v2313 = vld [vmem:[#allocation8 + $0x1160] sm:$0xff]
    %v2314 = vld [vmem:[#allocation8 + $0x1168] sm:$0xff]
    %v2315 = vld [vmem:[#allocation8 + $0x1170] sm:$0xff]
    %v2316 = vld [vmem:[#allocation8 + $0x1178] sm:$0xff]
    %v2317 = vld [vmem:[#allocation8 + $0x1180] sm:$0xff]
    %v2318 = vld [vmem:[#allocation8 + $0x1188] sm:$0xff]
    %v2319 = vld [vmem:[#allocation8 + $0x1190] sm:$0xff]
    %v2320 = vld [vmem:[#allocation8 + $0x1198] sm:$0xff]
    %v2321 = vld [vmem:[#allocation8 + $0x11a0] sm:$0xff]
    %v2322 = vld [vmem:[#allocation8 + $0x11a8] sm:$0xff]
    %v2323 = vld [vmem:[#allocation8 + $0x11b0] sm:$0xff]
    %v2324 = vld [vmem:[#allocation8 + $0x11b8] sm:$0xff]
    %v2325 = vld [vmem:[#allocation8 + $0x11c0] sm:$0xff]
    %v2326 = vld [vmem:[#allocation8 + $0x11c8] sm:$0xff]
    %v2327 = vld [vmem:[#allocation8 + $0x11d0] sm:$0xff]
    %v2328 = vld [vmem:[#allocation8 + $0x11d8] sm:$0xff]
    %v2329 = vld [vmem:[#allocation8 + $0x11e0] sm:$0xff]
    %v2330 = vld [vmem:[#allocation8 + $0x11e8] sm:$0xff]
    %v2331 = vld [vmem:[#allocation8 + $0x11f0] sm:$0xff]
    %v2332 = vld [vmem:[#allocation8 + $0x11f8] sm:$0xff]
    %v2333 = vld [vmem:[#allocation8 + $0x1200] sm:$0xff]
    %v2334 = vld [vmem:[#allocation8 + $0x1208] sm:$0xff]
    %v2335 = vld [vmem:[#allocation8 + $0x1210] sm:$0xff]
    %v2336 = vld [vmem:[#allocation8 + $0x1218] sm:$0xff]
    %v2337 = vld [vmem:[#allocation8 + $0x1220] sm:$0xff]
    %v2338 = vld [vmem:[#allocation8 + $0x1228] sm:$0xff]
    %v2339 = vld [vmem:[#allocation8 + $0x1230] sm:$0xff]
    %v2340 = vld [vmem:[#allocation8 + $0x1238] sm:$0xff]
    %v2341 = vld [vmem:[#allocation8 + $0x1240] sm:$0xff]
    %v2342 = vld [vmem:[#allocation8 + $0x1248] sm:$0xff]
    %v2343 = vld [vmem:[#allocation8 + $0x1250] sm:$0xff]
    %v2344 = vld [vmem:[#allocation8 + $0x1258] sm:$0xff]
    %v2345 = vld [vmem:[#allocation8 + $0x1260] sm:$0xff]
    %v2346 = vld [vmem:[#allocation8 + $0x1268] sm:$0xff]
    %v2347 = vld [vmem:[#allocation8 + $0x1270] sm:$0xff]
    %v2348 = vld [vmem:[#allocation8 + $0x1278] sm:$0xff]
    %v2349 = vld [vmem:[#allocation8 + $0x1280] sm:$0xff]
    %v2350 = vld [vmem:[#allocation8 + $0x1288] sm:$0xff]
    %v2351 = vld [vmem:[#allocation8 + $0x1290] sm:$0xff]
    %v2352 = vld [vmem:[#allocation8 + $0x1298] sm:$0xff]
    %v2353 = vld [vmem:[#allocation8 + $0x12a0] sm:$0xff]
    %v2354 = vld [vmem:[#allocation8 + $0x12a8] sm:$0xff]
    %v2355 = vld [vmem:[#allocation8 + $0x12b0] sm:$0xff]
    %v2356 = vld [vmem:[#allocation8 + $0x12b8] sm:$0xff]
    %v2357 = vld [vmem:[#allocation8 + $0x12c0] sm:$0xff]
    %v2358 = vld [vmem:[#allocation8 + $0x12c8] sm:$0xff]
    %v2359 = vld [vmem:[#allocation8 + $0x12d0] sm:$0xff]
    %v2360 = vld [vmem:[#allocation8 + $0x12d8] sm:$0xff]
    %v2361 = vld [vmem:[#allocation8 + $0x12e0] sm:$0xff]
    %v2362 = vld [vmem:[#allocation8 + $0x12e8] sm:$0xff]
    %v2363 = vld [vmem:[#allocation8 + $0x12f0] sm:$0xff]
    %v2364 = vld [vmem:[#allocation8 + $0x12f8] sm:$0xff]
    %v2365 = vld [vmem:[#allocation8 + $0x1300] sm:$0xff]
    %v2366 = vld [vmem:[#allocation8 + $0x1308] sm:$0xff]
    %v2367 = vld [vmem:[#allocation8 + $0x1310] sm:$0xff]
    %v2368 = vld [vmem:[#allocation8 + $0x1318] sm:$0xff]
    %v2369 = vld [vmem:[#allocation8 + $0x1320] sm:$0xff]
    %v2370 = vld [vmem:[#allocation8 + $0x1328] sm:$0xff]
    %v2371 = vld [vmem:[#allocation8 + $0x1330] sm:$0xff]
    %v2372 = vld [vmem:[#allocation8 + $0x1338] sm:$0xff]
    %v2373 = vld [vmem:[#allocation8 + $0x1340] sm:$0xff]
    %v2374 = vld [vmem:[#allocation8 + $0x1348] sm:$0xff]
    %v2375 = vld [vmem:[#allocation8 + $0x1350] sm:$0xff]
    %v2376 = vld [vmem:[#allocation8 + $0x1358] sm:$0xff]
    %v2377 = vld [vmem:[#allocation8 + $0x1360] sm:$0xff]
    %v2378 = vld [vmem:[#allocation8 + $0x1368] sm:$0xff]
    %v2379 = vld [vmem:[#allocation8 + $0x1370] sm:$0xff]
    %v2380 = vld [vmem:[#allocation8 + $0x1378] sm:$0xff]
    %v2381 = vld [vmem:[#allocation8 + $0x1380] sm:$0xff]
    %v2382 = vld [vmem:[#allocation8 + $0x1388] sm:$0xff]
    %v2383 = vld [vmem:[#allocation8 + $0x1390] sm:$0xff]
    %v2384 = vld [vmem:[#allocation8 + $0x1398] sm:$0xff]
    %v2385 = vld [vmem:[#allocation8 + $0x13a0] sm:$0xff]
    %v2386 = vld [vmem:[#allocation8 + $0x13a8] sm:$0xff]
    %v2387 = vld [vmem:[#allocation8 + $0x13b0] sm:$0xff]
    %v2388 = vld [vmem:[#allocation8 + $0x13b8] sm:$0xff]
    %v2389 = vld [vmem:[#allocation8 + $0x13c0] sm:$0xff]
    %v2390 = vld [vmem:[#allocation8 + $0x13c8] sm:$0xff]
    %v2391 = vld [vmem:[#allocation8 + $0x13d0] sm:$0xff]
    %v2392 = vld [vmem:[#allocation8 + $0x13d8] sm:$0xff]
    %v2393 = vld [vmem:[#allocation8 + $0x13e0] sm:$0xff]
    %v2394 = vld [vmem:[#allocation8 + $0x13e8] sm:$0xff]
    %v2395 = vld [vmem:[#allocation8 + $0x13f0] sm:$0xff]
    %v2396 = vld [vmem:[#allocation8 + $0x13f8] sm:$0xff]
    %v2397 = vld [vmem:[#allocation8 + $0x1400] sm:$0xff]
    %v2398 = vld [vmem:[#allocation8 + $0x1408] sm:$0xff]
    %v2399 = vld [vmem:[#allocation8 + $0x1410] sm:$0xff]
    %v2400 = vld [vmem:[#allocation8 + $0x1418] sm:$0xff]
    %v2401 = vld [vmem:[#allocation8 + $0x1420] sm:$0xff]
    %v2402 = vld [vmem:[#allocation8 + $0x1428] sm:$0xff]
    %v2403 = vld [vmem:[#allocation8 + $0x1430] sm:$0xff]
    %v2404 = vld [vmem:[#allocation8 + $0x1438] sm:$0xff]
    %v2405 = vld [vmem:[#allocation8 + $0x1440] sm:$0xff]
    %v2406 = vld [vmem:[#allocation8 + $0x1448] sm:$0xff]
    %v2407 = vld [vmem:[#allocation8 + $0x1450] sm:$0xff]
    %v2408 = vld [vmem:[#allocation8 + $0x1458] sm:$0xff]
    %v2409 = vld [vmem:[#allocation8 + $0x1460] sm:$0xff]
    %v2410 = vld [vmem:[#allocation8 + $0x1468] sm:$0xff]
    %v2411 = vld [vmem:[#allocation8 + $0x1470] sm:$0xff]
    %v2412 = vld [vmem:[#allocation8 + $0x1478] sm:$0xff]
    %v2413 = vld [vmem:[#allocation8 + $0x1480] sm:$0xff]
    %v2414 = vld [vmem:[#allocation8 + $0x1488] sm:$0xff]
    %v2415 = vld [vmem:[#allocation8 + $0x1490] sm:$0xff]
    %v2416 = vld [vmem:[#allocation8 + $0x1498] sm:$0xff]
    %v2417 = vld [vmem:[#allocation8 + $0x14a0] sm:$0xff]
    %v2418 = vld [vmem:[#allocation8 + $0x14a8] sm:$0xff]
    %v2419 = vld [vmem:[#allocation8 + $0x14b0] sm:$0xff]
    %v2420 = vld [vmem:[#allocation8 + $0x14b8] sm:$0xff]
    %v2421 = vld [vmem:[#allocation8 + $0x14c0] sm:$0xff]
    %v2422 = vld [vmem:[#allocation8 + $0x14c8] sm:$0xff]
    %v2423 = vld [vmem:[#allocation8 + $0x14d0] sm:$0xff]
    %v2424 = vld [vmem:[#allocation8 + $0x14d8] sm:$0xff]
    %v2425 = vld [vmem:[#allocation8 + $0x14e0] sm:$0xff]
    %v2426 = vld [vmem:[#allocation8 + $0x14e8] sm:$0xff]
    %v2427 = vld [vmem:[#allocation8 + $0x14f0] sm:$0xff]
    %v2428 = vld [vmem:[#allocation8 + $0x14f8] sm:$0xff]
    %v2429 = vld [vmem:[#allocation8 + $0x1500] sm:$0xff]
    %v2430 = vld [vmem:[#allocation8 + $0x1508] sm:$0xff]
    %v2431 = vld [vmem:[#allocation8 + $0x1510] sm:$0xff]
    %v2432 = vld [vmem:[#allocation8 + $0x1518] sm:$0xff]
    %v2433 = vld [vmem:[#allocation8 + $0x1520] sm:$0xff]
    %v2434 = vld [vmem:[#allocation8 + $0x1528] sm:$0xff]
    %v2435 = vld [vmem:[#allocation8 + $0x1530] sm:$0xff]
    %v2436 = vld [vmem:[#allocation8 + $0x1538] sm:$0xff]
    %v2437 = vld [vmem:[#allocation8 + $0x1540] sm:$0xff]
    %v2438 = vld [vmem:[#allocation8 + $0x1548] sm:$0xff]
    %v2439 = vld [vmem:[#allocation8 + $0x1550] sm:$0xff]
    %v2440 = vld [vmem:[#allocation8 + $0x1558] sm:$0xff]
    %v2441 = vld [vmem:[#allocation8 + $0x1560] sm:$0xff]
    %v2442 = vld [vmem:[#allocation8 + $0x1568] sm:$0xff]
    %v2443 = vld [vmem:[#allocation8 + $0x1570] sm:$0xff]
    %v2444 = vld [vmem:[#allocation8 + $0x1578] sm:$0xff]
    %v2445 = vld [vmem:[#allocation8 + $0x1580] sm:$0xff]
    %v2446 = vld [vmem:[#allocation8 + $0x1588] sm:$0xff]
    %v2447 = vld [vmem:[#allocation8 + $0x1590] sm:$0xff]
    %v2448 = vld [vmem:[#allocation8 + $0x1598] sm:$0xff]
    %v2449 = vld [vmem:[#allocation8 + $0x15a0] sm:$0xff]
    %v2450 = vld [vmem:[#allocation8 + $0x15a8] sm:$0xff]
    %v2451 = vld [vmem:[#allocation8 + $0x15b0] sm:$0xff]
    %v2452 = vld [vmem:[#allocation8 + $0x15b8] sm:$0xff]
    %v2453 = vld [vmem:[#allocation8 + $0x15c0] sm:$0xff]
    %v2454 = vld [vmem:[#allocation8 + $0x15c8] sm:$0xff]
    %v2455 = vld [vmem:[#allocation8 + $0x15d0] sm:$0xff]
    %v2456 = vld [vmem:[#allocation8 + $0x15d8] sm:$0xff]
    %v2457 = vld [vmem:[#allocation8 + $0x15e0] sm:$0xff]
    %v2458 = vld [vmem:[#allocation8 + $0x15e8] sm:$0xff]
    %v2459 = vld [vmem:[#allocation8 + $0x15f0] sm:$0xff]
    %v2460 = vld [vmem:[#allocation8 + $0x15f8] sm:$0xff]
    %v2461 = vld [vmem:[#allocation8 + $0x1600] sm:$0xff]
    %v2462 = vld [vmem:[#allocation8 + $0x1608] sm:$0xff]
    %v2463 = vld [vmem:[#allocation8 + $0x1610] sm:$0xff]
    %v2464 = vld [vmem:[#allocation8 + $0x1618] sm:$0xff]
    %v2465 = vld [vmem:[#allocation8 + $0x1620] sm:$0xff]
    %v2466 = vld [vmem:[#allocation8 + $0x1628] sm:$0xff]
    %v2467 = vld [vmem:[#allocation8 + $0x1630] sm:$0xff]
    %v2468 = vld [vmem:[#allocation8 + $0x1638] sm:$0xff]
    %v2469 = vld [vmem:[#allocation8 + $0x1640] sm:$0xff]
    %v2470 = vld [vmem:[#allocation8 + $0x1648] sm:$0xff]
    %v2471 = vld [vmem:[#allocation8 + $0x1650] sm:$0xff]
    %v2472 = vld [vmem:[#allocation8 + $0x1658] sm:$0xff]
    %v2473 = vld [vmem:[#allocation8 + $0x1660] sm:$0xff]
    %v2474 = vld [vmem:[#allocation8 + $0x1668] sm:$0xff]
    %v2475 = vld [vmem:[#allocation8 + $0x1670] sm:$0xff]
    %v2476 = vld [vmem:[#allocation8 + $0x1678] sm:$0xff]
    %v2477 = vld [vmem:[#allocation8 + $0x1680] sm:$0xff]
    %v2478 = vld [vmem:[#allocation8 + $0x1688] sm:$0xff]
    %v2479 = vld [vmem:[#allocation8 + $0x1690] sm:$0xff]
    %v2480 = vld [vmem:[#allocation8 + $0x1698] sm:$0xff]
    %v2481 = vld [vmem:[#allocation8 + $0x16a0] sm:$0xff]
    %v2482 = vld [vmem:[#allocation8 + $0x16a8] sm:$0xff]
    %v2483 = vld [vmem:[#allocation8 + $0x16b0] sm:$0xff]
    %v2484 = vld [vmem:[#allocation8 + $0x16b8] sm:$0xff]
    %v2485 = vld [vmem:[#allocation8 + $0x16c0] sm:$0xff]
    %v2486 = vld [vmem:[#allocation8 + $0x16c8] sm:$0xff]
    %v2487 = vld [vmem:[#allocation8 + $0x16d0] sm:$0xff]
    %v2488 = vld [vmem:[#allocation8 + $0x16d8] sm:$0xff]
    %v2489 = vld [vmem:[#allocation8 + $0x16e0] sm:$0xff]
    %v2490 = vld [vmem:[#allocation8 + $0x16e8] sm:$0xff]
    %v2491 = vld [vmem:[#allocation8 + $0x16f0] sm:$0xff]
    %v2492 = vld [vmem:[#allocation8 + $0x16f8] sm:$0xff]
    %v2493 = vld [vmem:[#allocation8 + $0x1700] sm:$0xff]
    %v2494 = vld [vmem:[#allocation8 + $0x1708] sm:$0xff]
    %v2495 = vld [vmem:[#allocation8 + $0x1710] sm:$0xff]
    %v2496 = vld [vmem:[#allocation8 + $0x1718] sm:$0xff]
    %v2497 = vld [vmem:[#allocation8 + $0x1720] sm:$0xff]
    %v2498 = vld [vmem:[#allocation8 + $0x1728] sm:$0xff]
    %v2499 = vld [vmem:[#allocation8 + $0x1730] sm:$0xff]
    %v2500 = vld [vmem:[#allocation8 + $0x1738] sm:$0xff]
    %v2501 = vld [vmem:[#allocation8 + $0x1740] sm:$0xff]
    %v2502 = vld [vmem:[#allocation8 + $0x1748] sm:$0xff]
    %v2503 = vld [vmem:[#allocation8 + $0x1750] sm:$0xff]
    %v2504 = vld [vmem:[#allocation8 + $0x1758] sm:$0xff]
    %v2505 = vld [vmem:[#allocation8 + $0x1760] sm:$0xff]
    %v2506 = vld [vmem:[#allocation8 + $0x1768] sm:$0xff]
    %v2507 = vld [vmem:[#allocation8 + $0x1770] sm:$0xff]
    %v2508 = vld [vmem:[#allocation8 + $0x1778] sm:$0xff]
    %v2509 = vld [vmem:[#allocation8 + $0x1780] sm:$0xff]
    %v2510 = vld [vmem:[#allocation8 + $0x1788] sm:$0xff]
    %v2511 = vld [vmem:[#allocation8 + $0x1790] sm:$0xff]
    %v2512 = vld [vmem:[#allocation8 + $0x1798] sm:$0xff]
    %v2513 = vld [vmem:[#allocation8 + $0x17a0] sm:$0xff]
    %v2514 = vld [vmem:[#allocation8 + $0x17a8] sm:$0xff]
    %v2515 = vld [vmem:[#allocation8 + $0x17b0] sm:$0xff]
    %v2516 = vld [vmem:[#allocation8 + $0x17b8] sm:$0xff]
    %v2517 = vld [vmem:[#allocation8 + $0x17c0] sm:$0xff]
    %v2518 = vld [vmem:[#allocation8 + $0x17c8] sm:$0xff]
    %v2519 = vld [vmem:[#allocation8 + $0x17d0] sm:$0xff]
    %v2520 = vld [vmem:[#allocation8 + $0x17d8] sm:$0xff]
    %v2521 = vld [vmem:[#allocation8 + $0x17e0] sm:$0xff]
    %v2522 = vld [vmem:[#allocation8 + $0x17e8] sm:$0xff]
    %v2523 = vld [vmem:[#allocation8 + $0x17f0] sm:$0xff]
    %v2524 = vld [vmem:[#allocation8 + $0x17f8] sm:$0xff]
    %v2525 = vld [vmem:[#allocation8 + $0x1800] sm:$0xff]
    %v2526 = vld [vmem:[#allocation8 + $0x1808] sm:$0xff]
    %v2527 = vld [vmem:[#allocation8 + $0x1810] sm:$0xff]
    %v2528 = vld [vmem:[#allocation8 + $0x1818] sm:$0xff]
    %v2529 = vld [vmem:[#allocation8 + $0x1820] sm:$0xff]
    %v2530 = vld [vmem:[#allocation8 + $0x1828] sm:$0xff]
    %v2531 = vld [vmem:[#allocation8 + $0x1830] sm:$0xff]
    %v2532 = vld [vmem:[#allocation8 + $0x1838] sm:$0xff]
    %v2533 = vld [vmem:[#allocation8 + $0x1840] sm:$0xff]
    %v2534 = vld [vmem:[#allocation8 + $0x1848] sm:$0xff]
    %v2535 = vld [vmem:[#allocation8 + $0x1850] sm:$0xff]
    %v2536 = vld [vmem:[#allocation8 + $0x1858] sm:$0xff]
    %v2537 = vld [vmem:[#allocation8 + $0x1860] sm:$0xff]
    %v2538 = vld [vmem:[#allocation8 + $0x1868] sm:$0xff]
    %v2539 = vld [vmem:[#allocation8 + $0x1870] sm:$0xff]
    %v2540 = vld [vmem:[#allocation8 + $0x1878] sm:$0xff]
    %v2541 = vld [vmem:[#allocation10] sm:$0xf]
    %v2543 = vlaneseq
    %v2544 = vshrl.u32 %v2543, 7
    %v2545 = vsub.s32 0, %v2544
    %v2546 = vrot.slane %v2541, %v2545
    %v2547 = vlaneseq
    %v2548 = vshrl.u32 %v2547, 7
    %v2549 = vsub.s32 1, %v2548
    %v2550 = vrot.slane %v2541, %v2549
    %v2551 = vlaneseq
    %v2552 = vshrl.u32 %v2551, 7
    %v2553 = vsub.s32 2, %v2552
    %v2554 = vrot.slane %v2541, %v2553
    %v2555 = vlaneseq
    %v2556 = vshrl.u32 %v2555, 7
    %v2557 = vsub.s32 3, %v2556
    %v2558 = vrot.slane %v2541, %v2557
    %v2576 = vunpack.c.l.b16 %v1744
    %v2577 = vunpack.c.h.b16 %v1744
    %v2578 = vunpack.c.l.b16 %v1745
    %v2579 = vunpack.c.h.b16 %v1745
    %v2580 = vunpack.c.l.b16 %v1746
    %v2581 = vunpack.c.h.b16 %v1746
    %v2582 = vunpack.c.l.b16 %v1747
    %v2583 = vunpack.c.h.b16 %v1747
    %v2584 = vunpack.c.l.b16 %v1748
    %v2585 = vunpack.c.h.b16 %v1748
    %v2586 = vunpack.c.l.b16 %v1749
    %v2587 = vunpack.c.h.b16 %v1749
    %v2588 = vunpack.c.l.b16 %v1750
    %v2589 = vunpack.c.h.b16 %v1750
    %v2590 = vunpack.c.l.b16 %v1751
    %v2591 = vunpack.c.h.b16 %v1751
    %v2592 = vunpack.c.l.b16 %v1752
    %v2593 = vunpack.c.h.b16 %v1752
    %v2594 = vunpack.c.l.b16 %v1753
    %v2595 = vunpack.c.h.b16 %v1753
    %v2596 = vunpack.c.l.b16 %v1754
    %v2597 = vunpack.c.h.b16 %v1754
    %v2598 = vunpack.c.l.b16 %v1755
    %v2599 = vunpack.c.h.b16 %v1755
    %v2600 = vunpack.c.l.b16 %v1756
    %v2601 = vpack.c.b16 %v2576, %v2576
    %v2602 = vpack.c.b16 %v2577, %v2577
    %v2603 = vpack.c.b16 %v2578, %v2578
    %v2604 = vpack.c.b16 %v2579, %v2579
    %v2605 = vpack.c.b16 %v2580, %v2580
    %v2606 = vpack.c.b16 %v2581, %v2581
    %v2607 = vpack.c.b16 %v2582, %v2582
    %v2608 = vpack.c.b16 %v2583, %v2583
    %v2609 = vpack.c.b16 %v2584, %v2584
    %v2610 = vpack.c.b16 %v2585, %v2585
    %v2611 = vpack.c.b16 %v2586, %v2586
    %v2612 = vpack.c.b16 %v2587, %v2587
    %v2613 = vpack.c.b16 %v2588, %v2588
    %v2614 = vpack.c.b16 %v2589, %v2589
    %v2615 = vpack.c.b16 %v2590, %v2590
    %v2616 = vpack.c.b16 %v2591, %v2591
    %v2617 = vpack.c.b16 %v2592, %v2592
    %v2618 = vpack.c.b16 %v2593, %v2593
    %v2619 = vpack.c.b16 %v2594, %v2594
    %v2620 = vpack.c.b16 %v2595, %v2595
    %v2621 = vpack.c.b16 %v2596, %v2596
    %v2622 = vpack.c.b16 %v2597, %v2597
    %v2623 = vpack.c.b16 %v2598, %v2598
    %v2624 = vpack.c.b16 %v2599, %v2599
    %v2625 = vpack.c.b16 %v2600, %v2600
    %v3434 = vunpack.c.l.b16 %v1757
    %v3435 = vunpack.c.h.b16 %v1757
    %v3436 = vunpack.c.l.b16 %v1758
    %v3437 = vunpack.c.h.b16 %v1758
    %v3438 = vunpack.c.l.b16 %v1759
    %v3439 = vunpack.c.h.b16 %v1759
    %v3440 = vunpack.c.l.b16 %v1760
    %v3441 = vunpack.c.h.b16 %v1760
    %v3442 = vunpack.c.l.b16 %v1761
    %v3443 = vunpack.c.h.b16 %v1761
    %v3444 = vunpack.c.l.b16 %v1762
    %v3445 = vunpack.c.h.b16 %v1762
    %v3446 = vunpack.c.l.b16 %v1763
    %v3447 = vunpack.c.h.b16 %v1763
    %v3448 = vunpack.c.l.b16 %v1764
    %v3449 = vunpack.c.h.b16 %v1764
    %v3450 = vunpack.c.l.b16 %v1765
    %v3451 = vunpack.c.h.b16 %v1765
    %v3452 = vunpack.c.l.b16 %v1766
    %v3453 = vunpack.c.h.b16 %v1766
    %v3454 = vunpack.c.l.b16 %v1767
    %v3455 = vunpack.c.h.b16 %v1767
    %v3456 = vunpack.c.l.b16 %v1768
    %v3457 = vunpack.c.h.b16 %v1768
    %v3458 = vunpack.c.l.b16 %v1769
    %v3459 = vunpack.c.h.b16 %v1769
    %v3460 = vunpack.c.l.b16 %v1770
    %v3461 = vunpack.c.h.b16 %v1770
    %v3462 = vunpack.c.l.b16 %v1771
    %v3463 = vunpack.c.h.b16 %v1771
    %v3464 = vunpack.c.l.b16 %v1772
    %v3465 = vunpack.c.h.b16 %v1772
    %v3466 = vunpack.c.l.b16 %v1773
    %v3467 = vunpack.c.h.b16 %v1773
    %v3468 = vunpack.c.l.b16 %v1774
    %v3469 = vunpack.c.h.b16 %v1774
    %v3470 = vunpack.c.l.b16 %v1775
    %v3471 = vunpack.c.h.b16 %v1775
    %v3472 = vunpack.c.l.b16 %v1776
    %v3473 = vunpack.c.h.b16 %v1776
    %v3474 = vunpack.c.l.b16 %v1777
    %v3475 = vunpack.c.h.b16 %v1777
    %v3476 = vunpack.c.l.b16 %v1778
    %v3477 = vunpack.c.h.b16 %v1778
    %v3478 = vunpack.c.l.b16 %v1779
    %v3479 = vunpack.c.h.b16 %v1779
    %v3480 = vunpack.c.l.b16 %v1780
    %v3481 = vunpack.c.h.b16 %v1780
    %v3482 = vunpack.c.l.b16 %v1781
    %v3483 = vunpack.c.h.b16 %v1781
    %v3484 = vunpack.c.l.b16 %v1782
    %v3485 = vunpack.c.h.b16 %v1782
    %v3486 = vunpack.c.l.b16 %v1783
    %v3487 = vunpack.c.h.b16 %v1783
    %v3488 = vunpack.c.l.b16 %v1784
    %v3489 = vunpack.c.h.b16 %v1784
    %v3490 = vunpack.c.l.b16 %v1785
    %v3491 = vunpack.c.h.b16 %v1785
    %v3492 = vunpack.c.l.b16 %v1786
    %v3493 = vunpack.c.h.b16 %v1786
    %v3494 = vunpack.c.l.b16 %v1787
    %v3495 = vunpack.c.h.b16 %v1787
    %v3496 = vunpack.c.l.b16 %v1788
    %v3497 = vunpack.c.h.b16 %v1788
    %v3498 = vunpack.c.l.b16 %v1789
    %v3499 = vunpack.c.h.b16 %v1789
    %v3500 = vunpack.c.l.b16 %v1790
    %v3501 = vunpack.c.h.b16 %v1790
    %v3502 = vunpack.c.l.b16 %v1791
    %v3503 = vunpack.c.h.b16 %v1791
    %v3504 = vunpack.c.l.b16 %v1792
    %v3505 = vunpack.c.h.b16 %v1792
    %v3506 = vunpack.c.l.b16 %v1793
    %v3507 = vunpack.c.h.b16 %v1793
    %v3508 = vunpack.c.l.b16 %v1794
    %v3509 = vunpack.c.h.b16 %v1794
    %v3510 = vunpack.c.l.b16 %v1795
    %v3511 = vunpack.c.h.b16 %v1795
    %v3512 = vunpack.c.l.b16 %v1796
    %v3513 = vunpack.c.h.b16 %v1796
    %v3514 = vunpack.c.l.b16 %v1797
    %v3515 = vunpack.c.h.b16 %v1797
    %v3516 = vunpack.c.l.b16 %v1798
    %v3517 = vunpack.c.h.b16 %v1798
    %v3518 = vunpack.c.l.b16 %v1799
    %v3519 = vunpack.c.h.b16 %v1799
    %v3520 = vunpack.c.l.b16 %v1800
    %v3521 = vunpack.c.h.b16 %v1800
    %v3522 = vunpack.c.l.b16 %v1801
    %v3523 = vunpack.c.h.b16 %v1801
    %v3524 = vunpack.c.l.b16 %v1802
    %v3525 = vunpack.c.h.b16 %v1802
    %v3526 = vunpack.c.l.b16 %v1803
    %v3527 = vunpack.c.h.b16 %v1803
    %v3528 = vunpack.c.l.b16 %v1804
    %v3529 = vunpack.c.h.b16 %v1804
    %v3530 = vunpack.c.l.b16 %v1805
    %v3531 = vunpack.c.h.b16 %v1805
    %v3532 = vunpack.c.l.b16 %v1806
    %v3533 = vunpack.c.h.b16 %v1806
    %v3534 = vunpack.c.l.b16 %v1807
    %v3535 = vunpack.c.h.b16 %v1807
    %v3536 = vunpack.c.l.b16 %v1808
    %v3537 = vunpack.c.h.b16 %v1808
    %v3538 = vunpack.c.l.b16 %v1809
    %v3539 = vunpack.c.h.b16 %v1809
    %v3540 = vunpack.c.l.b16 %v1810
    %v3541 = vunpack.c.h.b16 %v1810
    %v3542 = vunpack.c.l.b16 %v1811
    %v3543 = vunpack.c.h.b16 %v1811
    %v3544 = vunpack.c.l.b16 %v1812
    %v3545 = vunpack.c.h.b16 %v1812
    %v3546 = vunpack.c.l.b16 %v1813
    %v3547 = vunpack.c.h.b16 %v1813
    %v3548 = vunpack.c.l.b16 %v1814
    %v3549 = vunpack.c.h.b16 %v1814
    %v3550 = vunpack.c.l.b16 %v1815
    %v3551 = vunpack.c.h.b16 %v1815
    %v3552 = vunpack.c.l.b16 %v1816
    %v3553 = vunpack.c.h.b16 %v1816
    %v3554 = vunpack.c.l.b16 %v1817
    %v3555 = vunpack.c.h.b16 %v1817
    %v3556 = vunpack.c.l.b16 %v1818
    %v3557 = vunpack.c.h.b16 %v1818
    %v3558 = vunpack.c.l.b16 %v1819
    %v3559 = vunpack.c.h.b16 %v1819
    %v3560 = vunpack.c.l.b16 %v1820
    %v3561 = vunpack.c.h.b16 %v1820
    %v3562 = vunpack.c.l.b16 %v1821
    %v3563 = vunpack.c.h.b16 %v1821
    %v3564 = vunpack.c.l.b16 %v1822
    %v3565 = vunpack.c.h.b16 %v1822
    %v3566 = vunpack.c.l.b16 %v1823
    %v3567 = vunpack.c.h.b16 %v1823
    %v3568 = vunpack.c.l.b16 %v1824
    %v3569 = vunpack.c.h.b16 %v1824
    %v3570 = vunpack.c.l.b16 %v1825
    %v3571 = vunpack.c.h.b16 %v1825
    %v3572 = vunpack.c.l.b16 %v1826
    %v3573 = vunpack.c.h.b16 %v1826
    %v3574 = vunpack.c.l.b16 %v1827
    %v3575 = vunpack.c.h.b16 %v1827
    %v3576 = vunpack.c.l.b16 %v1828
    %v3577 = vunpack.c.h.b16 %v1828
    %v3578 = vunpack.c.l.b16 %v1829
    %v3579 = vunpack.c.h.b16 %v1829
    %v3580 = vunpack.c.l.b16 %v1830
    %v3581 = vunpack.c.h.b16 %v1830
    %v3582 = vunpack.c.l.b16 %v1831
    %v3583 = vunpack.c.h.b16 %v1831
    %v3584 = vunpack.c.l.b16 %v1832
    %v3585 = vunpack.c.h.b16 %v1832
    %v3586 = vunpack.c.l.b16 %v1833
    %v3587 = vunpack.c.h.b16 %v1833
    %v3588 = vunpack.c.l.b16 %v1834
    %v3589 = vunpack.c.h.b16 %v1834
    %v3590 = vunpack.c.l.b16 %v1835
    %v3591 = vunpack.c.h.b16 %v1835
    %v3592 = vunpack.c.l.b16 %v1836
    %v3593 = vunpack.c.h.b16 %v1836
    %v3594 = vunpack.c.l.b16 %v1837
    %v3595 = vunpack.c.h.b16 %v1837
    %v3596 = vunpack.c.l.b16 %v1838
    %v3597 = vunpack.c.h.b16 %v1838
    %v3598 = vunpack.c.l.b16 %v1839
    %v3599 = vunpack.c.h.b16 %v1839
    %v3600 = vunpack.c.l.b16 %v1840
    %v3601 = vunpack.c.h.b16 %v1840
    %v3602 = vunpack.c.l.b16 %v1841
    %v3603 = vunpack.c.h.b16 %v1841
    %v3604 = vunpack.c.l.b16 %v1842
    %v3605 = vunpack.c.h.b16 %v1842
    %v3606 = vunpack.c.l.b16 %v1843
    %v3607 = vunpack.c.h.b16 %v1843
    %v3608 = vunpack.c.l.b16 %v1844
    %v3609 = vunpack.c.h.b16 %v1844
    %v3610 = vunpack.c.l.b16 %v1845
    %v3611 = vunpack.c.h.b16 %v1845
    %v3612 = vunpack.c.l.b16 %v1846
    %v3613 = vunpack.c.h.b16 %v1846
    %v3614 = vunpack.c.l.b16 %v1847
    %v3615 = vunpack.c.h.b16 %v1847
    %v3616 = vunpack.c.l.b16 %v1848
    %v3617 = vunpack.c.h.b16 %v1848
    %v3618 = vunpack.c.l.b16 %v1849
    %v3619 = vunpack.c.h.b16 %v1849
    %v3620 = vunpack.c.l.b16 %v1850
    %v3621 = vunpack.c.h.b16 %v1850
    %v3622 = vunpack.c.l.b16 %v1851
    %v3623 = vunpack.c.h.b16 %v1851
    %v3624 = vunpack.c.l.b16 %v1852
    %v3625 = vunpack.c.h.b16 %v1852
    %v3626 = vunpack.c.l.b16 %v1853
    %v3627 = vunpack.c.h.b16 %v1853
    %v3628 = vunpack.c.l.b16 %v1854
    %v3629 = vunpack.c.h.b16 %v1854
    %v3630 = vunpack.c.l.b16 %v1855
    %v3631 = vunpack.c.h.b16 %v1855
    %v3632 = vunpack.c.l.b16 %v1856
    %v3633 = vunpack.c.h.b16 %v1856
    %v3634 = vunpack.c.l.b16 %v1857
    %v3635 = vunpack.c.h.b16 %v1857
    %v3636 = vunpack.c.l.b16 %v1858
    %v3637 = vunpack.c.h.b16 %v1858
    %v3638 = vunpack.c.l.b16 %v1859
    %v3639 = vunpack.c.h.b16 %v1859
    %v3640 = vunpack.c.l.b16 %v1860
    %v3641 = vunpack.c.h.b16 %v1860
    %v3642 = vunpack.c.l.b16 %v1861
    %v3643 = vunpack.c.h.b16 %v1861
    %v3644 = vunpack.c.l.b16 %v1862
    %v3645 = vunpack.c.h.b16 %v1862
    %v3646 = vunpack.c.l.b16 %v1863
    %v3647 = vunpack.c.h.b16 %v1863
    %v3648 = vunpack.c.l.b16 %v1864
    %v3649 = vunpack.c.h.b16 %v1864
    %v3650 = vunpack.c.l.b16 %v1865
    %v3651 = vunpack.c.h.b16 %v1865
    %v3652 = vunpack.c.l.b16 %v1866
    %v3653 = vunpack.c.h.b16 %v1866
    %v3654 = vunpack.c.l.b16 %v1867
    %v3655 = vunpack.c.h.b16 %v1867
    %v3656 = vunpack.c.l.b16 %v1868
    %v3657 = vunpack.c.h.b16 %v1868
    %v3658 = vunpack.c.l.b16 %v1869
    %v3659 = vunpack.c.h.b16 %v1869
    %v3660 = vunpack.c.l.b16 %v1870
    %v3661 = vunpack.c.h.b16 %v1870
    %v3662 = vunpack.c.l.b16 %v1871
    %v3663 = vunpack.c.h.b16 %v1871
    %v3664 = vunpack.c.l.b16 %v1872
    %v3665 = vunpack.c.h.b16 %v1872
    %v3666 = vunpack.c.l.b16 %v1873
    %v3667 = vunpack.c.h.b16 %v1873
    %v3668 = vunpack.c.l.b16 %v1874
    %v3669 = vunpack.c.h.b16 %v1874
    %v3670 = vunpack.c.l.b16 %v1875
    %v3671 = vunpack.c.h.b16 %v1875
    %v3672 = vunpack.c.l.b16 %v1876
    %v3673 = vunpack.c.h.b16 %v1876
    %v3674 = vunpack.c.l.b16 %v1877
    %v3675 = vunpack.c.h.b16 %v1877
    %v3676 = vunpack.c.l.b16 %v1878
    %v3677 = vunpack.c.h.b16 %v1878
    %v3678 = vunpack.c.l.b16 %v1879
    %v3679 = vunpack.c.h.b16 %v1879
    %v3680 = vunpack.c.l.b16 %v1880
    %v3681 = vunpack.c.h.b16 %v1880
    %v3682 = vunpack.c.l.b16 %v1881
    %v3683 = vunpack.c.h.b16 %v1881
    %v3684 = vunpack.c.l.b16 %v1882
    %v3685 = vunpack.c.h.b16 %v1882
    %v3686 = vunpack.c.l.b16 %v1883
    %v3687 = vunpack.c.h.b16 %v1883
    %v3688 = vunpack.c.l.b16 %v1884
    %v3689 = vunpack.c.h.b16 %v1884
    %v3690 = vunpack.c.l.b16 %v1885
    %v3691 = vunpack.c.h.b16 %v1885
    %v3692 = vunpack.c.l.b16 %v1886
    %v3693 = vunpack.c.h.b16 %v1886
    %v3694 = vunpack.c.l.b16 %v1887
    %v3695 = vunpack.c.h.b16 %v1887
    %v3696 = vunpack.c.l.b16 %v1888
    %v3697 = vunpack.c.h.b16 %v1888
    %v3698 = vunpack.c.l.b16 %v1889
    %v3699 = vunpack.c.h.b16 %v1889
    %v3700 = vunpack.c.l.b16 %v1890
    %v3701 = vunpack.c.h.b16 %v1890
    %v3702 = vunpack.c.l.b16 %v1891
    %v3703 = vunpack.c.h.b16 %v1891
    %v3704 = vunpack.c.l.b16 %v1892
    %v3705 = vunpack.c.h.b16 %v1892
    %v3706 = vunpack.c.l.b16 %v1893
    %v3707 = vunpack.c.h.b16 %v1893
    %v3708 = vunpack.c.l.b16 %v1894
    %v3709 = vunpack.c.h.b16 %v1894
    %v3710 = vunpack.c.l.b16 %v1895
    %v3711 = vunpack.c.h.b16 %v1895
    %v3712 = vunpack.c.l.b16 %v1896
    %v3713 = vunpack.c.h.b16 %v1896
    %v3714 = vunpack.c.l.b16 %v1897
    %v3715 = vunpack.c.h.b16 %v1897
    %v3716 = vunpack.c.l.b16 %v1898
    %v3717 = vunpack.c.h.b16 %v1898
    %v3718 = vunpack.c.l.b16 %v1899
    %v3719 = vunpack.c.h.b16 %v1899
    %v3720 = vunpack.c.l.b16 %v1900
    %v3721 = vunpack.c.h.b16 %v1900
    %v3722 = vunpack.c.l.b16 %v1901
    %v3723 = vunpack.c.h.b16 %v1901
    %v3724 = vunpack.c.l.b16 %v1902
    %v3725 = vunpack.c.h.b16 %v1902
    %v3726 = vunpack.c.l.b16 %v1903
    %v3727 = vunpack.c.h.b16 %v1903
    %v3728 = vunpack.c.l.b16 %v1904
    %v3729 = vunpack.c.h.b16 %v1904
    %v3730 = vunpack.c.l.b16 %v1905
    %v3731 = vunpack.c.h.b16 %v1905
    %v3732 = vunpack.c.l.b16 %v1906
    %v3733 = vunpack.c.h.b16 %v1906
    %v3734 = vunpack.c.l.b16 %v1907
    %v3735 = vunpack.c.h.b16 %v1907
    %v3736 = vunpack.c.l.b16 %v1908
    %v3737 = vunpack.c.h.b16 %v1908
    %v3738 = vunpack.c.l.b16 %v1909
    %v3739 = vunpack.c.h.b16 %v1909
    %v3740 = vunpack.c.l.b16 %v1910
    %v3741 = vunpack.c.h.b16 %v1910
    %v3742 = vunpack.c.l.b16 %v1911
    %v3743 = vunpack.c.h.b16 %v1911
    %v3744 = vunpack.c.l.b16 %v1912
    %v3745 = vunpack.c.h.b16 %v1912
    %v3746 = vunpack.c.l.b16 %v1913
    %v3747 = vunpack.c.h.b16 %v1913
    %v3748 = vunpack.c.l.b16 %v1914
    %v3749 = vunpack.c.h.b16 %v1914
    %v3750 = vunpack.c.l.b16 %v1915
    %v3751 = vunpack.c.h.b16 %v1915
    %v3752 = vunpack.c.l.b16 %v1916
    %v3753 = vunpack.c.h.b16 %v1916
    %v3754 = vunpack.c.l.b16 %v1917
    %v3755 = vunpack.c.h.b16 %v1917
    %v3756 = vunpack.c.l.b16 %v1918
    %v3757 = vunpack.c.h.b16 %v1918
    %v3758 = vunpack.c.l.b16 %v1919
    %v3759 = vunpack.c.h.b16 %v1919
    %v3760 = vunpack.c.l.b16 %v1920
    %v3761 = vunpack.c.h.b16 %v1920
    %v3762 = vunpack.c.l.b16 %v1921
    %v3763 = vunpack.c.h.b16 %v1921
    %v3764 = vunpack.c.l.b16 %v1922
    %v3765 = vunpack.c.h.b16 %v1922
    %v3766 = vunpack.c.l.b16 %v1923
    %v3767 = vunpack.c.h.b16 %v1923
    %v3768 = vunpack.c.l.b16 %v1924
    %v3769 = vunpack.c.h.b16 %v1924
    %v3770 = vunpack.c.l.b16 %v1925
    %v3771 = vunpack.c.h.b16 %v1925
    %v3772 = vunpack.c.l.b16 %v1926
    %v3773 = vunpack.c.h.b16 %v1926
    %v3774 = vunpack.c.l.b16 %v1927
    %v3775 = vunpack.c.h.b16 %v1927
    %v3776 = vunpack.c.l.b16 %v1928
    %v3777 = vunpack.c.h.b16 %v1928
    %v3778 = vunpack.c.l.b16 %v1929
    %v3779 = vunpack.c.h.b16 %v1929
    %v3780 = vunpack.c.l.b16 %v1930
    %v3781 = vunpack.c.h.b16 %v1930
    %v3782 = vunpack.c.l.b16 %v1931
    %v3783 = vunpack.c.h.b16 %v1931
    %v3784 = vunpack.c.l.b16 %v1932
    %v3785 = vunpack.c.h.b16 %v1932
    %v3786 = vunpack.c.l.b16 %v1933
    %v3787 = vunpack.c.h.b16 %v1933
    %v3788 = vunpack.c.l.b16 %v1934
    %v3789 = vunpack.c.h.b16 %v1934
    %v3790 = vunpack.c.l.b16 %v1935
    %v3791 = vunpack.c.h.b16 %v1935
    %v3792 = vunpack.c.l.b16 %v1936
    %v3793 = vunpack.c.h.b16 %v1936
    %v3794 = vunpack.c.l.b16 %v1937
    %v3795 = vunpack.c.h.b16 %v1937
    %v3796 = vunpack.c.l.b16 %v1938
    %v3797 = vunpack.c.h.b16 %v1938
    %v3798 = vunpack.c.l.b16 %v1939
    %v3799 = vunpack.c.h.b16 %v1939
    %v3800 = vunpack.c.l.b16 %v1940
    %v3801 = vunpack.c.h.b16 %v1940
    %v3802 = vunpack.c.l.b16 %v1941
    %v3803 = vunpack.c.h.b16 %v1941
    %v3804 = vunpack.c.l.b16 %v1942
    %v3805 = vunpack.c.h.b16 %v1942
    %v3806 = vunpack.c.l.b16 %v1943
    %v3807 = vunpack.c.h.b16 %v1943
    %v3808 = vunpack.c.l.b16 %v1944
    %v3809 = vunpack.c.h.b16 %v1944
    %v3810 = vunpack.c.l.b16 %v1945
    %v3811 = vunpack.c.h.b16 %v1945
    %v3812 = vunpack.c.l.b16 %v1946
    %v3813 = vunpack.c.h.b16 %v1946
    %v3814 = vunpack.c.l.b16 %v1947
    %v3815 = vunpack.c.h.b16 %v1947
    %v3816 = vunpack.c.l.b16 %v1948
    %v3817 = vunpack.c.h.b16 %v1948
    %v3818 = vunpack.c.l.b16 %v1949
    %v3819 = vunpack.c.h.b16 %v1949
    %v3820 = vunpack.c.l.b16 %v1950
    %v3821 = vunpack.c.h.b16 %v1950
    %v3822 = vunpack.c.l.b16 %v1951
    %v3823 = vunpack.c.h.b16 %v1951
    %v3824 = vunpack.c.l.b16 %v1952
    %v3825 = vunpack.c.h.b16 %v1952
    %v3826 = vunpack.c.l.b16 %v1953
    %v3827 = vunpack.c.h.b16 %v1953
    %v3828 = vunpack.c.l.b16 %v1954
    %v3829 = vunpack.c.h.b16 %v1954
    %v3830 = vunpack.c.l.b16 %v1955
    %v3831 = vunpack.c.h.b16 %v1955
    %v3832 = vunpack.c.l.b16 %v1956
    %v3833 = vunpack.c.h.b16 %v1956
    %v3834 = vunpack.c.l.b16 %v1957
    %v3835 = vunpack.c.h.b16 %v1957
    %v3836 = vunpack.c.l.b16 %v1958
    %v3837 = vunpack.c.h.b16 %v1958
    %v3838 = vunpack.c.l.b16 %v1959
    %v3839 = vunpack.c.h.b16 %v1959
    %v3840 = vunpack.c.l.b16 %v1960
    %v3841 = vunpack.c.h.b16 %v1960
    %v3842 = vunpack.c.l.b16 %v1961
    %v3843 = vunpack.c.h.b16 %v1961
    %v3844 = vunpack.c.l.b16 %v1962
    %v3845 = vunpack.c.h.b16 %v1962
    %v3846 = vunpack.c.l.b16 %v1963
    %v3847 = vunpack.c.h.b16 %v1963
    %v3848 = vunpack.c.l.b16 %v1964
    %v3849 = vunpack.c.h.b16 %v1964
    %v3850 = vunpack.c.l.b16 %v1965
    %v3851 = vunpack.c.h.b16 %v1965
    %v3852 = vunpack.c.l.b16 %v1966
    %v3853 = vunpack.c.h.b16 %v1966
    %v3854 = vunpack.c.l.b16 %v1967
    %v3855 = vunpack.c.h.b16 %v1967
    %v3856 = vunpack.c.l.b16 %v1968
    %v3857 = vunpack.c.h.b16 %v1968
    %v3858 = vunpack.c.l.b16 %v1969
    %v3859 = vunpack.c.h.b16 %v1969
    %v3860 = vunpack.c.l.b16 %v1970
    %v3861 = vunpack.c.h.b16 %v1970
    %v3862 = vunpack.c.l.b16 %v1971
    %v3863 = vunpack.c.h.b16 %v1971
    %v3864 = vunpack.c.l.b16 %v1972
    %v3865 = vunpack.c.h.b16 %v1972
    %v3866 = vunpack.c.l.b16 %v1973
    %v3867 = vunpack.c.h.b16 %v1973
    %v3868 = vunpack.c.l.b16 %v1974
    %v3869 = vunpack.c.h.b16 %v1974
    %v3870 = vunpack.c.l.b16 %v1975
    %v3871 = vunpack.c.h.b16 %v1975
    %v3872 = vunpack.c.l.b16 %v1976
    %v3873 = vunpack.c.h.b16 %v1976
    %v3874 = vunpack.c.l.b16 %v1977
    %v3875 = vunpack.c.h.b16 %v1977
    %v3876 = vunpack.c.l.b16 %v1978
    %v3877 = vunpack.c.h.b16 %v1978
    %v3878 = vunpack.c.l.b16 %v1979
    %v3879 = vunpack.c.h.b16 %v1979
    %v3880 = vunpack.c.l.b16 %v1980
    %v3881 = vunpack.c.h.b16 %v1980
    %v3882 = vunpack.c.l.b16 %v1981
    %v3883 = vunpack.c.h.b16 %v1981
    %v3884 = vunpack.c.l.b16 %v1982
    %v3885 = vunpack.c.h.b16 %v1982
    %v3886 = vunpack.c.l.b16 %v1983
    %v3887 = vunpack.c.h.b16 %v1983
    %v3888 = vunpack.c.l.b16 %v1984
    %v3889 = vunpack.c.h.b16 %v1984
    %v3890 = vunpack.c.l.b16 %v1985
    %v3891 = vunpack.c.h.b16 %v1985
    %v3892 = vunpack.c.l.b16 %v1986
    %v3893 = vunpack.c.h.b16 %v1986
    %v3894 = vunpack.c.l.b16 %v1987
    %v3895 = vunpack.c.h.b16 %v1987
    %v3896 = vunpack.c.l.b16 %v1988
    %v3897 = vunpack.c.h.b16 %v1988
    %v3898 = vunpack.c.l.b16 %v1989
    %v3899 = vunpack.c.h.b16 %v1989
    %v3900 = vunpack.c.l.b16 %v1990
    %v3901 = vunpack.c.h.b16 %v1990
    %v3902 = vunpack.c.l.b16 %v1991
    %v3903 = vunpack.c.h.b16 %v1991
    %v3904 = vunpack.c.l.b16 %v1992
    %v3905 = vunpack.c.h.b16 %v1992
    %v3906 = vunpack.c.l.b16 %v1993
    %v3907 = vunpack.c.h.b16 %v1993
    %v3908 = vunpack.c.l.b16 %v1994
    %v3909 = vunpack.c.h.b16 %v1994
    %v3910 = vunpack.c.l.b16 %v1995
    %v3911 = vunpack.c.h.b16 %v1995
    %v3912 = vunpack.c.l.b16 %v1996
    %v3913 = vunpack.c.h.b16 %v1996
    %v3914 = vunpack.c.l.b16 %v1997
    %v3915 = vunpack.c.h.b16 %v1997
    %v3916 = vunpack.c.l.b16 %v1998
    %v3917 = vunpack.c.h.b16 %v1998
    %v3918 = vunpack.c.l.b16 %v1999
    %v3919 = vunpack.c.h.b16 %v1999
    %v3920 = vunpack.c.l.b16 %v2000
    %v3921 = vunpack.c.h.b16 %v2000
    %v3922 = vunpack.c.l.b16 %v2001
    %v3923 = vunpack.c.h.b16 %v2001
    %v3924 = vunpack.c.l.b16 %v2002
    %v3925 = vunpack.c.h.b16 %v2002
    %v3926 = vunpack.c.l.b16 %v2003
    %v3927 = vunpack.c.h.b16 %v2003
    %v3928 = vunpack.c.l.b16 %v2004
    %v3929 = vunpack.c.h.b16 %v2004
    %v3930 = vunpack.c.l.b16 %v2005
    %v3931 = vunpack.c.h.b16 %v2005
    %v3932 = vunpack.c.l.b16 %v2006
    %v3933 = vunpack.c.h.b16 %v2006
    %v3934 = vunpack.c.l.b16 %v2007
    %v3935 = vunpack.c.h.b16 %v2007
    %v3936 = vunpack.c.l.b16 %v2008
    %v3937 = vunpack.c.h.b16 %v2008
    %v3938 = vunpack.c.l.b16 %v2009
    %v3939 = vunpack.c.h.b16 %v2009
    %v3940 = vunpack.c.l.b16 %v2010
    %v3941 = vunpack.c.h.b16 %v2010
    %v3942 = vunpack.c.l.b16 %v2011
    %v3943 = vunpack.c.h.b16 %v2011
    %v3944 = vunpack.c.l.b16 %v2012
    %v3945 = vunpack.c.h.b16 %v2012
    %v3946 = vunpack.c.l.b16 %v2013
    %v3947 = vunpack.c.h.b16 %v2013
    %v3948 = vunpack.c.l.b16 %v2014
    %v3949 = vunpack.c.h.b16 %v2014
    %v3950 = vunpack.c.l.b16 %v2015
    %v3951 = vunpack.c.h.b16 %v2015
    %v3952 = vunpack.c.l.b16 %v2016
    %v3953 = vunpack.c.h.b16 %v2016
    %v3954 = vunpack.c.l.b16 %v2017
    %v3955 = vunpack.c.h.b16 %v2017
    %v3956 = vunpack.c.l.b16 %v2018
    %v3957 = vunpack.c.h.b16 %v2018
    %v3958 = vunpack.c.l.b16 %v2019
    %v3959 = vunpack.c.h.b16 %v2019
    %v3960 = vunpack.c.l.b16 %v2020
    %v3961 = vunpack.c.h.b16 %v2020
    %v3962 = vunpack.c.l.b16 %v2021
    %v3963 = vunpack.c.h.b16 %v2021
    %v3964 = vunpack.c.l.b16 %v2022
    %v3965 = vunpack.c.h.b16 %v2022
    %v3966 = vunpack.c.l.b16 %v2023
    %v3967 = vunpack.c.h.b16 %v2023
    %v3968 = vunpack.c.l.b16 %v2024
    %v3969 = vunpack.c.h.b16 %v2024
    %v3970 = vunpack.c.l.b16 %v2025
    %v3971 = vunpack.c.h.b16 %v2025
    %v3972 = vunpack.c.l.b16 %v2026
    %v3973 = vunpack.c.h.b16 %v2026
    %v3974 = vunpack.c.l.b16 %v2027
    %v3975 = vunpack.c.h.b16 %v2027
    %v3976 = vunpack.c.l.b16 %v2028
    %v3977 = vunpack.c.h.b16 %v2028
    %v3978 = vunpack.c.l.b16 %v2029
    %v3979 = vunpack.c.h.b16 %v2029
    %v3980 = vunpack.c.l.b16 %v2030
    %v3981 = vunpack.c.h.b16 %v2030
    %v3982 = vunpack.c.l.b16 %v2031
    %v3983 = vunpack.c.h.b16 %v2031
    %v3984 = vunpack.c.l.b16 %v2032
    %v3985 = vunpack.c.h.b16 %v2032
    %v3986 = vunpack.c.l.b16 %v2033
    %v3987 = vunpack.c.h.b16 %v2033
    %v3988 = vunpack.c.l.b16 %v2034
    %v3989 = vunpack.c.h.b16 %v2034
    %v3990 = vunpack.c.l.b16 %v2035
    %v3991 = vunpack.c.h.b16 %v2035
    %v3992 = vunpack.c.l.b16 %v2036
    %v3993 = vunpack.c.h.b16 %v2036
    %v3994 = vunpack.c.l.b16 %v2037
    %v3995 = vunpack.c.h.b16 %v2037
    %v3996 = vunpack.c.l.b16 %v2038
    %v3997 = vunpack.c.h.b16 %v2038
    %v3998 = vunpack.c.l.b16 %v2039
    %v3999 = vunpack.c.h.b16 %v2039
    %v4000 = vunpack.c.l.b16 %v2040
    %v4001 = vunpack.c.h.b16 %v2040
    %v4002 = vunpack.c.l.b16 %v2041
    %v4003 = vunpack.c.h.b16 %v2041
    %v4004 = vunpack.c.l.b16 %v2042
    %v4005 = vunpack.c.h.b16 %v2042
    %v4006 = vunpack.c.l.b16 %v2043
    %v4007 = vunpack.c.h.b16 %v2043
    %v4008 = vunpack.c.l.b16 %v2044
    %v4009 = vunpack.c.h.b16 %v2044
    %v4010 = vunpack.c.l.b16 %v2045
    %v4011 = vunpack.c.h.b16 %v2045
    %v4012 = vunpack.c.l.b16 %v2046
    %v4013 = vunpack.c.h.b16 %v2046
    %v4014 = vunpack.c.l.b16 %v2047
    %v4015 = vunpack.c.h.b16 %v2047
    %v4016 = vunpack.c.l.b16 %v2048
    %v4017 = vunpack.c.h.b16 %v2048
    %v4018 = vunpack.c.l.b16 %v2049
    %v4019 = vunpack.c.h.b16 %v2049
    %v4020 = vunpack.c.l.b16 %v2050
    %v4021 = vunpack.c.h.b16 %v2050
    %v4022 = vunpack.c.l.b16 %v2051
    %v4023 = vunpack.c.h.b16 %v2051
    %v4024 = vunpack.c.l.b16 %v2052
    %v4025 = vunpack.c.h.b16 %v2052
    %v4026 = vunpack.c.l.b16 %v2053
    %v4027 = vunpack.c.h.b16 %v2053
    %v4028 = vunpack.c.l.b16 %v2054
    %v4029 = vunpack.c.h.b16 %v2054
    %v4030 = vunpack.c.l.b16 %v2055
    %v4031 = vunpack.c.h.b16 %v2055
    %v4032 = vunpack.c.l.b16 %v2056
    %v4033 = vunpack.c.h.b16 %v2056
    %v4034 = vunpack.c.l.b16 %v2057
    %v4035 = vunpack.c.h.b16 %v2057
    %v4036 = vunpack.c.l.b16 %v2058
    %v4037 = vunpack.c.h.b16 %v2058
    %v4038 = vunpack.c.l.b16 %v2059
    %v4039 = vunpack.c.h.b16 %v2059
    %v4040 = vunpack.c.l.b16 %v2060
    %v4041 = vunpack.c.h.b16 %v2060
    %v4042 = vunpack.c.l.b16 %v2061
    %v4043 = vunpack.c.h.b16 %v2061
    %v4044 = vunpack.c.l.b16 %v2062
    %v4045 = vunpack.c.h.b16 %v2062
    %v4046 = vunpack.c.l.b16 %v2063
    %v4047 = vunpack.c.h.b16 %v2063
    %v4048 = vunpack.c.l.b16 %v2064
    %v4049 = vunpack.c.h.b16 %v2064
    %v4050 = vunpack.c.l.b16 %v2065
    %v4051 = vunpack.c.h.b16 %v2065
    %v4052 = vunpack.c.l.b16 %v2066
    %v4053 = vunpack.c.h.b16 %v2066
    %v4054 = vunpack.c.l.b16 %v2067
    %v4055 = vunpack.c.h.b16 %v2067
    %v4056 = vunpack.c.l.b16 %v2068
    %v4057 = vunpack.c.h.b16 %v2068
    %v4058 = vunpack.c.l.b16 %v2069
    %v4059 = vunpack.c.h.b16 %v2069
    %v4060 = vunpack.c.l.b16 %v2070
    %v4061 = vunpack.c.h.b16 %v2070
    %v4062 = vunpack.c.l.b16 %v2071
    %v4063 = vunpack.c.h.b16 %v2071
    %v4064 = vunpack.c.l.b16 %v2072
    %v4065 = vunpack.c.h.b16 %v2072
    %v4066 = vunpack.c.l.b16 %v2073
    %v4067 = vunpack.c.h.b16 %v2073
    %v4068 = vunpack.c.l.b16 %v2074
    %v4069 = vunpack.c.h.b16 %v2074
    %v4070 = vunpack.c.l.b16 %v2075
    %v4071 = vunpack.c.h.b16 %v2075
    %v4072 = vunpack.c.l.b16 %v2076
    %v4073 = vunpack.c.h.b16 %v2076
    %v4074 = vunpack.c.l.b16 %v2077
    %v4075 = vunpack.c.h.b16 %v2077
    %v4076 = vunpack.c.l.b16 %v2078
    %v4077 = vunpack.c.h.b16 %v2078
    %v4078 = vunpack.c.l.b16 %v2079
    %v4079 = vunpack.c.h.b16 %v2079
    %v4080 = vunpack.c.l.b16 %v2080
    %v4081 = vunpack.c.h.b16 %v2080
    %v4082 = vunpack.c.l.b16 %v2081
    %v4083 = vunpack.c.h.b16 %v2081
    %v4084 = vunpack.c.l.b16 %v2082
    %v4085 = vunpack.c.h.b16 %v2082
    %v4086 = vunpack.c.l.b16 %v2083
    %v4087 = vunpack.c.h.b16 %v2083
    %v4088 = vunpack.c.l.b16 %v2084
    %v4089 = vunpack.c.h.b16 %v2084
    %v4090 = vunpack.c.l.b16 %v2085
    %v4091 = vunpack.c.h.b16 %v2085
    %v4092 = vunpack.c.l.b16 %v2086
    %v4093 = vunpack.c.h.b16 %v2086
    %v4094 = vunpack.c.l.b16 %v2087
    %v4095 = vunpack.c.h.b16 %v2087
    %v4096 = vunpack.c.l.b16 %v2088
    %v4097 = vunpack.c.h.b16 %v2088
    %v4098 = vunpack.c.l.b16 %v2089
    %v4099 = vunpack.c.h.b16 %v2089
    %v4100 = vunpack.c.l.b16 %v2090
    %v4101 = vunpack.c.h.b16 %v2090
    %v4102 = vunpack.c.l.b16 %v2091
    %v4103 = vunpack.c.h.b16 %v2091
    %v4104 = vunpack.c.l.b16 %v2092
    %v4105 = vunpack.c.h.b16 %v2092
    %v4106 = vunpack.c.l.b16 %v2093
    %v4107 = vunpack.c.h.b16 %v2093
    %v4108 = vunpack.c.l.b16 %v2094
    %v4109 = vunpack.c.h.b16 %v2094
    %v4110 = vunpack.c.l.b16 %v2095
    %v4111 = vunpack.c.h.b16 %v2095
    %v4112 = vunpack.c.l.b16 %v2096
    %v4113 = vunpack.c.h.b16 %v2096
    %v4114 = vunpack.c.l.b16 %v2097
    %v4115 = vunpack.c.h.b16 %v2097
    %v4116 = vunpack.c.l.b16 %v2098
    %v4117 = vunpack.c.h.b16 %v2098
    %v4118 = vunpack.c.l.b16 %v2099
    %v4119 = vunpack.c.h.b16 %v2099
    %v4120 = vunpack.c.l.b16 %v2100
    %v4121 = vunpack.c.h.b16 %v2100
    %v4122 = vunpack.c.l.b16 %v2101
    %v4123 = vunpack.c.h.b16 %v2101
    %v4124 = vunpack.c.l.b16 %v2102
    %v4125 = vunpack.c.h.b16 %v2102
    %v4126 = vunpack.c.l.b16 %v2103
    %v4127 = vunpack.c.h.b16 %v2103
    %v4128 = vunpack.c.l.b16 %v2104
    %v4129 = vunpack.c.h.b16 %v2104
    %v4130 = vunpack.c.l.b16 %v2105
    %v4131 = vunpack.c.h.b16 %v2105
    %v4132 = vunpack.c.l.b16 %v2106
    %v4133 = vunpack.c.h.b16 %v2106
    %v4134 = vunpack.c.l.b16 %v2107
    %v4135 = vunpack.c.h.b16 %v2107
    %v4136 = vunpack.c.l.b16 %v2108
    %v4137 = vunpack.c.h.b16 %v2108
    %v4138 = vunpack.c.l.b16 %v2109
    %v4139 = vunpack.c.h.b16 %v2109
    %v4140 = vunpack.c.l.b16 %v2110
    %v4141 = vunpack.c.h.b16 %v2110
    %v4142 = vunpack.c.l.b16 %v2111
    %v4143 = vunpack.c.h.b16 %v2111
    %v4144 = vunpack.c.l.b16 %v2112
    %v4145 = vunpack.c.h.b16 %v2112
    %v4146 = vunpack.c.l.b16 %v2113
    %v4147 = vunpack.c.h.b16 %v2113
    %v4148 = vunpack.c.l.b16 %v2114
    %v4149 = vunpack.c.h.b16 %v2114
    %v4150 = vunpack.c.l.b16 %v2115
    %v4151 = vunpack.c.h.b16 %v2115
    %v4152 = vunpack.c.l.b16 %v2116
    %v4153 = vunpack.c.h.b16 %v2116
    %v4154 = vunpack.c.l.b16 %v2117
    %v4155 = vunpack.c.h.b16 %v2117
    %v4156 = vunpack.c.l.b16 %v2118
    %v4157 = vunpack.c.h.b16 %v2118
    %v4158 = vunpack.c.l.b16 %v2119
    %v4159 = vunpack.c.h.b16 %v2119
    %v4160 = vunpack.c.l.b16 %v2120
    %v4161 = vunpack.c.h.b16 %v2120
    %v4162 = vunpack.c.l.b16 %v2121
    %v4163 = vunpack.c.h.b16 %v2121
    %v4164 = vunpack.c.l.b16 %v2122
    %v4165 = vunpack.c.h.b16 %v2122
    %v4166 = vunpack.c.l.b16 %v2123
    %v4167 = vunpack.c.h.b16 %v2123
    %v4168 = vunpack.c.l.b16 %v2124
    %v4169 = vunpack.c.h.b16 %v2124
    %v4170 = vunpack.c.l.b16 %v2125
    %v4171 = vunpack.c.h.b16 %v2125
    %v4172 = vunpack.c.l.b16 %v2126
    %v4173 = vunpack.c.h.b16 %v2126
    %v4174 = vunpack.c.l.b16 %v2127
    %v4175 = vunpack.c.h.b16 %v2127
    %v4176 = vunpack.c.l.b16 %v2128
    %v4177 = vunpack.c.h.b16 %v2128
    %v4178 = vunpack.c.l.b16 %v2129
    %v4179 = vunpack.c.h.b16 %v2129
    %v4180 = vunpack.c.l.b16 %v2130
    %v4181 = vunpack.c.h.b16 %v2130
    %v4182 = vunpack.c.l.b16 %v2131
    %v4183 = vunpack.c.h.b16 %v2131
    %v4184 = vunpack.c.l.b16 %v2132
    %v4185 = vunpack.c.h.b16 %v2132
    %v4186 = vunpack.c.l.b16 %v2133
    %v4187 = vunpack.c.h.b16 %v2133
    %v4188 = vunpack.c.l.b16 %v2134
    %v4189 = vunpack.c.h.b16 %v2134
    %v4190 = vunpack.c.l.b16 %v2135
    %v4191 = vunpack.c.h.b16 %v2135
    %v4192 = vunpack.c.l.b16 %v2136
    %v4193 = vunpack.c.h.b16 %v2136
    %v4194 = vunpack.c.l.b16 %v2137
    %v4195 = vunpack.c.h.b16 %v2137
    %v4196 = vunpack.c.l.b16 %v2138
    %v4197 = vunpack.c.h.b16 %v2138
    %v4198 = vunpack.c.l.b16 %v2139
    %v4199 = vunpack.c.h.b16 %v2139
    %v4200 = vunpack.c.l.b16 %v2140
    %v4201 = vunpack.c.h.b16 %v2140
    %v4202 = vunpack.c.l.b16 %v2141
    %v4203 = vunpack.c.h.b16 %v2141
    %v4204 = vunpack.c.l.b16 %v2142
    %v4205 = vunpack.c.h.b16 %v2142
    %v4206 = vunpack.c.l.b16 %v2143
    %v4207 = vunpack.c.h.b16 %v2143
    %v4208 = vunpack.c.l.b16 %v2144
    %v4209 = vunpack.c.h.b16 %v2144
    %v4210 = vunpack.c.l.b16 %v2145
    %v4211 = vunpack.c.h.b16 %v2145
    %v4212 = vunpack.c.l.b16 %v2146
    %v4213 = vunpack.c.h.b16 %v2146
    %v4214 = vunpack.c.l.b16 %v2147
    %v4215 = vunpack.c.h.b16 %v2147
    %v4216 = vunpack.c.l.b16 %v2148
    %v4217 = vunpack.c.h.b16 %v2148
    %v4218 = vunpack.c.l.b16 %v2149
    %v4219 = vunpack.c.h.b16 %v2149
    %v4220 = vunpack.c.l.b16 %v2150
    %v4221 = vunpack.c.h.b16 %v2150
    %v4222 = vunpack.c.l.b16 %v2151
    %v4223 = vunpack.c.h.b16 %v2151
    %v4224 = vunpack.c.l.b16 %v2152
    %v4225 = vunpack.c.h.b16 %v2152
    %v4226 = vunpack.c.l.b16 %v2153
    %v4227 = vunpack.c.h.b16 %v2153
    %v4228 = vunpack.c.l.b16 %v2154
    %v4229 = vunpack.c.h.b16 %v2154
    %v4230 = vunpack.c.l.b16 %v2155
    %v4231 = vunpack.c.h.b16 %v2155
    %v4232 = vunpack.c.l.b16 %v2156
    %v4233 = vunpack.c.h.b16 %v2156
    %v4234 = vunpack.c.l.b16 %v2157
    %v4235 = vunpack.c.h.b16 %v2157
    %v4236 = vunpack.c.l.b16 %v2158
    %v4237 = vunpack.c.h.b16 %v2158
    %v4238 = vunpack.c.l.b16 %v2159
    %v4239 = vunpack.c.h.b16 %v2159
    %v4240 = vunpack.c.l.b16 %v2160
    %v4241 = vunpack.c.h.b16 %v2160
    %v4242 = vunpack.c.l.b16 %v2161
    %v4243 = vunpack.c.h.b16 %v2161
    %v4244 = vunpack.c.l.b16 %v2162
    %v4245 = vunpack.c.h.b16 %v2162
    %v4246 = vunpack.c.l.b16 %v2163
    %v4247 = vunpack.c.h.b16 %v2163
    %v4248 = vunpack.c.l.b16 %v2164
    %v4249 = vunpack.c.h.b16 %v2164
    %v4250 = vunpack.c.l.b16 %v2165
    %v4251 = vunpack.c.h.b16 %v2165
    %v4252 = vunpack.c.l.b16 %v2166
    %v4253 = vunpack.c.h.b16 %v2166
    %v4254 = vunpack.c.l.b16 %v2167
    %v4255 = vunpack.c.h.b16 %v2167
    %v4256 = vunpack.c.l.b16 %v2168
    %v4257 = vunpack.c.h.b16 %v2168
    %v4258 = vunpack.c.l.b16 %v2169
    %v4259 = vunpack.c.h.b16 %v2169
    %v4260 = vunpack.c.l.b16 %v2170
    %v4261 = vunpack.c.h.b16 %v2170
    %v4262 = vunpack.c.l.b16 %v2171
    %v4263 = vunpack.c.h.b16 %v2171
    %v4264 = vunpack.c.l.b16 %v2172
    %v4265 = vunpack.c.h.b16 %v2172
    %v4266 = vunpack.c.l.b16 %v2173
    %v4267 = vunpack.c.h.b16 %v2173
    %v4268 = vunpack.c.l.b16 %v2174
    %v4269 = vunpack.c.h.b16 %v2174
    %v4270 = vunpack.c.l.b16 %v2175
    %v4271 = vunpack.c.h.b16 %v2175
    %v4272 = vunpack.c.l.b16 %v2176
    %v4273 = vunpack.c.h.b16 %v2176
    %v4274 = vunpack.c.l.b16 %v2177
    %v4275 = vunpack.c.h.b16 %v2177
    %v4276 = vunpack.c.l.b16 %v2178
    %v4277 = vunpack.c.h.b16 %v2178
    %v4278 = vunpack.c.l.b16 %v2179
    %v4279 = vunpack.c.h.b16 %v2179
    %v4280 = vunpack.c.l.b16 %v2180
    %v4281 = vunpack.c.h.b16 %v2180
    %v4282 = vunpack.c.l.b16 %v2181
    %v4283 = vunpack.c.h.b16 %v2181
    %v4284 = vunpack.c.l.b16 %v2182
    %v4285 = vunpack.c.h.b16 %v2182
    %v4286 = vunpack.c.l.b16 %v2183
    %v4287 = vunpack.c.h.b16 %v2183
    %v4288 = vunpack.c.l.b16 %v2184
    %v4289 = vunpack.c.h.b16 %v2184
    %v4290 = vunpack.c.l.b16 %v2185
    %v4291 = vunpack.c.h.b16 %v2185
    %v4292 = vunpack.c.l.b16 %v2186
    %v4293 = vunpack.c.h.b16 %v2186
    %v4294 = vunpack.c.l.b16 %v2187
    %v4295 = vunpack.c.h.b16 %v2187
    %v4296 = vunpack.c.l.b16 %v2188
    %v4297 = vunpack.c.h.b16 %v2188
    %v4298 = vunpack.c.l.b16 %v2189
    %v4299 = vunpack.c.h.b16 %v2189
    %v4300 = vunpack.c.l.b16 %v2190
    %v4301 = vunpack.c.h.b16 %v2190
    %v4302 = vunpack.c.l.b16 %v2191
    %v4303 = vunpack.c.h.b16 %v2191
    %v4304 = vunpack.c.l.b16 %v2192
    %v4305 = vunpack.c.h.b16 %v2192
    %v4306 = vunpack.c.l.b16 %v2193
    %v4307 = vunpack.c.h.b16 %v2193
    %v4308 = vunpack.c.l.b16 %v2194
    %v4309 = vunpack.c.h.b16 %v2194
    %v4310 = vunpack.c.l.b16 %v2195
    %v4311 = vunpack.c.h.b16 %v2195
    %v4312 = vunpack.c.l.b16 %v2196
    %v4313 = vunpack.c.h.b16 %v2196
    %v4314 = vunpack.c.l.b16 %v2197
    %v4315 = vunpack.c.h.b16 %v2197
    %v4316 = vunpack.c.l.b16 %v2198
    %v4317 = vunpack.c.h.b16 %v2198
    %v4318 = vunpack.c.l.b16 %v2199
    %v4319 = vunpack.c.h.b16 %v2199
    %v4320 = vunpack.c.l.b16 %v2200
    %v4321 = vunpack.c.h.b16 %v2200
    %v4322 = vunpack.c.l.b16 %v2201
    %v4323 = vunpack.c.h.b16 %v2201
    %v4324 = vunpack.c.l.b16 %v2202
    %v4325 = vunpack.c.h.b16 %v2202
    %v4326 = vunpack.c.l.b16 %v2203
    %v4327 = vunpack.c.h.b16 %v2203
    %v4328 = vunpack.c.l.b16 %v2204
    %v4329 = vunpack.c.h.b16 %v2204
    %v4330 = vunpack.c.l.b16 %v2205
    %v4331 = vunpack.c.h.b16 %v2205
    %v4332 = vunpack.c.l.b16 %v2206
    %v4333 = vunpack.c.h.b16 %v2206
    %v4334 = vunpack.c.l.b16 %v2207
    %v4335 = vunpack.c.h.b16 %v2207
    %v4336 = vunpack.c.l.b16 %v2208
    %v4337 = vunpack.c.h.b16 %v2208
    %v4338 = vunpack.c.l.b16 %v2209
    %v4339 = vunpack.c.h.b16 %v2209
    %v4340 = vunpack.c.l.b16 %v2210
    %v4341 = vunpack.c.h.b16 %v2210
    %v4342 = vunpack.c.l.b16 %v2211
    %v4343 = vunpack.c.h.b16 %v2211
    %v4344 = vunpack.c.l.b16 %v2212
    %v4345 = vunpack.c.h.b16 %v2212
    %v4346 = vunpack.c.l.b16 %v2213
    %v4347 = vunpack.c.h.b16 %v2213
    %v4348 = vunpack.c.l.b16 %v2214
    %v4349 = vunpack.c.h.b16 %v2214
    %v4350 = vunpack.c.l.b16 %v2215
    %v4351 = vunpack.c.h.b16 %v2215
    %v4352 = vunpack.c.l.b16 %v2216
    %v4353 = vunpack.c.h.b16 %v2216
    %v4354 = vunpack.c.l.b16 %v2217
    %v4355 = vunpack.c.h.b16 %v2217
    %v4356 = vunpack.c.l.b16 %v2218
    %v4357 = vunpack.c.h.b16 %v2218
    %v4358 = vunpack.c.l.b16 %v2219
    %v4359 = vunpack.c.h.b16 %v2219
    %v4360 = vunpack.c.l.b16 %v2220
    %v4361 = vunpack.c.h.b16 %v2220
    %v4362 = vunpack.c.l.b16 %v2221
    %v4363 = vunpack.c.h.b16 %v2221
    %v4364 = vunpack.c.l.b16 %v2222
    %v4365 = vunpack.c.h.b16 %v2222
    %v4366 = vunpack.c.l.b16 %v2223
    %v4367 = vunpack.c.h.b16 %v2223
    %v4368 = vunpack.c.l.b16 %v2224
    %v4369 = vunpack.c.h.b16 %v2224
    %v4370 = vunpack.c.l.b16 %v2225
    %v4371 = vunpack.c.h.b16 %v2225
    %v4372 = vunpack.c.l.b16 %v2226
    %v4373 = vunpack.c.h.b16 %v2226
    %v4374 = vunpack.c.l.b16 %v2227
    %v4375 = vunpack.c.h.b16 %v2227
    %v4376 = vunpack.c.l.b16 %v2228
    %v4377 = vunpack.c.h.b16 %v2228
    %v4378 = vunpack.c.l.b16 %v2229
    %v4379 = vunpack.c.h.b16 %v2229
    %v4380 = vunpack.c.l.b16 %v2230
    %v4381 = vunpack.c.h.b16 %v2230
    %v4382 = vunpack.c.l.b16 %v2231
    %v4383 = vunpack.c.h.b16 %v2231
    %v4384 = vunpack.c.l.b16 %v2232
    %v4385 = vunpack.c.h.b16 %v2232
    %v4386 = vunpack.c.l.b16 %v2233
    %v4387 = vunpack.c.h.b16 %v2233
    %v4388 = vunpack.c.l.b16 %v2234
    %v4389 = vunpack.c.h.b16 %v2234
    %v4390 = vunpack.c.l.b16 %v2235
    %v4391 = vunpack.c.h.b16 %v2235
    %v4392 = vunpack.c.l.b16 %v2236
    %v4393 = vunpack.c.h.b16 %v2236
    %v4394 = vunpack.c.l.b16 %v2237
    %v4395 = vunpack.c.h.b16 %v2237
    %v4396 = vunpack.c.l.b16 %v2238
    %v4397 = vunpack.c.h.b16 %v2238
    %v4398 = vunpack.c.l.b16 %v2239
    %v4399 = vunpack.c.h.b16 %v2239
    %v4400 = vunpack.c.l.b16 %v2240
    %v4401 = vunpack.c.h.b16 %v2240
    %v4402 = vunpack.c.l.b16 %v2241
    %v4403 = vunpack.c.h.b16 %v2241
    %v4404 = vunpack.c.l.b16 %v2242
    %v4405 = vunpack.c.h.b16 %v2242
    %v4406 = vunpack.c.l.b16 %v2243
    %v4407 = vunpack.c.h.b16 %v2243
    %v4408 = vunpack.c.l.b16 %v2244
    %v4409 = vunpack.c.h.b16 %v2244
    %v4410 = vunpack.c.l.b16 %v2245
    %v4411 = vunpack.c.h.b16 %v2245
    %v4412 = vunpack.c.l.b16 %v2246
    %v4413 = vunpack.c.h.b16 %v2246
    %v4414 = vunpack.c.l.b16 %v2247
    %v4415 = vunpack.c.h.b16 %v2247
    %v4416 = vunpack.c.l.b16 %v2248
    %v4417 = vunpack.c.h.b16 %v2248
    %v4418 = vunpack.c.l.b16 %v2249
    %v4419 = vunpack.c.h.b16 %v2249
    %v4420 = vunpack.c.l.b16 %v2250
    %v4421 = vunpack.c.h.b16 %v2250
    %v4422 = vunpack.c.l.b16 %v2251
    %v4423 = vunpack.c.h.b16 %v2251
    %v4424 = vunpack.c.l.b16 %v2252
    %v4425 = vunpack.c.h.b16 %v2252
    %v4426 = vunpack.c.l.b16 %v2253
    %v4427 = vunpack.c.h.b16 %v2253
    %v4428 = vunpack.c.l.b16 %v2254
    %v4429 = vunpack.c.h.b16 %v2254
    %v4430 = vunpack.c.l.b16 %v2255
    %v4431 = vunpack.c.h.b16 %v2255
    %v4432 = vunpack.c.l.b16 %v2256
    %v4433 = vunpack.c.h.b16 %v2256
    %v4434 = vunpack.c.l.b16 %v2257
    %v4435 = vunpack.c.h.b16 %v2257
    %v4436 = vunpack.c.l.b16 %v2258
    %v4437 = vunpack.c.h.b16 %v2258
    %v4438 = vunpack.c.l.b16 %v2259
    %v4439 = vunpack.c.h.b16 %v2259
    %v4440 = vunpack.c.l.b16 %v2260
    %v4441 = vunpack.c.h.b16 %v2260
    %v4442 = vunpack.c.l.b16 %v2261
    %v4443 = vunpack.c.h.b16 %v2261
    %v4444 = vunpack.c.l.b16 %v2262
    %v4445 = vunpack.c.h.b16 %v2262
    %v4446 = vunpack.c.l.b16 %v2263
    %v4447 = vunpack.c.h.b16 %v2263
    %v4448 = vunpack.c.l.b16 %v2264
    %v4449 = vunpack.c.h.b16 %v2264
    %v4450 = vunpack.c.l.b16 %v2265
    %v4451 = vunpack.c.h.b16 %v2265
    %v4452 = vunpack.c.l.b16 %v2266
    %v4453 = vunpack.c.h.b16 %v2266
    %v4454 = vunpack.c.l.b16 %v2267
    %v4455 = vunpack.c.h.b16 %v2267
    %v4456 = vunpack.c.l.b16 %v2268
    %v4457 = vunpack.c.h.b16 %v2268
    %v4458 = vunpack.c.l.b16 %v2269
    %v4459 = vunpack.c.h.b16 %v2269
    %v4460 = vunpack.c.l.b16 %v2270
    %v4461 = vunpack.c.h.b16 %v2270
    %v4462 = vunpack.c.l.b16 %v2271
    %v4463 = vunpack.c.h.b16 %v2271
    %v4464 = vunpack.c.l.b16 %v2272
    %v4465 = vunpack.c.h.b16 %v2272
    %v4466 = vunpack.c.l.b16 %v2273
    %v4467 = vunpack.c.h.b16 %v2273
    %v4468 = vunpack.c.l.b16 %v2274
    %v4469 = vunpack.c.h.b16 %v2274
    %v4470 = vunpack.c.l.b16 %v2275
    %v4471 = vunpack.c.h.b16 %v2275
    %v4472 = vunpack.c.l.b16 %v2276
    %v4473 = vunpack.c.h.b16 %v2276
    %v4474 = vunpack.c.l.b16 %v2277
    %v4475 = vunpack.c.h.b16 %v2277
    %v4476 = vunpack.c.l.b16 %v2278
    %v4477 = vunpack.c.h.b16 %v2278
    %v4478 = vunpack.c.l.b16 %v2279
    %v4479 = vunpack.c.h.b16 %v2279
    %v4480 = vunpack.c.l.b16 %v2280
    %v4481 = vunpack.c.h.b16 %v2280
    %v4482 = vunpack.c.l.b16 %v2281
    %v4483 = vunpack.c.h.b16 %v2281
    %v4484 = vunpack.c.l.b16 %v2282
    %v4485 = vunpack.c.h.b16 %v2282
    %v4486 = vunpack.c.l.b16 %v2283
    %v4487 = vunpack.c.h.b16 %v2283
    %v4488 = vunpack.c.l.b16 %v2284
    %v4489 = vunpack.c.h.b16 %v2284
    %v4490 = vunpack.c.l.b16 %v2285
    %v4491 = vunpack.c.h.b16 %v2285
    %v4492 = vunpack.c.l.b16 %v2286
    %v4493 = vunpack.c.h.b16 %v2286
    %v4494 = vunpack.c.l.b16 %v2287
    %v4495 = vunpack.c.h.b16 %v2287
    %v4496 = vunpack.c.l.b16 %v2288
    %v4497 = vunpack.c.h.b16 %v2288
    %v4498 = vunpack.c.l.b16 %v2289
    %v4499 = vunpack.c.h.b16 %v2289
    %v4500 = vunpack.c.l.b16 %v2290
    %v4501 = vunpack.c.h.b16 %v2290
    %v4502 = vunpack.c.l.b16 %v2291
    %v4503 = vunpack.c.h.b16 %v2291
    %v4504 = vunpack.c.l.b16 %v2292
    %v4505 = vunpack.c.h.b16 %v2292
    %v4506 = vunpack.c.l.b16 %v2293
    %v4507 = vunpack.c.h.b16 %v2293
    %v4508 = vunpack.c.l.b16 %v2294
    %v4509 = vunpack.c.h.b16 %v2294
    %v4510 = vunpack.c.l.b16 %v2295
    %v4511 = vunpack.c.h.b16 %v2295
    %v4512 = vunpack.c.l.b16 %v2296
    %v4513 = vunpack.c.h.b16 %v2296
    %v4514 = vunpack.c.l.b16 %v2297
    %v4515 = vunpack.c.h.b16 %v2297
    %v4516 = vunpack.c.l.b16 %v2298
    %v4517 = vunpack.c.h.b16 %v2298
    %v4518 = vunpack.c.l.b16 %v2299
    %v4519 = vunpack.c.h.b16 %v2299
    %v4520 = vunpack.c.l.b16 %v2300
    %v4521 = vunpack.c.h.b16 %v2300
    %v4522 = vunpack.c.l.b16 %v2301
    %v4523 = vunpack.c.h.b16 %v2301
    %v4524 = vunpack.c.l.b16 %v2302
    %v4525 = vunpack.c.h.b16 %v2302
    %v4526 = vunpack.c.l.b16 %v2303
    %v4527 = vunpack.c.h.b16 %v2303
    %v4528 = vunpack.c.l.b16 %v2304
    %v4529 = vunpack.c.h.b16 %v2304
    %v4530 = vunpack.c.l.b16 %v2305
    %v4531 = vunpack.c.h.b16 %v2305
    %v4532 = vunpack.c.l.b16 %v2306
    %v4533 = vunpack.c.h.b16 %v2306
    %v4534 = vunpack.c.l.b16 %v2307
    %v4535 = vunpack.c.h.b16 %v2307
    %v4536 = vunpack.c.l.b16 %v2308
    %v4537 = vunpack.c.h.b16 %v2308
    %v4538 = vunpack.c.l.b16 %v2309
    %v4539 = vunpack.c.h.b16 %v2309
    %v4540 = vunpack.c.l.b16 %v2310
    %v4541 = vunpack.c.h.b16 %v2310
    %v4542 = vunpack.c.l.b16 %v2311
    %v4543 = vunpack.c.h.b16 %v2311
    %v4544 = vunpack.c.l.b16 %v2312
    %v4545 = vunpack.c.h.b16 %v2312
    %v4546 = vunpack.c.l.b16 %v2313
    %v4547 = vunpack.c.h.b16 %v2313
    %v4548 = vunpack.c.l.b16 %v2314
    %v4549 = vunpack.c.h.b16 %v2314
    %v4550 = vunpack.c.l.b16 %v2315
    %v4551 = vunpack.c.h.b16 %v2315
    %v4552 = vunpack.c.l.b16 %v2316
    %v4553 = vunpack.c.h.b16 %v2316
    %v4554 = vunpack.c.l.b16 %v2317
    %v4555 = vunpack.c.h.b16 %v2317
    %v4556 = vunpack.c.l.b16 %v2318
    %v4557 = vunpack.c.h.b16 %v2318
    %v4558 = vunpack.c.l.b16 %v2319
    %v4559 = vunpack.c.h.b16 %v2319
    %v4560 = vunpack.c.l.b16 %v2320
    %v4561 = vunpack.c.h.b16 %v2320
    %v4562 = vunpack.c.l.b16 %v2321
    %v4563 = vunpack.c.h.b16 %v2321
    %v4564 = vunpack.c.l.b16 %v2322
    %v4565 = vunpack.c.h.b16 %v2322
    %v4566 = vunpack.c.l.b16 %v2323
    %v4567 = vunpack.c.h.b16 %v2323
    %v4568 = vunpack.c.l.b16 %v2324
    %v4569 = vunpack.c.h.b16 %v2324
    %v4570 = vunpack.c.l.b16 %v2325
    %v4571 = vunpack.c.h.b16 %v2325
    %v4572 = vunpack.c.l.b16 %v2326
    %v4573 = vunpack.c.h.b16 %v2326
    %v4574 = vunpack.c.l.b16 %v2327
    %v4575 = vunpack.c.h.b16 %v2327
    %v4576 = vunpack.c.l.b16 %v2328
    %v4577 = vunpack.c.h.b16 %v2328
    %v4578 = vunpack.c.l.b16 %v2329
    %v4579 = vunpack.c.h.b16 %v2329
    %v4580 = vunpack.c.l.b16 %v2330
    %v4581 = vunpack.c.h.b16 %v2330
    %v4582 = vunpack.c.l.b16 %v2331
    %v4583 = vunpack.c.h.b16 %v2331
    %v4584 = vunpack.c.l.b16 %v2332
    %v4585 = vunpack.c.h.b16 %v2332
    %v4586 = vunpack.c.l.b16 %v2333
    %v4587 = vunpack.c.h.b16 %v2333
    %v4588 = vunpack.c.l.b16 %v2334
    %v4589 = vunpack.c.h.b16 %v2334
    %v4590 = vunpack.c.l.b16 %v2335
    %v4591 = vunpack.c.h.b16 %v2335
    %v4592 = vunpack.c.l.b16 %v2336
    %v4593 = vunpack.c.h.b16 %v2336
    %v4594 = vunpack.c.l.b16 %v2337
    %v4595 = vunpack.c.h.b16 %v2337
    %v4596 = vunpack.c.l.b16 %v2338
    %v4597 = vunpack.c.h.b16 %v2338
    %v4598 = vunpack.c.l.b16 %v2339
    %v4599 = vunpack.c.h.b16 %v2339
    %v4600 = vunpack.c.l.b16 %v2340
    %v4601 = vunpack.c.h.b16 %v2340
    %v4602 = vunpack.c.l.b16 %v2341
    %v4603 = vunpack.c.h.b16 %v2341
    %v4604 = vunpack.c.l.b16 %v2342
    %v4605 = vunpack.c.h.b16 %v2342
    %v4606 = vunpack.c.l.b16 %v2343
    %v4607 = vunpack.c.h.b16 %v2343
    %v4608 = vunpack.c.l.b16 %v2344
    %v4609 = vunpack.c.h.b16 %v2344
    %v4610 = vunpack.c.l.b16 %v2345
    %v4611 = vunpack.c.h.b16 %v2345
    %v4612 = vunpack.c.l.b16 %v2346
    %v4613 = vunpack.c.h.b16 %v2346
    %v4614 = vunpack.c.l.b16 %v2347
    %v4615 = vunpack.c.h.b16 %v2347
    %v4616 = vunpack.c.l.b16 %v2348
    %v4617 = vunpack.c.h.b16 %v2348
    %v4618 = vunpack.c.l.b16 %v2349
    %v4619 = vunpack.c.h.b16 %v2349
    %v4620 = vunpack.c.l.b16 %v2350
    %v4621 = vunpack.c.h.b16 %v2350
    %v4622 = vunpack.c.l.b16 %v2351
    %v4623 = vunpack.c.h.b16 %v2351
    %v4624 = vunpack.c.l.b16 %v2352
    %v4625 = vunpack.c.h.b16 %v2352
    %v4626 = vunpack.c.l.b16 %v2353
    %v4627 = vunpack.c.h.b16 %v2353
    %v4628 = vunpack.c.l.b16 %v2354
    %v4629 = vunpack.c.h.b16 %v2354
    %v4630 = vunpack.c.l.b16 %v2355
    %v4631 = vunpack.c.h.b16 %v2355
    %v4632 = vunpack.c.l.b16 %v2356
    %v4633 = vunpack.c.h.b16 %v2356
    %v4634 = vunpack.c.l.b16 %v2357
    %v4635 = vunpack.c.h.b16 %v2357
    %v4636 = vunpack.c.l.b16 %v2358
    %v4637 = vunpack.c.h.b16 %v2358
    %v4638 = vunpack.c.l.b16 %v2359
    %v4639 = vunpack.c.h.b16 %v2359
    %v4640 = vunpack.c.l.b16 %v2360
    %v4641 = vunpack.c.h.b16 %v2360
    %v4642 = vunpack.c.l.b16 %v2361
    %v4643 = vunpack.c.h.b16 %v2361
    %v4644 = vunpack.c.l.b16 %v2362
    %v4645 = vunpack.c.h.b16 %v2362
    %v4646 = vunpack.c.l.b16 %v2363
    %v4647 = vunpack.c.h.b16 %v2363
    %v4648 = vunpack.c.l.b16 %v2364
    %v4649 = vunpack.c.h.b16 %v2364
    %v4650 = vunpack.c.l.b16 %v2365
    %v4651 = vunpack.c.h.b16 %v2365
    %v4652 = vunpack.c.l.b16 %v2366
    %v4653 = vunpack.c.h.b16 %v2366
    %v4654 = vunpack.c.l.b16 %v2367
    %v4655 = vunpack.c.h.b16 %v2367
    %v4656 = vunpack.c.l.b16 %v2368
    %v4657 = vunpack.c.h.b16 %v2368
    %v4658 = vunpack.c.l.b16 %v2369
    %v4659 = vunpack.c.h.b16 %v2369
    %v4660 = vunpack.c.l.b16 %v2370
    %v4661 = vunpack.c.h.b16 %v2370
    %v4662 = vunpack.c.l.b16 %v2371
    %v4663 = vunpack.c.h.b16 %v2371
    %v4664 = vunpack.c.l.b16 %v2372
    %v4665 = vunpack.c.h.b16 %v2372
    %v4666 = vunpack.c.l.b16 %v2373
    %v4667 = vunpack.c.h.b16 %v2373
    %v4668 = vunpack.c.l.b16 %v2374
    %v4669 = vunpack.c.h.b16 %v2374
    %v4670 = vunpack.c.l.b16 %v2375
    %v4671 = vunpack.c.h.b16 %v2375
    %v4672 = vunpack.c.l.b16 %v2376
    %v4673 = vunpack.c.h.b16 %v2376
    %v4674 = vunpack.c.l.b16 %v2377
    %v4675 = vunpack.c.h.b16 %v2377
    %v4676 = vunpack.c.l.b16 %v2378
    %v4677 = vunpack.c.h.b16 %v2378
    %v4678 = vunpack.c.l.b16 %v2379
    %v4679 = vunpack.c.h.b16 %v2379
    %v4680 = vunpack.c.l.b16 %v2380
    %v4681 = vunpack.c.h.b16 %v2380
    %v4682 = vunpack.c.l.b16 %v2381
    %v4683 = vunpack.c.h.b16 %v2381
    %v4684 = vunpack.c.l.b16 %v2382
    %v4685 = vunpack.c.h.b16 %v2382
    %v4686 = vunpack.c.l.b16 %v2383
    %v4687 = vunpack.c.h.b16 %v2383
    %v4688 = vunpack.c.l.b16 %v2384
    %v4689 = vunpack.c.h.b16 %v2384
    %v4690 = vunpack.c.l.b16 %v2385
    %v4691 = vunpack.c.h.b16 %v2385
    %v4692 = vunpack.c.l.b16 %v2386
    %v4693 = vunpack.c.h.b16 %v2386
    %v4694 = vunpack.c.l.b16 %v2387
    %v4695 = vunpack.c.h.b16 %v2387
    %v4696 = vunpack.c.l.b16 %v2388
    %v4697 = vunpack.c.h.b16 %v2388
    %v4698 = vunpack.c.l.b16 %v2389
    %v4699 = vunpack.c.h.b16 %v2389
    %v4700 = vunpack.c.l.b16 %v2390
    %v4701 = vunpack.c.h.b16 %v2390
    %v4702 = vunpack.c.l.b16 %v2391
    %v4703 = vunpack.c.h.b16 %v2391
    %v4704 = vunpack.c.l.b16 %v2392
    %v4705 = vunpack.c.h.b16 %v2392
    %v4706 = vunpack.c.l.b16 %v2393
    %v4707 = vunpack.c.h.b16 %v2393
    %v4708 = vunpack.c.l.b16 %v2394
    %v4709 = vunpack.c.h.b16 %v2394
    %v4710 = vunpack.c.l.b16 %v2395
    %v4711 = vunpack.c.h.b16 %v2395
    %v4712 = vunpack.c.l.b16 %v2396
    %v4713 = vunpack.c.h.b16 %v2396
    %v4714 = vunpack.c.l.b16 %v2397
    %v4715 = vunpack.c.h.b16 %v2397
    %v4716 = vunpack.c.l.b16 %v2398
    %v4717 = vunpack.c.h.b16 %v2398
    %v4718 = vunpack.c.l.b16 %v2399
    %v4719 = vunpack.c.h.b16 %v2399
    %v4720 = vunpack.c.l.b16 %v2400
    %v4721 = vunpack.c.h.b16 %v2400
    %v4722 = vunpack.c.l.b16 %v2401
    %v4723 = vunpack.c.h.b16 %v2401
    %v4724 = vunpack.c.l.b16 %v2402
    %v4725 = vunpack.c.h.b16 %v2402
    %v4726 = vunpack.c.l.b16 %v2403
    %v4727 = vunpack.c.h.b16 %v2403
    %v4728 = vunpack.c.l.b16 %v2404
    %v4729 = vunpack.c.h.b16 %v2404
    %v4730 = vunpack.c.l.b16 %v2405
    %v4731 = vunpack.c.h.b16 %v2405
    %v4732 = vunpack.c.l.b16 %v2406
    %v4733 = vunpack.c.h.b16 %v2406
    %v4734 = vunpack.c.l.b16 %v2407
    %v4735 = vunpack.c.h.b16 %v2407
    %v4736 = vunpack.c.l.b16 %v2408
    %v4737 = vunpack.c.h.b16 %v2408
    %v4738 = vunpack.c.l.b16 %v2409
    %v4739 = vunpack.c.h.b16 %v2409
    %v4740 = vunpack.c.l.b16 %v2410
    %v4741 = vunpack.c.h.b16 %v2410
    %v4742 = vunpack.c.l.b16 %v2411
    %v4743 = vunpack.c.h.b16 %v2411
    %v4744 = vunpack.c.l.b16 %v2412
    %v4745 = vunpack.c.h.b16 %v2412
    %v4746 = vunpack.c.l.b16 %v2413
    %v4747 = vunpack.c.h.b16 %v2413
    %v4748 = vunpack.c.l.b16 %v2414
    %v4749 = vunpack.c.h.b16 %v2414
    %v4750 = vunpack.c.l.b16 %v2415
    %v4751 = vunpack.c.h.b16 %v2415
    %v4752 = vunpack.c.l.b16 %v2416
    %v4753 = vunpack.c.h.b16 %v2416
    %v4754 = vunpack.c.l.b16 %v2417
    %v4755 = vunpack.c.h.b16 %v2417
    %v4756 = vunpack.c.l.b16 %v2418
    %v4757 = vunpack.c.h.b16 %v2418
    %v4758 = vunpack.c.l.b16 %v2419
    %v4759 = vunpack.c.h.b16 %v2419
    %v4760 = vunpack.c.l.b16 %v2420
    %v4761 = vunpack.c.h.b16 %v2420
    %v4762 = vunpack.c.l.b16 %v2421
    %v4763 = vunpack.c.h.b16 %v2421
    %v4764 = vunpack.c.l.b16 %v2422
    %v4765 = vunpack.c.h.b16 %v2422
    %v4766 = vunpack.c.l.b16 %v2423
    %v4767 = vunpack.c.h.b16 %v2423
    %v4768 = vunpack.c.l.b16 %v2424
    %v4769 = vunpack.c.h.b16 %v2424
    %v4770 = vunpack.c.l.b16 %v2425
    %v4771 = vunpack.c.h.b16 %v2425
    %v4772 = vunpack.c.l.b16 %v2426
    %v4773 = vunpack.c.h.b16 %v2426
    %v4774 = vunpack.c.l.b16 %v2427
    %v4775 = vunpack.c.h.b16 %v2427
    %v4776 = vunpack.c.l.b16 %v2428
    %v4777 = vunpack.c.h.b16 %v2428
    %v4778 = vunpack.c.l.b16 %v2429
    %v4779 = vunpack.c.h.b16 %v2429
    %v4780 = vunpack.c.l.b16 %v2430
    %v4781 = vunpack.c.h.b16 %v2430
    %v4782 = vunpack.c.l.b16 %v2431
    %v4783 = vunpack.c.h.b16 %v2431
    %v4784 = vunpack.c.l.b16 %v2432
    %v4785 = vunpack.c.h.b16 %v2432
    %v4786 = vunpack.c.l.b16 %v2433
    %v4787 = vunpack.c.h.b16 %v2433
    %v4788 = vunpack.c.l.b16 %v2434
    %v4789 = vunpack.c.h.b16 %v2434
    %v4790 = vunpack.c.l.b16 %v2435
    %v4791 = vunpack.c.h.b16 %v2435
    %v4792 = vunpack.c.l.b16 %v2436
    %v4793 = vunpack.c.h.b16 %v2436
    %v4794 = vunpack.c.l.b16 %v2437
    %v4795 = vunpack.c.h.b16 %v2437
    %v4796 = vunpack.c.l.b16 %v2438
    %v4797 = vunpack.c.h.b16 %v2438
    %v4798 = vunpack.c.l.b16 %v2439
    %v4799 = vunpack.c.h.b16 %v2439
    %v4800 = vunpack.c.l.b16 %v2440
    %v4801 = vunpack.c.h.b16 %v2440
    %v4802 = vunpack.c.l.b16 %v2441
    %v4803 = vunpack.c.h.b16 %v2441
    %v4804 = vunpack.c.l.b16 %v2442
    %v4805 = vunpack.c.h.b16 %v2442
    %v4806 = vunpack.c.l.b16 %v2443
    %v4807 = vunpack.c.h.b16 %v2443
    %v4808 = vunpack.c.l.b16 %v2444
    %v4809 = vunpack.c.h.b16 %v2444
    %v4810 = vunpack.c.l.b16 %v2445
    %v4811 = vunpack.c.h.b16 %v2445
    %v4812 = vunpack.c.l.b16 %v2446
    %v4813 = vunpack.c.h.b16 %v2446
    %v4814 = vunpack.c.l.b16 %v2447
    %v4815 = vunpack.c.h.b16 %v2447
    %v4816 = vunpack.c.l.b16 %v2448
    %v4817 = vunpack.c.h.b16 %v2448
    %v4818 = vunpack.c.l.b16 %v2449
    %v4819 = vunpack.c.h.b16 %v2449
    %v4820 = vunpack.c.l.b16 %v2450
    %v4821 = vunpack.c.h.b16 %v2450
    %v4822 = vunpack.c.l.b16 %v2451
    %v4823 = vunpack.c.h.b16 %v2451
    %v4824 = vunpack.c.l.b16 %v2452
    %v4825 = vunpack.c.h.b16 %v2452
    %v4826 = vunpack.c.l.b16 %v2453
    %v4827 = vunpack.c.h.b16 %v2453
    %v4828 = vunpack.c.l.b16 %v2454
    %v4829 = vunpack.c.h.b16 %v2454
    %v4830 = vunpack.c.l.b16 %v2455
    %v4831 = vunpack.c.h.b16 %v2455
    %v4832 = vunpack.c.l.b16 %v2456
    %v4833 = vunpack.c.h.b16 %v2456
    %v4834 = vunpack.c.l.b16 %v2457
    %v4835 = vunpack.c.h.b16 %v2457
    %v4836 = vunpack.c.l.b16 %v2458
    %v4837 = vunpack.c.h.b16 %v2458
    %v4838 = vunpack.c.l.b16 %v2459
    %v4839 = vunpack.c.h.b16 %v2459
    %v4840 = vunpack.c.l.b16 %v2460
    %v4841 = vunpack.c.h.b16 %v2460
    %v4842 = vunpack.c.l.b16 %v2461
    %v4843 = vunpack.c.h.b16 %v2461
    %v4844 = vunpack.c.l.b16 %v2462
    %v4845 = vunpack.c.h.b16 %v2462
    %v4846 = vunpack.c.l.b16 %v2463
    %v4847 = vunpack.c.h.b16 %v2463
    %v4848 = vunpack.c.l.b16 %v2464
    %v4849 = vunpack.c.h.b16 %v2464
    %v4850 = vunpack.c.l.b16 %v2465
    %v4851 = vunpack.c.h.b16 %v2465
    %v4852 = vunpack.c.l.b16 %v2466
    %v4853 = vunpack.c.h.b16 %v2466
    %v4854 = vunpack.c.l.b16 %v2467
    %v4855 = vunpack.c.h.b16 %v2467
    %v4856 = vunpack.c.l.b16 %v2468
    %v4857 = vunpack.c.h.b16 %v2468
    %v4858 = vunpack.c.l.b16 %v2469
    %v4859 = vunpack.c.h.b16 %v2469
    %v4860 = vunpack.c.l.b16 %v2470
    %v4861 = vunpack.c.h.b16 %v2470
    %v4862 = vunpack.c.l.b16 %v2471
    %v4863 = vunpack.c.h.b16 %v2471
    %v4864 = vunpack.c.l.b16 %v2472
    %v4865 = vunpack.c.h.b16 %v2472
    %v4866 = vunpack.c.l.b16 %v2473
    %v4867 = vunpack.c.h.b16 %v2473
    %v4868 = vunpack.c.l.b16 %v2474
    %v4869 = vunpack.c.h.b16 %v2474
    %v4870 = vunpack.c.l.b16 %v2475
    %v4871 = vunpack.c.h.b16 %v2475
    %v4872 = vunpack.c.l.b16 %v2476
    %v4873 = vunpack.c.h.b16 %v2476
    %v4874 = vunpack.c.l.b16 %v2477
    %v4875 = vunpack.c.h.b16 %v2477
    %v4876 = vunpack.c.l.b16 %v2478
    %v4877 = vunpack.c.h.b16 %v2478
    %v4878 = vunpack.c.l.b16 %v2479
    %v4879 = vunpack.c.h.b16 %v2479
    %v4880 = vunpack.c.l.b16 %v2480
    %v4881 = vunpack.c.h.b16 %v2480
    %v4882 = vunpack.c.l.b16 %v2481
    %v4883 = vunpack.c.h.b16 %v2481
    %v4884 = vunpack.c.l.b16 %v2482
    %v4885 = vunpack.c.h.b16 %v2482
    %v4886 = vunpack.c.l.b16 %v2483
    %v4887 = vunpack.c.h.b16 %v2483
    %v4888 = vunpack.c.l.b16 %v2484
    %v4889 = vunpack.c.h.b16 %v2484
    %v4890 = vunpack.c.l.b16 %v2485
    %v4891 = vunpack.c.h.b16 %v2485
    %v4892 = vunpack.c.l.b16 %v2486
    %v4893 = vunpack.c.h.b16 %v2486
    %v4894 = vunpack.c.l.b16 %v2487
    %v4895 = vunpack.c.h.b16 %v2487
    %v4896 = vunpack.c.l.b16 %v2488
    %v4897 = vunpack.c.h.b16 %v2488
    %v4898 = vunpack.c.l.b16 %v2489
    %v4899 = vunpack.c.h.b16 %v2489
    %v4900 = vunpack.c.l.b16 %v2490
    %v4901 = vunpack.c.h.b16 %v2490
    %v4902 = vunpack.c.l.b16 %v2491
    %v4903 = vunpack.c.h.b16 %v2491
    %v4904 = vunpack.c.l.b16 %v2492
    %v4905 = vunpack.c.h.b16 %v2492
    %v4906 = vunpack.c.l.b16 %v2493
    %v4907 = vunpack.c.h.b16 %v2493
    %v4908 = vunpack.c.l.b16 %v2494
    %v4909 = vunpack.c.h.b16 %v2494
    %v4910 = vunpack.c.l.b16 %v2495
    %v4911 = vunpack.c.h.b16 %v2495
    %v4912 = vunpack.c.l.b16 %v2496
    %v4913 = vunpack.c.h.b16 %v2496
    %v4914 = vunpack.c.l.b16 %v2497
    %v4915 = vunpack.c.h.b16 %v2497
    %v4916 = vunpack.c.l.b16 %v2498
    %v4917 = vunpack.c.h.b16 %v2498
    %v4918 = vunpack.c.l.b16 %v2499
    %v4919 = vunpack.c.h.b16 %v2499
    %v4920 = vunpack.c.l.b16 %v2500
    %v4921 = vunpack.c.h.b16 %v2500
    %v4922 = vunpack.c.l.b16 %v2501
    %v4923 = vunpack.c.h.b16 %v2501
    %v4924 = vunpack.c.l.b16 %v2502
    %v4925 = vunpack.c.h.b16 %v2502
    %v4926 = vunpack.c.l.b16 %v2503
    %v4927 = vunpack.c.h.b16 %v2503
    %v4928 = vunpack.c.l.b16 %v2504
    %v4929 = vunpack.c.h.b16 %v2504
    %v4930 = vunpack.c.l.b16 %v2505
    %v4931 = vunpack.c.h.b16 %v2505
    %v4932 = vunpack.c.l.b16 %v2506
    %v4933 = vunpack.c.h.b16 %v2506
    %v4934 = vunpack.c.l.b16 %v2507
    %v4935 = vunpack.c.h.b16 %v2507
    %v4936 = vunpack.c.l.b16 %v2508
    %v4937 = vunpack.c.h.b16 %v2508
    %v4938 = vunpack.c.l.b16 %v2509
    %v4939 = vunpack.c.h.b16 %v2509
    %v4940 = vunpack.c.l.b16 %v2510
    %v4941 = vunpack.c.h.b16 %v2510
    %v4942 = vunpack.c.l.b16 %v2511
    %v4943 = vunpack.c.h.b16 %v2511
    %v4944 = vunpack.c.l.b16 %v2512
    %v4945 = vunpack.c.h.b16 %v2512
    %v4946 = vunpack.c.l.b16 %v2513
    %v4947 = vunpack.c.h.b16 %v2513
    %v4948 = vunpack.c.l.b16 %v2514
    %v4949 = vunpack.c.h.b16 %v2514
    %v4950 = vunpack.c.l.b16 %v2515
    %v4951 = vunpack.c.h.b16 %v2515
    %v4952 = vunpack.c.l.b16 %v2516
    %v4953 = vunpack.c.h.b16 %v2516
    %v4954 = vunpack.c.l.b16 %v2517
    %v4955 = vunpack.c.h.b16 %v2517
    %v4956 = vunpack.c.l.b16 %v2518
    %v4957 = vunpack.c.h.b16 %v2518
    %v4958 = vunpack.c.l.b16 %v2519
    %v4959 = vunpack.c.h.b16 %v2519
    %v4960 = vunpack.c.l.b16 %v2520
    %v4961 = vunpack.c.h.b16 %v2520
    %v4962 = vunpack.c.l.b16 %v2521
    %v4963 = vunpack.c.h.b16 %v2521
    %v4964 = vunpack.c.l.b16 %v2522
    %v4965 = vunpack.c.h.b16 %v2522
    %v4966 = vunpack.c.l.b16 %v2523
    %v4967 = vunpack.c.h.b16 %v2523
    %v4968 = vunpack.c.l.b16 %v2524
    %v4969 = vunpack.c.h.b16 %v2524
    %v4970 = vunpack.c.l.b16 %v2525
    %v4971 = vunpack.c.h.b16 %v2525
    %v4972 = vunpack.c.l.b16 %v2526
    %v4973 = vunpack.c.h.b16 %v2526
    %v4974 = vunpack.c.l.b16 %v2527
    %v4975 = vunpack.c.h.b16 %v2527
    %v4976 = vunpack.c.l.b16 %v2528
    %v4977 = vunpack.c.h.b16 %v2528
    %v4978 = vunpack.c.l.b16 %v2529
    %v4979 = vunpack.c.h.b16 %v2529
    %v4980 = vunpack.c.l.b16 %v2530
    %v4981 = vunpack.c.h.b16 %v2530
    %v4982 = vunpack.c.l.b16 %v2531
    %v4983 = vunpack.c.h.b16 %v2531
    %v4984 = vunpack.c.l.b16 %v2532
    %v4985 = vunpack.c.h.b16 %v2532
    %v4986 = vunpack.c.l.b16 %v2533
    %v4987 = vunpack.c.h.b16 %v2533
    %v4988 = vunpack.c.l.b16 %v2534
    %v4989 = vunpack.c.h.b16 %v2534
    %v4990 = vunpack.c.l.b16 %v2535
    %v4991 = vunpack.c.h.b16 %v2535
    %v4992 = vunpack.c.l.b16 %v2536
    %v4993 = vunpack.c.h.b16 %v2536
    %v4994 = vunpack.c.l.b16 %v2537
    %v4995 = vunpack.c.h.b16 %v2537
    %v4996 = vunpack.c.l.b16 %v2538
    %v4997 = vunpack.c.h.b16 %v2538
    %v4998 = vunpack.c.l.b16 %v2539
    %v4999 = vunpack.c.h.b16 %v2539
    %v5000 = vunpack.c.l.b16 %v2540
    %v5001 = vunpack.c.h.b16 %v2540
    %v5002 = vpack.c.b16 %v3438, %v3434
    %v5003 = vpack.c.b16 %v3439, %v3435
    %v5004 = vpack.c.b16 %v3440, %v3436
    %v5005 = vpack.c.b16 %v3441, %v3437
    %v5006 = vpack.c.b16 %v3446, %v3442
    %v5007 = vpack.c.b16 %v3447, %v3443
    %v5008 = vpack.c.b16 %v3448, %v3444
    %v5009 = vpack.c.b16 %v3449, %v3445
    %v5010 = vpack.c.b16 %v3454, %v3450
    %v5011 = vpack.c.b16 %v3455, %v3451
    %v5012 = vpack.c.b16 %v3456, %v3452
    %v5013 = vpack.c.b16 %v3457, %v3453
    %v5014 = vpack.c.b16 %v3462, %v3458
    %v5015 = vpack.c.b16 %v3463, %v3459
    %v5016 = vpack.c.b16 %v3464, %v3460
    %v5017 = vpack.c.b16 %v3465, %v3461
    %v5018 = vpack.c.b16 %v3470, %v3466
    %v5019 = vpack.c.b16 %v3471, %v3467
    %v5020 = vpack.c.b16 %v3472, %v3468
    %v5021 = vpack.c.b16 %v3473, %v3469
    %v5022 = vpack.c.b16 %v3478, %v3474
    %v5023 = vpack.c.b16 %v3479, %v3475
    %v5024 = vpack.c.b16 %v3480, %v3476
    %v5025 = vpack.c.b16 %v3481, %v3477
    %v5026 = vpack.c.b16 %v3486, %v3482
    %v5027 = vpack.c.b16 %v3487, %v3483
    %v5028 = vpack.c.b16 %v3488, %v3484
    %v5029 = vpack.c.b16 %v3489, %v3485
    %v5030 = vpack.c.b16 %v3494, %v3490
    %v5031 = vpack.c.b16 %v3495, %v3491
    %v5032 = vpack.c.b16 %v3496, %v3492
    %v5033 = vpack.c.b16 %v3497, %v3493
    %v5034 = vpack.c.b16 %v3502, %v3498
    %v5035 = vpack.c.b16 %v3503, %v3499
    %v5036 = vpack.c.b16 %v3504, %v3500
    %v5037 = vpack.c.b16 %v3505, %v3501
    %v5038 = vpack.c.b16 %v3510, %v3506
    %v5039 = vpack.c.b16 %v3511, %v3507
    %v5040 = vpack.c.b16 %v3512, %v3508
    %v5041 = vpack.c.b16 %v3513, %v3509
    %v5042 = vpack.c.b16 %v3518, %v3514
    %v5043 = vpack.c.b16 %v3519, %v3515
    %v5044 = vpack.c.b16 %v3520, %v3516
    %v5045 = vpack.c.b16 %v3521, %v3517
    %v5046 = vpack.c.b16 %v3526, %v3522
    %v5047 = vpack.c.b16 %v3527, %v3523
    %v5048 = vpack.c.b16 %v3528, %v3524
    %v5049 = vpack.c.b16 %v3529, %v3525
    %v5050 = vpack.c.b16 %v3534, %v3530
    %v5051 = vpack.c.b16 %v3535, %v3531
    %v5052 = vpack.c.b16 %v3536, %v3532
    %v5053 = vpack.c.b16 %v3537, %v3533
    %v5054 = vpack.c.b16 %v3542, %v3538
    %v5055 = vpack.c.b16 %v3543, %v3539
    %v5056 = vpack.c.b16 %v3544, %v3540
    %v5057 = vpack.c.b16 %v3545, %v3541
    %v5058 = vpack.c.b16 %v3550, %v3546
    %v5059 = vpack.c.b16 %v3551, %v3547
    %v5060 = vpack.c.b16 %v3552, %v3548
    %v5061 = vpack.c.b16 %v3553, %v3549
    %v5062 = vpack.c.b16 %v3558, %v3554
    %v5063 = vpack.c.b16 %v3559, %v3555
    %v5064 = vpack.c.b16 %v3560, %v3556
    %v5065 = vpack.c.b16 %v3561, %v3557
    %v5066 = vpack.c.b16 %v3566, %v3562
    %v5067 = vpack.c.b16 %v3567, %v3563
    %v5068 = vpack.c.b16 %v3568, %v3564
    %v5069 = vpack.c.b16 %v3569, %v3565
    %v5070 = vpack.c.b16 %v3574, %v3570
    %v5071 = vpack.c.b16 %v3575, %v3571
    %v5072 = vpack.c.b16 %v3576, %v3572
    %v5073 = vpack.c.b16 %v3577, %v3573
    %v5074 = vpack.c.b16 %v3582, %v3578
    %v5075 = vpack.c.b16 %v3583, %v3579
    %v5076 = vpack.c.b16 %v3584, %v3580
    %v5077 = vpack.c.b16 %v3585, %v3581
    %v5078 = vpack.c.b16 %v3590, %v3586
    %v5079 = vpack.c.b16 %v3591, %v3587
    %v5080 = vpack.c.b16 %v3592, %v3588
    %v5081 = vpack.c.b16 %v3593, %v3589
    %v5082 = vpack.c.b16 %v3598, %v3594
    %v5083 = vpack.c.b16 %v3599, %v3595
    %v5084 = vpack.c.b16 %v3600, %v3596
    %v5085 = vpack.c.b16 %v3601, %v3597
    %v5086 = vpack.c.b16 %v3606, %v3602
    %v5087 = vpack.c.b16 %v3607, %v3603
    %v5088 = vpack.c.b16 %v3608, %v3604
    %v5089 = vpack.c.b16 %v3609, %v3605
    %v5090 = vpack.c.b16 %v3614, %v3610
    %v5091 = vpack.c.b16 %v3615, %v3611
    %v5092 = vpack.c.b16 %v3616, %v3612
    %v5093 = vpack.c.b16 %v3617, %v3613
    %v5094 = vpack.c.b16 %v3622, %v3618
    %v5095 = vpack.c.b16 %v3623, %v3619
    %v5096 = vpack.c.b16 %v3624, %v3620
    %v5097 = vpack.c.b16 %v3625, %v3621
    %v5098 = vpack.c.b16 %v3630, %v3626
    %v5099 = vpack.c.b16 %v3631, %v3627
    %v5100 = vpack.c.b16 %v3632, %v3628
    %v5101 = vpack.c.b16 %v3633, %v3629
    %v5102 = vpack.c.b16 %v3638, %v3634
    %v5103 = vpack.c.b16 %v3639, %v3635
    %v5104 = vpack.c.b16 %v3640, %v3636
    %v5105 = vpack.c.b16 %v3641, %v3637
    %v5106 = vpack.c.b16 %v3646, %v3642
    %v5107 = vpack.c.b16 %v3647, %v3643
    %v5108 = vpack.c.b16 %v3648, %v3644
    %v5109 = vpack.c.b16 %v3649, %v3645
    %v5110 = vpack.c.b16 %v3654, %v3650
    %v5111 = vpack.c.b16 %v3655, %v3651
    %v5112 = vpack.c.b16 %v3656, %v3652
    %v5113 = vpack.c.b16 %v3657, %v3653
    %v5114 = vpack.c.b16 %v3662, %v3658
    %v5115 = vpack.c.b16 %v3663, %v3659
    %v5116 = vpack.c.b16 %v3664, %v3660
    %v5117 = vpack.c.b16 %v3665, %v3661
    %v5118 = vpack.c.b16 %v3670, %v3666
    %v5119 = vpack.c.b16 %v3671, %v3667
    %v5120 = vpack.c.b16 %v3672, %v3668
    %v5121 = vpack.c.b16 %v3673, %v3669
    %v5122 = vpack.c.b16 %v3678, %v3674
    %v5123 = vpack.c.b16 %v3679, %v3675
    %v5124 = vpack.c.b16 %v3680, %v3676
    %v5125 = vpack.c.b16 %v3681, %v3677
    %v5126 = vpack.c.b16 %v3686, %v3682
    %v5127 = vpack.c.b16 %v3687, %v3683
    %v5128 = vpack.c.b16 %v3688, %v3684
    %v5129 = vpack.c.b16 %v3689, %v3685
    %v5130 = vpack.c.b16 %v3694, %v3690
    %v5131 = vpack.c.b16 %v3695, %v3691
    %v5132 = vpack.c.b16 %v3696, %v3692
    %v5133 = vpack.c.b16 %v3697, %v3693
    %v5134 = vpack.c.b16 %v3702, %v3698
    %v5135 = vpack.c.b16 %v3703, %v3699
    %v5136 = vpack.c.b16 %v3704, %v3700
    %v5137 = vpack.c.b16 %v3705, %v3701
    %v5138 = vpack.c.b16 %v3710, %v3706
    %v5139 = vpack.c.b16 %v3711, %v3707
    %v5140 = vpack.c.b16 %v3712, %v3708
    %v5141 = vpack.c.b16 %v3713, %v3709
    %v5142 = vpack.c.b16 %v3718, %v3714
    %v5143 = vpack.c.b16 %v3719, %v3715
    %v5144 = vpack.c.b16 %v3720, %v3716
    %v5145 = vpack.c.b16 %v3721, %v3717
    %v5146 = vpack.c.b16 %v3726, %v3722
    %v5147 = vpack.c.b16 %v3727, %v3723
    %v5148 = vpack.c.b16 %v3728, %v3724
    %v5149 = vpack.c.b16 %v3729, %v3725
    %v5150 = vpack.c.b16 %v3734, %v3730
    %v5151 = vpack.c.b16 %v3735, %v3731
    %v5152 = vpack.c.b16 %v3736, %v3732
    %v5153 = vpack.c.b16 %v3737, %v3733
    %v5154 = vpack.c.b16 %v3742, %v3738
    %v5155 = vpack.c.b16 %v3743, %v3739
    %v5156 = vpack.c.b16 %v3744, %v3740
    %v5157 = vpack.c.b16 %v3745, %v3741
    %v5158 = vpack.c.b16 %v3750, %v3746
    %v5159 = vpack.c.b16 %v3751, %v3747
    %v5160 = vpack.c.b16 %v3752, %v3748
    %v5161 = vpack.c.b16 %v3753, %v3749
    %v5162 = vpack.c.b16 %v3758, %v3754
    %v5163 = vpack.c.b16 %v3759, %v3755
    %v5164 = vpack.c.b16 %v3760, %v3756
    %v5165 = vpack.c.b16 %v3761, %v3757
    %v5166 = vpack.c.b16 %v3766, %v3762
    %v5167 = vpack.c.b16 %v3767, %v3763
    %v5168 = vpack.c.b16 %v3768, %v3764
    %v5169 = vpack.c.b16 %v3769, %v3765
    %v5170 = vpack.c.b16 %v3774, %v3770
    %v5171 = vpack.c.b16 %v3775, %v3771
    %v5172 = vpack.c.b16 %v3776, %v3772
    %v5173 = vpack.c.b16 %v3777, %v3773
    %v5174 = vpack.c.b16 %v3782, %v3778
    %v5175 = vpack.c.b16 %v3783, %v3779
    %v5176 = vpack.c.b16 %v3784, %v3780
    %v5177 = vpack.c.b16 %v3785, %v3781
    %v5178 = vpack.c.b16 %v3790, %v3786
    %v5179 = vpack.c.b16 %v3791, %v3787
    %v5180 = vpack.c.b16 %v3792, %v3788
    %v5181 = vpack.c.b16 %v3793, %v3789
    %v5182 = vpack.c.b16 %v3798, %v3794
    %v5183 = vpack.c.b16 %v3799, %v3795
    %v5184 = vpack.c.b16 %v3800, %v3796
    %v5185 = vpack.c.b16 %v3801, %v3797
    %v5186 = vpack.c.b16 %v3806, %v3802
    %v5187 = vpack.c.b16 %v3807, %v3803
    %v5188 = vpack.c.b16 %v3808, %v3804
    %v5189 = vpack.c.b16 %v3809, %v3805
    %v5190 = vpack.c.b16 %v3814, %v3810
    %v5191 = vpack.c.b16 %v3815, %v3811
    %v5192 = vpack.c.b16 %v3816, %v3812
    %v5193 = vpack.c.b16 %v3817, %v3813
    %v5194 = vpack.c.b16 %v3822, %v3818
    %v5195 = vpack.c.b16 %v3823, %v3819
    %v5196 = vpack.c.b16 %v3824, %v3820
    %v5197 = vpack.c.b16 %v3825, %v3821
    %v5198 = vpack.c.b16 %v3830, %v3826
    %v5199 = vpack.c.b16 %v3831, %v3827
    %v5200 = vpack.c.b16 %v3832, %v3828
    %v5201 = vpack.c.b16 %v3833, %v3829
    %v5202 = vpack.c.b16 %v3838, %v3834
    %v5203 = vpack.c.b16 %v3839, %v3835
    %v5204 = vpack.c.b16 %v3840, %v3836
    %v5205 = vpack.c.b16 %v3841, %v3837
    %v5206 = vpack.c.b16 %v3846, %v3842
    %v5207 = vpack.c.b16 %v3847, %v3843
    %v5208 = vpack.c.b16 %v3848, %v3844
    %v5209 = vpack.c.b16 %v3849, %v3845
    %v5210 = vpack.c.b16 %v3854, %v3850
    %v5211 = vpack.c.b16 %v3855, %v3851
    %v5212 = vpack.c.b16 %v3856, %v3852
    %v5213 = vpack.c.b16 %v3857, %v3853
    %v5214 = vpack.c.b16 %v3862, %v3858
    %v5215 = vpack.c.b16 %v3863, %v3859
    %v5216 = vpack.c.b16 %v3864, %v3860
    %v5217 = vpack.c.b16 %v3865, %v3861
    %v5218 = vpack.c.b16 %v3870, %v3866
    %v5219 = vpack.c.b16 %v3871, %v3867
    %v5220 = vpack.c.b16 %v3872, %v3868
    %v5221 = vpack.c.b16 %v3873, %v3869
    %v5222 = vpack.c.b16 %v3878, %v3874
    %v5223 = vpack.c.b16 %v3879, %v3875
    %v5224 = vpack.c.b16 %v3880, %v3876
    %v5225 = vpack.c.b16 %v3881, %v3877
    %v5226 = vpack.c.b16 %v3886, %v3882
    %v5227 = vpack.c.b16 %v3887, %v3883
    %v5228 = vpack.c.b16 %v3888, %v3884
    %v5229 = vpack.c.b16 %v3889, %v3885
    %v5230 = vpack.c.b16 %v3894, %v3890
    %v5231 = vpack.c.b16 %v3895, %v3891
    %v5232 = vpack.c.b16 %v3896, %v3892
    %v5233 = vpack.c.b16 %v3897, %v3893
    %v5234 = vpack.c.b16 %v3902, %v3898
    %v5235 = vpack.c.b16 %v3903, %v3899
    %v5236 = vpack.c.b16 %v3904, %v3900
    %v5237 = vpack.c.b16 %v3905, %v3901
    %v5238 = vpack.c.b16 %v3910, %v3906
    %v5239 = vpack.c.b16 %v3911, %v3907
    %v5240 = vpack.c.b16 %v3912, %v3908
    %v5241 = vpack.c.b16 %v3913, %v3909
    %v5242 = vpack.c.b16 %v3918, %v3914
    %v5243 = vpack.c.b16 %v3919, %v3915
    %v5244 = vpack.c.b16 %v3920, %v3916
    %v5245 = vpack.c.b16 %v3921, %v3917
    %v5246 = vpack.c.b16 %v3926, %v3922
    %v5247 = vpack.c.b16 %v3927, %v3923
    %v5248 = vpack.c.b16 %v3928, %v3924
    %v5249 = vpack.c.b16 %v3929, %v3925
    %v5250 = vpack.c.b16 %v3934, %v3930
    %v5251 = vpack.c.b16 %v3935, %v3931
    %v5252 = vpack.c.b16 %v3936, %v3932
    %v5253 = vpack.c.b16 %v3937, %v3933
    %v5254 = vpack.c.b16 %v3942, %v3938
    %v5255 = vpack.c.b16 %v3943, %v3939
    %v5256 = vpack.c.b16 %v3944, %v3940
    %v5257 = vpack.c.b16 %v3945, %v3941
    %v5258 = vpack.c.b16 %v3950, %v3946
    %v5259 = vpack.c.b16 %v3951, %v3947
    %v5260 = vpack.c.b16 %v3952, %v3948
    %v5261 = vpack.c.b16 %v3953, %v3949
    %v5262 = vpack.c.b16 %v3958, %v3954
    %v5263 = vpack.c.b16 %v3959, %v3955
    %v5264 = vpack.c.b16 %v3960, %v3956
    %v5265 = vpack.c.b16 %v3961, %v3957
    %v5266 = vpack.c.b16 %v3966, %v3962
    %v5267 = vpack.c.b16 %v3967, %v3963
    %v5268 = vpack.c.b16 %v3968, %v3964
    %v5269 = vpack.c.b16 %v3969, %v3965
    %v5270 = vpack.c.b16 %v3974, %v3970
    %v5271 = vpack.c.b16 %v3975, %v3971
    %v5272 = vpack.c.b16 %v3976, %v3972
    %v5273 = vpack.c.b16 %v3977, %v3973
    %v5274 = vpack.c.b16 %v3982, %v3978
    %v5275 = vpack.c.b16 %v3983, %v3979
    %v5276 = vpack.c.b16 %v3984, %v3980
    %v5277 = vpack.c.b16 %v3985, %v3981
    %v5278 = vpack.c.b16 %v3990, %v3986
    %v5279 = vpack.c.b16 %v3991, %v3987
    %v5280 = vpack.c.b16 %v3992, %v3988
    %v5281 = vpack.c.b16 %v3993, %v3989
    %v5282 = vpack.c.b16 %v3998, %v3994
    %v5283 = vpack.c.b16 %v3999, %v3995
    %v5284 = vpack.c.b16 %v4000, %v3996
    %v5285 = vpack.c.b16 %v4001, %v3997
    %v5286 = vpack.c.b16 %v4006, %v4002
    %v5287 = vpack.c.b16 %v4007, %v4003
    %v5288 = vpack.c.b16 %v4008, %v4004
    %v5289 = vpack.c.b16 %v4009, %v4005
    %v5290 = vpack.c.b16 %v4014, %v4010
    %v5291 = vpack.c.b16 %v4015, %v4011
    %v5292 = vpack.c.b16 %v4016, %v4012
    %v5293 = vpack.c.b16 %v4017, %v4013
    %v5294 = vpack.c.b16 %v4022, %v4018
    %v5295 = vpack.c.b16 %v4023, %v4019
    %v5296 = vpack.c.b16 %v4024, %v4020
    %v5297 = vpack.c.b16 %v4025, %v4021
    %v5298 = vpack.c.b16 %v4030, %v4026
    %v5299 = vpack.c.b16 %v4031, %v4027
    %v5300 = vpack.c.b16 %v4032, %v4028
    %v5301 = vpack.c.b16 %v4033, %v4029
    %v5302 = vpack.c.b16 %v4038, %v4034
    %v5303 = vpack.c.b16 %v4039, %v4035
    %v5304 = vpack.c.b16 %v4040, %v4036
    %v5305 = vpack.c.b16 %v4041, %v4037
    %v5306 = vpack.c.b16 %v4046, %v4042
    %v5307 = vpack.c.b16 %v4047, %v4043
    %v5308 = vpack.c.b16 %v4048, %v4044
    %v5309 = vpack.c.b16 %v4049, %v4045
    %v5310 = vpack.c.b16 %v4054, %v4050
    %v5311 = vpack.c.b16 %v4055, %v4051
    %v5312 = vpack.c.b16 %v4056, %v4052
    %v5313 = vpack.c.b16 %v4057, %v4053
    %v5314 = vpack.c.b16 %v4062, %v4058
    %v5315 = vpack.c.b16 %v4063, %v4059
    %v5316 = vpack.c.b16 %v4064, %v4060
    %v5317 = vpack.c.b16 %v4065, %v4061
    %v5318 = vpack.c.b16 %v4070, %v4066
    %v5319 = vpack.c.b16 %v4071, %v4067
    %v5320 = vpack.c.b16 %v4072, %v4068
    %v5321 = vpack.c.b16 %v4073, %v4069
    %v5322 = vpack.c.b16 %v4078, %v4074
    %v5323 = vpack.c.b16 %v4079, %v4075
    %v5324 = vpack.c.b16 %v4080, %v4076
    %v5325 = vpack.c.b16 %v4081, %v4077
    %v5326 = vpack.c.b16 %v4086, %v4082
    %v5327 = vpack.c.b16 %v4087, %v4083
    %v5328 = vpack.c.b16 %v4088, %v4084
    %v5329 = vpack.c.b16 %v4089, %v4085
    %v5330 = vpack.c.b16 %v4094, %v4090
    %v5331 = vpack.c.b16 %v4095, %v4091
    %v5332 = vpack.c.b16 %v4096, %v4092
    %v5333 = vpack.c.b16 %v4097, %v4093
    %v5334 = vpack.c.b16 %v4102, %v4098
    %v5335 = vpack.c.b16 %v4103, %v4099
    %v5336 = vpack.c.b16 %v4104, %v4100
    %v5337 = vpack.c.b16 %v4105, %v4101
    %v5338 = vpack.c.b16 %v4110, %v4106
    %v5339 = vpack.c.b16 %v4111, %v4107
    %v5340 = vpack.c.b16 %v4112, %v4108
    %v5341 = vpack.c.b16 %v4113, %v4109
    %v5342 = vpack.c.b16 %v4118, %v4114
    %v5343 = vpack.c.b16 %v4119, %v4115
    %v5344 = vpack.c.b16 %v4120, %v4116
    %v5345 = vpack.c.b16 %v4121, %v4117
    %v5346 = vpack.c.b16 %v4126, %v4122
    %v5347 = vpack.c.b16 %v4127, %v4123
    %v5348 = vpack.c.b16 %v4128, %v4124
    %v5349 = vpack.c.b16 %v4129, %v4125
    %v5350 = vpack.c.b16 %v4134, %v4130
    %v5351 = vpack.c.b16 %v4135, %v4131
    %v5352 = vpack.c.b16 %v4136, %v4132
    %v5353 = vpack.c.b16 %v4137, %v4133
    %v5354 = vpack.c.b16 %v4142, %v4138
    %v5355 = vpack.c.b16 %v4143, %v4139
    %v5356 = vpack.c.b16 %v4144, %v4140
    %v5357 = vpack.c.b16 %v4145, %v4141
    %v5358 = vpack.c.b16 %v4150, %v4146
    %v5359 = vpack.c.b16 %v4151, %v4147
    %v5360 = vpack.c.b16 %v4152, %v4148
    %v5361 = vpack.c.b16 %v4153, %v4149
    %v5362 = vpack.c.b16 %v4158, %v4154
    %v5363 = vpack.c.b16 %v4159, %v4155
    %v5364 = vpack.c.b16 %v4160, %v4156
    %v5365 = vpack.c.b16 %v4161, %v4157
    %v5366 = vpack.c.b16 %v4166, %v4162
    %v5367 = vpack.c.b16 %v4167, %v4163
    %v5368 = vpack.c.b16 %v4168, %v4164
    %v5369 = vpack.c.b16 %v4169, %v4165
    %v5370 = vpack.c.b16 %v4174, %v4170
    %v5371 = vpack.c.b16 %v4175, %v4171
    %v5372 = vpack.c.b16 %v4176, %v4172
    %v5373 = vpack.c.b16 %v4177, %v4173
    %v5374 = vpack.c.b16 %v4182, %v4178
    %v5375 = vpack.c.b16 %v4183, %v4179
    %v5376 = vpack.c.b16 %v4184, %v4180
    %v5377 = vpack.c.b16 %v4185, %v4181
    %v5378 = vpack.c.b16 %v4190, %v4186
    %v5379 = vpack.c.b16 %v4191, %v4187
    %v5380 = vpack.c.b16 %v4192, %v4188
    %v5381 = vpack.c.b16 %v4193, %v4189
    %v5382 = vpack.c.b16 %v4198, %v4194
    %v5383 = vpack.c.b16 %v4199, %v4195
    %v5384 = vpack.c.b16 %v4200, %v4196
    %v5385 = vpack.c.b16 %v4201, %v4197
    %v5386 = vpack.c.b16 %v4206, %v4202
    %v5387 = vpack.c.b16 %v4207, %v4203
    %v5388 = vpack.c.b16 %v4208, %v4204
    %v5389 = vpack.c.b16 %v4209, %v4205
    %v5390 = vpack.c.b16 %v4214, %v4210
    %v5391 = vpack.c.b16 %v4215, %v4211
    %v5392 = vpack.c.b16 %v4216, %v4212
    %v5393 = vpack.c.b16 %v4217, %v4213
    %v5394 = vpack.c.b16 %v4222, %v4218
    %v5395 = vpack.c.b16 %v4223, %v4219
    %v5396 = vpack.c.b16 %v4224, %v4220
    %v5397 = vpack.c.b16 %v4225, %v4221
    %v5398 = vpack.c.b16 %v4230, %v4226
    %v5399 = vpack.c.b16 %v4231, %v4227
    %v5400 = vpack.c.b16 %v4232, %v4228
    %v5401 = vpack.c.b16 %v4233, %v4229
    %v5402 = vpack.c.b16 %v4238, %v4234
    %v5403 = vpack.c.b16 %v4239, %v4235
    %v5404 = vpack.c.b16 %v4240, %v4236
    %v5405 = vpack.c.b16 %v4241, %v4237
    %v5406 = vpack.c.b16 %v4246, %v4242
    %v5407 = vpack.c.b16 %v4247, %v4243
    %v5408 = vpack.c.b16 %v4248, %v4244
    %v5409 = vpack.c.b16 %v4249, %v4245
    %v5410 = vpack.c.b16 %v4254, %v4250
    %v5411 = vpack.c.b16 %v4255, %v4251
    %v5412 = vpack.c.b16 %v4256, %v4252
    %v5413 = vpack.c.b16 %v4257, %v4253
    %v5414 = vpack.c.b16 %v4262, %v4258
    %v5415 = vpack.c.b16 %v4263, %v4259
    %v5416 = vpack.c.b16 %v4264, %v4260
    %v5417 = vpack.c.b16 %v4265, %v4261
    %v5418 = vpack.c.b16 %v4270, %v4266
    %v5419 = vpack.c.b16 %v4271, %v4267
    %v5420 = vpack.c.b16 %v4272, %v4268
    %v5421 = vpack.c.b16 %v4273, %v4269
    %v5422 = vpack.c.b16 %v4278, %v4274
    %v5423 = vpack.c.b16 %v4279, %v4275
    %v5424 = vpack.c.b16 %v4280, %v4276
    %v5425 = vpack.c.b16 %v4281, %v4277
    %v5426 = vpack.c.b16 %v4286, %v4282
    %v5427 = vpack.c.b16 %v4287, %v4283
    %v5428 = vpack.c.b16 %v4288, %v4284
    %v5429 = vpack.c.b16 %v4289, %v4285
    %v5430 = vpack.c.b16 %v4294, %v4290
    %v5431 = vpack.c.b16 %v4295, %v4291
    %v5432 = vpack.c.b16 %v4296, %v4292
    %v5433 = vpack.c.b16 %v4297, %v4293
    %v5434 = vpack.c.b16 %v4302, %v4298
    %v5435 = vpack.c.b16 %v4303, %v4299
    %v5436 = vpack.c.b16 %v4304, %v4300
    %v5437 = vpack.c.b16 %v4305, %v4301
    %v5438 = vpack.c.b16 %v4310, %v4306
    %v5439 = vpack.c.b16 %v4311, %v4307
    %v5440 = vpack.c.b16 %v4312, %v4308
    %v5441 = vpack.c.b16 %v4313, %v4309
    %v5442 = vpack.c.b16 %v4318, %v4314
    %v5443 = vpack.c.b16 %v4319, %v4315
    %v5444 = vpack.c.b16 %v4320, %v4316
    %v5445 = vpack.c.b16 %v4321, %v4317
    %v5446 = vpack.c.b16 %v4326, %v4322
    %v5447 = vpack.c.b16 %v4327, %v4323
    %v5448 = vpack.c.b16 %v4328, %v4324
    %v5449 = vpack.c.b16 %v4329, %v4325
    %v5450 = vpack.c.b16 %v4334, %v4330
    %v5451 = vpack.c.b16 %v4335, %v4331
    %v5452 = vpack.c.b16 %v4336, %v4332
    %v5453 = vpack.c.b16 %v4337, %v4333
    %v5454 = vpack.c.b16 %v4342, %v4338
    %v5455 = vpack.c.b16 %v4343, %v4339
    %v5456 = vpack.c.b16 %v4344, %v4340
    %v5457 = vpack.c.b16 %v4345, %v4341
    %v5458 = vpack.c.b16 %v4350, %v4346
    %v5459 = vpack.c.b16 %v4351, %v4347
    %v5460 = vpack.c.b16 %v4352, %v4348
    %v5461 = vpack.c.b16 %v4353, %v4349
    %v5462 = vpack.c.b16 %v4358, %v4354
    %v5463 = vpack.c.b16 %v4359, %v4355
    %v5464 = vpack.c.b16 %v4360, %v4356
    %v5465 = vpack.c.b16 %v4361, %v4357
    %v5466 = vpack.c.b16 %v4366, %v4362
    %v5467 = vpack.c.b16 %v4367, %v4363
    %v5468 = vpack.c.b16 %v4368, %v4364
    %v5469 = vpack.c.b16 %v4369, %v4365
    %v5470 = vpack.c.b16 %v4374, %v4370
    %v5471 = vpack.c.b16 %v4375, %v4371
    %v5472 = vpack.c.b16 %v4376, %v4372
    %v5473 = vpack.c.b16 %v4377, %v4373
    %v5474 = vpack.c.b16 %v4382, %v4378
    %v5475 = vpack.c.b16 %v4383, %v4379
    %v5476 = vpack.c.b16 %v4384, %v4380
    %v5477 = vpack.c.b16 %v4385, %v4381
    %v5478 = vpack.c.b16 %v4390, %v4386
    %v5479 = vpack.c.b16 %v4391, %v4387
    %v5480 = vpack.c.b16 %v4392, %v4388
    %v5481 = vpack.c.b16 %v4393, %v4389
    %v5482 = vpack.c.b16 %v4398, %v4394
    %v5483 = vpack.c.b16 %v4399, %v4395
    %v5484 = vpack.c.b16 %v4400, %v4396
    %v5485 = vpack.c.b16 %v4401, %v4397
    %v5486 = vpack.c.b16 %v4406, %v4402
    %v5487 = vpack.c.b16 %v4407, %v4403
    %v5488 = vpack.c.b16 %v4408, %v4404
    %v5489 = vpack.c.b16 %v4409, %v4405
    %v5490 = vpack.c.b16 %v4414, %v4410
    %v5491 = vpack.c.b16 %v4415, %v4411
    %v5492 = vpack.c.b16 %v4416, %v4412
    %v5493 = vpack.c.b16 %v4417, %v4413
    %v5494 = vpack.c.b16 %v4422, %v4418
    %v5495 = vpack.c.b16 %v4423, %v4419
    %v5496 = vpack.c.b16 %v4424, %v4420
    %v5497 = vpack.c.b16 %v4425, %v4421
    %v5498 = vpack.c.b16 %v4430, %v4426
    %v5499 = vpack.c.b16 %v4431, %v4427
    %v5500 = vpack.c.b16 %v4432, %v4428
    %v5501 = vpack.c.b16 %v4433, %v4429
    %v5502 = vpack.c.b16 %v4438, %v4434
    %v5503 = vpack.c.b16 %v4439, %v4435
    %v5504 = vpack.c.b16 %v4440, %v4436
    %v5505 = vpack.c.b16 %v4441, %v4437
    %v5506 = vpack.c.b16 %v4446, %v4442
    %v5507 = vpack.c.b16 %v4447, %v4443
    %v5508 = vpack.c.b16 %v4448, %v4444
    %v5509 = vpack.c.b16 %v4449, %v4445
    %v5510 = vpack.c.b16 %v4454, %v4450
    %v5511 = vpack.c.b16 %v4455, %v4451
    %v5512 = vpack.c.b16 %v4456, %v4452
    %v5513 = vpack.c.b16 %v4457, %v4453
    %v5514 = vpack.c.b16 %v4462, %v4458
    %v5515 = vpack.c.b16 %v4463, %v4459
    %v5516 = vpack.c.b16 %v4464, %v4460
    %v5517 = vpack.c.b16 %v4465, %v4461
    %v5518 = vpack.c.b16 %v4470, %v4466
    %v5519 = vpack.c.b16 %v4471, %v4467
    %v5520 = vpack.c.b16 %v4472, %v4468
    %v5521 = vpack.c.b16 %v4473, %v4469
    %v5522 = vpack.c.b16 %v4478, %v4474
    %v5523 = vpack.c.b16 %v4479, %v4475
    %v5524 = vpack.c.b16 %v4480, %v4476
    %v5525 = vpack.c.b16 %v4481, %v4477
    %v5526 = vpack.c.b16 %v4486, %v4482
    %v5527 = vpack.c.b16 %v4487, %v4483
    %v5528 = vpack.c.b16 %v4488, %v4484
    %v5529 = vpack.c.b16 %v4489, %v4485
    %v5530 = vpack.c.b16 %v4494, %v4490
    %v5531 = vpack.c.b16 %v4495, %v4491
    %v5532 = vpack.c.b16 %v4496, %v4492
    %v5533 = vpack.c.b16 %v4497, %v4493
    %v5534 = vpack.c.b16 %v4502, %v4498
    %v5535 = vpack.c.b16 %v4503, %v4499
    %v5536 = vpack.c.b16 %v4504, %v4500
    %v5537 = vpack.c.b16 %v4505, %v4501
    %v5538 = vpack.c.b16 %v4510, %v4506
    %v5539 = vpack.c.b16 %v4511, %v4507
    %v5540 = vpack.c.b16 %v4512, %v4508
    %v5541 = vpack.c.b16 %v4513, %v4509
    %v5542 = vpack.c.b16 %v4518, %v4514
    %v5543 = vpack.c.b16 %v4519, %v4515
    %v5544 = vpack.c.b16 %v4520, %v4516
    %v5545 = vpack.c.b16 %v4521, %v4517
    %v5546 = vpack.c.b16 %v4526, %v4522
    %v5547 = vpack.c.b16 %v4527, %v4523
    %v5548 = vpack.c.b16 %v4528, %v4524
    %v5549 = vpack.c.b16 %v4529, %v4525
    %v5550 = vpack.c.b16 %v4534, %v4530
    %v5551 = vpack.c.b16 %v4535, %v4531
    %v5552 = vpack.c.b16 %v4536, %v4532
    %v5553 = vpack.c.b16 %v4537, %v4533
    %v5554 = vpack.c.b16 %v4542, %v4538
    %v5555 = vpack.c.b16 %v4543, %v4539
    %v5556 = vpack.c.b16 %v4544, %v4540
    %v5557 = vpack.c.b16 %v4545, %v4541
    %v5558 = vpack.c.b16 %v4550, %v4546
    %v5559 = vpack.c.b16 %v4551, %v4547
    %v5560 = vpack.c.b16 %v4552, %v4548
    %v5561 = vpack.c.b16 %v4553, %v4549
    %v5562 = vpack.c.b16 %v4558, %v4554
    %v5563 = vpack.c.b16 %v4559, %v4555
    %v5564 = vpack.c.b16 %v4560, %v4556
    %v5565 = vpack.c.b16 %v4561, %v4557
    %v5566 = vpack.c.b16 %v4566, %v4562
    %v5567 = vpack.c.b16 %v4567, %v4563
    %v5568 = vpack.c.b16 %v4568, %v4564
    %v5569 = vpack.c.b16 %v4569, %v4565
    %v5570 = vpack.c.b16 %v4574, %v4570
    %v5571 = vpack.c.b16 %v4575, %v4571
    %v5572 = vpack.c.b16 %v4576, %v4572
    %v5573 = vpack.c.b16 %v4577, %v4573
    %v5574 = vpack.c.b16 %v4582, %v4578
    %v5575 = vpack.c.b16 %v4583, %v4579
    %v5576 = vpack.c.b16 %v4584, %v4580
    %v5577 = vpack.c.b16 %v4585, %v4581
    %v5578 = vpack.c.b16 %v4590, %v4586
    %v5579 = vpack.c.b16 %v4591, %v4587
    %v5580 = vpack.c.b16 %v4592, %v4588
    %v5581 = vpack.c.b16 %v4593, %v4589
    %v5582 = vpack.c.b16 %v4598, %v4594
    %v5583 = vpack.c.b16 %v4599, %v4595
    %v5584 = vpack.c.b16 %v4600, %v4596
    %v5585 = vpack.c.b16 %v4601, %v4597
    %v5586 = vpack.c.b16 %v4606, %v4602
    %v5587 = vpack.c.b16 %v4607, %v4603
    %v5588 = vpack.c.b16 %v4608, %v4604
    %v5589 = vpack.c.b16 %v4609, %v4605
    %v5590 = vpack.c.b16 %v4614, %v4610
    %v5591 = vpack.c.b16 %v4615, %v4611
    %v5592 = vpack.c.b16 %v4616, %v4612
    %v5593 = vpack.c.b16 %v4617, %v4613
    %v5594 = vpack.c.b16 %v4622, %v4618
    %v5595 = vpack.c.b16 %v4623, %v4619
    %v5596 = vpack.c.b16 %v4624, %v4620
    %v5597 = vpack.c.b16 %v4625, %v4621
    %v5598 = vpack.c.b16 %v4630, %v4626
    %v5599 = vpack.c.b16 %v4631, %v4627
    %v5600 = vpack.c.b16 %v4632, %v4628
    %v5601 = vpack.c.b16 %v4633, %v4629
    %v5602 = vpack.c.b16 %v4638, %v4634
    %v5603 = vpack.c.b16 %v4639, %v4635
    %v5604 = vpack.c.b16 %v4640, %v4636
    %v5605 = vpack.c.b16 %v4641, %v4637
    %v5606 = vpack.c.b16 %v4646, %v4642
    %v5607 = vpack.c.b16 %v4647, %v4643
    %v5608 = vpack.c.b16 %v4648, %v4644
    %v5609 = vpack.c.b16 %v4649, %v4645
    %v5610 = vpack.c.b16 %v4654, %v4650
    %v5611 = vpack.c.b16 %v4655, %v4651
    %v5612 = vpack.c.b16 %v4656, %v4652
    %v5613 = vpack.c.b16 %v4657, %v4653
    %v5614 = vpack.c.b16 %v4662, %v4658
    %v5615 = vpack.c.b16 %v4663, %v4659
    %v5616 = vpack.c.b16 %v4664, %v4660
    %v5617 = vpack.c.b16 %v4665, %v4661
    %v5618 = vpack.c.b16 %v4670, %v4666
    %v5619 = vpack.c.b16 %v4671, %v4667
    %v5620 = vpack.c.b16 %v4672, %v4668
    %v5621 = vpack.c.b16 %v4673, %v4669
    %v5622 = vpack.c.b16 %v4678, %v4674
    %v5623 = vpack.c.b16 %v4679, %v4675
    %v5624 = vpack.c.b16 %v4680, %v4676
    %v5625 = vpack.c.b16 %v4681, %v4677
    %v5626 = vpack.c.b16 %v4686, %v4682
    %v5627 = vpack.c.b16 %v4687, %v4683
    %v5628 = vpack.c.b16 %v4688, %v4684
    %v5629 = vpack.c.b16 %v4689, %v4685
    %v5630 = vpack.c.b16 %v4694, %v4690
    %v5631 = vpack.c.b16 %v4695, %v4691
    %v5632 = vpack.c.b16 %v4696, %v4692
    %v5633 = vpack.c.b16 %v4697, %v4693
    %v5634 = vpack.c.b16 %v4702, %v4698
    %v5635 = vpack.c.b16 %v4703, %v4699
    %v5636 = vpack.c.b16 %v4704, %v4700
    %v5637 = vpack.c.b16 %v4705, %v4701
    %v5638 = vpack.c.b16 %v4710, %v4706
    %v5639 = vpack.c.b16 %v4711, %v4707
    %v5640 = vpack.c.b16 %v4712, %v4708
    %v5641 = vpack.c.b16 %v4713, %v4709
    %v5642 = vpack.c.b16 %v4718, %v4714
    %v5643 = vpack.c.b16 %v4719, %v4715
    %v5644 = vpack.c.b16 %v4720, %v4716
    %v5645 = vpack.c.b16 %v4721, %v4717
    %v5646 = vpack.c.b16 %v4726, %v4722
    %v5647 = vpack.c.b16 %v4727, %v4723
    %v5648 = vpack.c.b16 %v4728, %v4724
    %v5649 = vpack.c.b16 %v4729, %v4725
    %v5650 = vpack.c.b16 %v4734, %v4730
    %v5651 = vpack.c.b16 %v4735, %v4731
    %v5652 = vpack.c.b16 %v4736, %v4732
    %v5653 = vpack.c.b16 %v4737, %v4733
    %v5654 = vpack.c.b16 %v4742, %v4738
    %v5655 = vpack.c.b16 %v4743, %v4739
    %v5656 = vpack.c.b16 %v4744, %v4740
    %v5657 = vpack.c.b16 %v4745, %v4741
    %v5658 = vpack.c.b16 %v4750, %v4746
    %v5659 = vpack.c.b16 %v4751, %v4747
    %v5660 = vpack.c.b16 %v4752, %v4748
    %v5661 = vpack.c.b16 %v4753, %v4749
    %v5662 = vpack.c.b16 %v4758, %v4754
    %v5663 = vpack.c.b16 %v4759, %v4755
    %v5664 = vpack.c.b16 %v4760, %v4756
    %v5665 = vpack.c.b16 %v4761, %v4757
    %v5666 = vpack.c.b16 %v4766, %v4762
    %v5667 = vpack.c.b16 %v4767, %v4763
    %v5668 = vpack.c.b16 %v4768, %v4764
    %v5669 = vpack.c.b16 %v4769, %v4765
    %v5670 = vpack.c.b16 %v4774, %v4770
    %v5671 = vpack.c.b16 %v4775, %v4771
    %v5672 = vpack.c.b16 %v4776, %v4772
    %v5673 = vpack.c.b16 %v4777, %v4773
    %v5674 = vpack.c.b16 %v4782, %v4778
    %v5675 = vpack.c.b16 %v4783, %v4779
    %v5676 = vpack.c.b16 %v4784, %v4780
    %v5677 = vpack.c.b16 %v4785, %v4781
    %v5678 = vpack.c.b16 %v4790, %v4786
    %v5679 = vpack.c.b16 %v4791, %v4787
    %v5680 = vpack.c.b16 %v4792, %v4788
    %v5681 = vpack.c.b16 %v4793, %v4789
    %v5682 = vpack.c.b16 %v4798, %v4794
    %v5683 = vpack.c.b16 %v4799, %v4795
    %v5684 = vpack.c.b16 %v4800, %v4796
    %v5685 = vpack.c.b16 %v4801, %v4797
    %v5686 = vpack.c.b16 %v4806, %v4802
    %v5687 = vpack.c.b16 %v4807, %v4803
    %v5688 = vpack.c.b16 %v4808, %v4804
    %v5689 = vpack.c.b16 %v4809, %v4805
    %v5690 = vpack.c.b16 %v4814, %v4810
    %v5691 = vpack.c.b16 %v4815, %v4811
    %v5692 = vpack.c.b16 %v4816, %v4812
    %v5693 = vpack.c.b16 %v4817, %v4813
    %v5694 = vpack.c.b16 %v4822, %v4818
    %v5695 = vpack.c.b16 %v4823, %v4819
    %v5696 = vpack.c.b16 %v4824, %v4820
    %v5697 = vpack.c.b16 %v4825, %v4821
    %v5698 = vpack.c.b16 %v4830, %v4826
    %v5699 = vpack.c.b16 %v4831, %v4827
    %v5700 = vpack.c.b16 %v4832, %v4828
    %v5701 = vpack.c.b16 %v4833, %v4829
    %v5702 = vpack.c.b16 %v4838, %v4834
    %v5703 = vpack.c.b16 %v4839, %v4835
    %v5704 = vpack.c.b16 %v4840, %v4836
    %v5705 = vpack.c.b16 %v4841, %v4837
    %v5706 = vpack.c.b16 %v4846, %v4842
    %v5707 = vpack.c.b16 %v4847, %v4843
    %v5708 = vpack.c.b16 %v4848, %v4844
    %v5709 = vpack.c.b16 %v4849, %v4845
    %v5710 = vpack.c.b16 %v4854, %v4850
    %v5711 = vpack.c.b16 %v4855, %v4851
    %v5712 = vpack.c.b16 %v4856, %v4852
    %v5713 = vpack.c.b16 %v4857, %v4853
    %v5714 = vpack.c.b16 %v4862, %v4858
    %v5715 = vpack.c.b16 %v4863, %v4859
    %v5716 = vpack.c.b16 %v4864, %v4860
    %v5717 = vpack.c.b16 %v4865, %v4861
    %v5718 = vpack.c.b16 %v4870, %v4866
    %v5719 = vpack.c.b16 %v4871, %v4867
    %v5720 = vpack.c.b16 %v4872, %v4868
    %v5721 = vpack.c.b16 %v4873, %v4869
    %v5722 = vpack.c.b16 %v4878, %v4874
    %v5723 = vpack.c.b16 %v4879, %v4875
    %v5724 = vpack.c.b16 %v4880, %v4876
    %v5725 = vpack.c.b16 %v4881, %v4877
    %v5726 = vpack.c.b16 %v4886, %v4882
    %v5727 = vpack.c.b16 %v4887, %v4883
    %v5728 = vpack.c.b16 %v4888, %v4884
    %v5729 = vpack.c.b16 %v4889, %v4885
    %v5730 = vpack.c.b16 %v4894, %v4890
    %v5731 = vpack.c.b16 %v4895, %v4891
    %v5732 = vpack.c.b16 %v4896, %v4892
    %v5733 = vpack.c.b16 %v4897, %v4893
    %v5734 = vpack.c.b16 %v4902, %v4898
    %v5735 = vpack.c.b16 %v4903, %v4899
    %v5736 = vpack.c.b16 %v4904, %v4900
    %v5737 = vpack.c.b16 %v4905, %v4901
    %v5738 = vpack.c.b16 %v4910, %v4906
    %v5739 = vpack.c.b16 %v4911, %v4907
    %v5740 = vpack.c.b16 %v4912, %v4908
    %v5741 = vpack.c.b16 %v4913, %v4909
    %v5742 = vpack.c.b16 %v4918, %v4914
    %v5743 = vpack.c.b16 %v4919, %v4915
    %v5744 = vpack.c.b16 %v4920, %v4916
    %v5745 = vpack.c.b16 %v4921, %v4917
    %v5746 = vpack.c.b16 %v4926, %v4922
    %v5747 = vpack.c.b16 %v4927, %v4923
    %v5748 = vpack.c.b16 %v4928, %v4924
    %v5749 = vpack.c.b16 %v4929, %v4925
    %v5750 = vpack.c.b16 %v4934, %v4930
    %v5751 = vpack.c.b16 %v4935, %v4931
    %v5752 = vpack.c.b16 %v4936, %v4932
    %v5753 = vpack.c.b16 %v4937, %v4933
    %v5754 = vpack.c.b16 %v4942, %v4938
    %v5755 = vpack.c.b16 %v4943, %v4939
    %v5756 = vpack.c.b16 %v4944, %v4940
    %v5757 = vpack.c.b16 %v4945, %v4941
    %v5758 = vpack.c.b16 %v4950, %v4946
    %v5759 = vpack.c.b16 %v4951, %v4947
    %v5760 = vpack.c.b16 %v4952, %v4948
    %v5761 = vpack.c.b16 %v4953, %v4949
    %v5762 = vpack.c.b16 %v4958, %v4954
    %v5763 = vpack.c.b16 %v4959, %v4955
    %v5764 = vpack.c.b16 %v4960, %v4956
    %v5765 = vpack.c.b16 %v4961, %v4957
    %v5766 = vpack.c.b16 %v4966, %v4962
    %v5767 = vpack.c.b16 %v4967, %v4963
    %v5768 = vpack.c.b16 %v4968, %v4964
    %v5769 = vpack.c.b16 %v4969, %v4965
    %v5770 = vpack.c.b16 %v4974, %v4970
    %v5771 = vpack.c.b16 %v4975, %v4971
    %v5772 = vpack.c.b16 %v4976, %v4972
    %v5773 = vpack.c.b16 %v4977, %v4973
    %v5774 = vpack.c.b16 %v4982, %v4978
    %v5775 = vpack.c.b16 %v4983, %v4979
    %v5776 = vpack.c.b16 %v4984, %v4980
    %v5777 = vpack.c.b16 %v4985, %v4981
    %v5778 = vpack.c.b16 %v4990, %v4986
    %v5779 = vpack.c.b16 %v4991, %v4987
    %v5780 = vpack.c.b16 %v4992, %v4988
    %v5781 = vpack.c.b16 %v4993, %v4989
    %v5782 = vpack.c.b16 %v4998, %v4994
    %v5783 = vpack.c.b16 %v4999, %v4995
    %v5784 = vpack.c.b16 %v5000, %v4996
    %v5785 = vpack.c.b16 %v5001, %v4997
    %vm6570 = vcmask 523264
    %v6572 = vsel %vm6570, %v2625, 0
    %6574 = vmatprep.subr.bf16.mxu0 %v5031
    %6575 = vmatpush1.bf16.msra.mxu0 %v5030
    %6576 = vmatprep.subr.bf16.mxu0 %v5027
    %6577 = vmatpush1.bf16.msra.mxu0 %v5026
    %6578 = vmatprep.subr.bf16.mxu0 %v5023
    %6579 = vmatpush1.bf16.msra.mxu0 %v5022
    %6580 = vmatprep.subr.bf16.mxu0 %v5019
    %6581 = vmatpush1.bf16.msra.mxu0 %v5018
    %6582 = vmatprep.subr.bf16.mxu0 %v5015
    %6583 = vmatpush1.bf16.msra.mxu0 %v5014
    %6584 = vmatprep.subr.bf16.mxu0 %v5011
    %6585 = vmatpush1.bf16.msra.mxu0 %v5010
    %6586 = vmatprep.subr.bf16.mxu0 %v5007
    %6587 = vmatpush1.bf16.msra.mxu0 %v5006
    %6588 = vmatprep.subr.bf16.mxu0 %v5003
    %6589 = vmatpush1.bf16.msra.mxu0 %v5002
    %6590 = vmatprep.subr.bf16.mxu0 %v5063
    %6591 = vmatpush2.bf16.msra.mxu0 %v5062
    %6592 = vmatprep.subr.bf16.mxu0 %v5059
    %6593 = vmatpush2.bf16.msra.mxu0 %v5058
    %6594 = vmatprep.subr.bf16.mxu0 %v5055
    %6595 = vmatpush2.bf16.msra.mxu0 %v5054
    %6596 = vmatprep.subr.bf16.mxu0 %v5051
    %6597 = vmatpush2.bf16.msra.mxu0 %v5050
    %6598 = vmatprep.subr.bf16.mxu0 %v5047
    %6599 = vmatpush2.bf16.msra.mxu0 %v5046
    %6600 = vmatprep.subr.bf16.mxu0 %v5043
    %6601 = vmatpush2.bf16.msra.mxu0 %v5042
    %6602 = vmatprep.subr.bf16.mxu0 %v5039
    %6603 = vmatpush2.bf16.msra.mxu0 %v5038
    %6604 = vmatprep.subr.bf16.mxu0 %v5035
    %6605 = vmatpush2.bf16.msra.mxu0 %v5034
    %6606 = vmatprep.mubr.bf16.mxu0 %v2602
    %6607 = vmatmul.mubr.bf16.gmra.mxu0 %v2601
    %v6608 = vpop.f32.mrf.mxu0
    %v6609 = vadd.f32 %v2546, %v6608
    %v6610 = vpop.f32.mrf.mxu0
    %v6611 = vadd.f32 %v2550, %v6610
    %v6612 = vpop.f32.mrf.mxu0
    %v6613 = vpop.f32.mrf.mxu0
    %6614 = vdwg.mxu0
    %6615 = vmatprep.subr.bf16.mxu0 %v5095
    %6616 = vmatpush1.bf16.msra.mxu0 %v5094
    %6617 = vmatprep.subr.bf16.mxu0 %v5091
    %6618 = vmatpush1.bf16.msra.mxu0 %v5090
    %6619 = vmatprep.subr.bf16.mxu0 %v5087
    %6620 = vmatpush1.bf16.msra.mxu0 %v5086
    %6621 = vmatprep.subr.bf16.mxu0 %v5083
    %6622 = vmatpush1.bf16.msra.mxu0 %v5082
    %6623 = vmatprep.subr.bf16.mxu0 %v5079
    %6624 = vmatpush1.bf16.msra.mxu0 %v5078
    %6625 = vmatprep.subr.bf16.mxu0 %v5075
    %6626 = vmatpush1.bf16.msra.mxu0 %v5074
    %6627 = vmatprep.subr.bf16.mxu0 %v5071
    %6628 = vmatpush1.bf16.msra.mxu0 %v5070
    %6629 = vmatprep.subr.bf16.mxu0 %v5067
    %6630 = vmatpush1.bf16.msra.mxu0 %v5066
    %6631 = vmatprep.subr.bf16.mxu0 %v5127
    %6632 = vmatpush2.bf16.msra.mxu0 %v5126
    %6633 = vmatprep.subr.bf16.mxu0 %v5123
    %6634 = vmatpush2.bf16.msra.mxu0 %v5122
    %6635 = vmatprep.subr.bf16.mxu0 %v5119
    %6636 = vmatpush2.bf16.msra.mxu0 %v5118
    %6637 = vmatprep.subr.bf16.mxu0 %v5115
    %6638 = vmatpush2.bf16.msra.mxu0 %v5114
    %6639 = vmatprep.subr.bf16.mxu0 %v5111
    %6640 = vmatpush2.bf16.msra.mxu0 %v5110
    %6641 = vmatprep.subr.bf16.mxu0 %v5107
    %6642 = vmatpush2.bf16.msra.mxu0 %v5106
    %6643 = vmatprep.subr.bf16.mxu0 %v5103
    %6644 = vmatpush2.bf16.msra.mxu0 %v5102
    %6645 = vmatprep.subr.bf16.mxu0 %v5099
    %6646 = vmatpush2.bf16.msra.mxu0 %v5098
    %6647 = vmatprep.mubr.bf16.mxu0 %v2604
    %6648 = vmatmul.mubr.bf16.gmra.mxu0 %v2603
    %v6649 = vpop.f32.mrf.mxu0
    %v6650 = vadd.f32 %v6609, %v6649
    %v6651 = vpop.f32.mrf.mxu0
    %v6652 = vadd.f32 %v6611, %v6651
    %v6653 = vpop.f32.mrf.mxu0
    %v6654 = vpop.f32.mrf.mxu0
    %6655 = vdwg.mxu0
    %6656 = vmatprep.subr.bf16.mxu0 %v5159
    %6657 = vmatpush1.bf16.msra.mxu0 %v5158
    %6658 = vmatprep.subr.bf16.mxu0 %v5155
    %6659 = vmatpush1.bf16.msra.mxu0 %v5154
    %6660 = vmatprep.subr.bf16.mxu0 %v5151
    %6661 = vmatpush1.bf16.msra.mxu0 %v5150
    %6662 = vmatprep.subr.bf16.mxu0 %v5147
    %6663 = vmatpush1.bf16.msra.mxu0 %v5146
    %6664 = vmatprep.subr.bf16.mxu0 %v5143
    %6665 = vmatpush1.bf16.msra.mxu0 %v5142
    %6666 = vmatprep.subr.bf16.mxu0 %v5139
    %6667 = vmatpush1.bf16.msra.mxu0 %v5138
    %6668 = vmatprep.subr.bf16.mxu0 %v5135
    %6669 = vmatpush1.bf16.msra.mxu0 %v5134
    %6670 = vmatprep.subr.bf16.mxu0 %v5131
    %6671 = vmatpush1.bf16.msra.mxu0 %v5130
    %6672 = vmatprep.subr.bf16.mxu0 %v5191
    %6673 = vmatpush2.bf16.msra.mxu0 %v5190
    %6674 = vmatprep.subr.bf16.mxu0 %v5187
    %6675 = vmatpush2.bf16.msra.mxu0 %v5186
    %6676 = vmatprep.subr.bf16.mxu0 %v5183
    %6677 = vmatpush2.bf16.msra.mxu0 %v5182
    %6678 = vmatprep.subr.bf16.mxu0 %v5179
    %6679 = vmatpush2.bf16.msra.mxu0 %v5178
    %6680 = vmatprep.subr.bf16.mxu0 %v5175
    %6681 = vmatpush2.bf16.msra.mxu0 %v5174
    %6682 = vmatprep.subr.bf16.mxu0 %v5171
    %6683 = vmatpush2.bf16.msra.mxu0 %v5170
    %6684 = vmatprep.subr.bf16.mxu0 %v5167
    %6685 = vmatpush2.bf16.msra.mxu0 %v5166
    %6686 = vmatprep.subr.bf16.mxu0 %v5163
    %6687 = vmatpush2.bf16.msra.mxu0 %v5162
    %6688 = vmatprep.mubr.bf16.mxu0 %v2606
    %6689 = vmatmul.mubr.bf16.gmra.mxu0 %v2605
    %v6690 = vpop.f32.mrf.mxu0
    %v6691 = vadd.f32 %v6650, %v6690
    %v6692 = vpop.f32.mrf.mxu0
    %v6693 = vadd.f32 %v6652, %v6692
    %v6694 = vpop.f32.mrf.mxu0
    %v6695 = vpop.f32.mrf.mxu0
    %6696 = vdwg.mxu0
    %6697 = vmatprep.subr.bf16.mxu0 %v5223
    %6698 = vmatpush1.bf16.msra.mxu0 %v5222
    %6699 = vmatprep.subr.bf16.mxu0 %v5219
    %6700 = vmatpush1.bf16.msra.mxu0 %v5218
    %6701 = vmatprep.subr.bf16.mxu0 %v5215
    %6702 = vmatpush1.bf16.msra.mxu0 %v5214
    %6703 = vmatprep.subr.bf16.mxu0 %v5211
    %6704 = vmatpush1.bf16.msra.mxu0 %v5210
    %6705 = vmatprep.subr.bf16.mxu0 %v5207
    %6706 = vmatpush1.bf16.msra.mxu0 %v5206
    %6707 = vmatprep.subr.bf16.mxu0 %v5203
    %6708 = vmatpush1.bf16.msra.mxu0 %v5202
    %6709 = vmatprep.subr.bf16.mxu0 %v5199
    %6710 = vmatpush1.bf16.msra.mxu0 %v5198
    %6711 = vmatprep.subr.bf16.mxu0 %v5195
    %6712 = vmatpush1.bf16.msra.mxu0 %v5194
    %6713 = vmatprep.subr.bf16.mxu0 %v5255
    %6714 = vmatpush2.bf16.msra.mxu0 %v5254
    %6715 = vmatprep.subr.bf16.mxu0 %v5251
    %6716 = vmatpush2.bf16.msra.mxu0 %v5250
    %6717 = vmatprep.subr.bf16.mxu0 %v5247
    %6718 = vmatpush2.bf16.msra.mxu0 %v5246
    %6719 = vmatprep.subr.bf16.mxu0 %v5243
    %6720 = vmatpush2.bf16.msra.mxu0 %v5242
    %6721 = vmatprep.subr.bf16.mxu0 %v5239
    %6722 = vmatpush2.bf16.msra.mxu0 %v5238
    %6723 = vmatprep.subr.bf16.mxu0 %v5235
    %6724 = vmatpush2.bf16.msra.mxu0 %v5234
    %6725 = vmatprep.subr.bf16.mxu0 %v5231
    %6726 = vmatpush2.bf16.msra.mxu0 %v5230
    %6727 = vmatprep.subr.bf16.mxu0 %v5227
    %6728 = vmatpush2.bf16.msra.mxu0 %v5226
    %6729 = vmatprep.mubr.bf16.mxu0 %v2608
    %6730 = vmatmul.mubr.bf16.gmra.mxu0 %v2607
    %v6731 = vpop.f32.mrf.mxu0
    %v6732 = vadd.f32 %v6691, %v6731
    %v6733 = vpop.f32.mrf.mxu0
    %v6734 = vadd.f32 %v6693, %v6733
    %v6735 = vpop.f32.mrf.mxu0
    %v6736 = vpop.f32.mrf.mxu0
    %6737 = vdwg.mxu0
    %6738 = vmatprep.subr.bf16.mxu0 %v5287
    %6739 = vmatpush1.bf16.msra.mxu0 %v5286
    %6740 = vmatprep.subr.bf16.mxu0 %v5283
    %6741 = vmatpush1.bf16.msra.mxu0 %v5282
    %6742 = vmatprep.subr.bf16.mxu0 %v5279
    %6743 = vmatpush1.bf16.msra.mxu0 %v5278
    %6744 = vmatprep.subr.bf16.mxu0 %v5275
    %6745 = vmatpush1.bf16.msra.mxu0 %v5274
    %6746 = vmatprep.subr.bf16.mxu0 %v5271
    %6747 = vmatpush1.bf16.msra.mxu0 %v5270
    %6748 = vmatprep.subr.bf16.mxu0 %v5267
    %6749 = vmatpush1.bf16.msra.mxu0 %v5266
    %6750 = vmatprep.subr.bf16.mxu0 %v5263
    %6751 = vmatpush1.bf16.msra.mxu0 %v5262
    %6752 = vmatprep.subr.bf16.mxu0 %v5259
    %6753 = vmatpush1.bf16.msra.mxu0 %v5258
    %6754 = vmatprep.subr.bf16.mxu0 %v5319
    %6755 = vmatpush2.bf16.msra.mxu0 %v5318
    %6756 = vmatprep.subr.bf16.mxu0 %v5315
    %6757 = vmatpush2.bf16.msra.mxu0 %v5314
    %6758 = vmatprep.subr.bf16.mxu0 %v5311
    %6759 = vmatpush2.bf16.msra.mxu0 %v5310
    %6760 = vmatprep.subr.bf16.mxu0 %v5307
    %6761 = vmatpush2.bf16.msra.mxu0 %v5306
    %6762 = vmatprep.subr.bf16.mxu0 %v5303
    %6763 = vmatpush2.bf16.msra.mxu0 %v5302
    %6764 = vmatprep.subr.bf16.mxu0 %v5299
    %6765 = vmatpush2.bf16.msra.mxu0 %v5298
    %6766 = vmatprep.subr.bf16.mxu0 %v5295
    %6767 = vmatpush2.bf16.msra.mxu0 %v5294
    %6768 = vmatprep.subr.bf16.mxu0 %v5291
    %6769 = vmatpush2.bf16.msra.mxu0 %v5290
    %6770 = vmatprep.mubr.bf16.mxu0 %v2610
    %6771 = vmatmul.mubr.bf16.gmra.mxu0 %v2609
    %v6772 = vpop.f32.mrf.mxu0
    %v6773 = vadd.f32 %v6732, %v6772
    %v6774 = vpop.f32.mrf.mxu0
    %v6775 = vadd.f32 %v6734, %v6774
    %v6776 = vpop.f32.mrf.mxu0
    %v6777 = vpop.f32.mrf.mxu0
    %6778 = vdwg.mxu0
    %6779 = vmatprep.subr.bf16.mxu0 %v5351
    %6780 = vmatpush1.bf16.msra.mxu0 %v5350
    %6781 = vmatprep.subr.bf16.mxu0 %v5347
    %6782 = vmatpush1.bf16.msra.mxu0 %v5346
    %6783 = vmatprep.subr.bf16.mxu0 %v5343
    %6784 = vmatpush1.bf16.msra.mxu0 %v5342
    %6785 = vmatprep.subr.bf16.mxu0 %v5339
    %6786 = vmatpush1.bf16.msra.mxu0 %v5338
    %6787 = vmatprep.subr.bf16.mxu0 %v5335
    %6788 = vmatpush1.bf16.msra.mxu0 %v5334
    %6789 = vmatprep.subr.bf16.mxu0 %v5331
    %6790 = vmatpush1.bf16.msra.mxu0 %v5330
    %6791 = vmatprep.subr.bf16.mxu0 %v5327
    %6792 = vmatpush1.bf16.msra.mxu0 %v5326
    %6793 = vmatprep.subr.bf16.mxu0 %v5323
    %6794 = vmatpush1.bf16.msra.mxu0 %v5322
    %6795 = vmatprep.subr.bf16.mxu0 %v5383
    %6796 = vmatpush2.bf16.msra.mxu0 %v5382
    %6797 = vmatprep.subr.bf16.mxu0 %v5379
    %6798 = vmatpush2.bf16.msra.mxu0 %v5378
    %6799 = vmatprep.subr.bf16.mxu0 %v5375
    %6800 = vmatpush2.bf16.msra.mxu0 %v5374
    %6801 = vmatprep.subr.bf16.mxu0 %v5371
    %6802 = vmatpush2.bf16.msra.mxu0 %v5370
    %6803 = vmatprep.subr.bf16.mxu0 %v5367
    %6804 = vmatpush2.bf16.msra.mxu0 %v5366
    %6805 = vmatprep.subr.bf16.mxu0 %v5363
    %6806 = vmatpush2.bf16.msra.mxu0 %v5362
    %6807 = vmatprep.subr.bf16.mxu0 %v5359
    %6808 = vmatpush2.bf16.msra.mxu0 %v5358
    %6809 = vmatprep.subr.bf16.mxu0 %v5355
    %6810 = vmatpush2.bf16.msra.mxu0 %v5354
    %6811 = vmatprep.mubr.bf16.mxu0 %v2612
    %6812 = vmatmul.mubr.bf16.gmra.mxu0 %v2611
    %v6813 = vpop.f32.mrf.mxu0
    %v6814 = vadd.f32 %v6773, %v6813
    %v6815 = vpop.f32.mrf.mxu0
    %v6816 = vadd.f32 %v6775, %v6815
    %v6817 = vpop.f32.mrf.mxu0
    %v6818 = vpop.f32.mrf.mxu0
    %6819 = vdwg.mxu0
    %6820 = vmatprep.subr.bf16.mxu0 %v5415
    %6821 = vmatpush1.bf16.msra.mxu0 %v5414
    %6822 = vmatprep.subr.bf16.mxu0 %v5411
    %6823 = vmatpush1.bf16.msra.mxu0 %v5410
    %6824 = vmatprep.subr.bf16.mxu0 %v5407
    %6825 = vmatpush1.bf16.msra.mxu0 %v5406
    %6826 = vmatprep.subr.bf16.mxu0 %v5403
    %6827 = vmatpush1.bf16.msra.mxu0 %v5402
    %6828 = vmatprep.subr.bf16.mxu0 %v5399
    %6829 = vmatpush1.bf16.msra.mxu0 %v5398
    %6830 = vmatprep.subr.bf16.mxu0 %v5395
    %6831 = vmatpush1.bf16.msra.mxu0 %v5394
    %6832 = vmatprep.subr.bf16.mxu0 %v5391
    %6833 = vmatpush1.bf16.msra.mxu0 %v5390
    %6834 = vmatprep.subr.bf16.mxu0 %v5387
    %6835 = vmatpush1.bf16.msra.mxu0 %v5386
    %6836 = vmatprep.subr.bf16.mxu0 %v5447
    %6837 = vmatpush2.bf16.msra.mxu0 %v5446
    %6838 = vmatprep.subr.bf16.mxu0 %v5443
    %6839 = vmatpush2.bf16.msra.mxu0 %v5442
    %6840 = vmatprep.subr.bf16.mxu0 %v5439
    %6841 = vmatpush2.bf16.msra.mxu0 %v5438
    %6842 = vmatprep.subr.bf16.mxu0 %v5435
    %6843 = vmatpush2.bf16.msra.mxu0 %v5434
    %6844 = vmatprep.subr.bf16.mxu0 %v5431
    %6845 = vmatpush2.bf16.msra.mxu0 %v5430
    %6846 = vmatprep.subr.bf16.mxu0 %v5427
    %6847 = vmatpush2.bf16.msra.mxu0 %v5426
    %6848 = vmatprep.subr.bf16.mxu0 %v5423
    %6849 = vmatpush2.bf16.msra.mxu0 %v5422
    %6850 = vmatprep.subr.bf16.mxu0 %v5419
    %6851 = vmatpush2.bf16.msra.mxu0 %v5418
    %6852 = vmatprep.mubr.bf16.mxu0 %v2614
    %6853 = vmatmul.mubr.bf16.gmra.mxu0 %v2613
    %v6854 = vpop.f32.mrf.mxu0
    %v6855 = vadd.f32 %v6814, %v6854
    %v6856 = vpop.f32.mrf.mxu0
    %v6857 = vadd.f32 %v6816, %v6856
    %v6858 = vpop.f32.mrf.mxu0
    %v6859 = vpop.f32.mrf.mxu0
    %6860 = vdwg.mxu0
    %6861 = vmatprep.subr.bf16.mxu0 %v5479
    %6862 = vmatpush1.bf16.msra.mxu0 %v5478
    %6863 = vmatprep.subr.bf16.mxu0 %v5475
    %6864 = vmatpush1.bf16.msra.mxu0 %v5474
    %6865 = vmatprep.subr.bf16.mxu0 %v5471
    %6866 = vmatpush1.bf16.msra.mxu0 %v5470
    %6867 = vmatprep.subr.bf16.mxu0 %v5467
    %6868 = vmatpush1.bf16.msra.mxu0 %v5466
    %6869 = vmatprep.subr.bf16.mxu0 %v5463
    %6870 = vmatpush1.bf16.msra.mxu0 %v5462
    %6871 = vmatprep.subr.bf16.mxu0 %v5459
    %6872 = vmatpush1.bf16.msra.mxu0 %v5458
    %6873 = vmatprep.subr.bf16.mxu0 %v5455
    %6874 = vmatpush1.bf16.msra.mxu0 %v5454
    %6875 = vmatprep.subr.bf16.mxu0 %v5451
    %6876 = vmatpush1.bf16.msra.mxu0 %v5450
    %6877 = vmatprep.subr.bf16.mxu0 %v5511
    %6878 = vmatpush2.bf16.msra.mxu0 %v5510
    %6879 = vmatprep.subr.bf16.mxu0 %v5507
    %6880 = vmatpush2.bf16.msra.mxu0 %v5506
    %6881 = vmatprep.subr.bf16.mxu0 %v5503
    %6882 = vmatpush2.bf16.msra.mxu0 %v5502
    %6883 = vmatprep.subr.bf16.mxu0 %v5499
    %6884 = vmatpush2.bf16.msra.mxu0 %v5498
    %6885 = vmatprep.subr.bf16.mxu0 %v5495
    %6886 = vmatpush2.bf16.msra.mxu0 %v5494
    %6887 = vmatprep.subr.bf16.mxu0 %v5491
    %6888 = vmatpush2.bf16.msra.mxu0 %v5490
    %6889 = vmatprep.subr.bf16.mxu0 %v5487
    %6890 = vmatpush2.bf16.msra.mxu0 %v5486
    %6891 = vmatprep.subr.bf16.mxu0 %v5483
    %6892 = vmatpush2.bf16.msra.mxu0 %v5482
    %6893 = vmatprep.mubr.bf16.mxu0 %v2616
    %6894 = vmatmul.mubr.bf16.gmra.mxu0 %v2615
    %v6895 = vpop.f32.mrf.mxu0
    %v6896 = vadd.f32 %v6855, %v6895
    %v6897 = vpop.f32.mrf.mxu0
    %v6898 = vadd.f32 %v6857, %v6897
    %v6899 = vpop.f32.mrf.mxu0
    %v6900 = vpop.f32.mrf.mxu0
    %6901 = vdwg.mxu0
    %6902 = vmatprep.subr.bf16.mxu0 %v5543
    %6903 = vmatpush1.bf16.msra.mxu0 %v5542
    %6904 = vmatprep.subr.bf16.mxu0 %v5539
    %6905 = vmatpush1.bf16.msra.mxu0 %v5538
    %6906 = vmatprep.subr.bf16.mxu0 %v5535
    %6907 = vmatpush1.bf16.msra.mxu0 %v5534
    %6908 = vmatprep.subr.bf16.mxu0 %v5531
    %6909 = vmatpush1.bf16.msra.mxu0 %v5530
    %6910 = vmatprep.subr.bf16.mxu0 %v5527
    %6911 = vmatpush1.bf16.msra.mxu0 %v5526
    %6912 = vmatprep.subr.bf16.mxu0 %v5523
    %6913 = vmatpush1.bf16.msra.mxu0 %v5522
    %6914 = vmatprep.subr.bf16.mxu0 %v5519
    %6915 = vmatpush1.bf16.msra.mxu0 %v5518
    %6916 = vmatprep.subr.bf16.mxu0 %v5515
    %6917 = vmatpush1.bf16.msra.mxu0 %v5514
    %6918 = vmatprep.subr.bf16.mxu0 %v5575
    %6919 = vmatpush2.bf16.msra.mxu0 %v5574
    %6920 = vmatprep.subr.bf16.mxu0 %v5571
    %6921 = vmatpush2.bf16.msra.mxu0 %v5570
    %6922 = vmatprep.subr.bf16.mxu0 %v5567
    %6923 = vmatpush2.bf16.msra.mxu0 %v5566
    %6924 = vmatprep.subr.bf16.mxu0 %v5563
    %6925 = vmatpush2.bf16.msra.mxu0 %v5562
    %6926 = vmatprep.subr.bf16.mxu0 %v5559
    %6927 = vmatpush2.bf16.msra.mxu0 %v5558
    %6928 = vmatprep.subr.bf16.mxu0 %v5555
    %6929 = vmatpush2.bf16.msra.mxu0 %v5554
    %6930 = vmatprep.subr.bf16.mxu0 %v5551
    %6931 = vmatpush2.bf16.msra.mxu0 %v5550
    %6932 = vmatprep.subr.bf16.mxu0 %v5547
    %6933 = vmatpush2.bf16.msra.mxu0 %v5546
    %6934 = vmatprep.mubr.bf16.mxu0 %v2618
    %6935 = vmatmul.mubr.bf16.gmra.mxu0 %v2617
    %v6936 = vpop.f32.mrf.mxu0
    %v6937 = vadd.f32 %v6896, %v6936
    %v6938 = vpop.f32.mrf.mxu0
    %v6939 = vadd.f32 %v6898, %v6938
    %v6940 = vpop.f32.mrf.mxu0
    %v6941 = vpop.f32.mrf.mxu0
    %6942 = vdwg.mxu0
    %6943 = vmatprep.subr.bf16.mxu0 %v5607
    %6944 = vmatpush1.bf16.msra.mxu0 %v5606
    %6945 = vmatprep.subr.bf16.mxu0 %v5603
    %6946 = vmatpush1.bf16.msra.mxu0 %v5602
    %6947 = vmatprep.subr.bf16.mxu0 %v5599
    %6948 = vmatpush1.bf16.msra.mxu0 %v5598
    %6949 = vmatprep.subr.bf16.mxu0 %v5595
    %6950 = vmatpush1.bf16.msra.mxu0 %v5594
    %6951 = vmatprep.subr.bf16.mxu0 %v5591
    %6952 = vmatpush1.bf16.msra.mxu0 %v5590
    %6953 = vmatprep.subr.bf16.mxu0 %v5587
    %6954 = vmatpush1.bf16.msra.mxu0 %v5586
    %6955 = vmatprep.subr.bf16.mxu0 %v5583
    %6956 = vmatpush1.bf16.msra.mxu0 %v5582
    %6957 = vmatprep.subr.bf16.mxu0 %v5579
    %6958 = vmatpush1.bf16.msra.mxu0 %v5578
    %6959 = vmatprep.subr.bf16.mxu0 %v5639
    %6960 = vmatpush2.bf16.msra.mxu0 %v5638
    %6961 = vmatprep.subr.bf16.mxu0 %v5635
    %6962 = vmatpush2.bf16.msra.mxu0 %v5634
    %6963 = vmatprep.subr.bf16.mxu0 %v5631
    %6964 = vmatpush2.bf16.msra.mxu0 %v5630
    %6965 = vmatprep.subr.bf16.mxu0 %v5627
    %6966 = vmatpush2.bf16.msra.mxu0 %v5626
    %6967 = vmatprep.subr.bf16.mxu0 %v5623
    %6968 = vmatpush2.bf16.msra.mxu0 %v5622
    %6969 = vmatprep.subr.bf16.mxu0 %v5619
    %6970 = vmatpush2.bf16.msra.mxu0 %v5618
    %6971 = vmatprep.subr.bf16.mxu0 %v5615
    %6972 = vmatpush2.bf16.msra.mxu0 %v5614
    %6973 = vmatprep.subr.bf16.mxu0 %v5611
    %6974 = vmatpush2.bf16.msra.mxu0 %v5610
    %6975 = vmatprep.mubr.bf16.mxu0 %v2620
    %6976 = vmatmul.mubr.bf16.gmra.mxu0 %v2619
    %v6977 = vpop.f32.mrf.mxu0
    %v6978 = vadd.f32 %v6937, %v6977
    %v6979 = vpop.f32.mrf.mxu0
    %v6980 = vadd.f32 %v6939, %v6979
    %v6981 = vpop.f32.mrf.mxu0
    %v6982 = vpop.f32.mrf.mxu0
    %6983 = vdwg.mxu0
    %6984 = vmatprep.subr.bf16.mxu0 %v5671
    %6985 = vmatpush1.bf16.msra.mxu0 %v5670
    %6986 = vmatprep.subr.bf16.mxu0 %v5667
    %6987 = vmatpush1.bf16.msra.mxu0 %v5666
    %6988 = vmatprep.subr.bf16.mxu0 %v5663
    %6989 = vmatpush1.bf16.msra.mxu0 %v5662
    %6990 = vmatprep.subr.bf16.mxu0 %v5659
    %6991 = vmatpush1.bf16.msra.mxu0 %v5658
    %6992 = vmatprep.subr.bf16.mxu0 %v5655
    %6993 = vmatpush1.bf16.msra.mxu0 %v5654
    %6994 = vmatprep.subr.bf16.mxu0 %v5651
    %6995 = vmatpush1.bf16.msra.mxu0 %v5650
    %6996 = vmatprep.subr.bf16.mxu0 %v5647
    %6997 = vmatpush1.bf16.msra.mxu0 %v5646
    %6998 = vmatprep.subr.bf16.mxu0 %v5643
    %6999 = vmatpush1.bf16.msra.mxu0 %v5642
    %7000 = vmatprep.subr.bf16.mxu0 %v5703
    %7001 = vmatpush2.bf16.msra.mxu0 %v5702
    %7002 = vmatprep.subr.bf16.mxu0 %v5699
    %7003 = vmatpush2.bf16.msra.mxu0 %v5698
    %7004 = vmatprep.subr.bf16.mxu0 %v5695
    %7005 = vmatpush2.bf16.msra.mxu0 %v5694
    %7006 = vmatprep.subr.bf16.mxu0 %v5691
    %7007 = vmatpush2.bf16.msra.mxu0 %v5690
    %7008 = vmatprep.subr.bf16.mxu0 %v5687
    %7009 = vmatpush2.bf16.msra.mxu0 %v5686
    %7010 = vmatprep.subr.bf16.mxu0 %v5683
    %7011 = vmatpush2.bf16.msra.mxu0 %v5682
    %7012 = vmatprep.subr.bf16.mxu0 %v5679
    %7013 = vmatpush2.bf16.msra.mxu0 %v5678
    %7014 = vmatprep.subr.bf16.mxu0 %v5675
    %7015 = vmatpush2.bf16.msra.mxu0 %v5674
    %7016 = vmatprep.mubr.bf16.mxu0 %v2622
    %7017 = vmatmul.mubr.bf16.gmra.mxu0 %v2621
    %v7018 = vpop.f32.mrf.mxu0
    %v7019 = vadd.f32 %v6978, %v7018
    %v7020 = vpop.f32.mrf.mxu0
    %v7021 = vadd.f32 %v6980, %v7020
    %v7022 = vpop.f32.mrf.mxu0
    %v7023 = vpop.f32.mrf.mxu0
    %7024 = vdwg.mxu0
    %7025 = vmatprep.subr.bf16.mxu0 %v5735
    %7026 = vmatpush1.bf16.msra.mxu0 %v5734
    %7027 = vmatprep.subr.bf16.mxu0 %v5731
    %7028 = vmatpush1.bf16.msra.mxu0 %v5730
    %7029 = vmatprep.subr.bf16.mxu0 %v5727
    %7030 = vmatpush1.bf16.msra.mxu0 %v5726
    %7031 = vmatprep.subr.bf16.mxu0 %v5723
    %7032 = vmatpush1.bf16.msra.mxu0 %v5722
    %7033 = vmatprep.subr.bf16.mxu0 %v5719
    %7034 = vmatpush1.bf16.msra.mxu0 %v5718
    %7035 = vmatprep.subr.bf16.mxu0 %v5715
    %7036 = vmatpush1.bf16.msra.mxu0 %v5714
    %7037 = vmatprep.subr.bf16.mxu0 %v5711
    %7038 = vmatpush1.bf16.msra.mxu0 %v5710
    %7039 = vmatprep.subr.bf16.mxu0 %v5707
    %7040 = vmatpush1.bf16.msra.mxu0 %v5706
    %7041 = vmatprep.subr.bf16.mxu0 %v5767
    %7042 = vmatpush2.bf16.msra.mxu0 %v5766
    %7043 = vmatprep.subr.bf16.mxu0 %v5763
    %7044 = vmatpush2.bf16.msra.mxu0 %v5762
    %7045 = vmatprep.subr.bf16.mxu0 %v5759
    %7046 = vmatpush2.bf16.msra.mxu0 %v5758
    %7047 = vmatprep.subr.bf16.mxu0 %v5755
    %7048 = vmatpush2.bf16.msra.mxu0 %v5754
    %7049 = vmatprep.subr.bf16.mxu0 %v5751
    %7050 = vmatpush2.bf16.msra.mxu0 %v5750
    %7051 = vmatprep.subr.bf16.mxu0 %v5747
    %7052 = vmatpush2.bf16.msra.mxu0 %v5746
    %7053 = vmatprep.subr.bf16.mxu0 %v5743
    %7054 = vmatpush2.bf16.msra.mxu0 %v5742
    %7055 = vmatprep.subr.bf16.mxu0 %v5739
    %7056 = vmatpush2.bf16.msra.mxu0 %v5738
    %7057 = vmatprep.mubr.bf16.mxu0 %v2624
    %7058 = vmatmul.mubr.bf16.gmra.mxu0 %v2623
    %v7059 = vpop.f32.mrf.mxu0
    %v7060 = vadd.f32 %v7019, %v7059
    %v7061 = vpop.f32.mrf.mxu0
    %v7062 = vadd.f32 %v7021, %v7061
    %v7063 = vpop.f32.mrf.mxu0
    %v7064 = vpop.f32.mrf.mxu0
    %7065 = vdwg.mxu0
    %7066 = vmatprep.subr.bf16.mxu0 0
    %7067 = vmatpush1.bf16.msra.mxu0 0
    %7068 = vmatprep.subr.bf16.mxu0 0
    %7069 = vmatpush1.bf16.msra.mxu0 0
    %7070 = vmatprep.subr.bf16.mxu0 0
    %7071 = vmatpush1.bf16.msra.mxu0 0
    %7072 = vmatprep.subr.bf16.mxu0 0
    %7073 = vmatpush1.bf16.msra.mxu0 0
    %7074 = vmatprep.subr.bf16.mxu0 %v5783
    %7075 = vmatpush1.bf16.msra.mxu0 %v5782
    %7076 = vmatprep.subr.bf16.mxu0 %v5779
    %7077 = vmatpush1.bf16.msra.mxu0 %v5778
    %7078 = vmatprep.subr.bf16.mxu0 %v5775
    %7079 = vmatpush1.bf16.msra.mxu0 %v5774
    %7080 = vmatprep.subr.bf16.mxu0 %v5771
    %7081 = vmatpush1.bf16.msra.mxu0 %v5770
    %7082 = vmatprep.subr.bf16.mxu0 0
    %7083 = vmatpush2.bf16.msra.mxu0 0
    %7084 = vmatprep.subr.bf16.mxu0 0
    %7085 = vmatpush2.bf16.msra.mxu0 0
    %7086 = vmatprep.subr.bf16.mxu0 0
    %7087 = vmatpush2.bf16.msra.mxu0 0
    %7088 = vmatprep.subr.bf16.mxu0 0
    %7089 = vmatpush2.bf16.msra.mxu0 0
    %7090 = vmatprep.subr.bf16.mxu0 0
    %7091 = vmatpush2.bf16.msra.mxu0 0
    %7092 = vmatprep.subr.bf16.mxu0 0
    %7093 = vmatpush2.bf16.msra.mxu0 0
    %7094 = vmatprep.subr.bf16.mxu0 0
    %7095 = vmatpush2.bf16.msra.mxu0 0
    %7096 = vmatprep.subr.bf16.mxu0 0
    %7097 = vmatpush2.bf16.msra.mxu0 0
    %7098 = vmatprep.mubr.bf16.mxu0 0
    %7099 = vmatmul.mubr.bf16.gmra.mxu0 %v6572
    %v7100 = vpop.f32.mrf.mxu0
    %v7101 = vadd.f32 %v7060, %v7100
    %v7102 = vpop.f32.mrf.mxu0
    %v7103 = vadd.f32 %v7062, %v7102
    %v7104 = vpop.f32.mrf.mxu0
    %v7105 = vpop.f32.mrf.mxu0
    %7106 = vdwg.mxu0
    %7107 = vmatprep.subr.bf16.mxu0 %v5033
    %7108 = vmatpush1.bf16.msra.mxu0 %v5032
    %7109 = vmatprep.subr.bf16.mxu0 %v5029
    %7110 = vmatpush1.bf16.msra.mxu0 %v5028
    %7111 = vmatprep.subr.bf16.mxu0 %v5025
    %7112 = vmatpush1.bf16.msra.mxu0 %v5024
    %7113 = vmatprep.subr.bf16.mxu0 %v5021
    %7114 = vmatpush1.bf16.msra.mxu0 %v5020
    %7115 = vmatprep.subr.bf16.mxu0 %v5017
    %7116 = vmatpush1.bf16.msra.mxu0 %v5016
    %7117 = vmatprep.subr.bf16.mxu0 %v5013
    %7118 = vmatpush1.bf16.msra.mxu0 %v5012
    %7119 = vmatprep.subr.bf16.mxu0 %v5009
    %7120 = vmatpush1.bf16.msra.mxu0 %v5008
    %7121 = vmatprep.subr.bf16.mxu0 %v5005
    %7122 = vmatpush1.bf16.msra.mxu0 %v5004
    %7123 = vmatprep.subr.bf16.mxu0 %v5065
    %7124 = vmatpush2.bf16.msra.mxu0 %v5064
    %7125 = vmatprep.subr.bf16.mxu0 %v5061
    %7126 = vmatpush2.bf16.msra.mxu0 %v5060
    %7127 = vmatprep.subr.bf16.mxu0 %v5057
    %7128 = vmatpush2.bf16.msra.mxu0 %v5056
    %7129 = vmatprep.subr.bf16.mxu0 %v5053
    %7130 = vmatpush2.bf16.msra.mxu0 %v5052
    %7131 = vmatprep.subr.bf16.mxu0 %v5049
    %7132 = vmatpush2.bf16.msra.mxu0 %v5048
    %7133 = vmatprep.subr.bf16.mxu0 %v5045
    %7134 = vmatpush2.bf16.msra.mxu0 %v5044
    %7135 = vmatprep.subr.bf16.mxu0 %v5041
    %7136 = vmatpush2.bf16.msra.mxu0 %v5040
    %7137 = vmatprep.subr.bf16.mxu0 %v5037
    %7138 = vmatpush2.bf16.msra.mxu0 %v5036
    %7139 = vmatprep.mubr.bf16.mxu0 %v2602
    %7140 = vmatmul.mubr.bf16.gmra.mxu0 %v2601
    %v7141 = vpop.f32.mrf.mxu0
    %v7142 = vadd.f32 %v2554, %v7141
    %v7143 = vpop.f32.mrf.mxu0
    %v7144 = vadd.f32 %v2558, %v7143
    %v7145 = vpop.f32.mrf.mxu0
    %v7146 = vpop.f32.mrf.mxu0
    %7147 = vdwg.mxu0
    %7148 = vmatprep.subr.bf16.mxu0 %v5097
    %7149 = vmatpush1.bf16.msra.mxu0 %v5096
    %7150 = vmatprep.subr.bf16.mxu0 %v5093
    %7151 = vmatpush1.bf16.msra.mxu0 %v5092
    %7152 = vmatprep.subr.bf16.mxu0 %v5089
    %7153 = vmatpush1.bf16.msra.mxu0 %v5088
    %7154 = vmatprep.subr.bf16.mxu0 %v5085
    %7155 = vmatpush1.bf16.msra.mxu0 %v5084
    %7156 = vmatprep.subr.bf16.mxu0 %v5081
    %7157 = vmatpush1.bf16.msra.mxu0 %v5080
    %7158 = vmatprep.subr.bf16.mxu0 %v5077
    %7159 = vmatpush1.bf16.msra.mxu0 %v5076
    %7160 = vmatprep.subr.bf16.mxu0 %v5073
    %7161 = vmatpush1.bf16.msra.mxu0 %v5072
    %7162 = vmatprep.subr.bf16.mxu0 %v5069
    %7163 = vmatpush1.bf16.msra.mxu0 %v5068
    %7164 = vmatprep.subr.bf16.mxu0 %v5129
    %7165 = vmatpush2.bf16.msra.mxu0 %v5128
    %7166 = vmatprep.subr.bf16.mxu0 %v5125
    %7167 = vmatpush2.bf16.msra.mxu0 %v5124
    %7168 = vmatprep.subr.bf16.mxu0 %v5121
    %7169 = vmatpush2.bf16.msra.mxu0 %v5120
    %7170 = vmatprep.subr.bf16.mxu0 %v5117
    %7171 = vmatpush2.bf16.msra.mxu0 %v5116
    %7172 = vmatprep.subr.bf16.mxu0 %v5113
    %7173 = vmatpush2.bf16.msra.mxu0 %v5112
    %7174 = vmatprep.subr.bf16.mxu0 %v5109
    %7175 = vmatpush2.bf16.msra.mxu0 %v5108
    %7176 = vmatprep.subr.bf16.mxu0 %v5105
    %7177 = vmatpush2.bf16.msra.mxu0 %v5104
    %7178 = vmatprep.subr.bf16.mxu0 %v5101
    %7179 = vmatpush2.bf16.msra.mxu0 %v5100
    %7180 = vmatprep.mubr.bf16.mxu0 %v2604
    %7181 = vmatmul.mubr.bf16.gmra.mxu0 %v2603
    %v7182 = vpop.f32.mrf.mxu0
    %v7183 = vadd.f32 %v7142, %v7182
    %v7184 = vpop.f32.mrf.mxu0
    %v7185 = vadd.f32 %v7144, %v7184
    %v7186 = vpop.f32.mrf.mxu0
    %v7187 = vpop.f32.mrf.mxu0
    %7188 = vdwg.mxu0
    %7189 = vmatprep.subr.bf16.mxu0 %v5161
    %7190 = vmatpush1.bf16.msra.mxu0 %v5160
    %7191 = vmatprep.subr.bf16.mxu0 %v5157
    %7192 = vmatpush1.bf16.msra.mxu0 %v5156
    %7193 = vmatprep.subr.bf16.mxu0 %v5153
    %7194 = vmatpush1.bf16.msra.mxu0 %v5152
    %7195 = vmatprep.subr.bf16.mxu0 %v5149
    %7196 = vmatpush1.bf16.msra.mxu0 %v5148
    %7197 = vmatprep.subr.bf16.mxu0 %v5145
    %7198 = vmatpush1.bf16.msra.mxu0 %v5144
    %7199 = vmatprep.subr.bf16.mxu0 %v5141
    %7200 = vmatpush1.bf16.msra.mxu0 %v5140
    %7201 = vmatprep.subr.bf16.mxu0 %v5137
    %7202 = vmatpush1.bf16.msra.mxu0 %v5136
    %7203 = vmatprep.subr.bf16.mxu0 %v5133
    %7204 = vmatpush1.bf16.msra.mxu0 %v5132
    %7205 = vmatprep.subr.bf16.mxu0 %v5193
    %7206 = vmatpush2.bf16.msra.mxu0 %v5192
    %7207 = vmatprep.subr.bf16.mxu0 %v5189
    %7208 = vmatpush2.bf16.msra.mxu0 %v5188
    %7209 = vmatprep.subr.bf16.mxu0 %v5185
    %7210 = vmatpush2.bf16.msra.mxu0 %v5184
    %7211 = vmatprep.subr.bf16.mxu0 %v5181
    %7212 = vmatpush2.bf16.msra.mxu0 %v5180
    %7213 = vmatprep.subr.bf16.mxu0 %v5177
    %7214 = vmatpush2.bf16.msra.mxu0 %v5176
    %7215 = vmatprep.subr.bf16.mxu0 %v5173
    %7216 = vmatpush2.bf16.msra.mxu0 %v5172
    %7217 = vmatprep.subr.bf16.mxu0 %v5169
    %7218 = vmatpush2.bf16.msra.mxu0 %v5168
    %7219 = vmatprep.subr.bf16.mxu0 %v5165
    %7220 = vmatpush2.bf16.msra.mxu0 %v5164
    %7221 = vmatprep.mubr.bf16.mxu0 %v2606
    %7222 = vmatmul.mubr.bf16.gmra.mxu0 %v2605
    %v7223 = vpop.f32.mrf.mxu0
    %v7224 = vadd.f32 %v7183, %v7223
    %v7225 = vpop.f32.mrf.mxu0
    %v7226 = vadd.f32 %v7185, %v7225
    %v7227 = vpop.f32.mrf.mxu0
    %v7228 = vpop.f32.mrf.mxu0
    %7229 = vdwg.mxu0
    %7230 = vmatprep.subr.bf16.mxu0 %v5225
    %7231 = vmatpush1.bf16.msra.mxu0 %v5224
    %7232 = vmatprep.subr.bf16.mxu0 %v5221
    %7233 = vmatpush1.bf16.msra.mxu0 %v5220
    %7234 = vmatprep.subr.bf16.mxu0 %v5217
    %7235 = vmatpush1.bf16.msra.mxu0 %v5216
    %7236 = vmatprep.subr.bf16.mxu0 %v5213
    %7237 = vmatpush1.bf16.msra.mxu0 %v5212
    %7238 = vmatprep.subr.bf16.mxu0 %v5209
    %7239 = vmatpush1.bf16.msra.mxu0 %v5208
    %7240 = vmatprep.subr.bf16.mxu0 %v5205
    %7241 = vmatpush1.bf16.msra.mxu0 %v5204
    %7242 = vmatprep.subr.bf16.mxu0 %v5201
    %7243 = vmatpush1.bf16.msra.mxu0 %v5200
    %7244 = vmatprep.subr.bf16.mxu0 %v5197
    %7245 = vmatpush1.bf16.msra.mxu0 %v5196
    %7246 = vmatprep.subr.bf16.mxu0 %v5257
    %7247 = vmatpush2.bf16.msra.mxu0 %v5256
    %7248 = vmatprep.subr.bf16.mxu0 %v5253
    %7249 = vmatpush2.bf16.msra.mxu0 %v5252
    %7250 = vmatprep.subr.bf16.mxu0 %v5249
    %7251 = vmatpush2.bf16.msra.mxu0 %v5248
    %7252 = vmatprep.subr.bf16.mxu0 %v5245
    %7253 = vmatpush2.bf16.msra.mxu0 %v5244
    %7254 = vmatprep.subr.bf16.mxu0 %v5241
    %7255 = vmatpush2.bf16.msra.mxu0 %v5240
    %7256 = vmatprep.subr.bf16.mxu0 %v5237
    %7257 = vmatpush2.bf16.msra.mxu0 %v5236
    %7258 = vmatprep.subr.bf16.mxu0 %v5233
    %7259 = vmatpush2.bf16.msra.mxu0 %v5232
    %7260 = vmatprep.subr.bf16.mxu0 %v5229
    %7261 = vmatpush2.bf16.msra.mxu0 %v5228
    %7262 = vmatprep.mubr.bf16.mxu0 %v2608
    %7263 = vmatmul.mubr.bf16.gmra.mxu0 %v2607
    %v7264 = vpop.f32.mrf.mxu0
    %v7265 = vadd.f32 %v7224, %v7264
    %v7266 = vpop.f32.mrf.mxu0
    %v7267 = vadd.f32 %v7226, %v7266
    %v7268 = vpop.f32.mrf.mxu0
    %v7269 = vpop.f32.mrf.mxu0
    %7270 = vdwg.mxu0
    %7271 = vmatprep.subr.bf16.mxu0 %v5289
    %7272 = vmatpush1.bf16.msra.mxu0 %v5288
    %7273 = vmatprep.subr.bf16.mxu0 %v5285
    %7274 = vmatpush1.bf16.msra.mxu0 %v5284
    %7275 = vmatprep.subr.bf16.mxu0 %v5281
    %7276 = vmatpush1.bf16.msra.mxu0 %v5280
    %7277 = vmatprep.subr.bf16.mxu0 %v5277
    %7278 = vmatpush1.bf16.msra.mxu0 %v5276
    %7279 = vmatprep.subr.bf16.mxu0 %v5273
    %7280 = vmatpush1.bf16.msra.mxu0 %v5272
    %7281 = vmatprep.subr.bf16.mxu0 %v5269
    %7282 = vmatpush1.bf16.msra.mxu0 %v5268
    %7283 = vmatprep.subr.bf16.mxu0 %v5265
    %7284 = vmatpush1.bf16.msra.mxu0 %v5264
    %7285 = vmatprep.subr.bf16.mxu0 %v5261
    %7286 = vmatpush1.bf16.msra.mxu0 %v5260
    %7287 = vmatprep.subr.bf16.mxu0 %v5321
    %7288 = vmatpush2.bf16.msra.mxu0 %v5320
    %7289 = vmatprep.subr.bf16.mxu0 %v5317
    %7290 = vmatpush2.bf16.msra.mxu0 %v5316
    %7291 = vmatprep.subr.bf16.mxu0 %v5313
    %7292 = vmatpush2.bf16.msra.mxu0 %v5312
    %7293 = vmatprep.subr.bf16.mxu0 %v5309
    %7294 = vmatpush2.bf16.msra.mxu0 %v5308
    %7295 = vmatprep.subr.bf16.mxu0 %v5305
    %7296 = vmatpush2.bf16.msra.mxu0 %v5304
    %7297 = vmatprep.subr.bf16.mxu0 %v5301
    %7298 = vmatpush2.bf16.msra.mxu0 %v5300
    %7299 = vmatprep.subr.bf16.mxu0 %v5297
    %7300 = vmatpush2.bf16.msra.mxu0 %v5296
    %7301 = vmatprep.subr.bf16.mxu0 %v5293
    %7302 = vmatpush2.bf16.msra.mxu0 %v5292
    %7303 = vmatprep.mubr.bf16.mxu0 %v2610
    %7304 = vmatmul.mubr.bf16.gmra.mxu0 %v2609
    %v7305 = vpop.f32.mrf.mxu0
    %v7306 = vadd.f32 %v7265, %v7305
    %v7307 = vpop.f32.mrf.mxu0
    %v7308 = vadd.f32 %v7267, %v7307
    %v7309 = vpop.f32.mrf.mxu0
    %v7310 = vpop.f32.mrf.mxu0
    %7311 = vdwg.mxu0
    %7312 = vmatprep.subr.bf16.mxu0 %v5353
    %7313 = vmatpush1.bf16.msra.mxu0 %v5352
    %7314 = vmatprep.subr.bf16.mxu0 %v5349
    %7315 = vmatpush1.bf16.msra.mxu0 %v5348
    %7316 = vmatprep.subr.bf16.mxu0 %v5345
    %7317 = vmatpush1.bf16.msra.mxu0 %v5344
    %7318 = vmatprep.subr.bf16.mxu0 %v5341
    %7319 = vmatpush1.bf16.msra.mxu0 %v5340
    %7320 = vmatprep.subr.bf16.mxu0 %v5337
    %7321 = vmatpush1.bf16.msra.mxu0 %v5336
    %7322 = vmatprep.subr.bf16.mxu0 %v5333
    %7323 = vmatpush1.bf16.msra.mxu0 %v5332
    %7324 = vmatprep.subr.bf16.mxu0 %v5329
    %7325 = vmatpush1.bf16.msra.mxu0 %v5328
    %7326 = vmatprep.subr.bf16.mxu0 %v5325
    %7327 = vmatpush1.bf16.msra.mxu0 %v5324
    %7328 = vmatprep.subr.bf16.mxu0 %v5385
    %7329 = vmatpush2.bf16.msra.mxu0 %v5384
    %7330 = vmatprep.subr.bf16.mxu0 %v5381
    %7331 = vmatpush2.bf16.msra.mxu0 %v5380
    %7332 = vmatprep.subr.bf16.mxu0 %v5377
    %7333 = vmatpush2.bf16.msra.mxu0 %v5376
    %7334 = vmatprep.subr.bf16.mxu0 %v5373
    %7335 = vmatpush2.bf16.msra.mxu0 %v5372
    %7336 = vmatprep.subr.bf16.mxu0 %v5369
    %7337 = vmatpush2.bf16.msra.mxu0 %v5368
    %7338 = vmatprep.subr.bf16.mxu0 %v5365
    %7339 = vmatpush2.bf16.msra.mxu0 %v5364
    %7340 = vmatprep.subr.bf16.mxu0 %v5361
    %7341 = vmatpush2.bf16.msra.mxu0 %v5360
    %7342 = vmatprep.subr.bf16.mxu0 %v5357
    %7343 = vmatpush2.bf16.msra.mxu0 %v5356
    %7344 = vmatprep.mubr.bf16.mxu0 %v2612
    %7345 = vmatmul.mubr.bf16.gmra.mxu0 %v2611
    %v7346 = vpop.f32.mrf.mxu0
    %v7347 = vadd.f32 %v7306, %v7346
    %v7348 = vpop.f32.mrf.mxu0
    %v7349 = vadd.f32 %v7308, %v7348
    %v7350 = vpop.f32.mrf.mxu0
    %v7351 = vpop.f32.mrf.mxu0
    %7352 = vdwg.mxu0
    %7353 = vmatprep.subr.bf16.mxu0 %v5417
    %7354 = vmatpush1.bf16.msra.mxu0 %v5416
    %7355 = vmatprep.subr.bf16.mxu0 %v5413
    %7356 = vmatpush1.bf16.msra.mxu0 %v5412
    %7357 = vmatprep.subr.bf16.mxu0 %v5409
    %7358 = vmatpush1.bf16.msra.mxu0 %v5408
    %7359 = vmatprep.subr.bf16.mxu0 %v5405
    %7360 = vmatpush1.bf16.msra.mxu0 %v5404
    %7361 = vmatprep.subr.bf16.mxu0 %v5401
    %7362 = vmatpush1.bf16.msra.mxu0 %v5400
    %7363 = vmatprep.subr.bf16.mxu0 %v5397
    %7364 = vmatpush1.bf16.msra.mxu0 %v5396
    %7365 = vmatprep.subr.bf16.mxu0 %v5393
    %7366 = vmatpush1.bf16.msra.mxu0 %v5392
    %7367 = vmatprep.subr.bf16.mxu0 %v5389
    %7368 = vmatpush1.bf16.msra.mxu0 %v5388
    %7369 = vmatprep.subr.bf16.mxu0 %v5449
    %7370 = vmatpush2.bf16.msra.mxu0 %v5448
    %7371 = vmatprep.subr.bf16.mxu0 %v5445
    %7372 = vmatpush2.bf16.msra.mxu0 %v5444
    %7373 = vmatprep.subr.bf16.mxu0 %v5441
    %7374 = vmatpush2.bf16.msra.mxu0 %v5440
    %7375 = vmatprep.subr.bf16.mxu0 %v5437
    %7376 = vmatpush2.bf16.msra.mxu0 %v5436
    %7377 = vmatprep.subr.bf16.mxu0 %v5433
    %7378 = vmatpush2.bf16.msra.mxu0 %v5432
    %7379 = vmatprep.subr.bf16.mxu0 %v5429
    %7380 = vmatpush2.bf16.msra.mxu0 %v5428
    %7381 = vmatprep.subr.bf16.mxu0 %v5425
    %7382 = vmatpush2.bf16.msra.mxu0 %v5424
    %7383 = vmatprep.subr.bf16.mxu0 %v5421
    %7384 = vmatpush2.bf16.msra.mxu0 %v5420
    %7385 = vmatprep.mubr.bf16.mxu0 %v2614
    %7386 = vmatmul.mubr.bf16.gmra.mxu0 %v2613
    %v7387 = vpop.f32.mrf.mxu0
    %v7388 = vadd.f32 %v7347, %v7387
    %v7389 = vpop.f32.mrf.mxu0
    %v7390 = vadd.f32 %v7349, %v7389
    %v7391 = vpop.f32.mrf.mxu0
    %v7392 = vpop.f32.mrf.mxu0
    %7393 = vdwg.mxu0
    %7394 = vmatprep.subr.bf16.mxu0 %v5481
    %7395 = vmatpush1.bf16.msra.mxu0 %v5480
    %7396 = vmatprep.subr.bf16.mxu0 %v5477
    %7397 = vmatpush1.bf16.msra.mxu0 %v5476
    %7398 = vmatprep.subr.bf16.mxu0 %v5473
    %7399 = vmatpush1.bf16.msra.mxu0 %v5472
    %7400 = vmatprep.subr.bf16.mxu0 %v5469
    %7401 = vmatpush1.bf16.msra.mxu0 %v5468
    %7402 = vmatprep.subr.bf16.mxu0 %v5465
    %7403 = vmatpush1.bf16.msra.mxu0 %v5464
    %7404 = vmatprep.subr.bf16.mxu0 %v5461
    %7405 = vmatpush1.bf16.msra.mxu0 %v5460
    %7406 = vmatprep.subr.bf16.mxu0 %v5457
    %7407 = vmatpush1.bf16.msra.mxu0 %v5456
    %7408 = vmatprep.subr.bf16.mxu0 %v5453
    %7409 = vmatpush1.bf16.msra.mxu0 %v5452
    %7410 = vmatprep.subr.bf16.mxu0 %v5513
    %7411 = vmatpush2.bf16.msra.mxu0 %v5512
    %7412 = vmatprep.subr.bf16.mxu0 %v5509
    %7413 = vmatpush2.bf16.msra.mxu0 %v5508
    %7414 = vmatprep.subr.bf16.mxu0 %v5505
    %7415 = vmatpush2.bf16.msra.mxu0 %v5504
    %7416 = vmatprep.subr.bf16.mxu0 %v5501
    %7417 = vmatpush2.bf16.msra.mxu0 %v5500
    %7418 = vmatprep.subr.bf16.mxu0 %v5497
    %7419 = vmatpush2.bf16.msra.mxu0 %v5496
    %7420 = vmatprep.subr.bf16.mxu0 %v5493
    %7421 = vmatpush2.bf16.msra.mxu0 %v5492
    %7422 = vmatprep.subr.bf16.mxu0 %v5489
    %7423 = vmatpush2.bf16.msra.mxu0 %v5488
    %7424 = vmatprep.subr.bf16.mxu0 %v5485
    %7425 = vmatpush2.bf16.msra.mxu0 %v5484
    %7426 = vmatprep.mubr.bf16.mxu0 %v2616
    %7427 = vmatmul.mubr.bf16.gmra.mxu0 %v2615
    %v7428 = vpop.f32.mrf.mxu0
    %v7429 = vadd.f32 %v7388, %v7428
    %v7430 = vpop.f32.mrf.mxu0
    %v7431 = vadd.f32 %v7390, %v7430
    %v7432 = vpop.f32.mrf.mxu0
    %v7433 = vpop.f32.mrf.mxu0
    %7434 = vdwg.mxu0
    %7435 = vmatprep.subr.bf16.mxu0 %v5545
    %7436 = vmatpush1.bf16.msra.mxu0 %v5544
    %7437 = vmatprep.subr.bf16.mxu0 %v5541
    %7438 = vmatpush1.bf16.msra.mxu0 %v5540
    %7439 = vmatprep.subr.bf16.mxu0 %v5537
    %7440 = vmatpush1.bf16.msra.mxu0 %v5536
    %7441 = vmatprep.subr.bf16.mxu0 %v5533
    %7442 = vmatpush1.bf16.msra.mxu0 %v5532
    %7443 = vmatprep.subr.bf16.mxu0 %v5529
    %7444 = vmatpush1.bf16.msra.mxu0 %v5528
    %7445 = vmatprep.subr.bf16.mxu0 %v5525
    %7446 = vmatpush1.bf16.msra.mxu0 %v5524
    %7447 = vmatprep.subr.bf16.mxu0 %v5521
    %7448 = vmatpush1.bf16.msra.mxu0 %v5520
    %7449 = vmatprep.subr.bf16.mxu0 %v5517
    %7450 = vmatpush1.bf16.msra.mxu0 %v5516
    %7451 = vmatprep.subr.bf16.mxu0 %v5577
    %7452 = vmatpush2.bf16.msra.mxu0 %v5576
    %7453 = vmatprep.subr.bf16.mxu0 %v5573
    %7454 = vmatpush2.bf16.msra.mxu0 %v5572
    %7455 = vmatprep.subr.bf16.mxu0 %v5569
    %7456 = vmatpush2.bf16.msra.mxu0 %v5568
    %7457 = vmatprep.subr.bf16.mxu0 %v5565
    %7458 = vmatpush2.bf16.msra.mxu0 %v5564
    %7459 = vmatprep.subr.bf16.mxu0 %v5561
    %7460 = vmatpush2.bf16.msra.mxu0 %v5560
    %7461 = vmatprep.subr.bf16.mxu0 %v5557
    %7462 = vmatpush2.bf16.msra.mxu0 %v5556
    %7463 = vmatprep.subr.bf16.mxu0 %v5553
    %7464 = vmatpush2.bf16.msra.mxu0 %v5552
    %7465 = vmatprep.subr.bf16.mxu0 %v5549
    %7466 = vmatpush2.bf16.msra.mxu0 %v5548
    %7467 = vmatprep.mubr.bf16.mxu0 %v2618
    %7468 = vmatmul.mubr.bf16.gmra.mxu0 %v2617
    %v7469 = vpop.f32.mrf.mxu0
    %v7470 = vadd.f32 %v7429, %v7469
    %v7471 = vpop.f32.mrf.mxu0
    %v7472 = vadd.f32 %v7431, %v7471
    %v7473 = vpop.f32.mrf.mxu0
    %v7474 = vpop.f32.mrf.mxu0
    %7475 = vdwg.mxu0
    %7476 = vmatprep.subr.bf16.mxu0 %v5609
    %7477 = vmatpush1.bf16.msra.mxu0 %v5608
    %7478 = vmatprep.subr.bf16.mxu0 %v5605
    %7479 = vmatpush1.bf16.msra.mxu0 %v5604
    %7480 = vmatprep.subr.bf16.mxu0 %v5601
    %7481 = vmatpush1.bf16.msra.mxu0 %v5600
    %7482 = vmatprep.subr.bf16.mxu0 %v5597
    %7483 = vmatpush1.bf16.msra.mxu0 %v5596
    %7484 = vmatprep.subr.bf16.mxu0 %v5593
    %7485 = vmatpush1.bf16.msra.mxu0 %v5592
    %7486 = vmatprep.subr.bf16.mxu0 %v5589
    %7487 = vmatpush1.bf16.msra.mxu0 %v5588
    %7488 = vmatprep.subr.bf16.mxu0 %v5585
    %7489 = vmatpush1.bf16.msra.mxu0 %v5584
    %7490 = vmatprep.subr.bf16.mxu0 %v5581
    %7491 = vmatpush1.bf16.msra.mxu0 %v5580
    %7492 = vmatprep.subr.bf16.mxu0 %v5641
    %7493 = vmatpush2.bf16.msra.mxu0 %v5640
    %7494 = vmatprep.subr.bf16.mxu0 %v5637
    %7495 = vmatpush2.bf16.msra.mxu0 %v5636
    %7496 = vmatprep.subr.bf16.mxu0 %v5633
    %7497 = vmatpush2.bf16.msra.mxu0 %v5632
    %7498 = vmatprep.subr.bf16.mxu0 %v5629
    %7499 = vmatpush2.bf16.msra.mxu0 %v5628
    %7500 = vmatprep.subr.bf16.mxu0 %v5625
    %7501 = vmatpush2.bf16.msra.mxu0 %v5624
    %7502 = vmatprep.subr.bf16.mxu0 %v5621
    %7503 = vmatpush2.bf16.msra.mxu0 %v5620
    %7504 = vmatprep.subr.bf16.mxu0 %v5617
    %7505 = vmatpush2.bf16.msra.mxu0 %v5616
    %7506 = vmatprep.subr.bf16.mxu0 %v5613
    %7507 = vmatpush2.bf16.msra.mxu0 %v5612
    %7508 = vmatprep.mubr.bf16.mxu0 %v2620
    %7509 = vmatmul.mubr.bf16.gmra.mxu0 %v2619
    %v7510 = vpop.f32.mrf.mxu0
    %v7511 = vadd.f32 %v7470, %v7510
    %v7512 = vpop.f32.mrf.mxu0
    %v7513 = vadd.f32 %v7472, %v7512
    %v7514 = vpop.f32.mrf.mxu0
    %v7515 = vpop.f32.mrf.mxu0
    %7516 = vdwg.mxu0
    %7517 = vmatprep.subr.bf16.mxu0 %v5673
    %7518 = vmatpush1.bf16.msra.mxu0 %v5672
    %7519 = vmatprep.subr.bf16.mxu0 %v5669
    %7520 = vmatpush1.bf16.msra.mxu0 %v5668
    %7521 = vmatprep.subr.bf16.mxu0 %v5665
    %7522 = vmatpush1.bf16.msra.mxu0 %v5664
    %7523 = vmatprep.subr.bf16.mxu0 %v5661
    %7524 = vmatpush1.bf16.msra.mxu0 %v5660
    %7525 = vmatprep.subr.bf16.mxu0 %v5657
    %7526 = vmatpush1.bf16.msra.mxu0 %v5656
    %7527 = vmatprep.subr.bf16.mxu0 %v5653
    %7528 = vmatpush1.bf16.msra.mxu0 %v5652
    %7529 = vmatprep.subr.bf16.mxu0 %v5649
    %7530 = vmatpush1.bf16.msra.mxu0 %v5648
    %7531 = vmatprep.subr.bf16.mxu0 %v5645
    %7532 = vmatpush1.bf16.msra.mxu0 %v5644
    %7533 = vmatprep.subr.bf16.mxu0 %v5705
    %7534 = vmatpush2.bf16.msra.mxu0 %v5704
    %7535 = vmatprep.subr.bf16.mxu0 %v5701
    %7536 = vmatpush2.bf16.msra.mxu0 %v5700
    %7537 = vmatprep.subr.bf16.mxu0 %v5697
    %7538 = vmatpush2.bf16.msra.mxu0 %v5696
    %7539 = vmatprep.subr.bf16.mxu0 %v5693
    %7540 = vmatpush2.bf16.msra.mxu0 %v5692
    %7541 = vmatprep.subr.bf16.mxu0 %v5689
    %7542 = vmatpush2.bf16.msra.mxu0 %v5688
    %7543 = vmatprep.subr.bf16.mxu0 %v5685
    %7544 = vmatpush2.bf16.msra.mxu0 %v5684
    %7545 = vmatprep.subr.bf16.mxu0 %v5681
    %7546 = vmatpush2.bf16.msra.mxu0 %v5680
    %7547 = vmatprep.subr.bf16.mxu0 %v5677
    %7548 = vmatpush2.bf16.msra.mxu0 %v5676
    %7549 = vmatprep.mubr.bf16.mxu0 %v2622
    %7550 = vmatmul.mubr.bf16.gmra.mxu0 %v2621
    %v7551 = vpop.f32.mrf.mxu0
    %v7552 = vadd.f32 %v7511, %v7551
    %v7553 = vpop.f32.mrf.mxu0
    %v7554 = vadd.f32 %v7513, %v7553
    %v7555 = vpop.f32.mrf.mxu0
    %v7556 = vpop.f32.mrf.mxu0
    %7557 = vdwg.mxu0
    %7558 = vmatprep.subr.bf16.mxu0 %v5737
    %7559 = vmatpush1.bf16.msra.mxu0 %v5736
    %7560 = vmatprep.subr.bf16.mxu0 %v5733
    %7561 = vmatpush1.bf16.msra.mxu0 %v5732
    %7562 = vmatprep.subr.bf16.mxu0 %v5729
    %7563 = vmatpush1.bf16.msra.mxu0 %v5728
    %7564 = vmatprep.subr.bf16.mxu0 %v5725
    %7565 = vmatpush1.bf16.msra.mxu0 %v5724
    %7566 = vmatprep.subr.bf16.mxu0 %v5721
    %7567 = vmatpush1.bf16.msra.mxu0 %v5720
    %7568 = vmatprep.subr.bf16.mxu0 %v5717
    %7569 = vmatpush1.bf16.msra.mxu0 %v5716
    %7570 = vmatprep.subr.bf16.mxu0 %v5713
    %7571 = vmatpush1.bf16.msra.mxu0 %v5712
    %7572 = vmatprep.subr.bf16.mxu0 %v5709
    %7573 = vmatpush1.bf16.msra.mxu0 %v5708
    %7574 = vmatprep.subr.bf16.mxu0 %v5769
    %7575 = vmatpush2.bf16.msra.mxu0 %v5768
    %7576 = vmatprep.subr.bf16.mxu0 %v5765
    %7577 = vmatpush2.bf16.msra.mxu0 %v5764
    %7578 = vmatprep.subr.bf16.mxu0 %v5761
    %7579 = vmatpush2.bf16.msra.mxu0 %v5760
    %7580 = vmatprep.subr.bf16.mxu0 %v5757
    %7581 = vmatpush2.bf16.msra.mxu0 %v5756
    %7582 = vmatprep.subr.bf16.mxu0 %v5753
    %7583 = vmatpush2.bf16.msra.mxu0 %v5752
    %7584 = vmatprep.subr.bf16.mxu0 %v5749
    %7585 = vmatpush2.bf16.msra.mxu0 %v5748
    %7586 = vmatprep.subr.bf16.mxu0 %v5745
    %7587 = vmatpush2.bf16.msra.mxu0 %v5744
    %7588 = vmatprep.subr.bf16.mxu0 %v5741
    %7589 = vmatpush2.bf16.msra.mxu0 %v5740
    %7590 = vmatprep.mubr.bf16.mxu0 %v2624
    %7591 = vmatmul.mubr.bf16.gmra.mxu0 %v2623
    %v7592 = vpop.f32.mrf.mxu0
    %v7593 = vadd.f32 %v7552, %v7592
    %v7594 = vpop.f32.mrf.mxu0
    %v7595 = vadd.f32 %v7554, %v7594
    %v7596 = vpop.f32.mrf.mxu0
    %v7597 = vpop.f32.mrf.mxu0
    %7598 = vdwg.mxu0
    %7599 = vmatprep.subr.bf16.mxu0 0
    %7600 = vmatpush1.bf16.msra.mxu0 0
    %7601 = vmatprep.subr.bf16.mxu0 0
    %7602 = vmatpush1.bf16.msra.mxu0 0
    %7603 = vmatprep.subr.bf16.mxu0 0
    %7604 = vmatpush1.bf16.msra.mxu0 0
    %7605 = vmatprep.subr.bf16.mxu0 0
    %7606 = vmatpush1.bf16.msra.mxu0 0
    %7607 = vmatprep.subr.bf16.mxu0 %v5785
    %7608 = vmatpush1.bf16.msra.mxu0 %v5784
    %7609 = vmatprep.subr.bf16.mxu0 %v5781
    %7610 = vmatpush1.bf16.msra.mxu0 %v5780
    %7611 = vmatprep.subr.bf16.mxu0 %v5777
    %7612 = vmatpush1.bf16.msra.mxu0 %v5776
    %7613 = vmatprep.subr.bf16.mxu0 %v5773
    %7614 = vmatpush1.bf16.msra.mxu0 %v5772
    %7615 = vmatprep.subr.bf16.mxu0 0
    %7616 = vmatpush2.bf16.msra.mxu0 0
    %7617 = vmatprep.subr.bf16.mxu0 0
    %7618 = vmatpush2.bf16.msra.mxu0 0
    %7619 = vmatprep.subr.bf16.mxu0 0
    %7620 = vmatpush2.bf16.msra.mxu0 0
    %7621 = vmatprep.subr.bf16.mxu0 0
    %7622 = vmatpush2.bf16.msra.mxu0 0
    %7623 = vmatprep.subr.bf16.mxu0 0
    %7624 = vmatpush2.bf16.msra.mxu0 0
    %7625 = vmatprep.subr.bf16.mxu0 0
    %7626 = vmatpush2.bf16.msra.mxu0 0
    %7627 = vmatprep.subr.bf16.mxu0 0
    %7628 = vmatpush2.bf16.msra.mxu0 0
    %7629 = vmatprep.subr.bf16.mxu0 0
    %7630 = vmatpush2.bf16.msra.mxu0 0
    %7631 = vmatprep.mubr.bf16.mxu0 0
    %7632 = vmatmul.mubr.bf16.gmra.mxu0 %v6572
    %v7633 = vpop.f32.mrf.mxu0
    %v7634 = vadd.f32 %v7593, %v7633
    %v7635 = vpop.f32.mrf.mxu0
    %v7636 = vadd.f32 %v7595, %v7635
    %v7637 = vpop.f32.mrf.mxu0
    %v7638 = vpop.f32.mrf.mxu0
    %7639 = vdwg.mxu0
    %v7640 = vmax.f32 %v7101, 0.0
    %v7641 = vmax.f32 %v7103, 0.0
    %v7642 = vmax.f32 %v7634, 0.0
    %v7643 = vmax.f32 %v7636, 0.0
    %v7644 = vpack.c.bf16 %v7640, %v7640
    %v7645 = vpack.c.bf16 %v7641, %v7641
    %v7646 = vpack.c.bf16 %v7642, %v7642
    %v7647 = vpack.c.bf16 %v7643, %v7643
    %v7648 = vld [vmem:[#allocation11] sm:$0xf]
    %v7649 = vld [vmem:[#allocation11 + $0x4] sm:$0xf]
    %v7650 = vld [vmem:[#allocation11 + $0x8] sm:$0xf]
    %v7651 = vld [vmem:[#allocation11 + $0xc] sm:$0xf]
    %v7652 = vld [vmem:[#allocation11 + $0x10] sm:$0xf]
    %v7653 = vld [vmem:[#allocation11 + $0x14] sm:$0xf]
    %v7654 = vld [vmem:[#allocation11 + $0x18] sm:$0xf]
    %v7655 = vld [vmem:[#allocation11 + $0x1c] sm:$0xf]
    %v7656 = vld [vmem:[#allocation11 + $0x20] sm:$0xf]
    %v7657 = vld [vmem:[#allocation11 + $0x24] sm:$0xf]
    %v7658 = vld [vmem:[#allocation11 + $0x28] sm:$0xf]
    %v7659 = vld [vmem:[#allocation11 + $0x2c] sm:$0xf]
    %v7660 = vld [vmem:[#allocation11 + $0x30] sm:$0xf]
    %v7661 = vld [vmem:[#allocation11 + $0x34] sm:$0xf]
    %v7662 = vld [vmem:[#allocation11 + $0x38] sm:$0xf]
    %v7663 = vld [vmem:[#allocation11 + $0x3c] sm:$0xf]
    %v7664 = vld [vmem:[#allocation11 + $0x40] sm:$0xf]
    %v7665 = vld [vmem:[#allocation11 + $0x44] sm:$0xf]
    %v7666 = vld [vmem:[#allocation11 + $0x48] sm:$0xf]
    %v7667 = vld [vmem:[#allocation11 + $0x4c] sm:$0xf]
    %v7668 = vld [vmem:[#allocation11 + $0x50] sm:$0xf]
    %v7669 = vld [vmem:[#allocation11 + $0x54] sm:$0xf]
    %v7670 = vld [vmem:[#allocation11 + $0x58] sm:$0xf]
    %v7671 = vld [vmem:[#allocation11 + $0x5c] sm:$0xf]
    %v7672 = vld [vmem:[#allocation11 + $0x60] sm:$0xf]
    %v7673 = vld [vmem:[#allocation11 + $0x64] sm:$0xf]
    %v7674 = vld [vmem:[#allocation11 + $0x68] sm:$0xf]
    %v7675 = vld [vmem:[#allocation11 + $0x6c] sm:$0xf]
    %v7676 = vld [vmem:[#allocation11 + $0x70] sm:$0xf]
    %v7677 = vld [vmem:[#allocation11 + $0x74] sm:$0xf]
    %v7678 = vld [vmem:[#allocation11 + $0x78] sm:$0xf]
    %v7679 = vld [vmem:[#allocation11 + $0x7c] sm:$0xf]
    %v7680 = vld [vmem:[#allocation11 + $0x80] sm:$0xf]
    %v7681 = vld [vmem:[#allocation11 + $0x84] sm:$0xf]
    %v7682 = vld [vmem:[#allocation11 + $0x88] sm:$0xf]
    %v7683 = vld [vmem:[#allocation11 + $0x8c] sm:$0xf]
    %v7684 = vld [vmem:[#allocation11 + $0x90] sm:$0xf]
    %v7685 = vld [vmem:[#allocation11 + $0x94] sm:$0xf]
    %v7686 = vld [vmem:[#allocation11 + $0x98] sm:$0xf]
    %v7687 = vld [vmem:[#allocation11 + $0x9c] sm:$0xf]
    %v7688 = vld [vmem:[#allocation11 + $0xa0] sm:$0xf]
    %v7689 = vld [vmem:[#allocation11 + $0xa4] sm:$0xf]
    %v7690 = vld [vmem:[#allocation11 + $0xa8] sm:$0xf]
    %v7691 = vld [vmem:[#allocation11 + $0xac] sm:$0xf]
    %v7692 = vld [vmem:[#allocation11 + $0xb0] sm:$0xf]
    %v7693 = vld [vmem:[#allocation11 + $0xb4] sm:$0xf]
    %v7694 = vld [vmem:[#allocation11 + $0xb8] sm:$0xf]
    %v7695 = vld [vmem:[#allocation11 + $0xbc] sm:$0xf]
    %v7696 = vld [vmem:[#allocation11 + $0xc0] sm:$0xf]
    %v7697 = vld [vmem:[#allocation11 + $0xc4] sm:$0xf]
    %v7698 = vld [vmem:[#allocation11 + $0xc8] sm:$0xf]
    %v7699 = vld [vmem:[#allocation11 + $0xcc] sm:$0xf]
    %v7700 = vld [vmem:[#allocation11 + $0xd0] sm:$0xf]
    %v7701 = vld [vmem:[#allocation11 + $0xd4] sm:$0xf]
    %v7702 = vld [vmem:[#allocation11 + $0xd8] sm:$0xf]
    %v7703 = vld [vmem:[#allocation11 + $0xdc] sm:$0xf]
    %v7704 = vld [vmem:[#allocation11 + $0xe0] sm:$0xf]
    %v7705 = vld [vmem:[#allocation11 + $0xe4] sm:$0xf]
    %v7706 = vld [vmem:[#allocation11 + $0xe8] sm:$0xf]
    %v7707 = vld [vmem:[#allocation11 + $0xec] sm:$0xf]
    %v7708 = vld [vmem:[#allocation11 + $0xf0] sm:$0xf]
    %v7709 = vld [vmem:[#allocation11 + $0xf4] sm:$0xf]
    %v7710 = vld [vmem:[#allocation11 + $0xf8] sm:$0xf]
    %v7711 = vld [vmem:[#allocation11 + $0xfc] sm:$0xf]
    %v7712 = vld [vmem:[#allocation13] sm:$0x1]
    %v7714 = vlaneseq
    %v7715 = vshrl.u32 %v7714, 7
    %v7716 = vsub.s32 0, %v7715
    %v7717 = vrot.slane %v7712, %v7716
    %v7783 = vunpack.c.l.b16 %v7648
    %v7784 = vunpack.c.l.b16 %v7649
    %v7785 = vunpack.c.l.b16 %v7650
    %v7786 = vunpack.c.l.b16 %v7651
    %v7787 = vunpack.c.l.b16 %v7652
    %v7788 = vunpack.c.l.b16 %v7653
    %v7789 = vunpack.c.l.b16 %v7654
    %v7790 = vunpack.c.l.b16 %v7655
    %v7791 = vunpack.c.l.b16 %v7656
    %v7792 = vunpack.c.l.b16 %v7657
    %v7793 = vunpack.c.l.b16 %v7658
    %v7794 = vunpack.c.l.b16 %v7659
    %v7795 = vunpack.c.l.b16 %v7660
    %v7796 = vunpack.c.l.b16 %v7661
    %v7797 = vunpack.c.l.b16 %v7662
    %v7798 = vunpack.c.l.b16 %v7663
    %v7799 = vunpack.c.l.b16 %v7664
    %v7800 = vunpack.c.l.b16 %v7665
    %v7801 = vunpack.c.l.b16 %v7666
    %v7802 = vunpack.c.l.b16 %v7667
    %v7803 = vunpack.c.l.b16 %v7668
    %v7804 = vunpack.c.l.b16 %v7669
    %v7805 = vunpack.c.l.b16 %v7670
    %v7806 = vunpack.c.l.b16 %v7671
    %v7807 = vunpack.c.l.b16 %v7672
    %v7808 = vunpack.c.l.b16 %v7673
    %v7809 = vunpack.c.l.b16 %v7674
    %v7810 = vunpack.c.l.b16 %v7675
    %v7811 = vunpack.c.l.b16 %v7676
    %v7812 = vunpack.c.l.b16 %v7677
    %v7813 = vunpack.c.l.b16 %v7678
    %v7814 = vunpack.c.l.b16 %v7679
    %v7815 = vunpack.c.l.b16 %v7680
    %v7816 = vunpack.c.l.b16 %v7681
    %v7817 = vunpack.c.l.b16 %v7682
    %v7818 = vunpack.c.l.b16 %v7683
    %v7819 = vunpack.c.l.b16 %v7684
    %v7820 = vunpack.c.l.b16 %v7685
    %v7821 = vunpack.c.l.b16 %v7686
    %v7822 = vunpack.c.l.b16 %v7687
    %v7823 = vunpack.c.l.b16 %v7688
    %v7824 = vunpack.c.l.b16 %v7689
    %v7825 = vunpack.c.l.b16 %v7690
    %v7826 = vunpack.c.l.b16 %v7691
    %v7827 = vunpack.c.l.b16 %v7692
    %v7828 = vunpack.c.l.b16 %v7693
    %v7829 = vunpack.c.l.b16 %v7694
    %v7830 = vunpack.c.l.b16 %v7695
    %v7831 = vunpack.c.l.b16 %v7696
    %v7832 = vunpack.c.l.b16 %v7697
    %v7833 = vunpack.c.l.b16 %v7698
    %v7834 = vunpack.c.l.b16 %v7699
    %v7835 = vunpack.c.l.b16 %v7700
    %v7836 = vunpack.c.l.b16 %v7701
    %v7837 = vunpack.c.l.b16 %v7702
    %v7838 = vunpack.c.l.b16 %v7703
    %v7839 = vunpack.c.l.b16 %v7704
    %v7840 = vunpack.c.l.b16 %v7705
    %v7841 = vunpack.c.l.b16 %v7706
    %v7842 = vunpack.c.l.b16 %v7707
    %v7843 = vunpack.c.l.b16 %v7708
    %v7844 = vunpack.c.l.b16 %v7709
    %v7845 = vunpack.c.l.b16 %v7710
    %v7846 = vunpack.c.l.b16 %v7711
    %v7847 = vpack.c.b16 %v7784, %v7783
    %v7848 = vpack.c.b16 %v7786, %v7785
    %v7849 = vpack.c.b16 %v7788, %v7787
    %v7850 = vpack.c.b16 %v7790, %v7789
    %v7851 = vpack.c.b16 %v7792, %v7791
    %v7852 = vpack.c.b16 %v7794, %v7793
    %v7853 = vpack.c.b16 %v7796, %v7795
    %v7854 = vpack.c.b16 %v7798, %v7797
    %v7855 = vpack.c.b16 %v7800, %v7799
    %v7856 = vpack.c.b16 %v7802, %v7801
    %v7857 = vpack.c.b16 %v7804, %v7803
    %v7858 = vpack.c.b16 %v7806, %v7805
    %v7859 = vpack.c.b16 %v7808, %v7807
    %v7860 = vpack.c.b16 %v7810, %v7809
    %v7861 = vpack.c.b16 %v7812, %v7811
    %v7862 = vpack.c.b16 %v7814, %v7813
    %v7863 = vpack.c.b16 %v7816, %v7815
    %v7864 = vpack.c.b16 %v7818, %v7817
    %v7865 = vpack.c.b16 %v7820, %v7819
    %v7866 = vpack.c.b16 %v7822, %v7821
    %v7867 = vpack.c.b16 %v7824, %v7823
    %v7868 = vpack.c.b16 %v7826, %v7825
    %v7869 = vpack.c.b16 %v7828, %v7827
    %v7870 = vpack.c.b16 %v7830, %v7829
    %v7871 = vpack.c.b16 %v7832, %v7831
    %v7872 = vpack.c.b16 %v7834, %v7833
    %v7873 = vpack.c.b16 %v7836, %v7835
    %v7874 = vpack.c.b16 %v7838, %v7837
    %v7875 = vpack.c.b16 %v7840, %v7839
    %v7876 = vpack.c.b16 %v7842, %v7841
    %v7877 = vpack.c.b16 %v7844, %v7843
    %v7878 = vpack.c.b16 %v7846, %v7845
    %7911 = vmatprep.subr.bf16.mxu0 0
    %7912 = vmatpush1.bf16.msra.mxu0 %v7854
    %7913 = vmatprep.subr.bf16.mxu0 0
    %7914 = vmatpush1.bf16.msra.mxu0 %v7853
    %7915 = vmatprep.subr.bf16.mxu0 0
    %7916 = vmatpush1.bf16.msra.mxu0 %v7852
    %7917 = vmatprep.subr.bf16.mxu0 0
    %7918 = vmatpush1.bf16.msra.mxu0 %v7851
    %7919 = vmatprep.subr.bf16.mxu0 0
    %7920 = vmatpush1.bf16.msra.mxu0 %v7850
    %7921 = vmatprep.subr.bf16.mxu0 0
    %7922 = vmatpush1.bf16.msra.mxu0 %v7849
    %7923 = vmatprep.subr.bf16.mxu0 0
    %7924 = vmatpush1.bf16.msra.mxu0 %v7848
    %7925 = vmatprep.subr.bf16.mxu0 0
    %7926 = vmatpush1.bf16.msra.mxu0 %v7847
    %7927 = vmatprep.subr.bf16.mxu0 0
    %7928 = vmatpush2.bf16.msra.mxu0 %v7862
    %7929 = vmatprep.subr.bf16.mxu0 0
    %7930 = vmatpush2.bf16.msra.mxu0 %v7861
    %7931 = vmatprep.subr.bf16.mxu0 0
    %7932 = vmatpush2.bf16.msra.mxu0 %v7860
    %7933 = vmatprep.subr.bf16.mxu0 0
    %7934 = vmatpush2.bf16.msra.mxu0 %v7859
    %7935 = vmatprep.subr.bf16.mxu0 0
    %7936 = vmatpush2.bf16.msra.mxu0 %v7858
    %7937 = vmatprep.subr.bf16.mxu0 0
    %7938 = vmatpush2.bf16.msra.mxu0 %v7857
    %7939 = vmatprep.subr.bf16.mxu0 0
    %7940 = vmatpush2.bf16.msra.mxu0 %v7856
    %7941 = vmatprep.subr.bf16.mxu0 0
    %7942 = vmatpush2.bf16.msra.mxu0 %v7855
    %7943 = vmatprep.mubr.bf16.mxu0 %v7645
    %7944 = vmatmul.mubr.bf16.gmra.mxu0 %v7644
    %v7945 = vpop.f32.mrf.mxu0
    %v7946 = vadd.f32 %v7717, %v7945
    %v7947 = vpop.f32.mrf.mxu0
    %v7948 = vpop.f32.mrf.mxu0
    %v7949 = vpop.f32.mrf.mxu0
    %7950 = vdwg.mxu0
    %7951 = vmatprep.subr.bf16.mxu0 0
    %7952 = vmatpush1.bf16.msra.mxu0 %v7870
    %7953 = vmatprep.subr.bf16.mxu0 0
    %7954 = vmatpush1.bf16.msra.mxu0 %v7869
    %7955 = vmatprep.subr.bf16.mxu0 0
    %7956 = vmatpush1.bf16.msra.mxu0 %v7868
    %7957 = vmatprep.subr.bf16.mxu0 0
    %7958 = vmatpush1.bf16.msra.mxu0 %v7867
    %7959 = vmatprep.subr.bf16.mxu0 0
    %7960 = vmatpush1.bf16.msra.mxu0 %v7866
    %7961 = vmatprep.subr.bf16.mxu0 0
    %7962 = vmatpush1.bf16.msra.mxu0 %v7865
    %7963 = vmatprep.subr.bf16.mxu0 0
    %7964 = vmatpush1.bf16.msra.mxu0 %v7864
    %7965 = vmatprep.subr.bf16.mxu0 0
    %7966 = vmatpush1.bf16.msra.mxu0 %v7863
    %7967 = vmatprep.subr.bf16.mxu0 0
    %7968 = vmatpush2.bf16.msra.mxu0 %v7878
    %7969 = vmatprep.subr.bf16.mxu0 0
    %7970 = vmatpush2.bf16.msra.mxu0 %v7877
    %7971 = vmatprep.subr.bf16.mxu0 0
    %7972 = vmatpush2.bf16.msra.mxu0 %v7876
    %7973 = vmatprep.subr.bf16.mxu0 0
    %7974 = vmatpush2.bf16.msra.mxu0 %v7875
    %7975 = vmatprep.subr.bf16.mxu0 0
    %7976 = vmatpush2.bf16.msra.mxu0 %v7874
    %7977 = vmatprep.subr.bf16.mxu0 0
    %7978 = vmatpush2.bf16.msra.mxu0 %v7873
    %7979 = vmatprep.subr.bf16.mxu0 0
    %7980 = vmatpush2.bf16.msra.mxu0 %v7872
    %7981 = vmatprep.subr.bf16.mxu0 0
    %7982 = vmatpush2.bf16.msra.mxu0 %v7871
    %7983 = vmatprep.mubr.bf16.mxu0 %v7647
    %7984 = vmatmul.mubr.bf16.gmra.mxu0 %v7646
    %v7985 = vpop.f32.mrf.mxu0
    %v7986 = vadd.f32 %v7946, %v7985
    %v7987 = vpop.f32.mrf.mxu0
    %v7988 = vpop.f32.mrf.mxu0
    %v7989 = vpop.f32.mrf.mxu0
    %7990 = vdwg.mxu0
    %7991 = vst [vmem:[%s9] sm:$0xff] %v7986
    // Predicated region
    $region66: #{dqn_forward_pallas.1} parent=1 // pred_check
      _
    $region67: #{dqn_forward_pallas.1} parent=1 // pred_check_branch
      %7993 = sbr.rel (0) target = $region69
    $region68: #{dqn_forward_pallas.1} parent=1 // pred_region
      _
    $region69: #{dqn_forward_pallas.1} parent=1 // pred_fallthru
      _
    // Predicated region
    $region70: #{dqn_forward_pallas.1} parent=1 // pred_check
      _
    $region71: #{dqn_forward_pallas.1} parent=1 // pred_check_branch
      %7995 = sbr.rel (0) target = $region73
    $region72: #{dqn_forward_pallas.1} parent=1 // pred_region
      _
    $region73: #{dqn_forward_pallas.1} parent=1 // pred_fallthru
      _
    %7996 = vsyncpa [#allocation4], 1
    %7997 = vsyncpa [#allocation6], 1
    %7998 = vsyncpa [#allocation9], 1
    %7999 = vsyncpa [#allocation12], 1

</llo_original>
